<compile_context>
chip_gen: v7x
topology: tpu7x:2x2x1
jax: 0.10.0
libtpu: 0.0.40
codegen_flags: <defaults>
</compile_context>

<pallas_src>
import jax
import jax.numpy as jnp
from jax.experimental import pallas as pl
from jax.experimental.pallas import tpu as pltpu

SEQ = 384
D_MODEL = 256
D_FF = 1024
EPS = 1e-12

TM = 192   # rows per grid step -> grid=(2,): even 2-way split on v7x megacore
RT = 96    # row sub-tile inside the kernel (bounds vreg pressure)
FC = 256   # D_FF chunk width (matches MXU output tile; avoids [TM,1024] spill)

_INV_SQRT2 = 0.7071067811865476


def _ffn_block_kernel(x_ref, res_ref,
                      w1_ref, b1_ref,
                      gamma_ref, beta_ref,
                      w2_ref, b2_ref,
                      w3_ref, b3_ref,
                      o_ref):
    inv_d = 1.0 / D_MODEL

    for r in range(TM // RT):                      # static, fully unrolled
        rows = slice(r * RT, (r + 1) * RT)
        x = x_ref[rows, :].astype(jnp.float32)
        res = res_ref[rows, :].astype(jnp.float32)

        # Linear 256 -> 256 (+ bias).  Dropout p=0.1 is identity in eval mode.
        h = jnp.dot(x, w1_ref[...], preferred_element_type=jnp.float32)
        h = h + b1_ref[...] + res

        # LayerNorm over last axis (eps=1e-12), single cross-lane pass.
        s1 = jnp.sum(h, axis=-1, keepdims=True)
        s2 = jnp.sum(h * h, axis=-1, keepdims=True)
        mean = s1 * inv_d
        var = s2 * inv_d - mean * mean
        h = (h - mean) * jax.lax.rsqrt(var + EPS)
        h = h * gamma_ref[...] + beta_ref[...]

        # FFN: chunk the 1024-wide hidden so the GELU intermediate stays small.
        y = jnp.zeros((RT, D_MODEL), jnp.float32)
        for c in range(D_FF // FC):                # static, fully unrolled
            cols = slice(c * FC, (c + 1) * FC)
            # Linear 256 -> 256-chunk of 1024 (+ bias).
            u = jnp.dot(h, w2_ref[:, cols], preferred_element_type=jnp.float32)
            u = u + b2_ref[:, cols]
            # Exact GELU (erf variant — torch._C._nn.gelu default).
            g = 0.5 * u * (1.0 + jax.lax.erf(u * _INV_SQRT2))
            # Partial Linear 1024-chunk -> 256, accumulate.
            y = y + jnp.dot(g, w3_ref[cols, :], preferred_element_type=jnp.float32)

        # Final bias.  Final dropout is identity in eval mode.
        o_ref[rows, :] = (y + b3_ref[...]).astype(o_ref.dtype)


@jax.jit
def ffn_forward(x351, x323, w1, b1, gamma, beta, w2, b2, w3, b3):
    # x351: [1, 384, 4, 64] -> view as [1, 384, 256] -> flatten rows.
    x = x351.reshape(SEQ, D_MODEL)
    res = x323.reshape(SEQ, D_MODEL)

    grid = (SEQ // TM,)

    row_spec = pl.BlockSpec((TM, D_MODEL), lambda i: (i, 0))
    full = lambda shape: pl.BlockSpec(shape, lambda i: (0, 0))

    out = pl.pallas_call(
        _ffn_block_kernel,
        out_shape=jax.ShapeDtypeStruct((SEQ, D_MODEL), x351.dtype),
        grid_spec=pltpu.PrefetchScalarGridSpec(
            num_scalar_prefetch=0,
            grid=grid,
            in_specs=[
                row_spec,                      # x tile
                row_spec,                      # residual tile
                full((D_MODEL, D_MODEL)),      # W1
                full((1, D_MODEL)),            # b1
                full((1, D_MODEL)),            # gamma
                full((1, D_MODEL)),            # beta
                full((D_MODEL, D_FF)),         # W2
                full((1, D_FF)),               # b2
                full((D_FF, D_MODEL)),         # W3
                full((1, D_MODEL)),            # b3
            ],
            out_specs=row_spec,
        ),
        compiler_params=pltpu.CompilerParams(
            dimension_semantics=("parallel",)),
    )(x, res, w1, b1, gamma, beta, w2, b2, w3, b3)

    return out.reshape(1, SEQ, D_MODEL)


def _init_params(key):
    ks = jax.random.split(key, 6)
    # Weights stored transposed relative to torch (as [in, out]) so the kernel
    # computes x @ W directly.
    w1 = jax.random.normal(ks[0], (D_MODEL, D_MODEL), jnp.float32) * 0.02
    b1 = jax.random.normal(ks[1], (1, D_MODEL), jnp.float32) * 0.02
    gamma = jnp.ones((1, D_MODEL), jnp.float32)
    beta = jnp.zeros((1, D_MODEL), jnp.float32)
    w2 = jax.random.normal(ks[2], (D_MODEL, D_FF), jnp.float32) * 0.02
    b2 = jax.random.normal(ks[3], (1, D_FF), jnp.float32) * 0.02
    w3 = jax.random.normal(ks[4], (D_FF, D_MODEL), jnp.float32) * 0.02
    b3 = jax.random.normal(ks[5], (1, D_MODEL), jnp.float32) * 0.02
    return w1, b1, gamma, beta, w2, b2, w3, b3


if __name__ == "__main__":
    key = jax.random.PRNGKey(0)
    k_in, k_res, k_par = jax.random.split(key, 3)

    x351 = jax.random.normal(k_in, (1, SEQ, 4, 64), jnp.float32)
    x323 = jax.random.normal(k_res, (1, SEQ, D_MODEL), jnp.float32)
    params = _init_params(k_par)

    out = ffn_forward(x351, x323, *params)
    jax.block_until_ready(out)

    # Lightweight sanity check against a pure-JAX reference.
    w1, b1, gamma, beta, w2, b2, w3, b3 = params
    xf = x351.reshape(1, SEQ, D_MODEL)
    h = xf @ w1 + b1
    h = h + x323
    mu = h.mean(-1, keepdims=True)
    var = ((h - mu) ** 2).mean(-1, keepdims=True)
    h = (h - mu) / jnp.sqrt(var + EPS) * gamma + beta
    u = h @ w2 + b2
    u = 0.5 * u * (1.0 + jax.lax.erf(u / jnp.sqrt(2.0)))
    ref = u @ w3 + b3
    assert jnp.allclose(out, ref, atol=1e-4, rtol=1e-4), "mismatch vs reference"

    print("KERNEL_OK")
</pallas_src>

<mosaic_0001>
module attributes {stable_mosaic.version = 11 : i64} {
  func.func @_ffn_block_kernel(%arg0: i32, %arg1: memref<192x256xf32, #tpu.memory_space<vmem>>, %arg2: memref<192x256xf32, #tpu.memory_space<vmem>>, %arg3: memref<256x256xf32, #tpu.memory_space<vmem>>, %arg4: memref<1x256xf32, #tpu.memory_space<vmem>>, %arg5: memref<1x256xf32, #tpu.memory_space<vmem>>, %arg6: memref<1x256xf32, #tpu.memory_space<vmem>>, %arg7: memref<256x1024xf32, #tpu.memory_space<vmem>>, %arg8: memref<1x1024xf32, #tpu.memory_space<vmem>>, %arg9: memref<1024x256xf32, #tpu.memory_space<vmem>>, %arg10: memref<1x256xf32, #tpu.memory_space<vmem>>, %arg11: memref<192x256xf32, #tpu.memory_space<vmem>>) attributes {dimension_semantics = [#tpu.dimension_semantics<parallel>], iteration_bounds = array<i64: 2>, scalar_prefetch = 0 : i64, scratch_operands = 0 : i64, tpu.core_type = #tpu.core_type<tc>, window_params = [{transform_indices = @transform_0, window_bounds = array<i64: 192, 256>}, {transform_indices = @transform_1, window_bounds = array<i64: 192, 256>}, {pipeline_mode = #tpu.pipeline_mode<synchronous>, transform_indices = @transform_2, window_bounds = array<i64: 256, 256>}, {pipeline_mode = #tpu.pipeline_mode<synchronous>, transform_indices = @transform_3, window_bounds = array<i64: 1, 256>}, {pipeline_mode = #tpu.pipeline_mode<synchronous>, transform_indices = @transform_4, window_bounds = array<i64: 1, 256>}, {pipeline_mode = #tpu.pipeline_mode<synchronous>, transform_indices = @transform_5, window_bounds = array<i64: 1, 256>}, {pipeline_mode = #tpu.pipeline_mode<synchronous>, transform_indices = @transform_6, window_bounds = array<i64: 256, 1024>}, {pipeline_mode = #tpu.pipeline_mode<synchronous>, transform_indices = @transform_7, window_bounds = array<i64: 1, 1024>}, {pipeline_mode = #tpu.pipeline_mode<synchronous>, transform_indices = @transform_8, window_bounds = array<i64: 1024, 256>}, {pipeline_mode = #tpu.pipeline_mode<synchronous>, transform_indices = @transform_9, window_bounds = array<i64: 1, 256>}, {transform_indices = @transform_10, window_bounds = array<i64: 192, 256>}]} {
    %c0 = arith.constant 0 : index
    %c0_0 = arith.constant 0 : index
    %0 = vector.load %arg1[%c0, %c0_0] : memref<192x256xf32, #tpu.memory_space<vmem>>, vector<96x256xf32>
    %c0_1 = arith.constant 0 : index
    %c0_2 = arith.constant 0 : index
    %1 = vector.load %arg2[%c0_1, %c0_2] : memref<192x256xf32, #tpu.memory_space<vmem>>, vector<96x256xf32>
    %c0_3 = arith.constant 0 : index
    %c0_4 = arith.constant 0 : index
    %2 = vector.load %arg3[%c0_3, %c0_4] : memref<256x256xf32, #tpu.memory_space<vmem>>, vector<256x256xf32>
    %cst = arith.constant dense<0.000000e+00> : vector<96x256xf32>
    %3 = tpu.matmul %0, %2, %cst {dimension_numbers = #tpu.dot_dimension_numbers<[1], [0], [0], [1], [0, 0, 1, 1], [], []>} : vector<96x256xf32>, vector<256x256xf32>, vector<96x256xf32> -> vector<96x256xf32>
    %c0_5 = arith.constant 0 : index
    %c0_6 = arith.constant 0 : index
    %4 = vector.load %arg4[%c0_5, %c0_6] : memref<1x256xf32, #tpu.memory_space<vmem>>, vector<1x256xf32>
    %5 = vector.broadcast %4 : vector<1x256xf32> to vector<96x256xf32>
    %6 = arith.addf %3, %5 : vector<96x256xf32>
    %7 = arith.addf %6, %1 : vector<96x256xf32>
    %cst_7 = arith.constant dense<0.000000e+00> : vector<96xf32>
    %8 = vector.multi_reduction <add>, %7, %cst_7 [1] : vector<96x256xf32> to vector<96xf32>
    %9 = vector.shape_cast %8 : vector<96xf32> to vector<96x1xf32>
    %10 = arith.mulf %7, %7 : vector<96x256xf32>
    %cst_8 = arith.constant dense<0.000000e+00> : vector<96xf32>
    %11 = vector.multi_reduction <add>, %10, %cst_8 [1] : vector<96x256xf32> to vector<96xf32>
    %12 = vector.shape_cast %11 : vector<96xf32> to vector<96x1xf32>
    %cst_9 = arith.constant 3.906250e-03 : f32
    %13 = vector.broadcast %cst_9 : f32 to vector<96x1xf32>
    %14 = arith.mulf %9, %13 : vector<96x1xf32>
    %cst_10 = arith.constant 3.906250e-03 : f32
    %15 = vector.broadcast %cst_10 : f32 to vector<96x1xf32>
    %16 = arith.mulf %12, %15 : vector<96x1xf32>
    %17 = arith.mulf %14, %14 : vector<96x1xf32>
    %18 = arith.subf %16, %17 : vector<96x1xf32>
    %19 = vector.broadcast %14 : vector<96x1xf32> to vector<96x256xf32>
    %20 = arith.subf %7, %19 : vector<96x256xf32>
    %cst_11 = arith.constant 9.99999996E-13 : f32
    %21 = vector.broadcast %cst_11 : f32 to vector<96x1xf32>
    %22 = arith.addf %18, %21 : vector<96x1xf32>
    %23 = math.rsqrt %22 : vector<96x1xf32>
    %24 = vector.broadcast %23 : vector<96x1xf32> to vector<96x256xf32>
    %25 = arith.mulf %20, %24 : vector<96x256xf32>
    %c0_12 = arith.constant 0 : index
    %c0_13 = arith.constant 0 : index
    %26 = vector.load %arg5[%c0_12, %c0_13] : memref<1x256xf32, #tpu.memory_space<vmem>>, vector<1x256xf32>
    %27 = vector.broadcast %26 : vector<1x256xf32> to vector<96x256xf32>
    %28 = arith.mulf %25, %27 : vector<96x256xf32>
    %c0_14 = arith.constant 0 : index
    %c0_15 = arith.constant 0 : index
    %29 = vector.load %arg6[%c0_14, %c0_15] : memref<1x256xf32, #tpu.memory_space<vmem>>, vector<1x256xf32>
    %30 = vector.broadcast %29 : vector<1x256xf32> to vector<96x256xf32>
    %31 = arith.addf %28, %30 : vector<96x256xf32>
    %cst_16 = arith.constant 0.000000e+00 : f32
    %32 = vector.broadcast %cst_16 : f32 to vector<96x256xf32>
    %c0_17 = arith.constant 0 : index
    %c0_18 = arith.constant 0 : index
    %33 = vector.load %arg7[%c0_17, %c0_18] : memref<256x1024xf32, #tpu.memory_space<vmem>>, vector<256x256xf32>
    %cst_19 = arith.constant dense<0.000000e+00> : vector<96x256xf32>
    %34 = tpu.matmul %31, %33, %cst_19 {dimension_numbers = #tpu.dot_dimension_numbers<[1], [0], [0], [1], [0, 0, 1, 1], [], []>} : vector<96x256xf32>, vector<256x256xf32>, vector<96x256xf32> -> vector<96x256xf32>
    %c0_20 = arith.constant 0 : index
    %c0_21 = arith.constant 0 : index
    %35 = vector.load %arg8[%c0_20, %c0_21] : memref<1x1024xf32, #tpu.memory_space<vmem>>, vector<1x256xf32>
    %36 = vector.broadcast %35 : vector<1x256xf32> to vector<96x256xf32>
    %37 = arith.addf %34, %36 : vector<96x256xf32>
    %cst_22 = arith.constant 5.000000e-01 : f32
    %38 = vector.broadcast %cst_22 : f32 to vector<96x256xf32>
    %39 = arith.mulf %38, %37 : vector<96x256xf32>
    %cst_23 = arith.constant 0.707106769 : f32
    %40 = vector.broadcast %cst_23 : f32 to vector<96x256xf32>
    %41 = arith.mulf %37, %40 : vector<96x256xf32>
    %42 = math.erf %41 : vector<96x256xf32>
    %cst_24 = arith.constant 1.000000e+00 : f32
    %43 = vector.broadcast %cst_24 : f32 to vector<96x256xf32>
    %44 = arith.addf %43, %42 : vector<96x256xf32>
    %45 = arith.mulf %39, %44 : vector<96x256xf32>
    %c0_25 = arith.constant 0 : index
    %c0_26 = arith.constant 0 : index
    %46 = vector.load %arg9[%c0_25, %c0_26] : memref<1024x256xf32, #tpu.memory_space<vmem>>, vector<256x256xf32>
    %cst_27 = arith.constant dense<0.000000e+00> : vector<96x256xf32>
    %47 = tpu.matmul %45, %46, %cst_27 {dimension_numbers = #tpu.dot_dimension_numbers<[1], [0], [0], [1], [0, 0, 1, 1], [], []>} : vector<96x256xf32>, vector<256x256xf32>, vector<96x256xf32> -> vector<96x256xf32>
    %48 = arith.addf %32, %47 : vector<96x256xf32>
    %c0_28 = arith.constant 0 : index
    %c256 = arith.constant 256 : index
    %49 = vector.load %arg7[%c0_28, %c256] : memref<256x1024xf32, #tpu.memory_space<vmem>>, vector<256x256xf32>
    %cst_29 = arith.constant dense<0.000000e+00> : vector<96x256xf32>
    %50 = tpu.matmul %31, %49, %cst_29 {dimension_numbers = #tpu.dot_dimension_numbers<[1], [0], [0], [1], [0, 0, 1, 1], [], []>} : vector<96x256xf32>, vector<256x256xf32>, vector<96x256xf32> -> vector<96x256xf32>
    %c0_30 = arith.constant 0 : index
    %c256_31 = arith.constant 256 : index
    %51 = vector.load %arg8[%c0_30, %c256_31] : memref<1x1024xf32, #tpu.memory_space<vmem>>, vector<1x256xf32>
    %52 = vector.broadcast %51 : vector<1x256xf32> to vector<96x256xf32>
    %53 = arith.addf %50, %52 : vector<96x256xf32>
    %cst_32 = arith.constant 5.000000e-01 : f32
    %54 = vector.broadcast %cst_32 : f32 to vector<96x256xf32>
    %55 = arith.mulf %54, %53 : vector<96x256xf32>
    %cst_33 = arith.constant 0.707106769 : f32
    %56 = vector.broadcast %cst_33 : f32 to vector<96x256xf32>
    %57 = arith.mulf %53, %56 : vector<96x256xf32>
    %58 = math.erf %57 : vector<96x256xf32>
    %cst_34 = arith.constant 1.000000e+00 : f32
    %59 = vector.broadcast %cst_34 : f32 to vector<96x256xf32>
    %60 = arith.addf %59, %58 : vector<96x256xf32>
    %61 = arith.mulf %55, %60 : vector<96x256xf32>
    %c256_35 = arith.constant 256 : index
    %c0_36 = arith.constant 0 : index
    %62 = vector.load %arg9[%c256_35, %c0_36] : memref<1024x256xf32, #tpu.memory_space<vmem>>, vector<256x256xf32>
    %cst_37 = arith.constant dense<0.000000e+00> : vector<96x256xf32>
    %63 = tpu.matmul %61, %62, %cst_37 {dimension_numbers = #tpu.dot_dimension_numbers<[1], [0], [0], [1], [0, 0, 1, 1], [], []>} : vector<96x256xf32>, vector<256x256xf32>, vector<96x256xf32> -> vector<96x256xf32>
    %64 = arith.addf %48, %63 : vector<96x256xf32>
    %c0_38 = arith.constant 0 : index
    %c512 = arith.constant 512 : index
    %65 = vector.load %arg7[%c0_38, %c512] : memref<256x1024xf32, #tpu.memory_space<vmem>>, vector<256x256xf32>
    %cst_39 = arith.constant dense<0.000000e+00> : vector<96x256xf32>
    %66 = tpu.matmul %31, %65, %cst_39 {dimension_numbers = #tpu.dot_dimension_numbers<[1], [0], [0], [1], [0, 0, 1, 1], [], []>} : vector<96x256xf32>, vector<256x256xf32>, vector<96x256xf32> -> vector<96x256xf32>
    %c0_40 = arith.constant 0 : index
    %c512_41 = arith.constant 512 : index
    %67 = vector.load %arg8[%c0_40, %c512_41] : memref<1x1024xf32, #tpu.memory_space<vmem>>, vector<1x256xf32>
    %68 = vector.broadcast %67 : vector<1x256xf32> to vector<96x256xf32>
    %69 = arith.addf %66, %68 : vector<96x256xf32>
    %cst_42 = arith.constant 5.000000e-01 : f32
    %70 = vector.broadcast %cst_42 : f32 to vector<96x256xf32>
    %71 = arith.mulf %70, %69 : vector<96x256xf32>
    %cst_43 = arith.constant 0.707106769 : f32
    %72 = vector.broadcast %cst_43 : f32 to vector<96x256xf32>
    %73 = arith.mulf %69, %72 : vector<96x256xf32>
    %74 = math.erf %73 : vector<96x256xf32>
    %cst_44 = arith.constant 1.000000e+00 : f32
    %75 = vector.broadcast %cst_44 : f32 to vector<96x256xf32>
    %76 = arith.addf %75, %74 : vector<96x256xf32>
    %77 = arith.mulf %71, %76 : vector<96x256xf32>
    %c512_45 = arith.constant 512 : index
    %c0_46 = arith.constant 0 : index
    %78 = vector.load %arg9[%c512_45, %c0_46] : memref<1024x256xf32, #tpu.memory_space<vmem>>, vector<256x256xf32>
    %cst_47 = arith.constant dense<0.000000e+00> : vector<96x256xf32>
    %79 = tpu.matmul %77, %78, %cst_47 {dimension_numbers = #tpu.dot_dimension_numbers<[1], [0], [0], [1], [0, 0, 1, 1], [], []>} : vector<96x256xf32>, vector<256x256xf32>, vector<96x256xf32> -> vector<96x256xf32>
    %80 = arith.addf %64, %79 : vector<96x256xf32>
    %c0_48 = arith.constant 0 : index
    %c768 = arith.constant 768 : index
    %81 = vector.load %arg7[%c0_48, %c768] : memref<256x1024xf32, #tpu.memory_space<vmem>>, vector<256x256xf32>
    %cst_49 = arith.constant dense<0.000000e+00> : vector<96x256xf32>
    %82 = tpu.matmul %31, %81, %cst_49 {dimension_numbers = #tpu.dot_dimension_numbers<[1], [0], [0], [1], [0, 0, 1, 1], [], []>} : vector<96x256xf32>, vector<256x256xf32>, vector<96x256xf32> -> vector<96x256xf32>
    %c0_50 = arith.constant 0 : index
    %c768_51 = arith.constant 768 : index
    %83 = vector.load %arg8[%c0_50, %c768_51] : memref<1x1024xf32, #tpu.memory_space<vmem>>, vector<1x256xf32>
    %84 = vector.broadcast %83 : vector<1x256xf32> to vector<96x256xf32>
    %85 = arith.addf %82, %84 : vector<96x256xf32>
    %cst_52 = arith.constant 5.000000e-01 : f32
    %86 = vector.broadcast %cst_52 : f32 to vector<96x256xf32>
    %87 = arith.mulf %86, %85 : vector<96x256xf32>
    %cst_53 = arith.constant 0.707106769 : f32
    %88 = vector.broadcast %cst_53 : f32 to vector<96x256xf32>
    %89 = arith.mulf %85, %88 : vector<96x256xf32>
    %90 = math.erf %89 : vector<96x256xf32>
    %cst_54 = arith.constant 1.000000e+00 : f32
    %91 = vector.broadcast %cst_54 : f32 to vector<96x256xf32>
    %92 = arith.addf %91, %90 : vector<96x256xf32>
    %93 = arith.mulf %87, %92 : vector<96x256xf32>
    %c768_55 = arith.constant 768 : index
    %c0_56 = arith.constant 0 : index
    %94 = vector.load %arg9[%c768_55, %c0_56] : memref<1024x256xf32, #tpu.memory_space<vmem>>, vector<256x256xf32>
    %cst_57 = arith.constant dense<0.000000e+00> : vector<96x256xf32>
    %95 = tpu.matmul %93, %94, %cst_57 {dimension_numbers = #tpu.dot_dimension_numbers<[1], [0], [0], [1], [0, 0, 1, 1], [], []>} : vector<96x256xf32>, vector<256x256xf32>, vector<96x256xf32> -> vector<96x256xf32>
    %96 = arith.addf %80, %95 : vector<96x256xf32>
    %c0_58 = arith.constant 0 : index
    %c0_59 = arith.constant 0 : index
    %97 = vector.load %arg10[%c0_58, %c0_59] : memref<1x256xf32, #tpu.memory_space<vmem>>, vector<1x256xf32>
    %98 = vector.broadcast %97 : vector<1x256xf32> to vector<96x256xf32>
    %99 = arith.addf %96, %98 : vector<96x256xf32>
    %c0_60 = arith.constant 0 : index
    %c0_61 = arith.constant 0 : index
    %100 = vector.load %arg11[%c0_60, %c0_61] : memref<192x256xf32, #tpu.memory_space<vmem>>, vector<96x256xf32>
    tpu.vector_store %arg11[%c0_60, %c0_61], %99 {strides = array<i32>} : memref<192x256xf32, #tpu.memory_space<vmem>>, vector<96x256xf32>,
    %c96 = arith.constant 96 : index
    %c0_62 = arith.constant 0 : index
    %101 = vector.load %arg1[%c96, %c0_62] : memref<192x256xf32, #tpu.memory_space<vmem>>, vector<96x256xf32>
    %c96_63 = arith.constant 96 : index
    %c0_64 = arith.constant 0 : index
    %102 = vector.load %arg2[%c96_63, %c0_64] : memref<192x256xf32, #tpu.memory_space<vmem>>, vector<96x256xf32>
    %c0_65 = arith.constant 0 : index
    %c0_66 = arith.constant 0 : index
    %103 = vector.load %arg3[%c0_65, %c0_66] : memref<256x256xf32, #tpu.memory_space<vmem>>, vector<256x256xf32>
    %cst_67 = arith.constant dense<0.000000e+00> : vector<96x256xf32>
    %104 = tpu.matmul %101, %103, %cst_67 {dimension_numbers = #tpu.dot_dimension_numbers<[1], [0], [0], [1], [0, 0, 1, 1], [], []>} : vector<96x256xf32>, vector<256x256xf32>, vector<96x256xf32> -> vector<96x256xf32>
    %c0_68 = arith.constant 0 : index
    %c0_69 = arith.constant 0 : index
    %105 = vector.load %arg4[%c0_68, %c0_69] : memref<1x256xf32, #tpu.memory_space<vmem>>, vector<1x256xf32>
    %106 = vector.broadcast %105 : vector<1x256xf32> to vector<96x256xf32>
    %107 = arith.addf %104, %106 : vector<96x256xf32>
    %108 = arith.addf %107, %102 : vector<96x256xf32>
    %cst_70 = arith.constant dense<0.000000e+00> : vector<96xf32>
    %109 = vector.multi_reduction <add>, %108, %cst_70 [1] : vector<96x256xf32> to vector<96xf32>
    %110 = vector.shape_cast %109 : vector<96xf32> to vector<96x1xf32>
    %111 = arith.mulf %108, %108 : vector<96x256xf32>
    %cst_71 = arith.constant dense<0.000000e+00> : vector<96xf32>
    %112 = vector.multi_reduction <add>, %111, %cst_71 [1] : vector<96x256xf32> to vector<96xf32>
    %113 = vector.shape_cast %112 : vector<96xf32> to vector<96x1xf32>
    %cst_72 = arith.constant 3.906250e-03 : f32
    %114 = vector.broadcast %cst_72 : f32 to vector<96x1xf32>
    %115 = arith.mulf %110, %114 : vector<96x1xf32>
    %cst_73 = arith.constant 3.906250e-03 : f32
    %116 = vector.broadcast %cst_73 : f32 to vector<96x1xf32>
    %117 = arith.mulf %113, %116 : vector<96x1xf32>
    %118 = arith.mulf %115, %115 : vector<96x1xf32>
    %119 = arith.subf %117, %118 : vector<96x1xf32>
    %120 = vector.broadcast %115 : vector<96x1xf32> to vector<96x256xf32>
    %121 = arith.subf %108, %120 : vector<96x256xf32>
    %cst_74 = arith.constant 9.99999996E-13 : f32
    %122 = vector.broadcast %cst_74 : f32 to vector<96x1xf32>
    %123 = arith.addf %119, %122 : vector<96x1xf32>
    %124 = math.rsqrt %123 : vector<96x1xf32>
    %125 = vector.broadcast %124 : vector<96x1xf32> to vector<96x256xf32>
    %126 = arith.mulf %121, %125 : vector<96x256xf32>
    %c0_75 = arith.constant 0 : index
    %c0_76 = arith.constant 0 : index
    %127 = vector.load %arg5[%c0_75, %c0_76] : memref<1x256xf32, #tpu.memory_space<vmem>>, vector<1x256xf32>
    %128 = vector.broadcast %127 : vector<1x256xf32> to vector<96x256xf32>
    %129 = arith.mulf %126, %128 : vector<96x256xf32>
    %c0_77 = arith.constant 0 : index
    %c0_78 = arith.constant 0 : index
    %130 = vector.load %arg6[%c0_77, %c0_78] : memref<1x256xf32, #tpu.memory_space<vmem>>, vector<1x256xf32>
    %131 = vector.broadcast %130 : vector<1x256xf32> to vector<96x256xf32>
    %132 = arith.addf %129, %131 : vector<96x256xf32>
    %cst_79 = arith.constant 0.000000e+00 : f32
    %133 = vector.broadcast %cst_79 : f32 to vector<96x256xf32>
    %c0_80 = arith.constant 0 : index
    %c0_81 = arith.constant 0 : index
    %134 = vector.load %arg7[%c0_80, %c0_81] : memref<256x1024xf32, #tpu.memory_space<vmem>>, vector<256x256xf32>
    %cst_82 = arith.constant dense<0.000000e+00> : vector<96x256xf32>
    %135 = tpu.matmul %132, %134, %cst_82 {dimension_numbers = #tpu.dot_dimension_numbers<[1], [0], [0], [1], [0, 0, 1, 1], [], []>} : vector<96x256xf32>, vector<256x256xf32>, vector<96x256xf32> -> vector<96x256xf32>
    %c0_83 = arith.constant 0 : index
    %c0_84 = arith.constant 0 : index
    %136 = vector.load %arg8[%c0_83, %c0_84] : memref<1x1024xf32, #tpu.memory_space<vmem>>, vector<1x256xf32>
    %137 = vector.broadcast %136 : vector<1x256xf32> to vector<96x256xf32>
    %138 = arith.addf %135, %137 : vector<96x256xf32>
    %cst_85 = arith.constant 5.000000e-01 : f32
    %139 = vector.broadcast %cst_85 : f32 to vector<96x256xf32>
    %140 = arith.mulf %139, %138 : vector<96x256xf32>
    %cst_86 = arith.constant 0.707106769 : f32
    %141 = vector.broadcast %cst_86 : f32 to vector<96x256xf32>
    %142 = arith.mulf %138, %141 : vector<96x256xf32>
    %143 = math.erf %142 : vector<96x256xf32>
    %cst_87 = arith.constant 1.000000e+00 : f32
    %144 = vector.broadcast %cst_87 : f32 to vector<96x256xf32>
    %145 = arith.addf %144, %143 : vector<96x256xf32>
    %146 = arith.mulf %140, %145 : vector<96x256xf32>
    %c0_88 = arith.constant 0 : index
    %c0_89 = arith.constant 0 : index
    %147 = vector.load %arg9[%c0_88, %c0_89] : memref<1024x256xf32, #tpu.memory_space<vmem>>, vector<256x256xf32>
    %cst_90 = arith.constant dense<0.000000e+00> : vector<96x256xf32>
    %148 = tpu.matmul %146, %147, %cst_90 {dimension_numbers = #tpu.dot_dimension_numbers<[1], [0], [0], [1], [0, 0, 1, 1], [], []>} : vector<96x256xf32>, vector<256x256xf32>, vector<96x256xf32> -> vector<96x256xf32>
    %149 = arith.addf %133, %148 : vector<96x256xf32>
    %c0_91 = arith.constant 0 : index
    %c256_92 = arith.constant 256 : index
    %150 = vector.load %arg7[%c0_91, %c256_92] : memref<256x1024xf32, #tpu.memory_space<vmem>>, vector<256x256xf32>
    %cst_93 = arith.constant dense<0.000000e+00> : vector<96x256xf32>
    %151 = tpu.matmul %132, %150, %cst_93 {dimension_numbers = #tpu.dot_dimension_numbers<[1], [0], [0], [1], [0, 0, 1, 1], [], []>} : vector<96x256xf32>, vector<256x256xf32>, vector<96x256xf32> -> vector<96x256xf32>
    %c0_94 = arith.constant 0 : index
    %c256_95 = arith.constant 256 : index
    %152 = vector.load %arg8[%c0_94, %c256_95] : memref<1x1024xf32, #tpu.memory_space<vmem>>, vector<1x256xf32>
    %153 = vector.broadcast %152 : vector<1x256xf32> to vector<96x256xf32>
    %154 = arith.addf %151, %153 : vector<96x256xf32>
    %cst_96 = arith.constant 5.000000e-01 : f32
    %155 = vector.broadcast %cst_96 : f32 to vector<96x256xf32>
    %156 = arith.mulf %155, %154 : vector<96x256xf32>
    %cst_97 = arith.constant 0.707106769 : f32
    %157 = vector.broadcast %cst_97 : f32 to vector<96x256xf32>
    %158 = arith.mulf %154, %157 : vector<96x256xf32>
    %159 = math.erf %158 : vector<96x256xf32>
    %cst_98 = arith.constant 1.000000e+00 : f32
    %160 = vector.broadcast %cst_98 : f32 to vector<96x256xf32>
    %161 = arith.addf %160, %159 : vector<96x256xf32>
    %162 = arith.mulf %156, %161 : vector<96x256xf32>
    %c256_99 = arith.constant 256 : index
    %c0_100 = arith.constant 0 : index
    %163 = vector.load %arg9[%c256_99, %c0_100] : memref<1024x256xf32, #tpu.memory_space<vmem>>, vector<256x256xf32>
    %cst_101 = arith.constant dense<0.000000e+00> : vector<96x256xf32>
    %164 = tpu.matmul %162, %163, %cst_101 {dimension_numbers = #tpu.dot_dimension_numbers<[1], [0], [0], [1], [0, 0, 1, 1], [], []>} : vector<96x256xf32>, vector<256x256xf32>, vector<96x256xf32> -> vector<96x256xf32>
    %165 = arith.addf %149, %164 : vector<96x256xf32>
    %c0_102 = arith.constant 0 : index
    %c512_103 = arith.constant 512 : index
    %166 = vector.load %arg7[%c0_102, %c512_103] : memref<256x1024xf32, #tpu.memory_space<vmem>>, vector<256x256xf32>
    %cst_104 = arith.constant dense<0.000000e+00> : vector<96x256xf32>
    %167 = tpu.matmul %132, %166, %cst_104 {dimension_numbers = #tpu.dot_dimension_numbers<[1], [0], [0], [1], [0, 0, 1, 1], [], []>} : vector<96x256xf32>, vector<256x256xf32>, vector<96x256xf32> -> vector<96x256xf32>
    %c0_105 = arith.constant 0 : index
    %c512_106 = arith.constant 512 : index
    %168 = vector.load %arg8[%c0_105, %c512_106] : memref<1x1024xf32, #tpu.memory_space<vmem>>, vector<1x256xf32>
    %169 = vector.broadcast %168 : vector<1x256xf32> to vector<96x256xf32>
    %170 = arith.addf %167, %169 : vector<96x256xf32>
    %cst_107 = arith.constant 5.000000e-01 : f32
    %171 = vector.broadcast %cst_107 : f32 to vector<96x256xf32>
    %172 = arith.mulf %171, %170 : vector<96x256xf32>
    %cst_108 = arith.constant 0.707106769 : f32
    %173 = vector.broadcast %cst_108 : f32 to vector<96x256xf32>
    %174 = arith.mulf %170, %173 : vector<96x256xf32>
    %175 = math.erf %174 : vector<96x256xf32>
    %cst_109 = arith.constant 1.000000e+00 : f32
    %176 = vector.broadcast %cst_109 : f32 to vector<96x256xf32>
    %177 = arith.addf %176, %175 : vector<96x256xf32>
    %178 = arith.mulf %172, %177 : vector<96x256xf32>
    %c512_110 = arith.constant 512 : index
    %c0_111 = arith.constant 0 : index
    %179 = vector.load %arg9[%c512_110, %c0_111] : memref<1024x256xf32, #tpu.memory_space<vmem>>, vector<256x256xf32>
    %cst_112 = arith.constant dense<0.000000e+00> : vector<96x256xf32>
    %180 = tpu.matmul %178, %179, %cst_112 {dimension_numbers = #tpu.dot_dimension_numbers<[1], [0], [0], [1], [0, 0, 1, 1], [], []>} : vector<96x256xf32>, vector<256x256xf32>, vector<96x256xf32> -> vector<96x256xf32>
    %181 = arith.addf %165, %180 : vector<96x256xf32>
    %c0_113 = arith.constant 0 : index
    %c768_114 = arith.constant 768 : index
    %182 = vector.load %arg7[%c0_113, %c768_114] : memref<256x1024xf32, #tpu.memory_space<vmem>>, vector<256x256xf32>
    %cst_115 = arith.constant dense<0.000000e+00> : vector<96x256xf32>
    %183 = tpu.matmul %132, %182, %cst_115 {dimension_numbers = #tpu.dot_dimension_numbers<[1], [0], [0], [1], [0, 0, 1, 1], [], []>} : vector<96x256xf32>, vector<256x256xf32>, vector<96x256xf32> -> vector<96x256xf32>
    %c0_116 = arith.constant 0 : index
    %c768_117 = arith.constant 768 : index
    %184 = vector.load %arg8[%c0_116, %c768_117] : memref<1x1024xf32, #tpu.memory_space<vmem>>, vector<1x256xf32>
    %185 = vector.broadcast %184 : vector<1x256xf32> to vector<96x256xf32>
    %186 = arith.addf %183, %185 : vector<96x256xf32>
    %cst_118 = arith.constant 5.000000e-01 : f32
    %187 = vector.broadcast %cst_118 : f32 to vector<96x256xf32>
    %188 = arith.mulf %187, %186 : vector<96x256xf32>
    %cst_119 = arith.constant 0.707106769 : f32
    %189 = vector.broadcast %cst_119 : f32 to vector<96x256xf32>
    %190 = arith.mulf %186, %189 : vector<96x256xf32>
    %191 = math.erf %190 : vector<96x256xf32>
    %cst_120 = arith.constant 1.000000e+00 : f32
    %192 = vector.broadcast %cst_120 : f32 to vector<96x256xf32>
    %193 = arith.addf %192, %191 : vector<96x256xf32>
    %194 = arith.mulf %188, %193 : vector<96x256xf32>
    %c768_121 = arith.constant 768 : index
    %c0_122 = arith.constant 0 : index
    %195 = vector.load %arg9[%c768_121, %c0_122] : memref<1024x256xf32, #tpu.memory_space<vmem>>, vector<256x256xf32>
    %cst_123 = arith.constant dense<0.000000e+00> : vector<96x256xf32>
    %196 = tpu.matmul %194, %195, %cst_123 {dimension_numbers = #tpu.dot_dimension_numbers<[1], [0], [0], [1], [0, 0, 1, 1], [], []>} : vector<96x256xf32>, vector<256x256xf32>, vector<96x256xf32> -> vector<96x256xf32>
    %197 = arith.addf %181, %196 : vector<96x256xf32>
    %c0_124 = arith.constant 0 : index
    %c0_125 = arith.constant 0 : index
    %198 = vector.load %arg10[%c0_124, %c0_125] : memref<1x256xf32, #tpu.memory_space<vmem>>, vector<1x256xf32>
    %199 = vector.broadcast %198 : vector<1x256xf32> to vector<96x256xf32>
    %200 = arith.addf %197, %199 : vector<96x256xf32>
    %c96_126 = arith.constant 96 : index
    %c0_127 = arith.constant 0 : index
    %201 = vector.load %arg11[%c96_126, %c0_127] : memref<192x256xf32, #tpu.memory_space<vmem>>, vector<96x256xf32>
    tpu.vector_store %arg11[%c96_126, %c0_127], %200 {strides = array<i32>} : memref<192x256xf32, #tpu.memory_space<vmem>>, vector<96x256xf32>,
    return
  }
  func.func @transform_0(%arg0: i32) -> (i32, i32) {
    %c0_i32 = arith.constant 0 : i32
    %c0_i32_0 = arith.constant 0 : i32
    return %arg0, %c0_i32 : i32, i32
  }
  func.func @transform_1(%arg0: i32) -> (i32, i32) {
    %c0_i32 = arith.constant 0 : i32
    %c0_i32_0 = arith.constant 0 : i32
    return %arg0, %c0_i32 : i32, i32
  }
  func.func @transform_2(%arg0: i32) -> (i32, i32) {
    %c0_i32 = arith.constant 0 : i32
    %c0_i32_0 = arith.constant 0 : i32
    %c0_i32_1 = arith.constant 0 : i32
    return %c0_i32, %c0_i32_0 : i32, i32
  }
  func.func @transform_3(%arg0: i32) -> (i32, i32) {
    %c0_i32 = arith.constant 0 : i32
    %c0_i32_0 = arith.constant 0 : i32
    %c0_i32_1 = arith.constant 0 : i32
    return %c0_i32, %c0_i32_0 : i32, i32
  }
  func.func @transform_4(%arg0: i32) -> (i32, i32) {
    %c0_i32 = arith.constant 0 : i32
    %c0_i32_0 = arith.constant 0 : i32
    %c0_i32_1 = arith.constant 0 : i32
    return %c0_i32, %c0_i32_0 : i32, i32
  }
  func.func @transform_5(%arg0: i32) -> (i32, i32) {
    %c0_i32 = arith.constant 0 : i32
    %c0_i32_0 = arith.constant 0 : i32
    %c0_i32_1 = arith.constant 0 : i32
    return %c0_i32, %c0_i32_0 : i32, i32
  }
  func.func @transform_6(%arg0: i32) -> (i32, i32) {
    %c0_i32 = arith.constant 0 : i32
    %c0_i32_0 = arith.constant 0 : i32
    %c0_i32_1 = arith.constant 0 : i32
    return %c0_i32, %c0_i32_0 : i32, i32
  }
  func.func @transform_7(%arg0: i32) -> (i32, i32) {
    %c0_i32 = arith.constant 0 : i32
    %c0_i32_0 = arith.constant 0 : i32
    %c0_i32_1 = arith.constant 0 : i32
    return %c0_i32, %c0_i32_0 : i32, i32
  }
  func.func @transform_8(%arg0: i32) -> (i32, i32) {
    %c0_i32 = arith.constant 0 : i32
    %c0_i32_0 = arith.constant 0 : i32
    %c0_i32_1 = arith.constant 0 : i32
    return %c0_i32, %c0_i32_0 : i32, i32
  }
  func.func @transform_9(%arg0: i32) -> (i32, i32) {
    %c0_i32 = arith.constant 0 : i32
    %c0_i32_0 = arith.constant 0 : i32
    %c0_i32_1 = arith.constant 0 : i32
    return %c0_i32, %c0_i32_0 : i32, i32
  }
  func.func @transform_10(%arg0: i32) -> (i32, i32) {
    %c0_i32 = arith.constant 0 : i32
    %c0_i32_0 = arith.constant 0 : i32
    return %arg0, %c0_i32 : i32, i32
  }
}

</mosaic_0001>

<llo_original>
// kernel: ffn_forward.1
$region0: #{ffn_forward.1}
  #allocation0 [shape = 'u32[]', space=smem, size = 0x4, offset = 0x4, fixed_abs, tag = 'smem constant byte address 0x4 - core index']
  #allocation1 [shape = 'u32[144,128]{1,0:T(1,128)}', space=vmem, size = 0x12000, scoped, tag = 'internal scratch']
  %s0 = inlined_call_operand.vmem [shape: f32[384,256], index: 0, kind: input, shape index: {}]
  %s1 = inlined_call_operand.vmem [shape: f32[384,256], index: 1, kind: input, shape index: {}]
  %s2 = inlined_call_operand.vmem [shape: f32[256,256], index: 2, kind: input, shape index: {}]
  %s3 = inlined_call_operand.vmem [shape: f32[1,256], index: 3, kind: input, shape index: {}]
  %s4 = inlined_call_operand.vmem [shape: f32[1,256], index: 4, kind: input, shape index: {}]
  %s5 = inlined_call_operand.vmem [shape: f32[1,256], index: 5, kind: input, shape index: {}]
  %s6 = inlined_call_operand.hbm [shape: f32[256,1024], index: 6, kind: input, shape index: {}]
  %s7 = inlined_call_operand.vmem [shape: f32[1,1024], index: 7, kind: input, shape index: {}]
  %s8 = inlined_call_operand.hbm [shape: f32[1024,256], index: 8, kind: input, shape index: {}]
  %s9 = inlined_call_operand.vmem [shape: f32[1,256], index: 9, kind: input, shape index: {}]
  %s10 = inlined_call_operand.hbm [shape: f32[384,256], index: 10, kind: output, shape index: {}]
  %s11 = sld [smem:[#allocation0]]
  $region81: #{ffn_forward.1} parent=0
    _
  %s13 = ssub.s32 1, %s11
  %s14 = scalar_select 0, %s13, %s11
  $region1: #{ffn_forward.1} parent=0
    #allocation2 [shape = 'u8[1048576]{0}', space=vmem, size = 0x100000, scoped, tag = 'input window, operand 6, single buffered']
    #allocation3 [shape = 's32[2]{0}', space=sflag, size = 0x8, scoped, tag = 'scoped memory for ffn_forward.1']
    #allocation4 [shape = 's32[2]{0}', space=sflag, size = 0x8, scoped, tag = 'scoped memory for ffn_forward.1']
    #allocation5 [shape = 'u8[1048576]{0}', space=vmem, size = 0x100000, scoped, tag = 'input window, operand 8, single buffered']
    #allocation6 [shape = 's32[1]{0}', space=sflag, size = 0x4, scoped, tag = 'scoped memory for ffn_forward.1']
    #allocation7 [shape = 'u8[393216]{0}', space=vmem, size = 0x60000, scoped, tag = 'output window, operand 0']
    %15 = vsyncpa [#allocation3], 0
    %16 = vsyncpa [#allocation6], 0
    %17 = vsyncpa [#allocation4], 0
    %s18 = scalar_lea.sflag [#allocation4], 1
    %19 = vsyncpa %s18, 0
    loop: start=0, step=1, limit=4
    $region2: #{ffn_forward.1} parent=1 // loop_pre_header
      _
    $region3: #{ffn_forward.1} parent=1 // loop_header
      %s21 = sphi 0, %s25
      %p22 = scmp.ge.s32.totalorder %s21, 4
      %s31 = sphi 0, %s33
      %s34 = sphi 0, %s31
      %s35 = sphi 0, %s34
      %s51 = sphi 0, %s35
      %s57 = sphi 0, %s59
      %s60 = sphi 0, %s57
      %s61 = sphi 0, %s60
      %s77 = sphi 0, %s61
      %s81 = sphi 0, %s81
      %s83 = sphi 0, %s81
      %s84 = sphi 0, %s83
      %s98 = sphi 0, %s84
      %s102 = sphi 0, %s102
      %s104 = sphi 0, %s102
      %s105 = sphi 0, %s104
      %s119 = sphi 0, %s105
      %s123 = sphi 0, %s123
      %s125 = sphi 0, %s123
      %s126 = sphi 0, %s125
      %s140 = sphi 0, %s126
      %s144 = sphi 0, %s144
      %s146 = sphi 0, %s144
      %s147 = sphi 0, %s146
      %s161 = sphi 0, %s147
      %s165 = sphi 0, %s165
      %s167 = sphi 0, %s165
      %s168 = sphi 0, %s167
      %s182 = sphi 0, %s168
      %s186 = sphi 0, %s186
      %s188 = sphi 0, %s186
      %s189 = sphi 0, %s188
      %s203 = sphi 0, %s189
      %s207 = sphi 0, %s207
      %s209 = sphi 0, %s207
      %s210 = sphi 0, %s209
      %s224 = sphi 0, %s210
      %s228 = sphi 0, %s228
      %s230 = sphi 0, %s228
      %s231 = sphi 0, %s230
      %s245 = sphi 0, %s231
      %s251 = sphi 0, %s253
      %s254 = sphi 0, %s251
      %s255 = sphi 0, %s254
      %s271 = sphi 0, %s255
    $region4: #{ffn_forward.1} parent=1 // loop_header_branch
      %24 = sbr.rel (%p22) target = $region8
    $region5: #{ffn_forward.1} parent=1 // loop_body
      %s26 = ssub.s32 %s21, 1
      %s27 = ssub.s32 %s21, 2
      %s28 = sadd.s32 %s21, 1
      %s29 = ssub.s32 %s21, %s28
      %p30 = scmp.eq.s32.totalorder %s29, 0
      %s32 = sadd.s32 %s31, 1
      %s33 = scalar_select %p30, %s31, %s32
      %p36 = pneg %p30
      %p37 = scmp.eq.s32.totalorder %s21, 1
      %p38 = por %p36, %p37
      %p39 = scmp.ne.s32.totalorder %s31, %s34
      %p40 = scmp.eq.s32.totalorder %s21, 0
      %p41 = por %p39, %p40
      %p42 = scmp.ne.s32.totalorder %s31, %s34
      %p43 = scmp.eq.s32.totalorder %s26, 1
      %p44 = por %p42, %p43
      %p45 = scmp.ne.s32.totalorder %s34, %s35
      %p46 = scmp.eq.s32.totalorder %s26, 0
      %p47 = por %p45, %p46
      %p48 = scmp.ne.s32.totalorder %s34, %s35
      %p49 = scmp.eq.s32.totalorder %s27, 1
      %p50 = por %p48, %p49
      %p52 = scmp.ne.s32.totalorder %s35, %s51
      %p53 = scmp.eq.s32.totalorder %s27, 0
      %p54 = por %p52, %p53
      %s55 = ssub.s32 %s21, %s28
      %p56 = scmp.eq.s32.totalorder %s55, 0
      %s58 = sadd.s32 %s57, 1
      %s59 = scalar_select %p56, %s57, %s58
      %p62 = pneg %p56
      %p63 = scmp.eq.s32.totalorder %s21, 1
      %p64 = por %p62, %p63
      %p65 = scmp.ne.s32.totalorder %s57, %s60
      %p66 = scmp.eq.s32.totalorder %s21, 0
      %p67 = por %p65, %p66
      %p68 = scmp.ne.s32.totalorder %s57, %s60
      %p69 = scmp.eq.s32.totalorder %s26, 1
      %p70 = por %p68, %p69
      %p71 = scmp.ne.s32.totalorder %s60, %s61
      %p72 = scmp.eq.s32.totalorder %s26, 0
      %p73 = por %p71, %p72
      %p74 = scmp.ne.s32.totalorder %s60, %s61
      %p75 = scmp.eq.s32.totalorder %s27, 1
      %p76 = por %p74, %p75
      %p78 = scmp.ne.s32.totalorder %s61, %s77
      %p79 = scmp.eq.s32.totalorder %s27, 0
      %p80 = por %p78, %p79
      %s82 = sadd.s32 %s81, 1
      %p85 = scmp.eq.s32.totalorder %s21, 1
      %p86 = scmp.ne.s32.totalorder %s81, %s83
      %p87 = scmp.eq.s32.totalorder %s21, 0
      %p88 = por %p86, %p87
      %p89 = scmp.ne.s32.totalorder %s81, %s83
      %p90 = scmp.eq.s32.totalorder %s26, 1
      %p91 = por %p89, %p90
      %p92 = scmp.ne.s32.totalorder %s83, %s84
      %p93 = scmp.eq.s32.totalorder %s26, 0
      %p94 = por %p92, %p93
      %p95 = scmp.ne.s32.totalorder %s83, %s84
      %p96 = scmp.eq.s32.totalorder %s27, 1
      %p97 = por %p95, %p96
      %p99 = scmp.ne.s32.totalorder %s84, %s98
      %p100 = scmp.eq.s32.totalorder %s27, 0
      %p101 = por %p99, %p100
      %s103 = sadd.s32 %s102, 1
      %p106 = scmp.eq.s32.totalorder %s21, 1
      %p107 = scmp.ne.s32.totalorder %s102, %s104
      %p108 = scmp.eq.s32.totalorder %s21, 0
      %p109 = por %p107, %p108
      %p110 = scmp.ne.s32.totalorder %s102, %s104
      %p111 = scmp.eq.s32.totalorder %s26, 1
      %p112 = por %p110, %p111
      %p113 = scmp.ne.s32.totalorder %s104, %s105
      %p114 = scmp.eq.s32.totalorder %s26, 0
      %p115 = por %p113, %p114
      %p116 = scmp.ne.s32.totalorder %s104, %s105
      %p117 = scmp.eq.s32.totalorder %s27, 1
      %p118 = por %p116, %p117
      %p120 = scmp.ne.s32.totalorder %s105, %s119
      %p121 = scmp.eq.s32.totalorder %s27, 0
      %p122 = por %p120, %p121
      %s124 = sadd.s32 %s123, 1
      %p127 = scmp.eq.s32.totalorder %s21, 1
      %p128 = scmp.ne.s32.totalorder %s123, %s125
      %p129 = scmp.eq.s32.totalorder %s21, 0
      %p130 = por %p128, %p129
      %p131 = scmp.ne.s32.totalorder %s123, %s125
      %p132 = scmp.eq.s32.totalorder %s26, 1
      %p133 = por %p131, %p132
      %p134 = scmp.ne.s32.totalorder %s125, %s126
      %p135 = scmp.eq.s32.totalorder %s26, 0
      %p136 = por %p134, %p135
      %p137 = scmp.ne.s32.totalorder %s125, %s126
      %p138 = scmp.eq.s32.totalorder %s27, 1
      %p139 = por %p137, %p138
      %p141 = scmp.ne.s32.totalorder %s126, %s140
      %p142 = scmp.eq.s32.totalorder %s27, 0
      %p143 = por %p141, %p142
      %s145 = sadd.s32 %s144, 1
      %p148 = scmp.eq.s32.totalorder %s21, 1
      %p149 = scmp.ne.s32.totalorder %s144, %s146
      %p150 = scmp.eq.s32.totalorder %s21, 0
      %p151 = por %p149, %p150
      %p152 = scmp.ne.s32.totalorder %s144, %s146
      %p153 = scmp.eq.s32.totalorder %s26, 1
      %p154 = por %p152, %p153
      %p155 = scmp.ne.s32.totalorder %s146, %s147
      %p156 = scmp.eq.s32.totalorder %s26, 0
      %p157 = por %p155, %p156
      %p158 = scmp.ne.s32.totalorder %s146, %s147
      %p159 = scmp.eq.s32.totalorder %s27, 1
      %p160 = por %p158, %p159
      %p162 = scmp.ne.s32.totalorder %s147, %s161
      %p163 = scmp.eq.s32.totalorder %s27, 0
      %p164 = por %p162, %p163
      %s166 = sadd.s32 %s165, 1
      %p169 = scmp.eq.s32.totalorder %s21, 1
      %p170 = scmp.ne.s32.totalorder %s165, %s167
      %p171 = scmp.eq.s32.totalorder %s21, 0
      %p172 = por %p170, %p171
      %p173 = scmp.ne.s32.totalorder %s165, %s167
      %p174 = scmp.eq.s32.totalorder %s26, 1
      %p175 = por %p173, %p174
      %p176 = scmp.ne.s32.totalorder %s167, %s168
      %p177 = scmp.eq.s32.totalorder %s26, 0
      %p178 = por %p176, %p177
      %p179 = scmp.ne.s32.totalorder %s167, %s168
      %p180 = scmp.eq.s32.totalorder %s27, 1
      %p181 = por %p179, %p180
      %p183 = scmp.ne.s32.totalorder %s168, %s182
      %p184 = scmp.eq.s32.totalorder %s27, 0
      %p185 = por %p183, %p184
      %s187 = sadd.s32 %s186, 1
      %p190 = scmp.eq.s32.totalorder %s21, 1
      %p191 = scmp.ne.s32.totalorder %s186, %s188
      %p192 = scmp.eq.s32.totalorder %s21, 0
      %p193 = por %p191, %p192
      %p194 = scmp.ne.s32.totalorder %s186, %s188
      %p195 = scmp.eq.s32.totalorder %s26, 1
      %p196 = por %p194, %p195
      %p197 = scmp.ne.s32.totalorder %s188, %s189
      %p198 = scmp.eq.s32.totalorder %s26, 0
      %p199 = por %p197, %p198
      %p200 = scmp.ne.s32.totalorder %s188, %s189
      %p201 = scmp.eq.s32.totalorder %s27, 1
      %p202 = por %p200, %p201
      %p204 = scmp.ne.s32.totalorder %s189, %s203
      %p205 = scmp.eq.s32.totalorder %s27, 0
      %p206 = por %p204, %p205
      %s208 = sadd.s32 %s207, 1
      %p211 = scmp.eq.s32.totalorder %s21, 1
      %p212 = scmp.ne.s32.totalorder %s207, %s209
      %p213 = scmp.eq.s32.totalorder %s21, 0
      %p214 = por %p212, %p213
      %p215 = scmp.ne.s32.totalorder %s207, %s209
      %p216 = scmp.eq.s32.totalorder %s26, 1
      %p217 = por %p215, %p216
      %p218 = scmp.ne.s32.totalorder %s209, %s210
      %p219 = scmp.eq.s32.totalorder %s26, 0
      %p220 = por %p218, %p219
      %p221 = scmp.ne.s32.totalorder %s209, %s210
      %p222 = scmp.eq.s32.totalorder %s27, 1
      %p223 = por %p221, %p222
      %p225 = scmp.ne.s32.totalorder %s210, %s224
      %p226 = scmp.eq.s32.totalorder %s27, 0
      %p227 = por %p225, %p226
      %s229 = sadd.s32 %s228, 1
      %p232 = scmp.eq.s32.totalorder %s21, 1
      %p233 = scmp.ne.s32.totalorder %s228, %s230
      %p234 = scmp.eq.s32.totalorder %s21, 0
      %p235 = por %p233, %p234
      %p236 = scmp.ne.s32.totalorder %s228, %s230
      %p237 = scmp.eq.s32.totalorder %s26, 1
      %p238 = por %p236, %p237
      %p239 = scmp.ne.s32.totalorder %s230, %s231
      %p240 = scmp.eq.s32.totalorder %s26, 0
      %p241 = por %p239, %p240
      %p242 = scmp.ne.s32.totalorder %s230, %s231
      %p243 = scmp.eq.s32.totalorder %s27, 1
      %p244 = por %p242, %p243
      %p246 = scmp.ne.s32.totalorder %s231, %s245
      %p247 = scmp.eq.s32.totalorder %s27, 0
      %p248 = por %p246, %p247
      %s249 = ssub.s32 %s21, %s28
      %p250 = scmp.eq.s32.totalorder %s249, 0
      %s252 = sadd.s32 %s251, 1
      %s253 = scalar_select %p250, %s251, %s252
      %p256 = pneg %p250
      %p257 = scmp.eq.s32.totalorder %s21, 1
      %p258 = por %p256, %p257
      %p259 = scmp.ne.s32.totalorder %s251, %s254
      %p260 = scmp.eq.s32.totalorder %s21, 0
      %p261 = por %p259, %p260
      %p262 = scmp.ne.s32.totalorder %s251, %s254
      %p263 = scmp.eq.s32.totalorder %s26, 1
      %p264 = por %p262, %p263
      %p265 = scmp.ne.s32.totalorder %s254, %s255
      %p266 = scmp.eq.s32.totalorder %s26, 0
      %p267 = por %p265, %p266
      %p268 = scmp.ne.s32.totalorder %s254, %s255
      %p269 = scmp.eq.s32.totalorder %s27, 1
      %p270 = por %p268, %p269
      %p272 = scmp.ne.s32.totalorder %s255, %s271
      %p273 = scmp.eq.s32.totalorder %s27, 0
      %p274 = por %p272, %p273
      %p275 = scmp.le.s32.totalorder 1, %s21
      %p276 = scmp.lt.s32.totalorder %s21, 3
      %p277 = pnand %p275, %p276
      %p278 = pneg %p277
      // Predicated region
      $region9: #{ffn_forward.1} parent=5 // pred_check
        _
      $region10: #{ffn_forward.1} parent=5 // pred_check_branch
        %280 = sbr.rel (%p277) target = $region12
      $region11: #{ffn_forward.1} parent=5 // pred_region
        %s281 = ssub.s32 %s21, 1
        // Predicated region
        $region13: #{ffn_forward.1} parent=11 // pred_check
          %p282 = pneg %p94
        $region14: #{ffn_forward.1} parent=11 // pred_check_branch
          %284 = sbr.rel (%p282) target = $region16
        $region15: #{ffn_forward.1} parent=11 // pred_region
          _
        $region16: #{ffn_forward.1} parent=11 // pred_fallthru
          _
        // Predicated region
        $region17: #{ffn_forward.1} parent=11 // pred_check
          %p285 = pneg %p115
        $region18: #{ffn_forward.1} parent=11 // pred_check_branch
          %287 = sbr.rel (%p285) target = $region20
        $region19: #{ffn_forward.1} parent=11 // pred_region
          _
        $region20: #{ffn_forward.1} parent=11 // pred_fallthru
          _
        // Predicated region
        $region21: #{ffn_forward.1} parent=11 // pred_check
          %p288 = pneg %p136
        $region22: #{ffn_forward.1} parent=11 // pred_check_branch
          %290 = sbr.rel (%p288) target = $region24
        $region23: #{ffn_forward.1} parent=11 // pred_region
          _
        $region24: #{ffn_forward.1} parent=11 // pred_fallthru
          _
        // Predicated region
        $region25: #{ffn_forward.1} parent=11 // pred_check
          %p291 = pneg %p157
        $region26: #{ffn_forward.1} parent=11 // pred_check_branch
          %293 = sbr.rel (%p291) target = $region28
        $region27: #{ffn_forward.1} parent=11 // pred_region
          _
        $region28: #{ffn_forward.1} parent=11 // pred_fallthru
          _
        // Predicated region
        $region29: #{ffn_forward.1} parent=11 // pred_check
          %p294 = pneg %p178
        $region30: #{ffn_forward.1} parent=11 // pred_check_branch
          %296 = sbr.rel (%p294) target = $region32
        $region31: #{ffn_forward.1} parent=11 // pred_region
          %s298 = ssub.s32 32768, 32768
          %299 = vsyncadd [#allocation3], %s298
          %s300 = sshll.u32 [#allocation2], 4
          %s301 = int_to_ptr.vmem [resolvable:$true] %s300
          %306 = dma.hbm_to_vmem [thread:$0]  %s6, 32768, %s301, [#allocation3], 1024, 1024, 64
        $region32: #{ffn_forward.1} parent=11 // pred_fallthru
          _
        // Predicated region
        $region33: #{ffn_forward.1} parent=11 // pred_check
          %p307 = pneg %p199
        $region34: #{ffn_forward.1} parent=11 // pred_check_branch
          %309 = sbr.rel (%p307) target = $region36
        $region35: #{ffn_forward.1} parent=11 // pred_region
          _
        $region36: #{ffn_forward.1} parent=11 // pred_fallthru
          _
        // Predicated region
        $region37: #{ffn_forward.1} parent=11 // pred_check
          %p310 = pneg %p220
        $region38: #{ffn_forward.1} parent=11 // pred_check_branch
          %312 = sbr.rel (%p310) target = $region40
        $region39: #{ffn_forward.1} parent=11 // pred_region
          %s314 = ssub.s32 32768, 32768
          %315 = vsyncadd [#allocation6], %s314
          %s316 = sshll.u32 [#allocation5], 4
          %s317 = int_to_ptr.vmem [resolvable:$true] %s316
          %322 = dma.hbm_to_vmem [thread:$0]  %s8, 32768, %s317, [#allocation6], 256, 256, 16
        $region40: #{ffn_forward.1} parent=11 // pred_fallthru
          _
        // Predicated region
        $region41: #{ffn_forward.1} parent=11 // pred_check
          %p323 = pneg %p241
        $region42: #{ffn_forward.1} parent=11 // pred_check_branch
          %325 = sbr.rel (%p323) target = $region44
        $region43: #{ffn_forward.1} parent=11 // pred_region
          _
        $region44: #{ffn_forward.1} parent=11 // pred_fallthru
          _
      $region12: #{ffn_forward.1} parent=5 // pred_fallthru
        _
      %p326 = scmp.lt.s32.totalorder %s21, 2
      // Predicated region
      $region45: #{ffn_forward.1} parent=5 // pred_check
        %p327 = pneg %p326
      $region46: #{ffn_forward.1} parent=5 // pred_check_branch
        %329 = sbr.rel (%p327) target = $region48
      $region47: #{ffn_forward.1} parent=5 // pred_region
        // Predicated region
        $region49: #{ffn_forward.1} parent=47 // pred_check
          %p330 = pneg %p41
        $region50: #{ffn_forward.1} parent=47 // pred_check_branch
          %332 = sbr.rel (%p330) target = $region52
        $region51: #{ffn_forward.1} parent=47 // pred_region
          %s333 = smul.u32 24, %s21
          %p334 = scmp.lt.s32.totalorder %s333, 47
          %s335 = scalar_select %p334, %s333, 47
          %s336 = smul.addr %s335, 2
          %s337 = smul.addr %s336, 8
          %s338 = scalar_lea.vmem %s0, %s337
          %s339 = smul.u32 24, %s21
        $region52: #{ffn_forward.1} parent=47 // pred_fallthru
          _
        // Predicated region
        $region53: #{ffn_forward.1} parent=47 // pred_check
          %p340 = pneg %p67
        $region54: #{ffn_forward.1} parent=47 // pred_check_branch
          %342 = sbr.rel (%p340) target = $region56
        $region55: #{ffn_forward.1} parent=47 // pred_region
          %s343 = smul.u32 24, %s21
          %p344 = scmp.lt.s32.totalorder %s343, 47
          %s345 = scalar_select %p344, %s343, 47
          %s346 = smul.addr %s345, 2
          %s347 = smul.addr %s346, 8
          %s348 = scalar_lea.vmem %s1, %s347
          %s349 = smul.u32 24, %s21
        $region56: #{ffn_forward.1} parent=47 // pred_fallthru
          _
      $region48: #{ffn_forward.1} parent=5 // pred_fallthru
        _
      %p350 = scmp.le.s32.totalorder 1, %s21
      %p351 = scmp.lt.s32.totalorder %s21, 3
      %p352 = pnand %p350, %p351
      %p353 = pneg %p352
      // Predicated region
      $region57: #{ffn_forward.1} parent=5 // pred_check
        _
      $region58: #{ffn_forward.1} parent=5 // pred_check_branch
        %355 = sbr.rel (%p352) target = $region60
      $region59: #{ffn_forward.1} parent=5 // pred_region
        %s356 = ssub.s32 %s21, 1
        // Predicated region
        $region61: #{ffn_forward.1} parent=59 // pred_check
          %p357 = pneg %p178
        $region62: #{ffn_forward.1} parent=59 // pred_check_branch
          %359 = sbr.rel (%p357) target = $region64
        $region63: #{ffn_forward.1} parent=59 // pred_region
          %360 = dma.done [#allocation3], 32768
        $region64: #{ffn_forward.1} parent=59 // pred_fallthru
          _
        // Predicated region
        $region65: #{ffn_forward.1} parent=59 // pred_check
          %p361 = pneg %p220
        $region66: #{ffn_forward.1} parent=59 // pred_check_branch
          %363 = sbr.rel (%p361) target = $region68
        $region67: #{ffn_forward.1} parent=59 // pred_region
          %364 = dma.done [#allocation6], 32768
        $region68: #{ffn_forward.1} parent=59 // pred_fallthru
          _
        %s365 = smul.u32 24, %s26
        %p366 = scmp.lt.s32.totalorder %s365, 47
        %s367 = scalar_select %p366, %s365, 47
        %s368 = smul.addr %s367, 2
        %s369 = smul.addr %s368, 8
        %s370 = scalar_lea.vmem %s0, %s369
        %p371 = pneg %p47
        %p372 = pneg %p44
        %s373 = smul.u32 24, %s26
        %p374 = scmp.lt.s32.totalorder %s373, 47
        %s375 = scalar_select %p374, %s373, 47
        %s376 = smul.addr %s375, 2
        %s377 = smul.addr %s376, 8
        %s378 = scalar_lea.vmem %s1, %s377
        %p379 = pneg %p73
        %p380 = pneg %p70
        %p381 = pneg %p94
        %p382 = pneg %p91
        %p383 = pneg %p115
        %p384 = pneg %p112
        %p385 = pneg %p136
        %p386 = pneg %p133
        %p387 = pneg %p157
        %p388 = pneg %p154
        %p389 = pneg %p178
        %p390 = pneg %p175
        %p391 = pneg %p199
        %p392 = pneg %p196
        %p393 = pneg %p220
        %p394 = pneg %p217
        %p395 = pneg %p241
        %p396 = pneg %p238
        %p397 = pneg %p267
        %p398 = pneg %p264
        %s399 = sand.u32 %s254, 1
        %s400 = scalar_lea.sflag [#allocation4], %s399
        %s401 = sand.u32 %s254, 1
        %s402 = smul.addr %s401, 384
        %s403 = scalar_lea.vmem [#allocation7], %s402
        %s404 = smul.u32 24, %s26
        %p405 = scmp.lt.s32.totalorder %s404, 47
        %s406 = scalar_select %p405, %s404, 47
        %s407 = smul.addr %s406, 2
        %s408 = smul.addr %s407, 8
        %s409 = scalar_lea.vmem %s0, %s408
        %s410 = smul.u32 24, %s26
        %s411 = smul.u32 24, %s26
        %p412 = scmp.lt.s32.totalorder %s411, 47
        %s413 = scalar_select %p412, %s411, 47
        %s414 = smul.addr %s413, 2
        %s415 = smul.addr %s414, 8
        %s416 = scalar_lea.vmem %s1, %s415
        %s417 = smul.u32 24, %s26
        %s418 = smul.u32 24, %s26
        %v419 = vld [vmem:[%s409] sm:$0xff]
        %v420 = vld [vmem:[%s409 + $0x8] sm:$0xff]
        %v421 = vld [vmem:[%s409 + $0x10] sm:$0xff]
        %v422 = vld [vmem:[%s409 + $0x18] sm:$0xff]
        %v423 = vld [vmem:[%s409 + $0x20] sm:$0xff]
        %v424 = vld [vmem:[%s409 + $0x28] sm:$0xff]
        %v425 = vld [vmem:[%s409 + $0x30] sm:$0xff]
        %v426 = vld [vmem:[%s409 + $0x38] sm:$0xff]
        %v427 = vld [vmem:[%s409 + $0x40] sm:$0xff]
        %v428 = vld [vmem:[%s409 + $0x48] sm:$0xff]
        %v429 = vld [vmem:[%s409 + $0x50] sm:$0xff]
        %v430 = vld [vmem:[%s409 + $0x58] sm:$0xff]
        %v431 = vld [vmem:[%s409 + $0x60] sm:$0xff]
        %v432 = vld [vmem:[%s409 + $0x68] sm:$0xff]
        %v433 = vld [vmem:[%s409 + $0x70] sm:$0xff]
        %v434 = vld [vmem:[%s409 + $0x78] sm:$0xff]
        %v435 = vld [vmem:[%s409 + $0x80] sm:$0xff]
        %v436 = vld [vmem:[%s409 + $0x88] sm:$0xff]
        %v437 = vld [vmem:[%s409 + $0x90] sm:$0xff]
        %v438 = vld [vmem:[%s409 + $0x98] sm:$0xff]
        %v439 = vld [vmem:[%s409 + $0xa0] sm:$0xff]
        %v440 = vld [vmem:[%s409 + $0xa8] sm:$0xff]
        %v441 = vld [vmem:[%s409 + $0xb0] sm:$0xff]
        %v442 = vld [vmem:[%s409 + $0xb8] sm:$0xff]
        %v443 = vld [vmem:[%s416] sm:$0xff]
        %v444 = vld [vmem:[%s416 + $0x8] sm:$0xff]
        %v445 = vld [vmem:[%s416 + $0x10] sm:$0xff]
        %v446 = vld [vmem:[%s416 + $0x18] sm:$0xff]
        %v447 = vld [vmem:[%s416 + $0x20] sm:$0xff]
        %v448 = vld [vmem:[%s416 + $0x28] sm:$0xff]
        %v449 = vld [vmem:[%s416 + $0x30] sm:$0xff]
        %v450 = vld [vmem:[%s416 + $0x38] sm:$0xff]
        %v451 = vld [vmem:[%s416 + $0x40] sm:$0xff]
        %v452 = vld [vmem:[%s416 + $0x48] sm:$0xff]
        %v453 = vld [vmem:[%s416 + $0x50] sm:$0xff]
        %v454 = vld [vmem:[%s416 + $0x58] sm:$0xff]
        %v455 = vld [vmem:[%s416 + $0x60] sm:$0xff]
        %v456 = vld [vmem:[%s416 + $0x68] sm:$0xff]
        %v457 = vld [vmem:[%s416 + $0x70] sm:$0xff]
        %v458 = vld [vmem:[%s416 + $0x78] sm:$0xff]
        %v459 = vld [vmem:[%s416 + $0x80] sm:$0xff]
        %v460 = vld [vmem:[%s416 + $0x88] sm:$0xff]
        %v461 = vld [vmem:[%s416 + $0x90] sm:$0xff]
        %v462 = vld [vmem:[%s416 + $0x98] sm:$0xff]
        %v463 = vld [vmem:[%s416 + $0xa0] sm:$0xff]
        %v464 = vld [vmem:[%s416 + $0xa8] sm:$0xff]
        %v465 = vld [vmem:[%s416 + $0xb0] sm:$0xff]
        %v466 = vld [vmem:[%s416 + $0xb8] sm:$0xff]
        %v467 = vld [vmem:[%s2] sm:$0xff]
        %v468 = vld [vmem:[%s2 + $0x8] sm:$0xff]
        %v469 = vld [vmem:[%s2 + $0x10] sm:$0xff]
        %v470 = vld [vmem:[%s2 + $0x18] sm:$0xff]
        %v471 = vld [vmem:[%s2 + $0x20] sm:$0xff]
        %v472 = vld [vmem:[%s2 + $0x28] sm:$0xff]
        %v473 = vld [vmem:[%s2 + $0x30] sm:$0xff]
        %v474 = vld [vmem:[%s2 + $0x38] sm:$0xff]
        %v475 = vld [vmem:[%s2 + $0x40] sm:$0xff]
        %v476 = vld [vmem:[%s2 + $0x48] sm:$0xff]
        %v477 = vld [vmem:[%s2 + $0x50] sm:$0xff]
        %v478 = vld [vmem:[%s2 + $0x58] sm:$0xff]
        %v479 = vld [vmem:[%s2 + $0x60] sm:$0xff]
        %v480 = vld [vmem:[%s2 + $0x68] sm:$0xff]
        %v481 = vld [vmem:[%s2 + $0x70] sm:$0xff]
        %v482 = vld [vmem:[%s2 + $0x78] sm:$0xff]
        %v483 = vld [vmem:[%s2 + $0x80] sm:$0xff]
        %v484 = vld [vmem:[%s2 + $0x88] sm:$0xff]
        %v485 = vld [vmem:[%s2 + $0x90] sm:$0xff]
        %v486 = vld [vmem:[%s2 + $0x98] sm:$0xff]
        %v487 = vld [vmem:[%s2 + $0xa0] sm:$0xff]
        %v488 = vld [vmem:[%s2 + $0xa8] sm:$0xff]
        %v489 = vld [vmem:[%s2 + $0xb0] sm:$0xff]
        %v490 = vld [vmem:[%s2 + $0xb8] sm:$0xff]
        %v491 = vld [vmem:[%s2 + $0xc0] sm:$0xff]
        %v492 = vld [vmem:[%s2 + $0xc8] sm:$0xff]
        %v493 = vld [vmem:[%s2 + $0xd0] sm:$0xff]
        %v494 = vld [vmem:[%s2 + $0xd8] sm:$0xff]
        %v495 = vld [vmem:[%s2 + $0xe0] sm:$0xff]
        %v496 = vld [vmem:[%s2 + $0xe8] sm:$0xff]
        %v497 = vld [vmem:[%s2 + $0xf0] sm:$0xff]
        %v498 = vld [vmem:[%s2 + $0xf8] sm:$0xff]
        %v499 = vld [vmem:[%s2 + $0x100] sm:$0xff]
        %v500 = vld [vmem:[%s2 + $0x108] sm:$0xff]
        %v501 = vld [vmem:[%s2 + $0x110] sm:$0xff]
        %v502 = vld [vmem:[%s2 + $0x118] sm:$0xff]
        %v503 = vld [vmem:[%s2 + $0x120] sm:$0xff]
        %v504 = vld [vmem:[%s2 + $0x128] sm:$0xff]
        %v505 = vld [vmem:[%s2 + $0x130] sm:$0xff]
        %v506 = vld [vmem:[%s2 + $0x138] sm:$0xff]
        %v507 = vld [vmem:[%s2 + $0x140] sm:$0xff]
        %v508 = vld [vmem:[%s2 + $0x148] sm:$0xff]
        %v509 = vld [vmem:[%s2 + $0x150] sm:$0xff]
        %v510 = vld [vmem:[%s2 + $0x158] sm:$0xff]
        %v511 = vld [vmem:[%s2 + $0x160] sm:$0xff]
        %v512 = vld [vmem:[%s2 + $0x168] sm:$0xff]
        %v513 = vld [vmem:[%s2 + $0x170] sm:$0xff]
        %v514 = vld [vmem:[%s2 + $0x178] sm:$0xff]
        %v515 = vld [vmem:[%s2 + $0x180] sm:$0xff]
        %v516 = vld [vmem:[%s2 + $0x188] sm:$0xff]
        %v517 = vld [vmem:[%s2 + $0x190] sm:$0xff]
        %v518 = vld [vmem:[%s2 + $0x198] sm:$0xff]
        %v519 = vld [vmem:[%s2 + $0x1a0] sm:$0xff]
        %v520 = vld [vmem:[%s2 + $0x1a8] sm:$0xff]
        %v521 = vld [vmem:[%s2 + $0x1b0] sm:$0xff]
        %v522 = vld [vmem:[%s2 + $0x1b8] sm:$0xff]
        %v523 = vld [vmem:[%s2 + $0x1c0] sm:$0xff]
        %v524 = vld [vmem:[%s2 + $0x1c8] sm:$0xff]
        %v525 = vld [vmem:[%s2 + $0x1d0] sm:$0xff]
        %v526 = vld [vmem:[%s2 + $0x1d8] sm:$0xff]
        %v527 = vld [vmem:[%s2 + $0x1e0] sm:$0xff]
        %v528 = vld [vmem:[%s2 + $0x1e8] sm:$0xff]
        %v529 = vld [vmem:[%s2 + $0x1f0] sm:$0xff]
        %v530 = vld [vmem:[%s2 + $0x1f8] sm:$0xff]
        %v531 = vld [vmem:[%s3] sm:$0x3]
        %v533 = vlaneseq
        %v534 = vshrl.u32 %v533, 7
        %v535 = vsub.s32 0, %v534
        %v536 = vrot.slane %v531, %v535
        %v537 = vlaneseq
        %v538 = vshrl.u32 %v537, 7
        %v539 = vsub.s32 1, %v538
        %v540 = vrot.slane %v531, %v539
        %543 = vmatprep.subr.mxu0 %v468
        %544 = vmatpush1.msra.mxu0 %v467
        %545 = vmatprep.subr.mxu0 %v470
        %546 = vmatpush1.msra.mxu0 %v469
        %547 = vmatprep.subr.mxu0 %v472
        %548 = vmatpush1.msra.mxu0 %v471
        %549 = vmatprep.subr.mxu0 %v474
        %550 = vmatpush1.msra.mxu0 %v473
        %551 = vmatprep.subr.mxu0 %v476
        %552 = vmatpush1.msra.mxu0 %v475
        %553 = vmatprep.subr.mxu0 %v478
        %554 = vmatpush1.msra.mxu0 %v477
        %555 = vmatprep.subr.mxu0 %v480
        %556 = vmatpush1.msra.mxu0 %v479
        %557 = vmatprep.subr.mxu0 %v482
        %558 = vmatpush1.msra.mxu0 %v481
        %559 = vmatprep.subr.mxu0 %v484
        %560 = vmatpush1.msra.mxu0 %v483
        %561 = vmatprep.subr.mxu0 %v486
        %562 = vmatpush1.msra.mxu0 %v485
        %563 = vmatprep.subr.mxu0 %v488
        %564 = vmatpush1.msra.mxu0 %v487
        %565 = vmatprep.subr.mxu0 %v490
        %566 = vmatpush1.msra.mxu0 %v489
        %567 = vmatprep.subr.mxu0 %v492
        %568 = vmatpush1.msra.mxu0 %v491
        %569 = vmatprep.subr.mxu0 %v494
        %570 = vmatpush1.msra.mxu0 %v493
        %571 = vmatprep.subr.mxu0 %v496
        %572 = vmatpush1.msra.mxu0 %v495
        %573 = vmatprep.subr.mxu0 %v498
        %574 = vmatpush1.msra.mxu0 %v497
        %575 = vmatprep.subr.mxu0 %v500
        %576 = vmatpush1.msra.mxu0 %v499
        %577 = vmatprep.subr.mxu0 %v502
        %578 = vmatpush1.msra.mxu0 %v501
        %579 = vmatprep.subr.mxu0 %v504
        %580 = vmatpush1.msra.mxu0 %v503
        %581 = vmatprep.subr.mxu0 %v506
        %582 = vmatpush1.msra.mxu0 %v505
        %583 = vmatprep.subr.mxu0 %v508
        %584 = vmatpush1.msra.mxu0 %v507
        %585 = vmatprep.subr.mxu0 %v510
        %586 = vmatpush1.msra.mxu0 %v509
        %587 = vmatprep.subr.mxu0 %v512
        %588 = vmatpush1.msra.mxu0 %v511
        %589 = vmatprep.subr.mxu0 %v514
        %590 = vmatpush1.msra.mxu0 %v513
        %591 = vmatprep.subr.mxu0 %v516
        %592 = vmatpush1.msra.mxu0 %v515
        %593 = vmatprep.subr.mxu0 %v518
        %594 = vmatpush1.msra.mxu0 %v517
        %595 = vmatprep.subr.mxu0 %v520
        %596 = vmatpush1.msra.mxu0 %v519
        %597 = vmatprep.subr.mxu0 %v522
        %598 = vmatpush1.msra.mxu0 %v521
        %599 = vmatprep.subr.mxu0 %v524
        %600 = vmatpush1.msra.mxu0 %v523
        %601 = vmatprep.subr.mxu0 %v526
        %602 = vmatpush1.msra.mxu0 %v525
        %603 = vmatprep.subr.mxu0 %v528
        %604 = vmatpush1.msra.mxu0 %v527
        %605 = vmatprep.subr.mxu0 %v530
        %606 = vmatpush1.msra.mxu0 %v529
        %607 = vmatprep.mubr.f32.mxu0 %v420
        %608 = vmatmul.mubr.f32.gmra.mrb[0].mxu0 %v419
        %v609 = vpop.f32.mrb[0].mxu0
        %v610 = vadd.f32 %v536, %v609
        %v611 = vpop.f32.mrb[0].mxu0
        %v612 = vadd.f32 %v540, %v611
        %613 = vmatprep.mubr.f32.mxu0 %v422
        %614 = vmatmul.mubr.f32.gmra.mrb[0].mxu0 %v421
        %v615 = vpop.f32.mrb[0].mxu0
        %v616 = vadd.f32 %v536, %v615
        %v617 = vpop.f32.mrb[0].mxu0
        %v618 = vadd.f32 %v540, %v617
        %619 = vmatprep.mubr.f32.mxu0 %v424
        %620 = vmatmul.mubr.f32.gmra.mrb[0].mxu0 %v423
        %v621 = vpop.f32.mrb[0].mxu0
        %v622 = vadd.f32 %v536, %v621
        %v623 = vpop.f32.mrb[0].mxu0
        %v624 = vadd.f32 %v540, %v623
        %625 = vmatprep.mubr.f32.mxu0 %v426
        %626 = vmatmul.mubr.f32.gmra.mrb[0].mxu0 %v425
        %v627 = vpop.f32.mrb[0].mxu0
        %v628 = vadd.f32 %v536, %v627
        %v629 = vpop.f32.mrb[0].mxu0
        %v630 = vadd.f32 %v540, %v629
        %631 = vmatprep.mubr.f32.mxu0 %v428
        %632 = vmatmul.mubr.f32.gmra.mrb[0].mxu0 %v427
        %v633 = vpop.f32.mrb[0].mxu0
        %v634 = vadd.f32 %v536, %v633
        %v635 = vpop.f32.mrb[0].mxu0
        %v636 = vadd.f32 %v540, %v635
        %637 = vmatprep.mubr.f32.mxu0 %v430
        %638 = vmatmul.mubr.f32.gmra.mrb[0].mxu0 %v429
        %v639 = vpop.f32.mrb[0].mxu0
        %v640 = vadd.f32 %v536, %v639
        %v641 = vpop.f32.mrb[0].mxu0
        %v642 = vadd.f32 %v540, %v641
        %643 = vmatprep.mubr.f32.mxu0 %v432
        %644 = vmatmul.mubr.f32.gmra.mrb[0].mxu0 %v431
        %v645 = vpop.f32.mrb[0].mxu0
        %v646 = vadd.f32 %v536, %v645
        %v647 = vpop.f32.mrb[0].mxu0
        %v648 = vadd.f32 %v540, %v647
        %649 = vmatprep.mubr.f32.mxu0 %v434
        %650 = vmatmul.mubr.f32.gmra.mrb[0].mxu0 %v433
        %v651 = vpop.f32.mrb[0].mxu0
        %v652 = vadd.f32 %v536, %v651
        %v653 = vpop.f32.mrb[0].mxu0
        %v654 = vadd.f32 %v540, %v653
        %655 = vmatprep.mubr.f32.mxu0 %v436
        %656 = vmatmul.mubr.f32.gmra.mrb[0].mxu0 %v435
        %v657 = vpop.f32.mrb[0].mxu0
        %v658 = vadd.f32 %v536, %v657
        %v659 = vpop.f32.mrb[0].mxu0
        %v660 = vadd.f32 %v540, %v659
        %661 = vmatprep.mubr.f32.mxu0 %v438
        %662 = vmatmul.mubr.f32.gmra.mrb[0].mxu0 %v437
        %v663 = vpop.f32.mrb[0].mxu0
        %v664 = vadd.f32 %v536, %v663
        %v665 = vpop.f32.mrb[0].mxu0
        %v666 = vadd.f32 %v540, %v665
        %667 = vmatprep.mubr.f32.mxu0 %v440
        %668 = vmatmul.mubr.f32.gmra.mrb[0].mxu0 %v439
        %v669 = vpop.f32.mrb[0].mxu0
        %v670 = vadd.f32 %v536, %v669
        %v671 = vpop.f32.mrb[0].mxu0
        %v672 = vadd.f32 %v540, %v671
        %673 = vmatprep.mubr.f32.mxu0 %v442
        %674 = vmatmul.mubr.f32.gmra.mrb[0].mxu0 %v441
        %v675 = vpop.f32.mrb[0].mxu0
        %v676 = vadd.f32 %v536, %v675
        %v677 = vpop.f32.mrb[0].mxu0
        %v678 = vadd.f32 %v540, %v677
        %679 = vdwg.mxu0
        %v680 = vadd.f32 %v610, %v443
        %v681 = vadd.f32 %v612, %v444
        %v682 = vadd.f32 %v616, %v445
        %v683 = vadd.f32 %v618, %v446
        %v684 = vadd.f32 %v622, %v447
        %v685 = vadd.f32 %v624, %v448
        %v686 = vadd.f32 %v628, %v449
        %v687 = vadd.f32 %v630, %v450
        %v688 = vadd.f32 %v634, %v451
        %v689 = vadd.f32 %v636, %v452
        %v690 = vadd.f32 %v640, %v453
        %v691 = vadd.f32 %v642, %v454
        %v692 = vadd.f32 %v646, %v455
        %v693 = vadd.f32 %v648, %v456
        %v694 = vadd.f32 %v652, %v457
        %v695 = vadd.f32 %v654, %v458
        %v696 = vadd.f32 %v658, %v459
        %v697 = vadd.f32 %v660, %v460
        %v698 = vadd.f32 %v664, %v461
        %v699 = vadd.f32 %v666, %v462
        %v700 = vadd.f32 %v670, %v463
        %v701 = vadd.f32 %v672, %v464
        %v702 = vadd.f32 %v676, %v465
        %v703 = vadd.f32 %v678, %v466
        %v704 = vadd.f32 %v680, %v681
        %705 = vadd.xlane.f32.xlu0 %v704
        %v706 = vpop.xlane.xlu0 %705
        %v707 = vadd.f32 %v682, %v683
        %708 = vadd.xlane.f32.xlu0 %v707
        %v709 = vpop.xlane.xlu0 %708
        %v710 = vadd.f32 %v684, %v685
        %711 = vadd.xlane.f32.xlu0 %v710
        %v712 = vpop.xlane.xlu0 %711
        %v713 = vadd.f32 %v686, %v687
        %714 = vadd.xlane.f32.xlu0 %v713
        %v715 = vpop.xlane.xlu0 %714
        %v716 = vadd.f32 %v688, %v689
        %717 = vadd.xlane.f32.xlu0 %v716
        %v718 = vpop.xlane.xlu0 %717
        %v719 = vadd.f32 %v690, %v691
        %720 = vadd.xlane.f32.xlu0 %v719
        %v721 = vpop.xlane.xlu0 %720
        %v722 = vadd.f32 %v692, %v693
        %723 = vadd.xlane.f32.xlu0 %v722
        %v724 = vpop.xlane.xlu0 %723
        %v725 = vadd.f32 %v694, %v695
        %726 = vadd.xlane.f32.xlu0 %v725
        %v727 = vpop.xlane.xlu0 %726
        %v728 = vadd.f32 %v696, %v697
        %729 = vadd.xlane.f32.xlu0 %v728
        %v730 = vpop.xlane.xlu0 %729
        %v731 = vadd.f32 %v698, %v699
        %732 = vadd.xlane.f32.xlu0 %v731
        %v733 = vpop.xlane.xlu0 %732
        %v734 = vadd.f32 %v700, %v701
        %735 = vadd.xlane.f32.xlu0 %v734
        %v736 = vpop.xlane.xlu0 %735
        %v737 = vadd.f32 %v702, %v703
        %738 = vadd.xlane.f32.xlu0 %v737
        %v739 = vpop.xlane.xlu0 %738
        %v740 = vmul.f32 %v680, %v680
        %v741 = vmul.f32 %v681, %v681
        %v742 = vmul.f32 %v682, %v682
        %v743 = vmul.f32 %v683, %v683
        %v744 = vmul.f32 %v684, %v684
        %v745 = vmul.f32 %v685, %v685
        %v746 = vmul.f32 %v686, %v686
        %v747 = vmul.f32 %v687, %v687
        %v748 = vmul.f32 %v688, %v688
        %v749 = vmul.f32 %v689, %v689
        %v750 = vmul.f32 %v690, %v690
        %v751 = vmul.f32 %v691, %v691
        %v752 = vmul.f32 %v692, %v692
        %v753 = vmul.f32 %v693, %v693
        %v754 = vmul.f32 %v694, %v694
        %v755 = vmul.f32 %v695, %v695
        %v756 = vmul.f32 %v696, %v696
        %v757 = vmul.f32 %v697, %v697
        %v758 = vmul.f32 %v698, %v698
        %v759 = vmul.f32 %v699, %v699
        %v760 = vmul.f32 %v700, %v700
        %v761 = vmul.f32 %v701, %v701
        %v762 = vmul.f32 %v702, %v702
        %v763 = vmul.f32 %v703, %v703
        %v764 = vadd.f32 %v740, %v741
        %765 = vadd.xlane.f32.xlu0 %v764
        %v766 = vpop.xlane.xlu0 %765
        %v767 = vadd.f32 %v742, %v743
        %768 = vadd.xlane.f32.xlu0 %v767
        %v769 = vpop.xlane.xlu0 %768
        %v770 = vadd.f32 %v744, %v745
        %771 = vadd.xlane.f32.xlu0 %v770
        %v772 = vpop.xlane.xlu0 %771
        %v773 = vadd.f32 %v746, %v747
        %774 = vadd.xlane.f32.xlu0 %v773
        %v775 = vpop.xlane.xlu0 %774
        %v776 = vadd.f32 %v748, %v749
        %777 = vadd.xlane.f32.xlu0 %v776
        %v778 = vpop.xlane.xlu0 %777
        %v779 = vadd.f32 %v750, %v751
        %780 = vadd.xlane.f32.xlu0 %v779
        %v781 = vpop.xlane.xlu0 %780
        %v782 = vadd.f32 %v752, %v753
        %783 = vadd.xlane.f32.xlu0 %v782
        %v784 = vpop.xlane.xlu0 %783
        %v785 = vadd.f32 %v754, %v755
        %786 = vadd.xlane.f32.xlu0 %v785
        %v787 = vpop.xlane.xlu0 %786
        %v788 = vadd.f32 %v756, %v757
        %789 = vadd.xlane.f32.xlu0 %v788
        %v790 = vpop.xlane.xlu0 %789
        %v791 = vadd.f32 %v758, %v759
        %792 = vadd.xlane.f32.xlu0 %v791
        %v793 = vpop.xlane.xlu0 %792
        %v794 = vadd.f32 %v760, %v761
        %795 = vadd.xlane.f32.xlu0 %v794
        %v796 = vpop.xlane.xlu0 %795
        %v797 = vadd.f32 %v762, %v763
        %798 = vadd.xlane.f32.xlu0 %v797
        %v799 = vpop.xlane.xlu0 %798
        %v800 = vmul.f32 %v706, 0.00390625
        %v801 = vmul.f32 %v709, 0.00390625
        %v802 = vmul.f32 %v712, 0.00390625
        %v803 = vmul.f32 %v715, 0.00390625
        %v804 = vmul.f32 %v718, 0.00390625
        %v805 = vmul.f32 %v721, 0.00390625
        %v806 = vmul.f32 %v724, 0.00390625
        %v807 = vmul.f32 %v727, 0.00390625
        %v808 = vmul.f32 %v730, 0.00390625
        %v809 = vmul.f32 %v733, 0.00390625
        %v810 = vmul.f32 %v736, 0.00390625
        %v811 = vmul.f32 %v739, 0.00390625
        %v812 = vmul.f32 %v766, 0.00390625
        %v813 = vmul.f32 %v769, 0.00390625
        %v814 = vmul.f32 %v772, 0.00390625
        %v815 = vmul.f32 %v775, 0.00390625
        %v816 = vmul.f32 %v778, 0.00390625
        %v817 = vmul.f32 %v781, 0.00390625
        %v818 = vmul.f32 %v784, 0.00390625
        %v819 = vmul.f32 %v787, 0.00390625
        %v820 = vmul.f32 %v790, 0.00390625
        %v821 = vmul.f32 %v793, 0.00390625
        %v822 = vmul.f32 %v796, 0.00390625
        %v823 = vmul.f32 %v799, 0.00390625
        %v824 = vmul.f32 %v800, %v800
        %v825 = vmul.f32 %v801, %v801
        %v826 = vmul.f32 %v802, %v802
        %v827 = vmul.f32 %v803, %v803
        %v828 = vmul.f32 %v804, %v804
        %v829 = vmul.f32 %v805, %v805
        %v830 = vmul.f32 %v806, %v806
        %v831 = vmul.f32 %v807, %v807
        %v832 = vmul.f32 %v808, %v808
        %v833 = vmul.f32 %v809, %v809
        %v834 = vmul.f32 %v810, %v810
        %v835 = vmul.f32 %v811, %v811
        %v836 = vsub.f32 %v812, %v824
        %v837 = vsub.f32 %v813, %v825
        %v838 = vsub.f32 %v814, %v826
        %v839 = vsub.f32 %v815, %v827
        %v840 = vsub.f32 %v816, %v828
        %v841 = vsub.f32 %v817, %v829
        %v842 = vsub.f32 %v818, %v830
        %v843 = vsub.f32 %v819, %v831
        %v844 = vsub.f32 %v820, %v832
        %v845 = vsub.f32 %v821, %v833
        %v846 = vsub.f32 %v822, %v834
        %v847 = vsub.f32 %v823, %v835
        %v848 = vsub.f32 %v680, %v800
        %v849 = vsub.f32 %v681, %v800
        %v850 = vsub.f32 %v682, %v801
        %v851 = vsub.f32 %v683, %v801
        %v852 = vsub.f32 %v684, %v802
        %v853 = vsub.f32 %v685, %v802
        %v854 = vsub.f32 %v686, %v803
        %v855 = vsub.f32 %v687, %v803
        %v856 = vsub.f32 %v688, %v804
        %v857 = vsub.f32 %v689, %v804
        %v858 = vsub.f32 %v690, %v805
        %v859 = vsub.f32 %v691, %v805
        %v860 = vsub.f32 %v692, %v806
        %v861 = vsub.f32 %v693, %v806
        %v862 = vsub.f32 %v694, %v807
        %v863 = vsub.f32 %v695, %v807
        %v864 = vsub.f32 %v696, %v808
        %v865 = vsub.f32 %v697, %v808
        %v866 = vsub.f32 %v698, %v809
        %v867 = vsub.f32 %v699, %v809
        %v868 = vsub.f32 %v700, %v810
        %v869 = vsub.f32 %v701, %v810
        %v870 = vsub.f32 %v702, %v811
        %v871 = vsub.f32 %v703, %v811
        %v872 = vadd.f32 %v836, 1e-12
        %v873 = vadd.f32 %v837, 1e-12
        %v874 = vadd.f32 %v838, 1e-12
        %v875 = vadd.f32 %v839, 1e-12
        %v876 = vadd.f32 %v840, 1e-12
        %v877 = vadd.f32 %v841, 1e-12
        %v878 = vadd.f32 %v842, 1e-12
        %v879 = vadd.f32 %v843, 1e-12
        %v880 = vadd.f32 %v844, 1e-12
        %v881 = vadd.f32 %v845, 1e-12
        %v882 = vadd.f32 %v846, 1e-12
        %v883 = vadd.f32 %v847, 1e-12
        %v884 = vrsqrt.pop %v872
        %v885 = vrsqrt.pop %v873
        %v886 = vrsqrt.pop %v874
        %v887 = vrsqrt.pop %v875
        %v888 = vrsqrt.pop %v876
        %v889 = vrsqrt.pop %v877
        %v890 = vrsqrt.pop %v878
        %v891 = vrsqrt.pop %v879
        %v892 = vrsqrt.pop %v880
        %v893 = vrsqrt.pop %v881
        %v894 = vrsqrt.pop %v882
        %v895 = vrsqrt.pop %v883
        %v896 = vmul.f32 %v848, %v884
        %v897 = vmul.f32 %v849, %v884
        %v898 = vmul.f32 %v850, %v885
        %v899 = vmul.f32 %v851, %v885
        %v900 = vmul.f32 %v852, %v886
        %v901 = vmul.f32 %v853, %v886
        %v902 = vmul.f32 %v854, %v887
        %v903 = vmul.f32 %v855, %v887
        %v904 = vmul.f32 %v856, %v888
        %v905 = vmul.f32 %v857, %v888
        %v906 = vmul.f32 %v858, %v889
        %v907 = vmul.f32 %v859, %v889
        %v908 = vmul.f32 %v860, %v890
        %v909 = vmul.f32 %v861, %v890
        %v910 = vmul.f32 %v862, %v891
        %v911 = vmul.f32 %v863, %v891
        %v912 = vmul.f32 %v864, %v892
        %v913 = vmul.f32 %v865, %v892
        %v914 = vmul.f32 %v866, %v893
        %v915 = vmul.f32 %v867, %v893
        %v916 = vmul.f32 %v868, %v894
        %v917 = vmul.f32 %v869, %v894
        %v918 = vmul.f32 %v870, %v895
        %v919 = vmul.f32 %v871, %v895
        %v920 = vld [vmem:[%s4] sm:$0x3]
        %v922 = vlaneseq
        %v923 = vshrl.u32 %v922, 7
        %v924 = vsub.s32 0, %v923
        %v925 = vrot.slane %v920, %v924
        %v926 = vlaneseq
        %v927 = vshrl.u32 %v926, 7
        %v928 = vsub.s32 1, %v927
        %v929 = vrot.slane %v920, %v928
        %v932 = vmul.f32 %v896, %v925
        %v933 = vmul.f32 %v897, %v929
        %v934 = vmul.f32 %v898, %v925
        %v935 = vmul.f32 %v899, %v929
        %v936 = vmul.f32 %v900, %v925
        %v937 = vmul.f32 %v901, %v929
        %v938 = vmul.f32 %v902, %v925
        %v939 = vmul.f32 %v903, %v929
        %v940 = vmul.f32 %v904, %v925
        %v941 = vmul.f32 %v905, %v929
        %v942 = vmul.f32 %v906, %v925
        %v943 = vmul.f32 %v907, %v929
        %v944 = vmul.f32 %v908, %v925
        %v945 = vmul.f32 %v909, %v929
        %v946 = vmul.f32 %v910, %v925
        %v947 = vmul.f32 %v911, %v929
        %v948 = vmul.f32 %v912, %v925
        %v949 = vmul.f32 %v913, %v929
        %v950 = vmul.f32 %v914, %v925
        %v951 = vmul.f32 %v915, %v929
        %v952 = vmul.f32 %v916, %v925
        %v953 = vmul.f32 %v917, %v929
        %v954 = vmul.f32 %v918, %v925
        %v955 = vmul.f32 %v919, %v929
        %v956 = vld [vmem:[%s5] sm:$0x3]
        %v958 = vlaneseq
        %v959 = vshrl.u32 %v958, 7
        %v960 = vsub.s32 0, %v959
        %v961 = vrot.slane %v956, %v960
        %v962 = vlaneseq
        %v963 = vshrl.u32 %v962, 7
        %v964 = vsub.s32 1, %v963
        %v965 = vrot.slane %v956, %v964
        %v968 = vadd.f32 %v932, %v961
        %v969 = vadd.f32 %v933, %v965
        %v970 = vadd.f32 %v934, %v961
        %v971 = vadd.f32 %v935, %v965
        %v972 = vadd.f32 %v936, %v961
        %v973 = vadd.f32 %v937, %v965
        %v974 = vadd.f32 %v938, %v961
        %v975 = vadd.f32 %v939, %v965
        %v976 = vadd.f32 %v940, %v961
        %v977 = vadd.f32 %v941, %v965
        %v978 = vadd.f32 %v942, %v961
        %v979 = vadd.f32 %v943, %v965
        %v980 = vadd.f32 %v944, %v961
        %v981 = vadd.f32 %v945, %v965
        %v982 = vadd.f32 %v946, %v961
        %v983 = vadd.f32 %v947, %v965
        %v984 = vadd.f32 %v948, %v961
        %v985 = vadd.f32 %v949, %v965
        %v986 = vadd.f32 %v950, %v961
        %v987 = vadd.f32 %v951, %v965
        %v988 = vadd.f32 %v952, %v961
        %v989 = vadd.f32 %v953, %v965
        %v990 = vadd.f32 %v954, %v961
        %v991 = vadd.f32 %v955, %v965
        %v992 = vld [vmem:[#allocation2] sm:$0xff]
        %v993 = vld [vmem:[#allocation2 + $0x8] sm:$0xff]
        %v994 = vld [vmem:[#allocation2 + $0x40] sm:$0xff]
        %v995 = vld [vmem:[#allocation2 + $0x48] sm:$0xff]
        %v996 = vld [vmem:[#allocation2 + $0x80] sm:$0xff]
        %v997 = vld [vmem:[#allocation2 + $0x88] sm:$0xff]
        %v998 = vld [vmem:[#allocation2 + $0xc0] sm:$0xff]
        %v999 = vld [vmem:[#allocation2 + $0xc8] sm:$0xff]
        %v1000 = vld [vmem:[#allocation2 + $0x100] sm:$0xff]
        %v1001 = vld [vmem:[#allocation2 + $0x108] sm:$0xff]
        %v1002 = vld [vmem:[#allocation2 + $0x140] sm:$0xff]
        %v1003 = vld [vmem:[#allocation2 + $0x148] sm:$0xff]
        %v1004 = vld [vmem:[#allocation2 + $0x180] sm:$0xff]
        %v1005 = vld [vmem:[#allocation2 + $0x188] sm:$0xff]
        %v1006 = vld [vmem:[#allocation2 + $0x1c0] sm:$0xff]
        %v1007 = vld [vmem:[#allocation2 + $0x1c8] sm:$0xff]
        %v1008 = vld [vmem:[#allocation2 + $0x200] sm:$0xff]
        %v1009 = vld [vmem:[#allocation2 + $0x208] sm:$0xff]
        %v1010 = vld [vmem:[#allocation2 + $0x240] sm:$0xff]
        %v1011 = vld [vmem:[#allocation2 + $0x248] sm:$0xff]
        %v1012 = vld [vmem:[#allocation2 + $0x280] sm:$0xff]
        %v1013 = vld [vmem:[#allocation2 + $0x288] sm:$0xff]
        %v1014 = vld [vmem:[#allocation2 + $0x2c0] sm:$0xff]
        %v1015 = vld [vmem:[#allocation2 + $0x2c8] sm:$0xff]
        %v1016 = vld [vmem:[#allocation2 + $0x300] sm:$0xff]
        %v1017 = vld [vmem:[#allocation2 + $0x308] sm:$0xff]
        %v1018 = vld [vmem:[#allocation2 + $0x340] sm:$0xff]
        %v1019 = vld [vmem:[#allocation2 + $0x348] sm:$0xff]
        %v1020 = vld [vmem:[#allocation2 + $0x380] sm:$0xff]
        %v1021 = vld [vmem:[#allocation2 + $0x388] sm:$0xff]
        %v1022 = vld [vmem:[#allocation2 + $0x3c0] sm:$0xff]
        %v1023 = vld [vmem:[#allocation2 + $0x3c8] sm:$0xff]
        %v1024 = vld [vmem:[#allocation2 + $0x400] sm:$0xff]
        %v1025 = vld [vmem:[#allocation2 + $0x408] sm:$0xff]
        %v1026 = vld [vmem:[#allocation2 + $0x440] sm:$0xff]
        %v1027 = vld [vmem:[#allocation2 + $0x448] sm:$0xff]
        %v1028 = vld [vmem:[#allocation2 + $0x480] sm:$0xff]
        %v1029 = vld [vmem:[#allocation2 + $0x488] sm:$0xff]
        %v1030 = vld [vmem:[#allocation2 + $0x4c0] sm:$0xff]
        %v1031 = vld [vmem:[#allocation2 + $0x4c8] sm:$0xff]
        %v1032 = vld [vmem:[#allocation2 + $0x500] sm:$0xff]
        %v1033 = vld [vmem:[#allocation2 + $0x508] sm:$0xff]
        %v1034 = vld [vmem:[#allocation2 + $0x540] sm:$0xff]
        %v1035 = vld [vmem:[#allocation2 + $0x548] sm:$0xff]
        %v1036 = vld [vmem:[#allocation2 + $0x580] sm:$0xff]
        %v1037 = vld [vmem:[#allocation2 + $0x588] sm:$0xff]
        %v1038 = vld [vmem:[#allocation2 + $0x5c0] sm:$0xff]
        %v1039 = vld [vmem:[#allocation2 + $0x5c8] sm:$0xff]
        %v1040 = vld [vmem:[#allocation2 + $0x600] sm:$0xff]
        %v1041 = vld [vmem:[#allocation2 + $0x608] sm:$0xff]
        %v1042 = vld [vmem:[#allocation2 + $0x640] sm:$0xff]
        %v1043 = vld [vmem:[#allocation2 + $0x648] sm:$0xff]
        %v1044 = vld [vmem:[#allocation2 + $0x680] sm:$0xff]
        %v1045 = vld [vmem:[#allocation2 + $0x688] sm:$0xff]
        %v1046 = vld [vmem:[#allocation2 + $0x6c0] sm:$0xff]
        %v1047 = vld [vmem:[#allocation2 + $0x6c8] sm:$0xff]
        %v1048 = vld [vmem:[#allocation2 + $0x700] sm:$0xff]
        %v1049 = vld [vmem:[#allocation2 + $0x708] sm:$0xff]
        %v1050 = vld [vmem:[#allocation2 + $0x740] sm:$0xff]
        %v1051 = vld [vmem:[#allocation2 + $0x748] sm:$0xff]
        %v1052 = vld [vmem:[#allocation2 + $0x780] sm:$0xff]
        %v1053 = vld [vmem:[#allocation2 + $0x788] sm:$0xff]
        %v1054 = vld [vmem:[#allocation2 + $0x7c0] sm:$0xff]
        %v1055 = vld [vmem:[#allocation2 + $0x7c8] sm:$0xff]
        %v1056 = vld [vmem:[%s7] sm:$0x3]
        %v1058 = vlaneseq
        %v1059 = vshrl.u32 %v1058, 7
        %v1060 = vsub.s32 0, %v1059
        %v1061 = vrot.slane %v1056, %v1060
        %v1062 = vlaneseq
        %v1063 = vshrl.u32 %v1062, 7
        %v1064 = vsub.s32 1, %v1063
        %v1065 = vrot.slane %v1056, %v1064
        %1068 = vmatprep.subr.mxu0 %v993
        %1069 = vmatpush1.msra.mxu0 %v992
        %1070 = vmatprep.subr.mxu0 %v995
        %1071 = vmatpush1.msra.mxu0 %v994
        %1072 = vmatprep.subr.mxu0 %v997
        %1073 = vmatpush1.msra.mxu0 %v996
        %1074 = vmatprep.subr.mxu0 %v999
        %1075 = vmatpush1.msra.mxu0 %v998
        %1076 = vmatprep.subr.mxu0 %v1001
        %1077 = vmatpush1.msra.mxu0 %v1000
        %1078 = vmatprep.subr.mxu0 %v1003
        %1079 = vmatpush1.msra.mxu0 %v1002
        %1080 = vmatprep.subr.mxu0 %v1005
        %1081 = vmatpush1.msra.mxu0 %v1004
        %1082 = vmatprep.subr.mxu0 %v1007
        %1083 = vmatpush1.msra.mxu0 %v1006
        %1084 = vmatprep.subr.mxu0 %v1009
        %1085 = vmatpush1.msra.mxu0 %v1008
        %1086 = vmatprep.subr.mxu0 %v1011
        %1087 = vmatpush1.msra.mxu0 %v1010
        %1088 = vmatprep.subr.mxu0 %v1013
        %1089 = vmatpush1.msra.mxu0 %v1012
        %1090 = vmatprep.subr.mxu0 %v1015
        %1091 = vmatpush1.msra.mxu0 %v1014
        %1092 = vmatprep.subr.mxu0 %v1017
        %1093 = vmatpush1.msra.mxu0 %v1016
        %1094 = vmatprep.subr.mxu0 %v1019
        %1095 = vmatpush1.msra.mxu0 %v1018
        %1096 = vmatprep.subr.mxu0 %v1021
        %1097 = vmatpush1.msra.mxu0 %v1020
        %1098 = vmatprep.subr.mxu0 %v1023
        %1099 = vmatpush1.msra.mxu0 %v1022
        %1100 = vmatprep.subr.mxu0 %v1025
        %1101 = vmatpush1.msra.mxu0 %v1024
        %1102 = vmatprep.subr.mxu0 %v1027
        %1103 = vmatpush1.msra.mxu0 %v1026
        %1104 = vmatprep.subr.mxu0 %v1029
        %1105 = vmatpush1.msra.mxu0 %v1028
        %1106 = vmatprep.subr.mxu0 %v1031
        %1107 = vmatpush1.msra.mxu0 %v1030
        %1108 = vmatprep.subr.mxu0 %v1033
        %1109 = vmatpush1.msra.mxu0 %v1032
        %1110 = vmatprep.subr.mxu0 %v1035
        %1111 = vmatpush1.msra.mxu0 %v1034
        %1112 = vmatprep.subr.mxu0 %v1037
        %1113 = vmatpush1.msra.mxu0 %v1036
        %1114 = vmatprep.subr.mxu0 %v1039
        %1115 = vmatpush1.msra.mxu0 %v1038
        %1116 = vmatprep.subr.mxu0 %v1041
        %1117 = vmatpush1.msra.mxu0 %v1040
        %1118 = vmatprep.subr.mxu0 %v1043
        %1119 = vmatpush1.msra.mxu0 %v1042
        %1120 = vmatprep.subr.mxu0 %v1045
        %1121 = vmatpush1.msra.mxu0 %v1044
        %1122 = vmatprep.subr.mxu0 %v1047
        %1123 = vmatpush1.msra.mxu0 %v1046
        %1124 = vmatprep.subr.mxu0 %v1049
        %1125 = vmatpush1.msra.mxu0 %v1048
        %1126 = vmatprep.subr.mxu0 %v1051
        %1127 = vmatpush1.msra.mxu0 %v1050
        %1128 = vmatprep.subr.mxu0 %v1053
        %1129 = vmatpush1.msra.mxu0 %v1052
        %1130 = vmatprep.subr.mxu0 %v1055
        %1131 = vmatpush1.msra.mxu0 %v1054
        %1132 = vmatprep.mubr.f32.mxu0 %v969
        %1133 = vmatmul.mubr.f32.gmra.mrb[0].mxu0 %v968
        %v1134 = vpop.f32.mrb[0].mxu0
        %v1135 = vadd.f32 %v1061, %v1134
        %v1136 = vpop.f32.mrb[0].mxu0
        %v1137 = vadd.f32 %v1065, %v1136
        %1138 = vmatprep.mubr.f32.mxu0 %v971
        %1139 = vmatmul.mubr.f32.gmra.mrb[0].mxu0 %v970
        %v1140 = vpop.f32.mrb[0].mxu0
        %v1141 = vadd.f32 %v1061, %v1140
        %v1142 = vpop.f32.mrb[0].mxu0
        %v1143 = vadd.f32 %v1065, %v1142
        %1144 = vmatprep.mubr.f32.mxu0 %v973
        %1145 = vmatmul.mubr.f32.gmra.mrb[0].mxu0 %v972
        %v1146 = vpop.f32.mrb[0].mxu0
        %v1147 = vadd.f32 %v1061, %v1146
        %v1148 = vpop.f32.mrb[0].mxu0
        %v1149 = vadd.f32 %v1065, %v1148
        %1150 = vmatprep.mubr.f32.mxu0 %v975
        %1151 = vmatmul.mubr.f32.gmra.mrb[0].mxu0 %v974
        %v1152 = vpop.f32.mrb[0].mxu0
        %v1153 = vadd.f32 %v1061, %v1152
        %v1154 = vpop.f32.mrb[0].mxu0
        %v1155 = vadd.f32 %v1065, %v1154
        %1156 = vmatprep.mubr.f32.mxu0 %v977
        %1157 = vmatmul.mubr.f32.gmra.mrb[0].mxu0 %v976
        %v1158 = vpop.f32.mrb[0].mxu0
        %v1159 = vadd.f32 %v1061, %v1158
        %v1160 = vpop.f32.mrb[0].mxu0
        %v1161 = vadd.f32 %v1065, %v1160
        %1162 = vmatprep.mubr.f32.mxu0 %v979
        %1163 = vmatmul.mubr.f32.gmra.mrb[0].mxu0 %v978
        %v1164 = vpop.f32.mrb[0].mxu0
        %v1165 = vadd.f32 %v1061, %v1164
        %v1166 = vpop.f32.mrb[0].mxu0
        %v1167 = vadd.f32 %v1065, %v1166
        %1168 = vmatprep.mubr.f32.mxu0 %v981
        %1169 = vmatmul.mubr.f32.gmra.mrb[0].mxu0 %v980
        %v1170 = vpop.f32.mrb[0].mxu0
        %v1171 = vadd.f32 %v1061, %v1170
        %v1172 = vpop.f32.mrb[0].mxu0
        %v1173 = vadd.f32 %v1065, %v1172
        %1174 = vmatprep.mubr.f32.mxu0 %v983
        %1175 = vmatmul.mubr.f32.gmra.mrb[0].mxu0 %v982
        %v1176 = vpop.f32.mrb[0].mxu0
        %v1177 = vadd.f32 %v1061, %v1176
        %v1178 = vpop.f32.mrb[0].mxu0
        %v1179 = vadd.f32 %v1065, %v1178
        %1180 = vmatprep.mubr.f32.mxu0 %v985
        %1181 = vmatmul.mubr.f32.gmra.mrb[0].mxu0 %v984
        %v1182 = vpop.f32.mrb[0].mxu0
        %v1183 = vadd.f32 %v1061, %v1182
        %v1184 = vpop.f32.mrb[0].mxu0
        %v1185 = vadd.f32 %v1065, %v1184
        %1186 = vmatprep.mubr.f32.mxu0 %v987
        %1187 = vmatmul.mubr.f32.gmra.mrb[0].mxu0 %v986
        %v1188 = vpop.f32.mrb[0].mxu0
        %v1189 = vadd.f32 %v1061, %v1188
        %v1190 = vpop.f32.mrb[0].mxu0
        %v1191 = vadd.f32 %v1065, %v1190
        %1192 = vmatprep.mubr.f32.mxu0 %v989
        %1193 = vmatmul.mubr.f32.gmra.mrb[0].mxu0 %v988
        %v1194 = vpop.f32.mrb[0].mxu0
        %v1195 = vadd.f32 %v1061, %v1194
        %v1196 = vpop.f32.mrb[0].mxu0
        %v1197 = vadd.f32 %v1065, %v1196
        %1198 = vmatprep.mubr.f32.mxu0 %v991
        %1199 = vmatmul.mubr.f32.gmra.mrb[0].mxu0 %v990
        %v1200 = vpop.f32.mrb[0].mxu0
        %v1201 = vadd.f32 %v1061, %v1200
        %v1202 = vpop.f32.mrb[0].mxu0
        %v1203 = vadd.f32 %v1065, %v1202
        %1204 = vdwg.mxu0
        %v1205 = vmul.f32 %v1135, 0.5
        %v1206 = vmul.f32 %v1137, 0.5
        %v1207 = vmul.f32 %v1141, 0.5
        %v1208 = vmul.f32 %v1143, 0.5
        %v1209 = vmul.f32 %v1147, 0.5
        %v1210 = vmul.f32 %v1149, 0.5
        %v1211 = vmul.f32 %v1153, 0.5
        %v1212 = vmul.f32 %v1155, 0.5
        %v1213 = vmul.f32 %v1159, 0.5
        %v1214 = vmul.f32 %v1161, 0.5
        %v1215 = vmul.f32 %v1165, 0.5
        %v1216 = vmul.f32 %v1167, 0.5
        %v1217 = vmul.f32 %v1171, 0.5
        %v1218 = vmul.f32 %v1173, 0.5
        %v1219 = vmul.f32 %v1177, 0.5
        %v1220 = vmul.f32 %v1179, 0.5
        %v1221 = vmul.f32 %v1183, 0.5
        %v1222 = vmul.f32 %v1185, 0.5
        %v1223 = vmul.f32 %v1189, 0.5
        %v1224 = vmul.f32 %v1191, 0.5
        %v1225 = vmul.f32 %v1195, 0.5
        %v1226 = vmul.f32 %v1197, 0.5
        %v1227 = vmul.f32 %v1201, 0.5
        %v1228 = vmul.f32 %v1203, 0.5
        %v1229 = vmul.f32 %v1135, 0.70710677
        %v1230 = vmul.f32 %v1137, 0.70710677
        %v1231 = vmul.f32 %v1141, 0.70710677
        %v1232 = vmul.f32 %v1143, 0.70710677
        %v1233 = vmul.f32 %v1147, 0.70710677
        %v1234 = vmul.f32 %v1149, 0.70710677
        %v1235 = vmul.f32 %v1153, 0.70710677
        %v1236 = vmul.f32 %v1155, 0.70710677
        %v1237 = vmul.f32 %v1159, 0.70710677
        %v1238 = vmul.f32 %v1161, 0.70710677
        %v1239 = vmul.f32 %v1165, 0.70710677
        %v1240 = vmul.f32 %v1167, 0.70710677
        %v1241 = vmul.f32 %v1171, 0.70710677
        %v1242 = vmul.f32 %v1173, 0.70710677
        %v1243 = vmul.f32 %v1177, 0.70710677
        %v1244 = vmul.f32 %v1179, 0.70710677
        %v1245 = vmul.f32 %v1183, 0.70710677
        %v1246 = vmul.f32 %v1185, 0.70710677
        %v1247 = vmul.f32 %v1189, 0.70710677
        %v1248 = vmul.f32 %v1191, 0.70710677
        %v1249 = vmul.f32 %v1195, 0.70710677
        %v1250 = vmul.f32 %v1197, 0.70710677
        %v1251 = vmul.f32 %v1201, 0.70710677
        %v1252 = vmul.f32 %v1203, 0.70710677
        %v1253 = verf.f32.pop %v1229
        %v1254 = verf.f32.pop %v1230
        %v1255 = verf.f32.pop %v1231
        %v1256 = verf.f32.pop %v1232
        %v1257 = verf.f32.pop %v1233
        %v1258 = verf.f32.pop %v1234
        %v1259 = verf.f32.pop %v1235
        %v1260 = verf.f32.pop %v1236
        %v1261 = verf.f32.pop %v1237
        %v1262 = verf.f32.pop %v1238
        %v1263 = verf.f32.pop %v1239
        %v1264 = verf.f32.pop %v1240
        %v1265 = verf.f32.pop %v1241
        %v1266 = verf.f32.pop %v1242
        %v1267 = verf.f32.pop %v1243
        %v1268 = verf.f32.pop %v1244
        %v1269 = verf.f32.pop %v1245
        %v1270 = verf.f32.pop %v1246
        %v1271 = verf.f32.pop %v1247
        %v1272 = verf.f32.pop %v1248
        %v1273 = verf.f32.pop %v1249
        %v1274 = verf.f32.pop %v1250
        %v1275 = verf.f32.pop %v1251
        %v1276 = verf.f32.pop %v1252
        %v1277 = vadd.f32 %v1253, 1.0
        %v1278 = vadd.f32 %v1254, 1.0
        %v1279 = vadd.f32 %v1255, 1.0
        %v1280 = vadd.f32 %v1256, 1.0
        %v1281 = vadd.f32 %v1257, 1.0
        %v1282 = vadd.f32 %v1258, 1.0
        %v1283 = vadd.f32 %v1259, 1.0
        %v1284 = vadd.f32 %v1260, 1.0
        %v1285 = vadd.f32 %v1261, 1.0
        %v1286 = vadd.f32 %v1262, 1.0
        %v1287 = vadd.f32 %v1263, 1.0
        %v1288 = vadd.f32 %v1264, 1.0
        %v1289 = vadd.f32 %v1265, 1.0
        %v1290 = vadd.f32 %v1266, 1.0
        %v1291 = vadd.f32 %v1267, 1.0
        %v1292 = vadd.f32 %v1268, 1.0
        %v1293 = vadd.f32 %v1269, 1.0
        %v1294 = vadd.f32 %v1270, 1.0
        %v1295 = vadd.f32 %v1271, 1.0
        %v1296 = vadd.f32 %v1272, 1.0
        %v1297 = vadd.f32 %v1273, 1.0
        %v1298 = vadd.f32 %v1274, 1.0
        %v1299 = vadd.f32 %v1275, 1.0
        %v1300 = vadd.f32 %v1276, 1.0
        %v1301 = vmul.f32 %v1205, %v1277
        %v1302 = vmul.f32 %v1206, %v1278
        %v1303 = vmul.f32 %v1207, %v1279
        %v1304 = vmul.f32 %v1208, %v1280
        %v1305 = vmul.f32 %v1209, %v1281
        %v1306 = vmul.f32 %v1210, %v1282
        %v1307 = vmul.f32 %v1211, %v1283
        %v1308 = vmul.f32 %v1212, %v1284
        %v1309 = vmul.f32 %v1213, %v1285
        %v1310 = vmul.f32 %v1214, %v1286
        %v1311 = vmul.f32 %v1215, %v1287
        %v1312 = vmul.f32 %v1216, %v1288
        %v1313 = vmul.f32 %v1217, %v1289
        %v1314 = vmul.f32 %v1218, %v1290
        %v1315 = vmul.f32 %v1219, %v1291
        %v1316 = vmul.f32 %v1220, %v1292
        %v1317 = vmul.f32 %v1221, %v1293
        %v1318 = vmul.f32 %v1222, %v1294
        %v1319 = vmul.f32 %v1223, %v1295
        %v1320 = vmul.f32 %v1224, %v1296
        %v1321 = vmul.f32 %v1225, %v1297
        %v1322 = vmul.f32 %v1226, %v1298
        %v1323 = vmul.f32 %v1227, %v1299
        %v1324 = vmul.f32 %v1228, %v1300
        %v1325 = vld [vmem:[#allocation5] sm:$0xff]
        %v1326 = vld [vmem:[#allocation5 + $0x8] sm:$0xff]
        %v1327 = vld [vmem:[#allocation5 + $0x10] sm:$0xff]
        %v1328 = vld [vmem:[#allocation5 + $0x18] sm:$0xff]
        %v1329 = vld [vmem:[#allocation5 + $0x20] sm:$0xff]
        %v1330 = vld [vmem:[#allocation5 + $0x28] sm:$0xff]
        %v1331 = vld [vmem:[#allocation5 + $0x30] sm:$0xff]
        %v1332 = vld [vmem:[#allocation5 + $0x38] sm:$0xff]
        %v1333 = vld [vmem:[#allocation5 + $0x40] sm:$0xff]
        %v1334 = vld [vmem:[#allocation5 + $0x48] sm:$0xff]
        %v1335 = vld [vmem:[#allocation5 + $0x50] sm:$0xff]
        %v1336 = vld [vmem:[#allocation5 + $0x58] sm:$0xff]
        %v1337 = vld [vmem:[#allocation5 + $0x60] sm:$0xff]
        %v1338 = vld [vmem:[#allocation5 + $0x68] sm:$0xff]
        %v1339 = vld [vmem:[#allocation5 + $0x70] sm:$0xff]
        %v1340 = vld [vmem:[#allocation5 + $0x78] sm:$0xff]
        %v1341 = vld [vmem:[#allocation5 + $0x80] sm:$0xff]
        %v1342 = vld [vmem:[#allocation5 + $0x88] sm:$0xff]
        %v1343 = vld [vmem:[#allocation5 + $0x90] sm:$0xff]
        %v1344 = vld [vmem:[#allocation5 + $0x98] sm:$0xff]
        %v1345 = vld [vmem:[#allocation5 + $0xa0] sm:$0xff]
        %v1346 = vld [vmem:[#allocation5 + $0xa8] sm:$0xff]
        %v1347 = vld [vmem:[#allocation5 + $0xb0] sm:$0xff]
        %v1348 = vld [vmem:[#allocation5 + $0xb8] sm:$0xff]
        %v1349 = vld [vmem:[#allocation5 + $0xc0] sm:$0xff]
        %v1350 = vld [vmem:[#allocation5 + $0xc8] sm:$0xff]
        %v1351 = vld [vmem:[#allocation5 + $0xd0] sm:$0xff]
        %v1352 = vld [vmem:[#allocation5 + $0xd8] sm:$0xff]
        %v1353 = vld [vmem:[#allocation5 + $0xe0] sm:$0xff]
        %v1354 = vld [vmem:[#allocation5 + $0xe8] sm:$0xff]
        %v1355 = vld [vmem:[#allocation5 + $0xf0] sm:$0xff]
        %v1356 = vld [vmem:[#allocation5 + $0xf8] sm:$0xff]
        %v1357 = vld [vmem:[#allocation5 + $0x100] sm:$0xff]
        %v1358 = vld [vmem:[#allocation5 + $0x108] sm:$0xff]
        %v1359 = vld [vmem:[#allocation5 + $0x110] sm:$0xff]
        %v1360 = vld [vmem:[#allocation5 + $0x118] sm:$0xff]
        %v1361 = vld [vmem:[#allocation5 + $0x120] sm:$0xff]
        %v1362 = vld [vmem:[#allocation5 + $0x128] sm:$0xff]
        %v1363 = vld [vmem:[#allocation5 + $0x130] sm:$0xff]
        %v1364 = vld [vmem:[#allocation5 + $0x138] sm:$0xff]
        %v1365 = vld [vmem:[#allocation5 + $0x140] sm:$0xff]
        %v1366 = vld [vmem:[#allocation5 + $0x148] sm:$0xff]
        %v1367 = vld [vmem:[#allocation5 + $0x150] sm:$0xff]
        %v1368 = vld [vmem:[#allocation5 + $0x158] sm:$0xff]
        %v1369 = vld [vmem:[#allocation5 + $0x160] sm:$0xff]
        %v1370 = vld [vmem:[#allocation5 + $0x168] sm:$0xff]
        %v1371 = vld [vmem:[#allocation5 + $0x170] sm:$0xff]
        %v1372 = vld [vmem:[#allocation5 + $0x178] sm:$0xff]
        %v1373 = vld [vmem:[#allocation5 + $0x180] sm:$0xff]
        %v1374 = vld [vmem:[#allocation5 + $0x188] sm:$0xff]
        %v1375 = vld [vmem:[#allocation5 + $0x190] sm:$0xff]
        %v1376 = vld [vmem:[#allocation5 + $0x198] sm:$0xff]
        %v1377 = vld [vmem:[#allocation5 + $0x1a0] sm:$0xff]
        %v1378 = vld [vmem:[#allocation5 + $0x1a8] sm:$0xff]
        %v1379 = vld [vmem:[#allocation5 + $0x1b0] sm:$0xff]
        %v1380 = vld [vmem:[#allocation5 + $0x1b8] sm:$0xff]
        %v1381 = vld [vmem:[#allocation5 + $0x1c0] sm:$0xff]
        %v1382 = vld [vmem:[#allocation5 + $0x1c8] sm:$0xff]
        %v1383 = vld [vmem:[#allocation5 + $0x1d0] sm:$0xff]
        %v1384 = vld [vmem:[#allocation5 + $0x1d8] sm:$0xff]
        %v1385 = vld [vmem:[#allocation5 + $0x1e0] sm:$0xff]
        %v1386 = vld [vmem:[#allocation5 + $0x1e8] sm:$0xff]
        %v1387 = vld [vmem:[#allocation5 + $0x1f0] sm:$0xff]
        %v1388 = vld [vmem:[#allocation5 + $0x1f8] sm:$0xff]
        %v1389 = vld [vmem:[#allocation2 + $0x10] sm:$0xff]
        %v1390 = vld [vmem:[#allocation2 + $0x18] sm:$0xff]
        %v1391 = vld [vmem:[#allocation2 + $0x50] sm:$0xff]
        %v1392 = vld [vmem:[#allocation2 + $0x58] sm:$0xff]
        %v1393 = vld [vmem:[#allocation2 + $0x90] sm:$0xff]
        %v1394 = vld [vmem:[#allocation2 + $0x98] sm:$0xff]
        %v1395 = vld [vmem:[#allocation2 + $0xd0] sm:$0xff]
        %v1396 = vld [vmem:[#allocation2 + $0xd8] sm:$0xff]
        %v1397 = vld [vmem:[#allocation2 + $0x110] sm:$0xff]
        %v1398 = vld [vmem:[#allocation2 + $0x118] sm:$0xff]
        %v1399 = vld [vmem:[#allocation2 + $0x150] sm:$0xff]
        %v1400 = vld [vmem:[#allocation2 + $0x158] sm:$0xff]
        %v1401 = vld [vmem:[#allocation2 + $0x190] sm:$0xff]
        %v1402 = vld [vmem:[#allocation2 + $0x198] sm:$0xff]
        %v1403 = vld [vmem:[#allocation2 + $0x1d0] sm:$0xff]
        %v1404 = vld [vmem:[#allocation2 + $0x1d8] sm:$0xff]
        %v1405 = vld [vmem:[#allocation2 + $0x210] sm:$0xff]
        %v1406 = vld [vmem:[#allocation2 + $0x218] sm:$0xff]
        %v1407 = vld [vmem:[#allocation2 + $0x250] sm:$0xff]
        %v1408 = vld [vmem:[#allocation2 + $0x258] sm:$0xff]
        %v1409 = vld [vmem:[#allocation2 + $0x290] sm:$0xff]
        %v1410 = vld [vmem:[#allocation2 + $0x298] sm:$0xff]
        %v1411 = vld [vmem:[#allocation2 + $0x2d0] sm:$0xff]
        %v1412 = vld [vmem:[#allocation2 + $0x2d8] sm:$0xff]
        %v1413 = vld [vmem:[#allocation2 + $0x310] sm:$0xff]
        %v1414 = vld [vmem:[#allocation2 + $0x318] sm:$0xff]
        %v1415 = vld [vmem:[#allocation2 + $0x350] sm:$0xff]
        %v1416 = vld [vmem:[#allocation2 + $0x358] sm:$0xff]
        %v1417 = vld [vmem:[#allocation2 + $0x390] sm:$0xff]
        %v1418 = vld [vmem:[#allocation2 + $0x398] sm:$0xff]
        %v1419 = vld [vmem:[#allocation2 + $0x3d0] sm:$0xff]
        %v1420 = vld [vmem:[#allocation2 + $0x3d8] sm:$0xff]
        %v1421 = vld [vmem:[#allocation2 + $0x410] sm:$0xff]
        %v1422 = vld [vmem:[#allocation2 + $0x418] sm:$0xff]
        %v1423 = vld [vmem:[#allocation2 + $0x450] sm:$0xff]
        %v1424 = vld [vmem:[#allocation2 + $0x458] sm:$0xff]
        %v1425 = vld [vmem:[#allocation2 + $0x490] sm:$0xff]
        %v1426 = vld [vmem:[#allocation2 + $0x498] sm:$0xff]
        %v1427 = vld [vmem:[#allocation2 + $0x4d0] sm:$0xff]
        %v1428 = vld [vmem:[#allocation2 + $0x4d8] sm:$0xff]
        %v1429 = vld [vmem:[#allocation2 + $0x510] sm:$0xff]
        %v1430 = vld [vmem:[#allocation2 + $0x518] sm:$0xff]
        %v1431 = vld [vmem:[#allocation2 + $0x550] sm:$0xff]
        %v1432 = vld [vmem:[#allocation2 + $0x558] sm:$0xff]
        %v1433 = vld [vmem:[#allocation2 + $0x590] sm:$0xff]
        %v1434 = vld [vmem:[#allocation2 + $0x598] sm:$0xff]
        %v1435 = vld [vmem:[#allocation2 + $0x5d0] sm:$0xff]
        %v1436 = vld [vmem:[#allocation2 + $0x5d8] sm:$0xff]
        %v1437 = vld [vmem:[#allocation2 + $0x610] sm:$0xff]
        %v1438 = vld [vmem:[#allocation2 + $0x618] sm:$0xff]
        %v1439 = vld [vmem:[#allocation2 + $0x650] sm:$0xff]
        %v1440 = vld [vmem:[#allocation2 + $0x658] sm:$0xff]
        %v1441 = vld [vmem:[#allocation2 + $0x690] sm:$0xff]
        %v1442 = vld [vmem:[#allocation2 + $0x698] sm:$0xff]
        %v1443 = vld [vmem:[#allocation2 + $0x6d0] sm:$0xff]
        %v1444 = vld [vmem:[#allocation2 + $0x6d8] sm:$0xff]
        %v1445 = vld [vmem:[#allocation2 + $0x710] sm:$0xff]
        %v1446 = vld [vmem:[#allocation2 + $0x718] sm:$0xff]
        %v1447 = vld [vmem:[#allocation2 + $0x750] sm:$0xff]
        %v1448 = vld [vmem:[#allocation2 + $0x758] sm:$0xff]
        %v1449 = vld [vmem:[#allocation2 + $0x790] sm:$0xff]
        %v1450 = vld [vmem:[#allocation2 + $0x798] sm:$0xff]
        %v1451 = vld [vmem:[#allocation2 + $0x7d0] sm:$0xff]
        %v1452 = vld [vmem:[#allocation2 + $0x7d8] sm:$0xff]
        %v1453 = vld [vmem:[%s7 + $0x2] sm:$0x3]
        %v1455 = vlaneseq
        %v1456 = vshrl.u32 %v1455, 7
        %v1457 = vsub.s32 0, %v1456
        %v1458 = vrot.slane %v1453, %v1457
        %v1459 = vlaneseq
        %v1460 = vshrl.u32 %v1459, 7
        %v1461 = vsub.s32 1, %v1460
        %v1462 = vrot.slane %v1453, %v1461
        %1465 = vmatprep.subr.mxu0 %v1390
        %1466 = vmatpush1.msra.mxu0 %v1389
        %1467 = vmatprep.subr.mxu0 %v1392
        %1468 = vmatpush1.msra.mxu0 %v1391
        %1469 = vmatprep.subr.mxu0 %v1394
        %1470 = vmatpush1.msra.mxu0 %v1393
        %1471 = vmatprep.subr.mxu0 %v1396
        %1472 = vmatpush1.msra.mxu0 %v1395
        %1473 = vmatprep.subr.mxu0 %v1398
        %1474 = vmatpush1.msra.mxu0 %v1397
        %1475 = vmatprep.subr.mxu0 %v1400
        %1476 = vmatpush1.msra.mxu0 %v1399
        %1477 = vmatprep.subr.mxu0 %v1402
        %1478 = vmatpush1.msra.mxu0 %v1401
        %1479 = vmatprep.subr.mxu0 %v1404
        %1480 = vmatpush1.msra.mxu0 %v1403
        %1481 = vmatprep.subr.mxu0 %v1406
        %1482 = vmatpush1.msra.mxu0 %v1405
        %1483 = vmatprep.subr.mxu0 %v1408
        %1484 = vmatpush1.msra.mxu0 %v1407
        %1485 = vmatprep.subr.mxu0 %v1410
        %1486 = vmatpush1.msra.mxu0 %v1409
        %1487 = vmatprep.subr.mxu0 %v1412
        %1488 = vmatpush1.msra.mxu0 %v1411
        %1489 = vmatprep.subr.mxu0 %v1414
        %1490 = vmatpush1.msra.mxu0 %v1413
        %1491 = vmatprep.subr.mxu0 %v1416
        %1492 = vmatpush1.msra.mxu0 %v1415
        %1493 = vmatprep.subr.mxu0 %v1418
        %1494 = vmatpush1.msra.mxu0 %v1417
        %1495 = vmatprep.subr.mxu0 %v1420
        %1496 = vmatpush1.msra.mxu0 %v1419
        %1497 = vmatprep.subr.mxu0 %v1422
        %1498 = vmatpush1.msra.mxu0 %v1421
        %1499 = vmatprep.subr.mxu0 %v1424
        %1500 = vmatpush1.msra.mxu0 %v1423
        %1501 = vmatprep.subr.mxu0 %v1426
        %1502 = vmatpush1.msra.mxu0 %v1425
        %1503 = vmatprep.subr.mxu0 %v1428
        %1504 = vmatpush1.msra.mxu0 %v1427
        %1505 = vmatprep.subr.mxu0 %v1430
        %1506 = vmatpush1.msra.mxu0 %v1429
        %1507 = vmatprep.subr.mxu0 %v1432
        %1508 = vmatpush1.msra.mxu0 %v1431
        %1509 = vmatprep.subr.mxu0 %v1434
        %1510 = vmatpush1.msra.mxu0 %v1433
        %1511 = vmatprep.subr.mxu0 %v1436
        %1512 = vmatpush1.msra.mxu0 %v1435
        %1513 = vmatprep.subr.mxu0 %v1438
        %1514 = vmatpush1.msra.mxu0 %v1437
        %1515 = vmatprep.subr.mxu0 %v1440
        %1516 = vmatpush1.msra.mxu0 %v1439
        %1517 = vmatprep.subr.mxu0 %v1442
        %1518 = vmatpush1.msra.mxu0 %v1441
        %1519 = vmatprep.subr.mxu0 %v1444
        %1520 = vmatpush1.msra.mxu0 %v1443
        %1521 = vmatprep.subr.mxu0 %v1446
        %1522 = vmatpush1.msra.mxu0 %v1445
        %1523 = vmatprep.subr.mxu0 %v1448
        %1524 = vmatpush1.msra.mxu0 %v1447
        %1525 = vmatprep.subr.mxu0 %v1450
        %1526 = vmatpush1.msra.mxu0 %v1449
        %1527 = vmatprep.subr.mxu0 %v1452
        %1528 = vmatpush1.msra.mxu0 %v1451
        %1529 = vmatprep.mubr.f32.mxu0 %v969
        %1530 = vmatmul.mubr.f32.gmra.mrb[0].mxu0 %v968
        %v1531 = vpop.f32.mrb[0].mxu0
        %v1532 = vadd.f32 %v1458, %v1531
        %v1533 = vpop.f32.mrb[0].mxu0
        %v1534 = vadd.f32 %v1462, %v1533
        %1535 = vmatprep.mubr.f32.mxu0 %v971
        %1536 = vmatmul.mubr.f32.gmra.mrb[0].mxu0 %v970
        %v1537 = vpop.f32.mrb[0].mxu0
        %v1538 = vadd.f32 %v1458, %v1537
        %v1539 = vpop.f32.mrb[0].mxu0
        %v1540 = vadd.f32 %v1462, %v1539
        %1541 = vmatprep.mubr.f32.mxu0 %v973
        %1542 = vmatmul.mubr.f32.gmra.mrb[0].mxu0 %v972
        %v1543 = vpop.f32.mrb[0].mxu0
        %v1544 = vadd.f32 %v1458, %v1543
        %v1545 = vpop.f32.mrb[0].mxu0
        %v1546 = vadd.f32 %v1462, %v1545
        %1547 = vmatprep.mubr.f32.mxu0 %v975
        %1548 = vmatmul.mubr.f32.gmra.mrb[0].mxu0 %v974
        %v1549 = vpop.f32.mrb[0].mxu0
        %v1550 = vadd.f32 %v1458, %v1549
        %v1551 = vpop.f32.mrb[0].mxu0
        %v1552 = vadd.f32 %v1462, %v1551
        %1553 = vmatprep.mubr.f32.mxu0 %v977
        %1554 = vmatmul.mubr.f32.gmra.mrb[0].mxu0 %v976
        %v1555 = vpop.f32.mrb[0].mxu0
        %v1556 = vadd.f32 %v1458, %v1555
        %v1557 = vpop.f32.mrb[0].mxu0
        %v1558 = vadd.f32 %v1462, %v1557
        %1559 = vmatprep.mubr.f32.mxu0 %v979
        %1560 = vmatmul.mubr.f32.gmra.mrb[0].mxu0 %v978
        %v1561 = vpop.f32.mrb[0].mxu0
        %v1562 = vadd.f32 %v1458, %v1561
        %v1563 = vpop.f32.mrb[0].mxu0
        %v1564 = vadd.f32 %v1462, %v1563
        %1565 = vmatprep.mubr.f32.mxu0 %v981
        %1566 = vmatmul.mubr.f32.gmra.mrb[0].mxu0 %v980
        %v1567 = vpop.f32.mrb[0].mxu0
        %v1568 = vadd.f32 %v1458, %v1567
        %v1569 = vpop.f32.mrb[0].mxu0
        %v1570 = vadd.f32 %v1462, %v1569
        %1571 = vmatprep.mubr.f32.mxu0 %v983
        %1572 = vmatmul.mubr.f32.gmra.mrb[0].mxu0 %v982
        %v1573 = vpop.f32.mrb[0].mxu0
        %v1574 = vadd.f32 %v1458, %v1573
        %v1575 = vpop.f32.mrb[0].mxu0
        %v1576 = vadd.f32 %v1462, %v1575
        %1577 = vmatprep.mubr.f32.mxu0 %v985
        %1578 = vmatmul.mubr.f32.gmra.mrb[0].mxu0 %v984
        %v1579 = vpop.f32.mrb[0].mxu0
        %v1580 = vadd.f32 %v1458, %v1579
        %v1581 = vpop.f32.mrb[0].mxu0
        %v1582 = vadd.f32 %v1462, %v1581
        %1583 = vmatprep.mubr.f32.mxu0 %v987
        %1584 = vmatmul.mubr.f32.gmra.mrb[0].mxu0 %v986
        %v1585 = vpop.f32.mrb[0].mxu0
        %v1586 = vadd.f32 %v1458, %v1585
        %v1587 = vpop.f32.mrb[0].mxu0
        %v1588 = vadd.f32 %v1462, %v1587
        %1589 = vmatprep.mubr.f32.mxu0 %v989
        %1590 = vmatmul.mubr.f32.gmra.mrb[0].mxu0 %v988
        %v1591 = vpop.f32.mrb[0].mxu0
        %v1592 = vadd.f32 %v1458, %v1591
        %v1593 = vpop.f32.mrb[0].mxu0
        %v1594 = vadd.f32 %v1462, %v1593
        %1595 = vmatprep.mubr.f32.mxu0 %v991
        %1596 = vmatmul.mubr.f32.gmra.mrb[0].mxu0 %v990
        %v1597 = vpop.f32.mrb[0].mxu0
        %v1598 = vadd.f32 %v1458, %v1597
        %v1599 = vpop.f32.mrb[0].mxu0
        %v1600 = vadd.f32 %v1462, %v1599
        %1601 = vdwg.mxu0
        %v1602 = vmul.f32 %v1532, 0.5
        %v1603 = vmul.f32 %v1534, 0.5
        %v1604 = vmul.f32 %v1538, 0.5
        %v1605 = vmul.f32 %v1540, 0.5
        %v1606 = vmul.f32 %v1544, 0.5
        %v1607 = vmul.f32 %v1546, 0.5
        %v1608 = vmul.f32 %v1550, 0.5
        %v1609 = vmul.f32 %v1552, 0.5
        %v1610 = vmul.f32 %v1556, 0.5
        %v1611 = vmul.f32 %v1558, 0.5
        %v1612 = vmul.f32 %v1562, 0.5
        %v1613 = vmul.f32 %v1564, 0.5
        %v1614 = vmul.f32 %v1568, 0.5
        %v1615 = vmul.f32 %v1570, 0.5
        %v1616 = vmul.f32 %v1574, 0.5
        %v1617 = vmul.f32 %v1576, 0.5
        %v1618 = vmul.f32 %v1580, 0.5
        %v1619 = vmul.f32 %v1582, 0.5
        %v1620 = vmul.f32 %v1586, 0.5
        %v1621 = vmul.f32 %v1588, 0.5
        %v1622 = vmul.f32 %v1592, 0.5
        %v1623 = vmul.f32 %v1594, 0.5
        %v1624 = vmul.f32 %v1598, 0.5
        %v1625 = vmul.f32 %v1600, 0.5
        %v1626 = vmul.f32 %v1532, 0.70710677
        %v1627 = vmul.f32 %v1534, 0.70710677
        %v1628 = vmul.f32 %v1538, 0.70710677
        %v1629 = vmul.f32 %v1540, 0.70710677
        %v1630 = vmul.f32 %v1544, 0.70710677
        %v1631 = vmul.f32 %v1546, 0.70710677
        %v1632 = vmul.f32 %v1550, 0.70710677
        %v1633 = vmul.f32 %v1552, 0.70710677
        %v1634 = vmul.f32 %v1556, 0.70710677
        %v1635 = vmul.f32 %v1558, 0.70710677
        %v1636 = vmul.f32 %v1562, 0.70710677
        %v1637 = vmul.f32 %v1564, 0.70710677
        %v1638 = vmul.f32 %v1568, 0.70710677
        %v1639 = vmul.f32 %v1570, 0.70710677
        %v1640 = vmul.f32 %v1574, 0.70710677
        %v1641 = vmul.f32 %v1576, 0.70710677
        %v1642 = vmul.f32 %v1580, 0.70710677
        %v1643 = vmul.f32 %v1582, 0.70710677
        %v1644 = vmul.f32 %v1586, 0.70710677
        %v1645 = vmul.f32 %v1588, 0.70710677
        %v1646 = vmul.f32 %v1592, 0.70710677
        %v1647 = vmul.f32 %v1594, 0.70710677
        %v1648 = vmul.f32 %v1598, 0.70710677
        %v1649 = vmul.f32 %v1600, 0.70710677
        %v1650 = verf.f32.pop %v1626
        %v1651 = verf.f32.pop %v1627
        %v1652 = verf.f32.pop %v1628
        %v1653 = verf.f32.pop %v1629
        %v1654 = verf.f32.pop %v1630
        %v1655 = verf.f32.pop %v1631
        %v1656 = verf.f32.pop %v1632
        %v1657 = verf.f32.pop %v1633
        %v1658 = verf.f32.pop %v1634
        %v1659 = verf.f32.pop %v1635
        %v1660 = verf.f32.pop %v1636
        %v1661 = verf.f32.pop %v1637
        %v1662 = verf.f32.pop %v1638
        %v1663 = verf.f32.pop %v1639
        %v1664 = verf.f32.pop %v1640
        %v1665 = verf.f32.pop %v1641
        %v1666 = verf.f32.pop %v1642
        %v1667 = verf.f32.pop %v1643
        %v1668 = verf.f32.pop %v1644
        %v1669 = verf.f32.pop %v1645
        %v1670 = verf.f32.pop %v1646
        %v1671 = verf.f32.pop %v1647
        %v1672 = verf.f32.pop %v1648
        %v1673 = verf.f32.pop %v1649
        %v1674 = vadd.f32 %v1650, 1.0
        %v1675 = vadd.f32 %v1651, 1.0
        %v1676 = vadd.f32 %v1652, 1.0
        %v1677 = vadd.f32 %v1653, 1.0
        %v1678 = vadd.f32 %v1654, 1.0
        %v1679 = vadd.f32 %v1655, 1.0
        %v1680 = vadd.f32 %v1656, 1.0
        %v1681 = vadd.f32 %v1657, 1.0
        %v1682 = vadd.f32 %v1658, 1.0
        %v1683 = vadd.f32 %v1659, 1.0
        %v1684 = vadd.f32 %v1660, 1.0
        %v1685 = vadd.f32 %v1661, 1.0
        %v1686 = vadd.f32 %v1662, 1.0
        %v1687 = vadd.f32 %v1663, 1.0
        %v1688 = vadd.f32 %v1664, 1.0
        %v1689 = vadd.f32 %v1665, 1.0
        %v1690 = vadd.f32 %v1666, 1.0
        %v1691 = vadd.f32 %v1667, 1.0
        %v1692 = vadd.f32 %v1668, 1.0
        %v1693 = vadd.f32 %v1669, 1.0
        %v1694 = vadd.f32 %v1670, 1.0
        %v1695 = vadd.f32 %v1671, 1.0
        %v1696 = vadd.f32 %v1672, 1.0
        %v1697 = vadd.f32 %v1673, 1.0
        %v1698 = vmul.f32 %v1602, %v1674
        %v1699 = vmul.f32 %v1603, %v1675
        %v1700 = vmul.f32 %v1604, %v1676
        %v1701 = vmul.f32 %v1605, %v1677
        %v1702 = vmul.f32 %v1606, %v1678
        %v1703 = vmul.f32 %v1607, %v1679
        %v1704 = vmul.f32 %v1608, %v1680
        %v1705 = vmul.f32 %v1609, %v1681
        %v1706 = vmul.f32 %v1610, %v1682
        %v1707 = vmul.f32 %v1611, %v1683
        %v1708 = vmul.f32 %v1612, %v1684
        %v1709 = vmul.f32 %v1613, %v1685
        %v1710 = vmul.f32 %v1614, %v1686
        %v1711 = vmul.f32 %v1615, %v1687
        %v1712 = vmul.f32 %v1616, %v1688
        %v1713 = vmul.f32 %v1617, %v1689
        %v1714 = vmul.f32 %v1618, %v1690
        %v1715 = vmul.f32 %v1619, %v1691
        %v1716 = vmul.f32 %v1620, %v1692
        %v1717 = vmul.f32 %v1621, %v1693
        %v1718 = vmul.f32 %v1622, %v1694
        %v1719 = vmul.f32 %v1623, %v1695
        %v1720 = vmul.f32 %v1624, %v1696
        %v1721 = vmul.f32 %v1625, %v1697
        %v1722 = vld [vmem:[#allocation5 + $0x200] sm:$0xff]
        %v1723 = vld [vmem:[#allocation5 + $0x208] sm:$0xff]
        %v1724 = vld [vmem:[#allocation5 + $0x210] sm:$0xff]
        %v1725 = vld [vmem:[#allocation5 + $0x218] sm:$0xff]
        %v1726 = vld [vmem:[#allocation5 + $0x220] sm:$0xff]
        %v1727 = vld [vmem:[#allocation5 + $0x228] sm:$0xff]
        %v1728 = vld [vmem:[#allocation5 + $0x230] sm:$0xff]
        %v1729 = vld [vmem:[#allocation5 + $0x238] sm:$0xff]
        %v1730 = vld [vmem:[#allocation5 + $0x240] sm:$0xff]
        %v1731 = vld [vmem:[#allocation5 + $0x248] sm:$0xff]
        %v1732 = vld [vmem:[#allocation5 + $0x250] sm:$0xff]
        %v1733 = vld [vmem:[#allocation5 + $0x258] sm:$0xff]
        %v1734 = vld [vmem:[#allocation5 + $0x260] sm:$0xff]
        %v1735 = vld [vmem:[#allocation5 + $0x268] sm:$0xff]
        %v1736 = vld [vmem:[#allocation5 + $0x270] sm:$0xff]
        %v1737 = vld [vmem:[#allocation5 + $0x278] sm:$0xff]
        %v1738 = vld [vmem:[#allocation5 + $0x280] sm:$0xff]
        %v1739 = vld [vmem:[#allocation5 + $0x288] sm:$0xff]
        %v1740 = vld [vmem:[#allocation5 + $0x290] sm:$0xff]
        %v1741 = vld [vmem:[#allocation5 + $0x298] sm:$0xff]
        %v1742 = vld [vmem:[#allocation5 + $0x2a0] sm:$0xff]
        %v1743 = vld [vmem:[#allocation5 + $0x2a8] sm:$0xff]
        %v1744 = vld [vmem:[#allocation5 + $0x2b0] sm:$0xff]
        %v1745 = vld [vmem:[#allocation5 + $0x2b8] sm:$0xff]
        %v1746 = vld [vmem:[#allocation5 + $0x2c0] sm:$0xff]
        %v1747 = vld [vmem:[#allocation5 + $0x2c8] sm:$0xff]
        %v1748 = vld [vmem:[#allocation5 + $0x2d0] sm:$0xff]
        %v1749 = vld [vmem:[#allocation5 + $0x2d8] sm:$0xff]
        %v1750 = vld [vmem:[#allocation5 + $0x2e0] sm:$0xff]
        %v1751 = vld [vmem:[#allocation5 + $0x2e8] sm:$0xff]
        %v1752 = vld [vmem:[#allocation5 + $0x2f0] sm:$0xff]
        %v1753 = vld [vmem:[#allocation5 + $0x2f8] sm:$0xff]
        %v1754 = vld [vmem:[#allocation5 + $0x300] sm:$0xff]
        %v1755 = vld [vmem:[#allocation5 + $0x308] sm:$0xff]
        %v1756 = vld [vmem:[#allocation5 + $0x310] sm:$0xff]
        %v1757 = vld [vmem:[#allocation5 + $0x318] sm:$0xff]
        %v1758 = vld [vmem:[#allocation5 + $0x320] sm:$0xff]
        %v1759 = vld [vmem:[#allocation5 + $0x328] sm:$0xff]
        %v1760 = vld [vmem:[#allocation5 + $0x330] sm:$0xff]
        %v1761 = vld [vmem:[#allocation5 + $0x338] sm:$0xff]
        %v1762 = vld [vmem:[#allocation5 + $0x340] sm:$0xff]
        %v1763 = vld [vmem:[#allocation5 + $0x348] sm:$0xff]
        %v1764 = vld [vmem:[#allocation5 + $0x350] sm:$0xff]
        %v1765 = vld [vmem:[#allocation5 + $0x358] sm:$0xff]
        %v1766 = vld [vmem:[#allocation5 + $0x360] sm:$0xff]
        %v1767 = vld [vmem:[#allocation5 + $0x368] sm:$0xff]
        %v1768 = vld [vmem:[#allocation5 + $0x370] sm:$0xff]
        %v1769 = vld [vmem:[#allocation5 + $0x378] sm:$0xff]
        %v1770 = vld [vmem:[#allocation5 + $0x380] sm:$0xff]
        %v1771 = vld [vmem:[#allocation5 + $0x388] sm:$0xff]
        %v1772 = vld [vmem:[#allocation5 + $0x390] sm:$0xff]
        %v1773 = vld [vmem:[#allocation5 + $0x398] sm:$0xff]
        %v1774 = vld [vmem:[#allocation5 + $0x3a0] sm:$0xff]
        %v1775 = vld [vmem:[#allocation5 + $0x3a8] sm:$0xff]
        %v1776 = vld [vmem:[#allocation5 + $0x3b0] sm:$0xff]
        %v1777 = vld [vmem:[#allocation5 + $0x3b8] sm:$0xff]
        %v1778 = vld [vmem:[#allocation5 + $0x3c0] sm:$0xff]
        %v1779 = vld [vmem:[#allocation5 + $0x3c8] sm:$0xff]
        %v1780 = vld [vmem:[#allocation5 + $0x3d0] sm:$0xff]
        %v1781 = vld [vmem:[#allocation5 + $0x3d8] sm:$0xff]
        %v1782 = vld [vmem:[#allocation5 + $0x3e0] sm:$0xff]
        %v1783 = vld [vmem:[#allocation5 + $0x3e8] sm:$0xff]
        %v1784 = vld [vmem:[#allocation5 + $0x3f0] sm:$0xff]
        %v1785 = vld [vmem:[#allocation5 + $0x3f8] sm:$0xff]
        %1786 = vmatprep.subr.mxu0 %v1723
        %1787 = vmatpush1.msra.mxu0 %v1722
        %1788 = vmatprep.subr.mxu0 %v1725
        %1789 = vmatpush1.msra.mxu0 %v1724
        %1790 = vmatprep.subr.mxu0 %v1727
        %1791 = vmatpush1.msra.mxu0 %v1726
        %1792 = vmatprep.subr.mxu0 %v1729
        %1793 = vmatpush1.msra.mxu0 %v1728
        %1794 = vmatprep.subr.mxu0 %v1731
        %1795 = vmatpush1.msra.mxu0 %v1730
        %1796 = vmatprep.subr.mxu0 %v1733
        %1797 = vmatpush1.msra.mxu0 %v1732
        %1798 = vmatprep.subr.mxu0 %v1735
        %1799 = vmatpush1.msra.mxu0 %v1734
        %1800 = vmatprep.subr.mxu0 %v1737
        %1801 = vmatpush1.msra.mxu0 %v1736
        %1802 = vmatprep.subr.mxu0 %v1739
        %1803 = vmatpush1.msra.mxu0 %v1738
        %1804 = vmatprep.subr.mxu0 %v1741
        %1805 = vmatpush1.msra.mxu0 %v1740
        %1806 = vmatprep.subr.mxu0 %v1743
        %1807 = vmatpush1.msra.mxu0 %v1742
        %1808 = vmatprep.subr.mxu0 %v1745
        %1809 = vmatpush1.msra.mxu0 %v1744
        %1810 = vmatprep.subr.mxu0 %v1747
        %1811 = vmatpush1.msra.mxu0 %v1746
        %1812 = vmatprep.subr.mxu0 %v1749
        %1813 = vmatpush1.msra.mxu0 %v1748
        %1814 = vmatprep.subr.mxu0 %v1751
        %1815 = vmatpush1.msra.mxu0 %v1750
        %1816 = vmatprep.subr.mxu0 %v1753
        %1817 = vmatpush1.msra.mxu0 %v1752
        %1818 = vmatprep.subr.mxu0 %v1755
        %1819 = vmatpush1.msra.mxu0 %v1754
        %1820 = vmatprep.subr.mxu0 %v1757
        %1821 = vmatpush1.msra.mxu0 %v1756
        %1822 = vmatprep.subr.mxu0 %v1759
        %1823 = vmatpush1.msra.mxu0 %v1758
        %1824 = vmatprep.subr.mxu0 %v1761
        %1825 = vmatpush1.msra.mxu0 %v1760
        %1826 = vmatprep.subr.mxu0 %v1763
        %1827 = vmatpush1.msra.mxu0 %v1762
        %1828 = vmatprep.subr.mxu0 %v1765
        %1829 = vmatpush1.msra.mxu0 %v1764
        %1830 = vmatprep.subr.mxu0 %v1767
        %1831 = vmatpush1.msra.mxu0 %v1766
        %1832 = vmatprep.subr.mxu0 %v1769
        %1833 = vmatpush1.msra.mxu0 %v1768
        %1834 = vmatprep.subr.mxu0 %v1771
        %1835 = vmatpush1.msra.mxu0 %v1770
        %1836 = vmatprep.subr.mxu0 %v1773
        %1837 = vmatpush1.msra.mxu0 %v1772
        %1838 = vmatprep.subr.mxu0 %v1775
        %1839 = vmatpush1.msra.mxu0 %v1774
        %1840 = vmatprep.subr.mxu0 %v1777
        %1841 = vmatpush1.msra.mxu0 %v1776
        %1842 = vmatprep.subr.mxu0 %v1779
        %1843 = vmatpush1.msra.mxu0 %v1778
        %1844 = vmatprep.subr.mxu0 %v1781
        %1845 = vmatpush1.msra.mxu0 %v1780
        %1846 = vmatprep.subr.mxu0 %v1783
        %1847 = vmatpush1.msra.mxu0 %v1782
        %1848 = vmatprep.subr.mxu0 %v1785
        %1849 = vmatpush1.msra.mxu0 %v1784
        %1850 = vmatprep.mubr.f32.mxu0 %v1699
        %1851 = vmatmul.mubr.f32.gmra.mrb[0].mxu0 %v1698
        %v1852 = vpop.f32.mrb[0].mxu0
        %v1853 = vadd.f32 0.0, %v1852
        %v1854 = vpop.f32.mrb[0].mxu0
        %v1855 = vadd.f32 0.0, %v1854
        %1856 = vmatprep.mubr.f32.mxu0 %v1701
        %1857 = vmatmul.mubr.f32.gmra.mrb[0].mxu0 %v1700
        %v1858 = vpop.f32.mrb[0].mxu0
        %v1859 = vadd.f32 0.0, %v1858
        %v1860 = vpop.f32.mrb[0].mxu0
        %v1861 = vadd.f32 0.0, %v1860
        %1862 = vmatprep.mubr.f32.mxu0 %v1703
        %1863 = vmatmul.mubr.f32.gmra.mrb[0].mxu0 %v1702
        %v1864 = vpop.f32.mrb[0].mxu0
        %v1865 = vadd.f32 0.0, %v1864
        %v1866 = vpop.f32.mrb[0].mxu0
        %v1867 = vadd.f32 0.0, %v1866
        %1868 = vmatprep.mubr.f32.mxu0 %v1705
        %1869 = vmatmul.mubr.f32.gmra.mrb[0].mxu0 %v1704
        %v1870 = vpop.f32.mrb[0].mxu0
        %v1871 = vadd.f32 0.0, %v1870
        %v1872 = vpop.f32.mrb[0].mxu0
        %v1873 = vadd.f32 0.0, %v1872
        %1874 = vmatprep.mubr.f32.mxu0 %v1707
        %1875 = vmatmul.mubr.f32.gmra.mrb[0].mxu0 %v1706
        %v1876 = vpop.f32.mrb[0].mxu0
        %v1877 = vadd.f32 0.0, %v1876
        %v1878 = vpop.f32.mrb[0].mxu0
        %v1879 = vadd.f32 0.0, %v1878
        %1880 = vmatprep.mubr.f32.mxu0 %v1709
        %1881 = vmatmul.mubr.f32.gmra.mrb[0].mxu0 %v1708
        %v1882 = vpop.f32.mrb[0].mxu0
        %v1883 = vadd.f32 0.0, %v1882
        %v1884 = vpop.f32.mrb[0].mxu0
        %v1885 = vadd.f32 0.0, %v1884
        %1886 = vmatprep.mubr.f32.mxu0 %v1711
        %1887 = vmatmul.mubr.f32.gmra.mrb[0].mxu0 %v1710
        %v1888 = vpop.f32.mrb[0].mxu0
        %v1889 = vadd.f32 0.0, %v1888
        %v1890 = vpop.f32.mrb[0].mxu0
        %v1891 = vadd.f32 0.0, %v1890
        %1892 = vmatprep.mubr.f32.mxu0 %v1713
        %1893 = vmatmul.mubr.f32.gmra.mrb[0].mxu0 %v1712
        %v1894 = vpop.f32.mrb[0].mxu0
        %v1895 = vadd.f32 0.0, %v1894
        %v1896 = vpop.f32.mrb[0].mxu0
        %v1897 = vadd.f32 0.0, %v1896
        %1898 = vmatprep.mubr.f32.mxu0 %v1715
        %1899 = vmatmul.mubr.f32.gmra.mrb[0].mxu0 %v1714
        %v1900 = vpop.f32.mrb[0].mxu0
        %v1901 = vadd.f32 0.0, %v1900
        %v1902 = vpop.f32.mrb[0].mxu0
        %v1903 = vadd.f32 0.0, %v1902
        %1904 = vmatprep.mubr.f32.mxu0 %v1717
        %1905 = vmatmul.mubr.f32.gmra.mrb[0].mxu0 %v1716
        %v1906 = vpop.f32.mrb[0].mxu0
        %v1907 = vadd.f32 0.0, %v1906
        %v1908 = vpop.f32.mrb[0].mxu0
        %v1909 = vadd.f32 0.0, %v1908
        %1910 = vmatprep.mubr.f32.mxu0 %v1719
        %1911 = vmatmul.mubr.f32.gmra.mrb[0].mxu0 %v1718
        %v1912 = vpop.f32.mrb[0].mxu0
        %v1913 = vadd.f32 0.0, %v1912
        %v1914 = vpop.f32.mrb[0].mxu0
        %v1915 = vadd.f32 0.0, %v1914
        %1916 = vmatprep.mubr.f32.mxu0 %v1721
        %1917 = vmatmul.mubr.f32.gmra.mrb[0].mxu0 %v1720
        %v1918 = vpop.f32.mrb[0].mxu0
        %v1919 = vadd.f32 0.0, %v1918
        %v1920 = vpop.f32.mrb[0].mxu0
        %v1921 = vadd.f32 0.0, %v1920
        %1922 = vdwg.mxu0
        %1923 = vmatprep.subr.mxu0 %v1326
        %1924 = vmatpush1.msra.mxu0 %v1325
        %1925 = vmatprep.subr.mxu0 %v1328
        %1926 = vmatpush1.msra.mxu0 %v1327
        %1927 = vmatprep.subr.mxu0 %v1330
        %1928 = vmatpush1.msra.mxu0 %v1329
        %1929 = vmatprep.subr.mxu0 %v1332
        %1930 = vmatpush1.msra.mxu0 %v1331
        %1931 = vmatprep.subr.mxu0 %v1334
        %1932 = vmatpush1.msra.mxu0 %v1333
        %1933 = vmatprep.subr.mxu0 %v1336
        %1934 = vmatpush1.msra.mxu0 %v1335
        %1935 = vmatprep.subr.mxu0 %v1338
        %1936 = vmatpush1.msra.mxu0 %v1337
        %1937 = vmatprep.subr.mxu0 %v1340
        %1938 = vmatpush1.msra.mxu0 %v1339
        %1939 = vmatprep.subr.mxu0 %v1342
        %1940 = vmatpush1.msra.mxu0 %v1341
        %1941 = vmatprep.subr.mxu0 %v1344
        %1942 = vmatpush1.msra.mxu0 %v1343
        %1943 = vmatprep.subr.mxu0 %v1346
        %1944 = vmatpush1.msra.mxu0 %v1345
        %1945 = vmatprep.subr.mxu0 %v1348
        %1946 = vmatpush1.msra.mxu0 %v1347
        %1947 = vmatprep.subr.mxu0 %v1350
        %1948 = vmatpush1.msra.mxu0 %v1349
        %1949 = vmatprep.subr.mxu0 %v1352
        %1950 = vmatpush1.msra.mxu0 %v1351
        %1951 = vmatprep.subr.mxu0 %v1354
        %1952 = vmatpush1.msra.mxu0 %v1353
        %1953 = vmatprep.subr.mxu0 %v1356
        %1954 = vmatpush1.msra.mxu0 %v1355
        %1955 = vmatprep.subr.mxu0 %v1358
        %1956 = vmatpush1.msra.mxu0 %v1357
        %1957 = vmatprep.subr.mxu0 %v1360
        %1958 = vmatpush1.msra.mxu0 %v1359
        %1959 = vmatprep.subr.mxu0 %v1362
        %1960 = vmatpush1.msra.mxu0 %v1361
        %1961 = vmatprep.subr.mxu0 %v1364
        %1962 = vmatpush1.msra.mxu0 %v1363
        %1963 = vmatprep.subr.mxu0 %v1366
        %1964 = vmatpush1.msra.mxu0 %v1365
        %1965 = vmatprep.subr.mxu0 %v1368
        %1966 = vmatpush1.msra.mxu0 %v1367
        %1967 = vmatprep.subr.mxu0 %v1370
        %1968 = vmatpush1.msra.mxu0 %v1369
        %1969 = vmatprep.subr.mxu0 %v1372
        %1970 = vmatpush1.msra.mxu0 %v1371
        %1971 = vmatprep.subr.mxu0 %v1374
        %1972 = vmatpush1.msra.mxu0 %v1373
        %1973 = vmatprep.subr.mxu0 %v1376
        %1974 = vmatpush1.msra.mxu0 %v1375
        %1975 = vmatprep.subr.mxu0 %v1378
        %1976 = vmatpush1.msra.mxu0 %v1377
        %1977 = vmatprep.subr.mxu0 %v1380
        %1978 = vmatpush1.msra.mxu0 %v1379
        %1979 = vmatprep.subr.mxu0 %v1382
        %1980 = vmatpush1.msra.mxu0 %v1381
        %1981 = vmatprep.subr.mxu0 %v1384
        %1982 = vmatpush1.msra.mxu0 %v1383
        %1983 = vmatprep.subr.mxu0 %v1386
        %1984 = vmatpush1.msra.mxu0 %v1385
        %1985 = vmatprep.subr.mxu0 %v1388
        %1986 = vmatpush1.msra.mxu0 %v1387
        %1987 = vmatprep.mubr.f32.mxu0 %v1302
        %1988 = vmatmul.mubr.f32.gmra.mrb[0].mxu0 %v1301
        %v1989 = vpop.f32.mrb[0].mxu0
        %v1990 = vadd.f32 %v1853, %v1989
        %v1991 = vpop.f32.mrb[0].mxu0
        %v1992 = vadd.f32 %v1855, %v1991
        %1993 = vmatprep.mubr.f32.mxu0 %v1304
        %1994 = vmatmul.mubr.f32.gmra.mrb[0].mxu0 %v1303
        %v1995 = vpop.f32.mrb[0].mxu0
        %v1996 = vadd.f32 %v1859, %v1995
        %v1997 = vpop.f32.mrb[0].mxu0
        %v1998 = vadd.f32 %v1861, %v1997
        %1999 = vmatprep.mubr.f32.mxu0 %v1306
        %2000 = vmatmul.mubr.f32.gmra.mrb[0].mxu0 %v1305
        %v2001 = vpop.f32.mrb[0].mxu0
        %v2002 = vadd.f32 %v1865, %v2001
        %v2003 = vpop.f32.mrb[0].mxu0
        %v2004 = vadd.f32 %v1867, %v2003
        %2005 = vmatprep.mubr.f32.mxu0 %v1308
        %2006 = vmatmul.mubr.f32.gmra.mrb[0].mxu0 %v1307
        %v2007 = vpop.f32.mrb[0].mxu0
        %v2008 = vadd.f32 %v1871, %v2007
        %v2009 = vpop.f32.mrb[0].mxu0
        %v2010 = vadd.f32 %v1873, %v2009
        %2011 = vmatprep.mubr.f32.mxu0 %v1310
        %2012 = vmatmul.mubr.f32.gmra.mrb[0].mxu0 %v1309
        %v2013 = vpop.f32.mrb[0].mxu0
        %v2014 = vadd.f32 %v1877, %v2013
        %v2015 = vpop.f32.mrb[0].mxu0
        %v2016 = vadd.f32 %v1879, %v2015
        %2017 = vmatprep.mubr.f32.mxu0 %v1312
        %2018 = vmatmul.mubr.f32.gmra.mrb[0].mxu0 %v1311
        %v2019 = vpop.f32.mrb[0].mxu0
        %v2020 = vadd.f32 %v1883, %v2019
        %v2021 = vpop.f32.mrb[0].mxu0
        %v2022 = vadd.f32 %v1885, %v2021
        %2023 = vmatprep.mubr.f32.mxu0 %v1314
        %2024 = vmatmul.mubr.f32.gmra.mrb[0].mxu0 %v1313
        %v2025 = vpop.f32.mrb[0].mxu0
        %v2026 = vadd.f32 %v1889, %v2025
        %v2027 = vpop.f32.mrb[0].mxu0
        %v2028 = vadd.f32 %v1891, %v2027
        %2029 = vmatprep.mubr.f32.mxu0 %v1316
        %2030 = vmatmul.mubr.f32.gmra.mrb[0].mxu0 %v1315
        %v2031 = vpop.f32.mrb[0].mxu0
        %v2032 = vadd.f32 %v1895, %v2031
        %v2033 = vpop.f32.mrb[0].mxu0
        %v2034 = vadd.f32 %v1897, %v2033
        %2035 = vmatprep.mubr.f32.mxu0 %v1318
        %2036 = vmatmul.mubr.f32.gmra.mrb[0].mxu0 %v1317
        %v2037 = vpop.f32.mrb[0].mxu0
        %v2038 = vadd.f32 %v1901, %v2037
        %v2039 = vpop.f32.mrb[0].mxu0
        %v2040 = vadd.f32 %v1903, %v2039
        %2041 = vmatprep.mubr.f32.mxu0 %v1320
        %2042 = vmatmul.mubr.f32.gmra.mrb[0].mxu0 %v1319
        %v2043 = vpop.f32.mrb[0].mxu0
        %v2044 = vadd.f32 %v1907, %v2043
        %v2045 = vpop.f32.mrb[0].mxu0
        %v2046 = vadd.f32 %v1909, %v2045
        %2047 = vmatprep.mubr.f32.mxu0 %v1322
        %2048 = vmatmul.mubr.f32.gmra.mrb[0].mxu0 %v1321
        %v2049 = vpop.f32.mrb[0].mxu0
        %v2050 = vadd.f32 %v1913, %v2049
        %v2051 = vpop.f32.mrb[0].mxu0
        %v2052 = vadd.f32 %v1915, %v2051
        %2053 = vmatprep.mubr.f32.mxu0 %v1324
        %2054 = vmatmul.mubr.f32.gmra.mrb[0].mxu0 %v1323
        %v2055 = vpop.f32.mrb[0].mxu0
        %v2056 = vadd.f32 %v1919, %v2055
        %v2057 = vpop.f32.mrb[0].mxu0
        %v2058 = vadd.f32 %v1921, %v2057
        %2059 = vdwg.mxu0
        %v2060 = vld [vmem:[#allocation2 + $0x20] sm:$0xff]
        %v2061 = vld [vmem:[#allocation2 + $0x28] sm:$0xff]
        %v2062 = vld [vmem:[#allocation2 + $0x60] sm:$0xff]
        %v2063 = vld [vmem:[#allocation2 + $0x68] sm:$0xff]
        %v2064 = vld [vmem:[#allocation2 + $0xa0] sm:$0xff]
        %v2065 = vld [vmem:[#allocation2 + $0xa8] sm:$0xff]
        %v2066 = vld [vmem:[#allocation2 + $0xe0] sm:$0xff]
        %v2067 = vld [vmem:[#allocation2 + $0xe8] sm:$0xff]
        %v2068 = vld [vmem:[#allocation2 + $0x120] sm:$0xff]
        %v2069 = vld [vmem:[#allocation2 + $0x128] sm:$0xff]
        %v2070 = vld [vmem:[#allocation2 + $0x160] sm:$0xff]
        %v2071 = vld [vmem:[#allocation2 + $0x168] sm:$0xff]
        %v2072 = vld [vmem:[#allocation2 + $0x1a0] sm:$0xff]
        %v2073 = vld [vmem:[#allocation2 + $0x1a8] sm:$0xff]
        %v2074 = vld [vmem:[#allocation2 + $0x1e0] sm:$0xff]
        %v2075 = vld [vmem:[#allocation2 + $0x1e8] sm:$0xff]
        %v2076 = vld [vmem:[#allocation2 + $0x220] sm:$0xff]
        %v2077 = vld [vmem:[#allocation2 + $0x228] sm:$0xff]
        %v2078 = vld [vmem:[#allocation2 + $0x260] sm:$0xff]
        %v2079 = vld [vmem:[#allocation2 + $0x268] sm:$0xff]
        %v2080 = vld [vmem:[#allocation2 + $0x2a0] sm:$0xff]
        %v2081 = vld [vmem:[#allocation2 + $0x2a8] sm:$0xff]
        %v2082 = vld [vmem:[#allocation2 + $0x2e0] sm:$0xff]
        %v2083 = vld [vmem:[#allocation2 + $0x2e8] sm:$0xff]
        %v2084 = vld [vmem:[#allocation2 + $0x320] sm:$0xff]
        %v2085 = vld [vmem:[#allocation2 + $0x328] sm:$0xff]
        %v2086 = vld [vmem:[#allocation2 + $0x360] sm:$0xff]
        %v2087 = vld [vmem:[#allocation2 + $0x368] sm:$0xff]
        %v2088 = vld [vmem:[#allocation2 + $0x3a0] sm:$0xff]
        %v2089 = vld [vmem:[#allocation2 + $0x3a8] sm:$0xff]
        %v2090 = vld [vmem:[#allocation2 + $0x3e0] sm:$0xff]
        %v2091 = vld [vmem:[#allocation2 + $0x3e8] sm:$0xff]
        %v2092 = vld [vmem:[#allocation2 + $0x420] sm:$0xff]
        %v2093 = vld [vmem:[#allocation2 + $0x428] sm:$0xff]
        %v2094 = vld [vmem:[#allocation2 + $0x460] sm:$0xff]
        %v2095 = vld [vmem:[#allocation2 + $0x468] sm:$0xff]
        %v2096 = vld [vmem:[#allocation2 + $0x4a0] sm:$0xff]
        %v2097 = vld [vmem:[#allocation2 + $0x4a8] sm:$0xff]
        %v2098 = vld [vmem:[#allocation2 + $0x4e0] sm:$0xff]
        %v2099 = vld [vmem:[#allocation2 + $0x4e8] sm:$0xff]
        %v2100 = vld [vmem:[#allocation2 + $0x520] sm:$0xff]
        %v2101 = vld [vmem:[#allocation2 + $0x528] sm:$0xff]
        %v2102 = vld [vmem:[#allocation2 + $0x560] sm:$0xff]
        %v2103 = vld [vmem:[#allocation2 + $0x568] sm:$0xff]
        %v2104 = vld [vmem:[#allocation2 + $0x5a0] sm:$0xff]
        %v2105 = vld [vmem:[#allocation2 + $0x5a8] sm:$0xff]
        %v2106 = vld [vmem:[#allocation2 + $0x5e0] sm:$0xff]
        %v2107 = vld [vmem:[#allocation2 + $0x5e8] sm:$0xff]
        %v2108 = vld [vmem:[#allocation2 + $0x620] sm:$0xff]
        %v2109 = vld [vmem:[#allocation2 + $0x628] sm:$0xff]
        %v2110 = vld [vmem:[#allocation2 + $0x660] sm:$0xff]
        %v2111 = vld [vmem:[#allocation2 + $0x668] sm:$0xff]
        %v2112 = vld [vmem:[#allocation2 + $0x6a0] sm:$0xff]
        %v2113 = vld [vmem:[#allocation2 + $0x6a8] sm:$0xff]
        %v2114 = vld [vmem:[#allocation2 + $0x6e0] sm:$0xff]
        %v2115 = vld [vmem:[#allocation2 + $0x6e8] sm:$0xff]
        %v2116 = vld [vmem:[#allocation2 + $0x720] sm:$0xff]
        %v2117 = vld [vmem:[#allocation2 + $0x728] sm:$0xff]
        %v2118 = vld [vmem:[#allocation2 + $0x760] sm:$0xff]
        %v2119 = vld [vmem:[#allocation2 + $0x768] sm:$0xff]
        %v2120 = vld [vmem:[#allocation2 + $0x7a0] sm:$0xff]
        %v2121 = vld [vmem:[#allocation2 + $0x7a8] sm:$0xff]
        %v2122 = vld [vmem:[#allocation2 + $0x7e0] sm:$0xff]
        %v2123 = vld [vmem:[#allocation2 + $0x7e8] sm:$0xff]
        %v2124 = vld [vmem:[%s7 + $0x4] sm:$0x3]
        %v2126 = vlaneseq
        %v2127 = vshrl.u32 %v2126, 7
        %v2128 = vsub.s32 0, %v2127
        %v2129 = vrot.slane %v2124, %v2128
        %v2130 = vlaneseq
        %v2131 = vshrl.u32 %v2130, 7
        %v2132 = vsub.s32 1, %v2131
        %v2133 = vrot.slane %v2124, %v2132
        %2136 = vmatprep.subr.mxu0 %v2061
        %2137 = vmatpush1.msra.mxu0 %v2060
        %2138 = vmatprep.subr.mxu0 %v2063
        %2139 = vmatpush1.msra.mxu0 %v2062
        %2140 = vmatprep.subr.mxu0 %v2065
        %2141 = vmatpush1.msra.mxu0 %v2064
        %2142 = vmatprep.subr.mxu0 %v2067
        %2143 = vmatpush1.msra.mxu0 %v2066
        %2144 = vmatprep.subr.mxu0 %v2069
        %2145 = vmatpush1.msra.mxu0 %v2068
        %2146 = vmatprep.subr.mxu0 %v2071
        %2147 = vmatpush1.msra.mxu0 %v2070
        %2148 = vmatprep.subr.mxu0 %v2073
        %2149 = vmatpush1.msra.mxu0 %v2072
        %2150 = vmatprep.subr.mxu0 %v2075
        %2151 = vmatpush1.msra.mxu0 %v2074
        %2152 = vmatprep.subr.mxu0 %v2077
        %2153 = vmatpush1.msra.mxu0 %v2076
        %2154 = vmatprep.subr.mxu0 %v2079
        %2155 = vmatpush1.msra.mxu0 %v2078
        %2156 = vmatprep.subr.mxu0 %v2081
        %2157 = vmatpush1.msra.mxu0 %v2080
        %2158 = vmatprep.subr.mxu0 %v2083
        %2159 = vmatpush1.msra.mxu0 %v2082
        %2160 = vmatprep.subr.mxu0 %v2085
        %2161 = vmatpush1.msra.mxu0 %v2084
        %2162 = vmatprep.subr.mxu0 %v2087
        %2163 = vmatpush1.msra.mxu0 %v2086
        %2164 = vmatprep.subr.mxu0 %v2089
        %2165 = vmatpush1.msra.mxu0 %v2088
        %2166 = vmatprep.subr.mxu0 %v2091
        %2167 = vmatpush1.msra.mxu0 %v2090
        %2168 = vmatprep.subr.mxu0 %v2093
        %2169 = vmatpush1.msra.mxu0 %v2092
        %2170 = vmatprep.subr.mxu0 %v2095
        %2171 = vmatpush1.msra.mxu0 %v2094
        %2172 = vmatprep.subr.mxu0 %v2097
        %2173 = vmatpush1.msra.mxu0 %v2096
        %2174 = vmatprep.subr.mxu0 %v2099
        %2175 = vmatpush1.msra.mxu0 %v2098
        %2176 = vmatprep.subr.mxu0 %v2101
        %2177 = vmatpush1.msra.mxu0 %v2100
        %2178 = vmatprep.subr.mxu0 %v2103
        %2179 = vmatpush1.msra.mxu0 %v2102
        %2180 = vmatprep.subr.mxu0 %v2105
        %2181 = vmatpush1.msra.mxu0 %v2104
        %2182 = vmatprep.subr.mxu0 %v2107
        %2183 = vmatpush1.msra.mxu0 %v2106
        %2184 = vmatprep.subr.mxu0 %v2109
        %2185 = vmatpush1.msra.mxu0 %v2108
        %2186 = vmatprep.subr.mxu0 %v2111
        %2187 = vmatpush1.msra.mxu0 %v2110
        %2188 = vmatprep.subr.mxu0 %v2113
        %2189 = vmatpush1.msra.mxu0 %v2112
        %2190 = vmatprep.subr.mxu0 %v2115
        %2191 = vmatpush1.msra.mxu0 %v2114
        %2192 = vmatprep.subr.mxu0 %v2117
        %2193 = vmatpush1.msra.mxu0 %v2116
        %2194 = vmatprep.subr.mxu0 %v2119
        %2195 = vmatpush1.msra.mxu0 %v2118
        %2196 = vmatprep.subr.mxu0 %v2121
        %2197 = vmatpush1.msra.mxu0 %v2120
        %2198 = vmatprep.subr.mxu0 %v2123
        %2199 = vmatpush1.msra.mxu0 %v2122
        %2200 = vmatprep.mubr.f32.mxu0 %v969
        %2201 = vmatmul.mubr.f32.gmra.mrb[0].mxu0 %v968
        %v2202 = vpop.f32.mrb[0].mxu0
        %v2203 = vadd.f32 %v2129, %v2202
        %v2204 = vpop.f32.mrb[0].mxu0
        %v2205 = vadd.f32 %v2133, %v2204
        %2206 = vmatprep.mubr.f32.mxu0 %v971
        %2207 = vmatmul.mubr.f32.gmra.mrb[0].mxu0 %v970
        %v2208 = vpop.f32.mrb[0].mxu0
        %v2209 = vadd.f32 %v2129, %v2208
        %v2210 = vpop.f32.mrb[0].mxu0
        %v2211 = vadd.f32 %v2133, %v2210
        %2212 = vmatprep.mubr.f32.mxu0 %v973
        %2213 = vmatmul.mubr.f32.gmra.mrb[0].mxu0 %v972
        %v2214 = vpop.f32.mrb[0].mxu0
        %v2215 = vadd.f32 %v2129, %v2214
        %v2216 = vpop.f32.mrb[0].mxu0
        %v2217 = vadd.f32 %v2133, %v2216
        %2218 = vmatprep.mubr.f32.mxu0 %v975
        %2219 = vmatmul.mubr.f32.gmra.mrb[0].mxu0 %v974
        %v2220 = vpop.f32.mrb[0].mxu0
        %v2221 = vadd.f32 %v2129, %v2220
        %v2222 = vpop.f32.mrb[0].mxu0
        %v2223 = vadd.f32 %v2133, %v2222
        %2224 = vmatprep.mubr.f32.mxu0 %v977
        %2225 = vmatmul.mubr.f32.gmra.mrb[0].mxu0 %v976
        %v2226 = vpop.f32.mrb[0].mxu0
        %v2227 = vadd.f32 %v2129, %v2226
        %v2228 = vpop.f32.mrb[0].mxu0
        %v2229 = vadd.f32 %v2133, %v2228
        %2230 = vmatprep.mubr.f32.mxu0 %v979
        %2231 = vmatmul.mubr.f32.gmra.mrb[0].mxu0 %v978
        %v2232 = vpop.f32.mrb[0].mxu0
        %v2233 = vadd.f32 %v2129, %v2232
        %v2234 = vpop.f32.mrb[0].mxu0
        %v2235 = vadd.f32 %v2133, %v2234
        %2236 = vmatprep.mubr.f32.mxu0 %v981
        %2237 = vmatmul.mubr.f32.gmra.mrb[0].mxu0 %v980
        %v2238 = vpop.f32.mrb[0].mxu0
        %v2239 = vadd.f32 %v2129, %v2238
        %v2240 = vpop.f32.mrb[0].mxu0
        %v2241 = vadd.f32 %v2133, %v2240
        %2242 = vmatprep.mubr.f32.mxu0 %v983
        %2243 = vmatmul.mubr.f32.gmra.mrb[0].mxu0 %v982
        %v2244 = vpop.f32.mrb[0].mxu0
        %v2245 = vadd.f32 %v2129, %v2244
        %v2246 = vpop.f32.mrb[0].mxu0
        %v2247 = vadd.f32 %v2133, %v2246
        %2248 = vmatprep.mubr.f32.mxu0 %v985
        %2249 = vmatmul.mubr.f32.gmra.mrb[0].mxu0 %v984
        %v2250 = vpop.f32.mrb[0].mxu0
        %v2251 = vadd.f32 %v2129, %v2250
        %v2252 = vpop.f32.mrb[0].mxu0
        %v2253 = vadd.f32 %v2133, %v2252
        %2254 = vmatprep.mubr.f32.mxu0 %v987
        %2255 = vmatmul.mubr.f32.gmra.mrb[0].mxu0 %v986
        %v2256 = vpop.f32.mrb[0].mxu0
        %v2257 = vadd.f32 %v2129, %v2256
        %v2258 = vpop.f32.mrb[0].mxu0
        %v2259 = vadd.f32 %v2133, %v2258
        %2260 = vmatprep.mubr.f32.mxu0 %v989
        %2261 = vmatmul.mubr.f32.gmra.mrb[0].mxu0 %v988
        %v2262 = vpop.f32.mrb[0].mxu0
        %v2263 = vadd.f32 %v2129, %v2262
        %v2264 = vpop.f32.mrb[0].mxu0
        %v2265 = vadd.f32 %v2133, %v2264
        %2266 = vmatprep.mubr.f32.mxu0 %v991
        %2267 = vmatmul.mubr.f32.gmra.mrb[0].mxu0 %v990
        %v2268 = vpop.f32.mrb[0].mxu0
        %v2269 = vadd.f32 %v2129, %v2268
        %v2270 = vpop.f32.mrb[0].mxu0
        %v2271 = vadd.f32 %v2133, %v2270
        %2272 = vdwg.mxu0
        %v2273 = vmul.f32 %v2203, 0.5
        %v2274 = vmul.f32 %v2205, 0.5
        %v2275 = vmul.f32 %v2209, 0.5
        %v2276 = vmul.f32 %v2211, 0.5
        %v2277 = vmul.f32 %v2215, 0.5
        %v2278 = vmul.f32 %v2217, 0.5
        %v2279 = vmul.f32 %v2221, 0.5
        %v2280 = vmul.f32 %v2223, 0.5
        %v2281 = vmul.f32 %v2227, 0.5
        %v2282 = vmul.f32 %v2229, 0.5
        %v2283 = vmul.f32 %v2233, 0.5
        %v2284 = vmul.f32 %v2235, 0.5
        %v2285 = vmul.f32 %v2239, 0.5
        %v2286 = vmul.f32 %v2241, 0.5
        %v2287 = vmul.f32 %v2245, 0.5
        %v2288 = vmul.f32 %v2247, 0.5
        %v2289 = vmul.f32 %v2251, 0.5
        %v2290 = vmul.f32 %v2253, 0.5
        %v2291 = vmul.f32 %v2257, 0.5
        %v2292 = vmul.f32 %v2259, 0.5
        %v2293 = vmul.f32 %v2263, 0.5
        %v2294 = vmul.f32 %v2265, 0.5
        %v2295 = vmul.f32 %v2269, 0.5
        %v2296 = vmul.f32 %v2271, 0.5
        %v2297 = vmul.f32 %v2203, 0.70710677
        %v2298 = vmul.f32 %v2205, 0.70710677
        %v2299 = vmul.f32 %v2209, 0.70710677
        %v2300 = vmul.f32 %v2211, 0.70710677
        %v2301 = vmul.f32 %v2215, 0.70710677
        %v2302 = vmul.f32 %v2217, 0.70710677
        %v2303 = vmul.f32 %v2221, 0.70710677
        %v2304 = vmul.f32 %v2223, 0.70710677
        %v2305 = vmul.f32 %v2227, 0.70710677
        %v2306 = vmul.f32 %v2229, 0.70710677
        %v2307 = vmul.f32 %v2233, 0.70710677
        %v2308 = vmul.f32 %v2235, 0.70710677
        %v2309 = vmul.f32 %v2239, 0.70710677
        %v2310 = vmul.f32 %v2241, 0.70710677
        %v2311 = vmul.f32 %v2245, 0.70710677
        %v2312 = vmul.f32 %v2247, 0.70710677
        %v2313 = vmul.f32 %v2251, 0.70710677
        %v2314 = vmul.f32 %v2253, 0.70710677
        %v2315 = vmul.f32 %v2257, 0.70710677
        %v2316 = vmul.f32 %v2259, 0.70710677
        %v2317 = vmul.f32 %v2263, 0.70710677
        %v2318 = vmul.f32 %v2265, 0.70710677
        %v2319 = vmul.f32 %v2269, 0.70710677
        %v2320 = vmul.f32 %v2271, 0.70710677
        %v2321 = verf.f32.pop %v2297
        %v2322 = verf.f32.pop %v2298
        %v2323 = verf.f32.pop %v2299
        %v2324 = verf.f32.pop %v2300
        %v2325 = verf.f32.pop %v2301
        %v2326 = verf.f32.pop %v2302
        %v2327 = verf.f32.pop %v2303
        %v2328 = verf.f32.pop %v2304
        %v2329 = verf.f32.pop %v2305
        %v2330 = verf.f32.pop %v2306
        %v2331 = verf.f32.pop %v2307
        %v2332 = verf.f32.pop %v2308
        %v2333 = verf.f32.pop %v2309
        %v2334 = verf.f32.pop %v2310
        %v2335 = verf.f32.pop %v2311
        %v2336 = verf.f32.pop %v2312
        %v2337 = verf.f32.pop %v2313
        %v2338 = verf.f32.pop %v2314
        %v2339 = verf.f32.pop %v2315
        %v2340 = verf.f32.pop %v2316
        %v2341 = verf.f32.pop %v2317
        %v2342 = verf.f32.pop %v2318
        %v2343 = verf.f32.pop %v2319
        %v2344 = verf.f32.pop %v2320
        %v2345 = vadd.f32 %v2321, 1.0
        %v2346 = vadd.f32 %v2322, 1.0
        %v2347 = vadd.f32 %v2323, 1.0
        %v2348 = vadd.f32 %v2324, 1.0
        %v2349 = vadd.f32 %v2325, 1.0
        %v2350 = vadd.f32 %v2326, 1.0
        %v2351 = vadd.f32 %v2327, 1.0
        %v2352 = vadd.f32 %v2328, 1.0
        %v2353 = vadd.f32 %v2329, 1.0
        %v2354 = vadd.f32 %v2330, 1.0
        %v2355 = vadd.f32 %v2331, 1.0
        %v2356 = vadd.f32 %v2332, 1.0
        %v2357 = vadd.f32 %v2333, 1.0
        %v2358 = vadd.f32 %v2334, 1.0
        %v2359 = vadd.f32 %v2335, 1.0
        %v2360 = vadd.f32 %v2336, 1.0
        %v2361 = vadd.f32 %v2337, 1.0
        %v2362 = vadd.f32 %v2338, 1.0
        %v2363 = vadd.f32 %v2339, 1.0
        %v2364 = vadd.f32 %v2340, 1.0
        %v2365 = vadd.f32 %v2341, 1.0
        %v2366 = vadd.f32 %v2342, 1.0
        %v2367 = vadd.f32 %v2343, 1.0
        %v2368 = vadd.f32 %v2344, 1.0
        %v2369 = vmul.f32 %v2273, %v2345
        %v2370 = vmul.f32 %v2274, %v2346
        %v2371 = vmul.f32 %v2275, %v2347
        %v2372 = vmul.f32 %v2276, %v2348
        %v2373 = vmul.f32 %v2277, %v2349
        %v2374 = vmul.f32 %v2278, %v2350
        %v2375 = vmul.f32 %v2279, %v2351
        %v2376 = vmul.f32 %v2280, %v2352
        %v2377 = vmul.f32 %v2281, %v2353
        %v2378 = vmul.f32 %v2282, %v2354
        %v2379 = vmul.f32 %v2283, %v2355
        %v2380 = vmul.f32 %v2284, %v2356
        %v2381 = vmul.f32 %v2285, %v2357
        %v2382 = vmul.f32 %v2286, %v2358
        %v2383 = vmul.f32 %v2287, %v2359
        %v2384 = vmul.f32 %v2288, %v2360
        %v2385 = vmul.f32 %v2289, %v2361
        %v2386 = vmul.f32 %v2290, %v2362
        %v2387 = vmul.f32 %v2291, %v2363
        %v2388 = vmul.f32 %v2292, %v2364
        %v2389 = vmul.f32 %v2293, %v2365
        %v2390 = vmul.f32 %v2294, %v2366
        %v2391 = vmul.f32 %v2295, %v2367
        %v2392 = vmul.f32 %v2296, %v2368
        %v2393 = vld [vmem:[#allocation5 + $0x400] sm:$0xff]
        %v2394 = vld [vmem:[#allocation5 + $0x408] sm:$0xff]
        %v2395 = vld [vmem:[#allocation5 + $0x410] sm:$0xff]
        %v2396 = vld [vmem:[#allocation5 + $0x418] sm:$0xff]
        %v2397 = vld [vmem:[#allocation5 + $0x420] sm:$0xff]
        %v2398 = vld [vmem:[#allocation5 + $0x428] sm:$0xff]
        %v2399 = vld [vmem:[#allocation5 + $0x430] sm:$0xff]
        %v2400 = vld [vmem:[#allocation5 + $0x438] sm:$0xff]
        %v2401 = vld [vmem:[#allocation5 + $0x440] sm:$0xff]
        %v2402 = vld [vmem:[#allocation5 + $0x448] sm:$0xff]
        %v2403 = vld [vmem:[#allocation5 + $0x450] sm:$0xff]
        %v2404 = vld [vmem:[#allocation5 + $0x458] sm:$0xff]
        %v2405 = vld [vmem:[#allocation5 + $0x460] sm:$0xff]
        %v2406 = vld [vmem:[#allocation5 + $0x468] sm:$0xff]
        %v2407 = vld [vmem:[#allocation5 + $0x470] sm:$0xff]
        %v2408 = vld [vmem:[#allocation5 + $0x478] sm:$0xff]
        %v2409 = vld [vmem:[#allocation5 + $0x480] sm:$0xff]
        %v2410 = vld [vmem:[#allocation5 + $0x488] sm:$0xff]
        %v2411 = vld [vmem:[#allocation5 + $0x490] sm:$0xff]
        %v2412 = vld [vmem:[#allocation5 + $0x498] sm:$0xff]
        %v2413 = vld [vmem:[#allocation5 + $0x4a0] sm:$0xff]
        %v2414 = vld [vmem:[#allocation5 + $0x4a8] sm:$0xff]
        %v2415 = vld [vmem:[#allocation5 + $0x4b0] sm:$0xff]
        %v2416 = vld [vmem:[#allocation5 + $0x4b8] sm:$0xff]
        %v2417 = vld [vmem:[#allocation5 + $0x4c0] sm:$0xff]
        %v2418 = vld [vmem:[#allocation5 + $0x4c8] sm:$0xff]
        %v2419 = vld [vmem:[#allocation5 + $0x4d0] sm:$0xff]
        %v2420 = vld [vmem:[#allocation5 + $0x4d8] sm:$0xff]
        %v2421 = vld [vmem:[#allocation5 + $0x4e0] sm:$0xff]
        %v2422 = vld [vmem:[#allocation5 + $0x4e8] sm:$0xff]
        %v2423 = vld [vmem:[#allocation5 + $0x4f0] sm:$0xff]
        %v2424 = vld [vmem:[#allocation5 + $0x4f8] sm:$0xff]
        %v2425 = vld [vmem:[#allocation5 + $0x500] sm:$0xff]
        %v2426 = vld [vmem:[#allocation5 + $0x508] sm:$0xff]
        %v2427 = vld [vmem:[#allocation5 + $0x510] sm:$0xff]
        %v2428 = vld [vmem:[#allocation5 + $0x518] sm:$0xff]
        %v2429 = vld [vmem:[#allocation5 + $0x520] sm:$0xff]
        %v2430 = vld [vmem:[#allocation5 + $0x528] sm:$0xff]
        %v2431 = vld [vmem:[#allocation5 + $0x530] sm:$0xff]
        %v2432 = vld [vmem:[#allocation5 + $0x538] sm:$0xff]
        %v2433 = vld [vmem:[#allocation5 + $0x540] sm:$0xff]
        %v2434 = vld [vmem:[#allocation5 + $0x548] sm:$0xff]
        %v2435 = vld [vmem:[#allocation5 + $0x550] sm:$0xff]
        %v2436 = vld [vmem:[#allocation5 + $0x558] sm:$0xff]
        %v2437 = vld [vmem:[#allocation5 + $0x560] sm:$0xff]
        %v2438 = vld [vmem:[#allocation5 + $0x568] sm:$0xff]
        %v2439 = vld [vmem:[#allocation5 + $0x570] sm:$0xff]
        %v2440 = vld [vmem:[#allocation5 + $0x578] sm:$0xff]
        %v2441 = vld [vmem:[#allocation5 + $0x580] sm:$0xff]
        %v2442 = vld [vmem:[#allocation5 + $0x588] sm:$0xff]
        %v2443 = vld [vmem:[#allocation5 + $0x590] sm:$0xff]
        %v2444 = vld [vmem:[#allocation5 + $0x598] sm:$0xff]
        %v2445 = vld [vmem:[#allocation5 + $0x5a0] sm:$0xff]
        %v2446 = vld [vmem:[#allocation5 + $0x5a8] sm:$0xff]
        %v2447 = vld [vmem:[#allocation5 + $0x5b0] sm:$0xff]
        %v2448 = vld [vmem:[#allocation5 + $0x5b8] sm:$0xff]
        %v2449 = vld [vmem:[#allocation5 + $0x5c0] sm:$0xff]
        %v2450 = vld [vmem:[#allocation5 + $0x5c8] sm:$0xff]
        %v2451 = vld [vmem:[#allocation5 + $0x5d0] sm:$0xff]
        %v2452 = vld [vmem:[#allocation5 + $0x5d8] sm:$0xff]
        %v2453 = vld [vmem:[#allocation5 + $0x5e0] sm:$0xff]
        %v2454 = vld [vmem:[#allocation5 + $0x5e8] sm:$0xff]
        %v2455 = vld [vmem:[#allocation5 + $0x5f0] sm:$0xff]
        %v2456 = vld [vmem:[#allocation5 + $0x5f8] sm:$0xff]
        %2457 = vmatprep.subr.mxu0 %v2394
        %2458 = vmatpush1.msra.mxu0 %v2393
        %2459 = vmatprep.subr.mxu0 %v2396
        %2460 = vmatpush1.msra.mxu0 %v2395
        %2461 = vmatprep.subr.mxu0 %v2398
        %2462 = vmatpush1.msra.mxu0 %v2397
        %2463 = vmatprep.subr.mxu0 %v2400
        %2464 = vmatpush1.msra.mxu0 %v2399
        %2465 = vmatprep.subr.mxu0 %v2402
        %2466 = vmatpush1.msra.mxu0 %v2401
        %2467 = vmatprep.subr.mxu0 %v2404
        %2468 = vmatpush1.msra.mxu0 %v2403
        %2469 = vmatprep.subr.mxu0 %v2406
        %2470 = vmatpush1.msra.mxu0 %v2405
        %2471 = vmatprep.subr.mxu0 %v2408
        %2472 = vmatpush1.msra.mxu0 %v2407
        %2473 = vmatprep.subr.mxu0 %v2410
        %2474 = vmatpush1.msra.mxu0 %v2409
        %2475 = vmatprep.subr.mxu0 %v2412
        %2476 = vmatpush1.msra.mxu0 %v2411
        %2477 = vmatprep.subr.mxu0 %v2414
        %2478 = vmatpush1.msra.mxu0 %v2413
        %2479 = vmatprep.subr.mxu0 %v2416
        %2480 = vmatpush1.msra.mxu0 %v2415
        %2481 = vmatprep.subr.mxu0 %v2418
        %2482 = vmatpush1.msra.mxu0 %v2417
        %2483 = vmatprep.subr.mxu0 %v2420
        %2484 = vmatpush1.msra.mxu0 %v2419
        %2485 = vmatprep.subr.mxu0 %v2422
        %2486 = vmatpush1.msra.mxu0 %v2421
        %2487 = vmatprep.subr.mxu0 %v2424
        %2488 = vmatpush1.msra.mxu0 %v2423
        %2489 = vmatprep.subr.mxu0 %v2426
        %2490 = vmatpush1.msra.mxu0 %v2425
        %2491 = vmatprep.subr.mxu0 %v2428
        %2492 = vmatpush1.msra.mxu0 %v2427
        %2493 = vmatprep.subr.mxu0 %v2430
        %2494 = vmatpush1.msra.mxu0 %v2429
        %2495 = vmatprep.subr.mxu0 %v2432
        %2496 = vmatpush1.msra.mxu0 %v2431
        %2497 = vmatprep.subr.mxu0 %v2434
        %2498 = vmatpush1.msra.mxu0 %v2433
        %2499 = vmatprep.subr.mxu0 %v2436
        %2500 = vmatpush1.msra.mxu0 %v2435
        %2501 = vmatprep.subr.mxu0 %v2438
        %2502 = vmatpush1.msra.mxu0 %v2437
        %2503 = vmatprep.subr.mxu0 %v2440
        %2504 = vmatpush1.msra.mxu0 %v2439
        %2505 = vmatprep.subr.mxu0 %v2442
        %2506 = vmatpush1.msra.mxu0 %v2441
        %2507 = vmatprep.subr.mxu0 %v2444
        %2508 = vmatpush1.msra.mxu0 %v2443
        %2509 = vmatprep.subr.mxu0 %v2446
        %2510 = vmatpush1.msra.mxu0 %v2445
        %2511 = vmatprep.subr.mxu0 %v2448
        %2512 = vmatpush1.msra.mxu0 %v2447
        %2513 = vmatprep.subr.mxu0 %v2450
        %2514 = vmatpush1.msra.mxu0 %v2449
        %2515 = vmatprep.subr.mxu0 %v2452
        %2516 = vmatpush1.msra.mxu0 %v2451
        %2517 = vmatprep.subr.mxu0 %v2454
        %2518 = vmatpush1.msra.mxu0 %v2453
        %2519 = vmatprep.subr.mxu0 %v2456
        %2520 = vmatpush1.msra.mxu0 %v2455
        %2521 = vmatprep.mubr.f32.mxu0 %v2370
        %2522 = vmatmul.mubr.f32.gmra.mrb[0].mxu0 %v2369
        %v2523 = vpop.f32.mrb[0].mxu0
        %v2524 = vadd.f32 0.0, %v2523
        %v2525 = vpop.f32.mrb[0].mxu0
        %v2526 = vadd.f32 0.0, %v2525
        %2527 = vmatprep.mubr.f32.mxu0 %v2372
        %2528 = vmatmul.mubr.f32.gmra.mrb[0].mxu0 %v2371
        %v2529 = vpop.f32.mrb[0].mxu0
        %v2530 = vadd.f32 0.0, %v2529
        %v2531 = vpop.f32.mrb[0].mxu0
        %v2532 = vadd.f32 0.0, %v2531
        %2533 = vmatprep.mubr.f32.mxu0 %v2374
        %2534 = vmatmul.mubr.f32.gmra.mrb[0].mxu0 %v2373
        %v2535 = vpop.f32.mrb[0].mxu0
        %v2536 = vadd.f32 0.0, %v2535
        %v2537 = vpop.f32.mrb[0].mxu0
        %v2538 = vadd.f32 0.0, %v2537
        %2539 = vmatprep.mubr.f32.mxu0 %v2376
        %2540 = vmatmul.mubr.f32.gmra.mrb[0].mxu0 %v2375
        %v2541 = vpop.f32.mrb[0].mxu0
        %v2542 = vadd.f32 0.0, %v2541
        %v2543 = vpop.f32.mrb[0].mxu0
        %v2544 = vadd.f32 0.0, %v2543
        %2545 = vmatprep.mubr.f32.mxu0 %v2378
        %2546 = vmatmul.mubr.f32.gmra.mrb[0].mxu0 %v2377
        %v2547 = vpop.f32.mrb[0].mxu0
        %v2548 = vadd.f32 0.0, %v2547
        %v2549 = vpop.f32.mrb[0].mxu0
        %v2550 = vadd.f32 0.0, %v2549
        %2551 = vmatprep.mubr.f32.mxu0 %v2380
        %2552 = vmatmul.mubr.f32.gmra.mrb[0].mxu0 %v2379
        %v2553 = vpop.f32.mrb[0].mxu0
        %v2554 = vadd.f32 0.0, %v2553
        %v2555 = vpop.f32.mrb[0].mxu0
        %v2556 = vadd.f32 0.0, %v2555
        %2557 = vmatprep.mubr.f32.mxu0 %v2382
        %2558 = vmatmul.mubr.f32.gmra.mrb[0].mxu0 %v2381
        %v2559 = vpop.f32.mrb[0].mxu0
        %v2560 = vadd.f32 0.0, %v2559
        %v2561 = vpop.f32.mrb[0].mxu0
        %v2562 = vadd.f32 0.0, %v2561
        %2563 = vmatprep.mubr.f32.mxu0 %v2384
        %2564 = vmatmul.mubr.f32.gmra.mrb[0].mxu0 %v2383
        %v2565 = vpop.f32.mrb[0].mxu0
        %v2566 = vadd.f32 0.0, %v2565
        %v2567 = vpop.f32.mrb[0].mxu0
        %v2568 = vadd.f32 0.0, %v2567
        %2569 = vmatprep.mubr.f32.mxu0 %v2386
        %2570 = vmatmul.mubr.f32.gmra.mrb[0].mxu0 %v2385
        %v2571 = vpop.f32.mrb[0].mxu0
        %v2572 = vadd.f32 0.0, %v2571
        %v2573 = vpop.f32.mrb[0].mxu0
        %v2574 = vadd.f32 0.0, %v2573
        %2575 = vmatprep.mubr.f32.mxu0 %v2388
        %2576 = vmatmul.mubr.f32.gmra.mrb[0].mxu0 %v2387
        %v2577 = vpop.f32.mrb[0].mxu0
        %v2578 = vadd.f32 0.0, %v2577
        %v2579 = vpop.f32.mrb[0].mxu0
        %v2580 = vadd.f32 0.0, %v2579
        %2581 = vmatprep.mubr.f32.mxu0 %v2390
        %2582 = vmatmul.mubr.f32.gmra.mrb[0].mxu0 %v2389
        %v2583 = vpop.f32.mrb[0].mxu0
        %v2584 = vadd.f32 0.0, %v2583
        %v2585 = vpop.f32.mrb[0].mxu0
        %v2586 = vadd.f32 0.0, %v2585
        %2587 = vmatprep.mubr.f32.mxu0 %v2392
        %2588 = vmatmul.mubr.f32.gmra.mrb[0].mxu0 %v2391
        %v2589 = vpop.f32.mrb[0].mxu0
        %v2590 = vadd.f32 0.0, %v2589
        %v2591 = vpop.f32.mrb[0].mxu0
        %v2592 = vadd.f32 0.0, %v2591
        %2593 = vdwg.mxu0
        %v2594 = vadd.f32 %v1990, %v2524
        %v2595 = vadd.f32 %v1992, %v2526
        %v2596 = vadd.f32 %v1996, %v2530
        %v2597 = vadd.f32 %v1998, %v2532
        %v2598 = vadd.f32 %v2002, %v2536
        %v2599 = vadd.f32 %v2004, %v2538
        %v2600 = vadd.f32 %v2008, %v2542
        %v2601 = vadd.f32 %v2010, %v2544
        %v2602 = vadd.f32 %v2014, %v2548
        %v2603 = vadd.f32 %v2016, %v2550
        %v2604 = vadd.f32 %v2020, %v2554
        %v2605 = vadd.f32 %v2022, %v2556
        %v2606 = vadd.f32 %v2026, %v2560
        %v2607 = vadd.f32 %v2028, %v2562
        %v2608 = vadd.f32 %v2032, %v2566
        %v2609 = vadd.f32 %v2034, %v2568
        %v2610 = vadd.f32 %v2038, %v2572
        %v2611 = vadd.f32 %v2040, %v2574
        %v2612 = vadd.f32 %v2044, %v2578
        %v2613 = vadd.f32 %v2046, %v2580
        %v2614 = vadd.f32 %v2050, %v2584
        %v2615 = vadd.f32 %v2052, %v2586
        %v2616 = vadd.f32 %v2056, %v2590
        %v2617 = vadd.f32 %v2058, %v2592
        %v2618 = vld [vmem:[#allocation2 + $0x30] sm:$0xff]
        %v2619 = vld [vmem:[#allocation2 + $0x38] sm:$0xff]
        %v2620 = vld [vmem:[#allocation2 + $0x70] sm:$0xff]
        %v2621 = vld [vmem:[#allocation2 + $0x78] sm:$0xff]
        %v2622 = vld [vmem:[#allocation2 + $0xb0] sm:$0xff]
        %v2623 = vld [vmem:[#allocation2 + $0xb8] sm:$0xff]
        %v2624 = vld [vmem:[#allocation2 + $0xf0] sm:$0xff]
        %v2625 = vld [vmem:[#allocation2 + $0xf8] sm:$0xff]
        %v2626 = vld [vmem:[#allocation2 + $0x130] sm:$0xff]
        %v2627 = vld [vmem:[#allocation2 + $0x138] sm:$0xff]
        %v2628 = vld [vmem:[#allocation2 + $0x170] sm:$0xff]
        %v2629 = vld [vmem:[#allocation2 + $0x178] sm:$0xff]
        %v2630 = vld [vmem:[#allocation2 + $0x1b0] sm:$0xff]
        %v2631 = vld [vmem:[#allocation2 + $0x1b8] sm:$0xff]
        %v2632 = vld [vmem:[#allocation2 + $0x1f0] sm:$0xff]
        %v2633 = vld [vmem:[#allocation2 + $0x1f8] sm:$0xff]
        %v2634 = vld [vmem:[#allocation2 + $0x230] sm:$0xff]
        %v2635 = vld [vmem:[#allocation2 + $0x238] sm:$0xff]
        %v2636 = vld [vmem:[#allocation2 + $0x270] sm:$0xff]
        %v2637 = vld [vmem:[#allocation2 + $0x278] sm:$0xff]
        %v2638 = vld [vmem:[#allocation2 + $0x2b0] sm:$0xff]
        %v2639 = vld [vmem:[#allocation2 + $0x2b8] sm:$0xff]
        %v2640 = vld [vmem:[#allocation2 + $0x2f0] sm:$0xff]
        %v2641 = vld [vmem:[#allocation2 + $0x2f8] sm:$0xff]
        %v2642 = vld [vmem:[#allocation2 + $0x330] sm:$0xff]
        %v2643 = vld [vmem:[#allocation2 + $0x338] sm:$0xff]
        %v2644 = vld [vmem:[#allocation2 + $0x370] sm:$0xff]
        %v2645 = vld [vmem:[#allocation2 + $0x378] sm:$0xff]
        %v2646 = vld [vmem:[#allocation2 + $0x3b0] sm:$0xff]
        %v2647 = vld [vmem:[#allocation2 + $0x3b8] sm:$0xff]
        %v2648 = vld [vmem:[#allocation2 + $0x3f0] sm:$0xff]
        %v2649 = vld [vmem:[#allocation2 + $0x3f8] sm:$0xff]
        %v2650 = vld [vmem:[#allocation2 + $0x430] sm:$0xff]
        %v2651 = vld [vmem:[#allocation2 + $0x438] sm:$0xff]
        %v2652 = vld [vmem:[#allocation2 + $0x470] sm:$0xff]
        %v2653 = vld [vmem:[#allocation2 + $0x478] sm:$0xff]
        %v2654 = vld [vmem:[#allocation2 + $0x4b0] sm:$0xff]
        %v2655 = vld [vmem:[#allocation2 + $0x4b8] sm:$0xff]
        %v2656 = vld [vmem:[#allocation2 + $0x4f0] sm:$0xff]
        %v2657 = vld [vmem:[#allocation2 + $0x4f8] sm:$0xff]
        %v2658 = vld [vmem:[#allocation2 + $0x530] sm:$0xff]
        %v2659 = vld [vmem:[#allocation2 + $0x538] sm:$0xff]
        %v2660 = vld [vmem:[#allocation2 + $0x570] sm:$0xff]
        %v2661 = vld [vmem:[#allocation2 + $0x578] sm:$0xff]
        %v2662 = vld [vmem:[#allocation2 + $0x5b0] sm:$0xff]
        %v2663 = vld [vmem:[#allocation2 + $0x5b8] sm:$0xff]
        %v2664 = vld [vmem:[#allocation2 + $0x5f0] sm:$0xff]
        %v2665 = vld [vmem:[#allocation2 + $0x5f8] sm:$0xff]
        %v2666 = vld [vmem:[#allocation2 + $0x630] sm:$0xff]
        %v2667 = vld [vmem:[#allocation2 + $0x638] sm:$0xff]
        %v2668 = vld [vmem:[#allocation2 + $0x670] sm:$0xff]
        %v2669 = vld [vmem:[#allocation2 + $0x678] sm:$0xff]
        %v2670 = vld [vmem:[#allocation2 + $0x6b0] sm:$0xff]
        %v2671 = vld [vmem:[#allocation2 + $0x6b8] sm:$0xff]
        %v2672 = vld [vmem:[#allocation2 + $0x6f0] sm:$0xff]
        %v2673 = vld [vmem:[#allocation2 + $0x6f8] sm:$0xff]
        %v2674 = vld [vmem:[#allocation2 + $0x730] sm:$0xff]
        %v2675 = vld [vmem:[#allocation2 + $0x738] sm:$0xff]
        %v2676 = vld [vmem:[#allocation2 + $0x770] sm:$0xff]
        %v2677 = vld [vmem:[#allocation2 + $0x778] sm:$0xff]
        %v2678 = vld [vmem:[#allocation2 + $0x7b0] sm:$0xff]
        %v2679 = vld [vmem:[#allocation2 + $0x7b8] sm:$0xff]
        %v2680 = vld [vmem:[#allocation2 + $0x7f0] sm:$0xff]
        %v2681 = vld [vmem:[#allocation2 + $0x7f8] sm:$0xff]
        %v2682 = vld [vmem:[%s7 + $0x6] sm:$0x3]
        %v2684 = vlaneseq
        %v2685 = vshrl.u32 %v2684, 7
        %v2686 = vsub.s32 0, %v2685
        %v2687 = vrot.slane %v2682, %v2686
        %v2688 = vlaneseq
        %v2689 = vshrl.u32 %v2688, 7
        %v2690 = vsub.s32 1, %v2689
        %v2691 = vrot.slane %v2682, %v2690
        %2694 = vmatprep.subr.mxu0 %v2619
        %2695 = vmatpush1.msra.mxu0 %v2618
        %2696 = vmatprep.subr.mxu0 %v2621
        %2697 = vmatpush1.msra.mxu0 %v2620
        %2698 = vmatprep.subr.mxu0 %v2623
        %2699 = vmatpush1.msra.mxu0 %v2622
        %2700 = vmatprep.subr.mxu0 %v2625
        %2701 = vmatpush1.msra.mxu0 %v2624
        %2702 = vmatprep.subr.mxu0 %v2627
        %2703 = vmatpush1.msra.mxu0 %v2626
        %2704 = vmatprep.subr.mxu0 %v2629
        %2705 = vmatpush1.msra.mxu0 %v2628
        %2706 = vmatprep.subr.mxu0 %v2631
        %2707 = vmatpush1.msra.mxu0 %v2630
        %2708 = vmatprep.subr.mxu0 %v2633
        %2709 = vmatpush1.msra.mxu0 %v2632
        %2710 = vmatprep.subr.mxu0 %v2635
        %2711 = vmatpush1.msra.mxu0 %v2634
        %2712 = vmatprep.subr.mxu0 %v2637
        %2713 = vmatpush1.msra.mxu0 %v2636
        %2714 = vmatprep.subr.mxu0 %v2639
        %2715 = vmatpush1.msra.mxu0 %v2638
        %2716 = vmatprep.subr.mxu0 %v2641
        %2717 = vmatpush1.msra.mxu0 %v2640
        %2718 = vmatprep.subr.mxu0 %v2643
        %2719 = vmatpush1.msra.mxu0 %v2642
        %2720 = vmatprep.subr.mxu0 %v2645
        %2721 = vmatpush1.msra.mxu0 %v2644
        %2722 = vmatprep.subr.mxu0 %v2647
        %2723 = vmatpush1.msra.mxu0 %v2646
        %2724 = vmatprep.subr.mxu0 %v2649
        %2725 = vmatpush1.msra.mxu0 %v2648
        %2726 = vmatprep.subr.mxu0 %v2651
        %2727 = vmatpush1.msra.mxu0 %v2650
        %2728 = vmatprep.subr.mxu0 %v2653
        %2729 = vmatpush1.msra.mxu0 %v2652
        %2730 = vmatprep.subr.mxu0 %v2655
        %2731 = vmatpush1.msra.mxu0 %v2654
        %2732 = vmatprep.subr.mxu0 %v2657
        %2733 = vmatpush1.msra.mxu0 %v2656
        %2734 = vmatprep.subr.mxu0 %v2659
        %2735 = vmatpush1.msra.mxu0 %v2658
        %2736 = vmatprep.subr.mxu0 %v2661
        %2737 = vmatpush1.msra.mxu0 %v2660
        %2738 = vmatprep.subr.mxu0 %v2663
        %2739 = vmatpush1.msra.mxu0 %v2662
        %2740 = vmatprep.subr.mxu0 %v2665
        %2741 = vmatpush1.msra.mxu0 %v2664
        %2742 = vmatprep.subr.mxu0 %v2667
        %2743 = vmatpush1.msra.mxu0 %v2666
        %2744 = vmatprep.subr.mxu0 %v2669
        %2745 = vmatpush1.msra.mxu0 %v2668
        %2746 = vmatprep.subr.mxu0 %v2671
        %2747 = vmatpush1.msra.mxu0 %v2670
        %2748 = vmatprep.subr.mxu0 %v2673
        %2749 = vmatpush1.msra.mxu0 %v2672
        %2750 = vmatprep.subr.mxu0 %v2675
        %2751 = vmatpush1.msra.mxu0 %v2674
        %2752 = vmatprep.subr.mxu0 %v2677
        %2753 = vmatpush1.msra.mxu0 %v2676
        %2754 = vmatprep.subr.mxu0 %v2679
        %2755 = vmatpush1.msra.mxu0 %v2678
        %2756 = vmatprep.subr.mxu0 %v2681
        %2757 = vmatpush1.msra.mxu0 %v2680
        %2758 = vmatprep.mubr.f32.mxu0 %v969
        %2759 = vmatmul.mubr.f32.gmra.mrb[0].mxu0 %v968
        %v2760 = vpop.f32.mrb[0].mxu0
        %v2761 = vadd.f32 %v2687, %v2760
        %v2762 = vpop.f32.mrb[0].mxu0
        %v2763 = vadd.f32 %v2691, %v2762
        %2764 = vmatprep.mubr.f32.mxu0 %v971
        %2765 = vmatmul.mubr.f32.gmra.mrb[0].mxu0 %v970
        %v2766 = vpop.f32.mrb[0].mxu0
        %v2767 = vadd.f32 %v2687, %v2766
        %v2768 = vpop.f32.mrb[0].mxu0
        %v2769 = vadd.f32 %v2691, %v2768
        %2770 = vmatprep.mubr.f32.mxu0 %v973
        %2771 = vmatmul.mubr.f32.gmra.mrb[0].mxu0 %v972
        %v2772 = vpop.f32.mrb[0].mxu0
        %v2773 = vadd.f32 %v2687, %v2772
        %v2774 = vpop.f32.mrb[0].mxu0
        %v2775 = vadd.f32 %v2691, %v2774
        %2776 = vmatprep.mubr.f32.mxu0 %v975
        %2777 = vmatmul.mubr.f32.gmra.mrb[0].mxu0 %v974
        %v2778 = vpop.f32.mrb[0].mxu0
        %v2779 = vadd.f32 %v2687, %v2778
        %v2780 = vpop.f32.mrb[0].mxu0
        %v2781 = vadd.f32 %v2691, %v2780
        %2782 = vmatprep.mubr.f32.mxu0 %v977
        %2783 = vmatmul.mubr.f32.gmra.mrb[0].mxu0 %v976
        %v2784 = vpop.f32.mrb[0].mxu0
        %v2785 = vadd.f32 %v2687, %v2784
        %v2786 = vpop.f32.mrb[0].mxu0
        %v2787 = vadd.f32 %v2691, %v2786
        %2788 = vmatprep.mubr.f32.mxu0 %v979
        %2789 = vmatmul.mubr.f32.gmra.mrb[0].mxu0 %v978
        %v2790 = vpop.f32.mrb[0].mxu0
        %v2791 = vadd.f32 %v2687, %v2790
        %v2792 = vpop.f32.mrb[0].mxu0
        %v2793 = vadd.f32 %v2691, %v2792
        %2794 = vmatprep.mubr.f32.mxu0 %v981
        %2795 = vmatmul.mubr.f32.gmra.mrb[0].mxu0 %v980
        %v2796 = vpop.f32.mrb[0].mxu0
        %v2797 = vadd.f32 %v2687, %v2796
        %v2798 = vpop.f32.mrb[0].mxu0
        %v2799 = vadd.f32 %v2691, %v2798
        %2800 = vmatprep.mubr.f32.mxu0 %v983
        %2801 = vmatmul.mubr.f32.gmra.mrb[0].mxu0 %v982
        %v2802 = vpop.f32.mrb[0].mxu0
        %v2803 = vadd.f32 %v2687, %v2802
        %v2804 = vpop.f32.mrb[0].mxu0
        %v2805 = vadd.f32 %v2691, %v2804
        %2806 = vmatprep.mubr.f32.mxu0 %v985
        %2807 = vmatmul.mubr.f32.gmra.mrb[0].mxu0 %v984
        %v2808 = vpop.f32.mrb[0].mxu0
        %v2809 = vadd.f32 %v2687, %v2808
        %v2810 = vpop.f32.mrb[0].mxu0
        %v2811 = vadd.f32 %v2691, %v2810
        %2812 = vmatprep.mubr.f32.mxu0 %v987
        %2813 = vmatmul.mubr.f32.gmra.mrb[0].mxu0 %v986
        %v2814 = vpop.f32.mrb[0].mxu0
        %v2815 = vadd.f32 %v2687, %v2814
        %v2816 = vpop.f32.mrb[0].mxu0
        %v2817 = vadd.f32 %v2691, %v2816
        %2818 = vmatprep.mubr.f32.mxu0 %v989
        %2819 = vmatmul.mubr.f32.gmra.mrb[0].mxu0 %v988
        %v2820 = vpop.f32.mrb[0].mxu0
        %v2821 = vadd.f32 %v2687, %v2820
        %v2822 = vpop.f32.mrb[0].mxu0
        %v2823 = vadd.f32 %v2691, %v2822
        %2824 = vmatprep.mubr.f32.mxu0 %v991
        %2825 = vmatmul.mubr.f32.gmra.mrb[0].mxu0 %v990
        %v2826 = vpop.f32.mrb[0].mxu0
        %v2827 = vadd.f32 %v2687, %v2826
        %v2828 = vpop.f32.mrb[0].mxu0
        %v2829 = vadd.f32 %v2691, %v2828
        %2830 = vdwg.mxu0
        %v2831 = vmul.f32 %v2761, 0.5
        %v2832 = vmul.f32 %v2763, 0.5
        %v2833 = vmul.f32 %v2767, 0.5
        %v2834 = vmul.f32 %v2769, 0.5
        %v2835 = vmul.f32 %v2773, 0.5
        %v2836 = vmul.f32 %v2775, 0.5
        %v2837 = vmul.f32 %v2779, 0.5
        %v2838 = vmul.f32 %v2781, 0.5
        %v2839 = vmul.f32 %v2785, 0.5
        %v2840 = vmul.f32 %v2787, 0.5
        %v2841 = vmul.f32 %v2791, 0.5
        %v2842 = vmul.f32 %v2793, 0.5
        %v2843 = vmul.f32 %v2797, 0.5
        %v2844 = vmul.f32 %v2799, 0.5
        %v2845 = vmul.f32 %v2803, 0.5
        %v2846 = vmul.f32 %v2805, 0.5
        %v2847 = vmul.f32 %v2809, 0.5
        %v2848 = vmul.f32 %v2811, 0.5
        %v2849 = vmul.f32 %v2815, 0.5
        %v2850 = vmul.f32 %v2817, 0.5
        %v2851 = vmul.f32 %v2821, 0.5
        %v2852 = vmul.f32 %v2823, 0.5
        %v2853 = vmul.f32 %v2827, 0.5
        %v2854 = vmul.f32 %v2829, 0.5
        %v2855 = vmul.f32 %v2761, 0.70710677
        %v2856 = vmul.f32 %v2763, 0.70710677
        %v2857 = vmul.f32 %v2767, 0.70710677
        %v2858 = vmul.f32 %v2769, 0.70710677
        %v2859 = vmul.f32 %v2773, 0.70710677
        %v2860 = vmul.f32 %v2775, 0.70710677
        %v2861 = vmul.f32 %v2779, 0.70710677
        %v2862 = vmul.f32 %v2781, 0.70710677
        %v2863 = vmul.f32 %v2785, 0.70710677
        %v2864 = vmul.f32 %v2787, 0.70710677
        %v2865 = vmul.f32 %v2791, 0.70710677
        %v2866 = vmul.f32 %v2793, 0.70710677
        %v2867 = vmul.f32 %v2797, 0.70710677
        %v2868 = vmul.f32 %v2799, 0.70710677
        %v2869 = vmul.f32 %v2803, 0.70710677
        %v2870 = vmul.f32 %v2805, 0.70710677
        %v2871 = vmul.f32 %v2809, 0.70710677
        %v2872 = vmul.f32 %v2811, 0.70710677
        %v2873 = vmul.f32 %v2815, 0.70710677
        %v2874 = vmul.f32 %v2817, 0.70710677
        %v2875 = vmul.f32 %v2821, 0.70710677
        %v2876 = vmul.f32 %v2823, 0.70710677
        %v2877 = vmul.f32 %v2827, 0.70710677
        %v2878 = vmul.f32 %v2829, 0.70710677
        %v2879 = verf.f32.pop %v2855
        %v2880 = verf.f32.pop %v2856
        %v2881 = verf.f32.pop %v2857
        %v2882 = verf.f32.pop %v2858
        %v2883 = verf.f32.pop %v2859
        %v2884 = verf.f32.pop %v2860
        %v2885 = verf.f32.pop %v2861
        %v2886 = verf.f32.pop %v2862
        %v2887 = verf.f32.pop %v2863
        %v2888 = verf.f32.pop %v2864
        %v2889 = verf.f32.pop %v2865
        %v2890 = verf.f32.pop %v2866
        %v2891 = verf.f32.pop %v2867
        %v2892 = verf.f32.pop %v2868
        %v2893 = verf.f32.pop %v2869
        %v2894 = verf.f32.pop %v2870
        %v2895 = verf.f32.pop %v2871
        %v2896 = verf.f32.pop %v2872
        %v2897 = verf.f32.pop %v2873
        %v2898 = verf.f32.pop %v2874
        %v2899 = verf.f32.pop %v2875
        %v2900 = verf.f32.pop %v2876
        %v2901 = verf.f32.pop %v2877
        %v2902 = verf.f32.pop %v2878
        %v2903 = vadd.f32 %v2879, 1.0
        %v2904 = vadd.f32 %v2880, 1.0
        %v2905 = vadd.f32 %v2881, 1.0
        %v2906 = vadd.f32 %v2882, 1.0
        %v2907 = vadd.f32 %v2883, 1.0
        %v2908 = vadd.f32 %v2884, 1.0
        %v2909 = vadd.f32 %v2885, 1.0
        %v2910 = vadd.f32 %v2886, 1.0
        %v2911 = vadd.f32 %v2887, 1.0
        %v2912 = vadd.f32 %v2888, 1.0
        %v2913 = vadd.f32 %v2889, 1.0
        %v2914 = vadd.f32 %v2890, 1.0
        %v2915 = vadd.f32 %v2891, 1.0
        %v2916 = vadd.f32 %v2892, 1.0
        %v2917 = vadd.f32 %v2893, 1.0
        %v2918 = vadd.f32 %v2894, 1.0
        %v2919 = vadd.f32 %v2895, 1.0
        %v2920 = vadd.f32 %v2896, 1.0
        %v2921 = vadd.f32 %v2897, 1.0
        %v2922 = vadd.f32 %v2898, 1.0
        %v2923 = vadd.f32 %v2899, 1.0
        %v2924 = vadd.f32 %v2900, 1.0
        %v2925 = vadd.f32 %v2901, 1.0
        %v2926 = vadd.f32 %v2902, 1.0
        %v2927 = vmul.f32 %v2831, %v2903
        %v2928 = vmul.f32 %v2832, %v2904
        %v2929 = vmul.f32 %v2833, %v2905
        %v2930 = vmul.f32 %v2834, %v2906
        %v2931 = vmul.f32 %v2835, %v2907
        %v2932 = vmul.f32 %v2836, %v2908
        %v2933 = vmul.f32 %v2837, %v2909
        %v2934 = vmul.f32 %v2838, %v2910
        %v2935 = vmul.f32 %v2839, %v2911
        %v2936 = vmul.f32 %v2840, %v2912
        %v2937 = vmul.f32 %v2841, %v2913
        %v2938 = vmul.f32 %v2842, %v2914
        %v2939 = vmul.f32 %v2843, %v2915
        %v2940 = vmul.f32 %v2844, %v2916
        %v2941 = vmul.f32 %v2845, %v2917
        %v2942 = vmul.f32 %v2846, %v2918
        %v2943 = vmul.f32 %v2847, %v2919
        %v2944 = vmul.f32 %v2848, %v2920
        %v2945 = vmul.f32 %v2849, %v2921
        %v2946 = vmul.f32 %v2850, %v2922
        %v2947 = vmul.f32 %v2851, %v2923
        %v2948 = vmul.f32 %v2852, %v2924
        %v2949 = vmul.f32 %v2853, %v2925
        %v2950 = vmul.f32 %v2854, %v2926
        %v2951 = vld [vmem:[#allocation5 + $0x600] sm:$0xff]
        %v2952 = vld [vmem:[#allocation5 + $0x608] sm:$0xff]
        %v2953 = vld [vmem:[#allocation5 + $0x610] sm:$0xff]
        %v2954 = vld [vmem:[#allocation5 + $0x618] sm:$0xff]
        %v2955 = vld [vmem:[#allocation5 + $0x620] sm:$0xff]
        %v2956 = vld [vmem:[#allocation5 + $0x628] sm:$0xff]
        %v2957 = vld [vmem:[#allocation5 + $0x630] sm:$0xff]
        %v2958 = vld [vmem:[#allocation5 + $0x638] sm:$0xff]
        %v2959 = vld [vmem:[#allocation5 + $0x640] sm:$0xff]
        %v2960 = vld [vmem:[#allocation5 + $0x648] sm:$0xff]
        %v2961 = vld [vmem:[#allocation5 + $0x650] sm:$0xff]
        %v2962 = vld [vmem:[#allocation5 + $0x658] sm:$0xff]
        %v2963 = vld [vmem:[#allocation5 + $0x660] sm:$0xff]
        %v2964 = vld [vmem:[#allocation5 + $0x668] sm:$0xff]
        %v2965 = vld [vmem:[#allocation5 + $0x670] sm:$0xff]
        %v2966 = vld [vmem:[#allocation5 + $0x678] sm:$0xff]
        %v2967 = vld [vmem:[#allocation5 + $0x680] sm:$0xff]
        %v2968 = vld [vmem:[#allocation5 + $0x688] sm:$0xff]
        %v2969 = vld [vmem:[#allocation5 + $0x690] sm:$0xff]
        %v2970 = vld [vmem:[#allocation5 + $0x698] sm:$0xff]
        %v2971 = vld [vmem:[#allocation5 + $0x6a0] sm:$0xff]
        %v2972 = vld [vmem:[#allocation5 + $0x6a8] sm:$0xff]
        %v2973 = vld [vmem:[#allocation5 + $0x6b0] sm:$0xff]
        %v2974 = vld [vmem:[#allocation5 + $0x6b8] sm:$0xff]
        %v2975 = vld [vmem:[#allocation5 + $0x6c0] sm:$0xff]
        %v2976 = vld [vmem:[#allocation5 + $0x6c8] sm:$0xff]
        %v2977 = vld [vmem:[#allocation5 + $0x6d0] sm:$0xff]
        %v2978 = vld [vmem:[#allocation5 + $0x6d8] sm:$0xff]
        %v2979 = vld [vmem:[#allocation5 + $0x6e0] sm:$0xff]
        %v2980 = vld [vmem:[#allocation5 + $0x6e8] sm:$0xff]
        %v2981 = vld [vmem:[#allocation5 + $0x6f0] sm:$0xff]
        %v2982 = vld [vmem:[#allocation5 + $0x6f8] sm:$0xff]
        %v2983 = vld [vmem:[#allocation5 + $0x700] sm:$0xff]
        %v2984 = vld [vmem:[#allocation5 + $0x708] sm:$0xff]
        %v2985 = vld [vmem:[#allocation5 + $0x710] sm:$0xff]
        %v2986 = vld [vmem:[#allocation5 + $0x718] sm:$0xff]
        %v2987 = vld [vmem:[#allocation5 + $0x720] sm:$0xff]
        %v2988 = vld [vmem:[#allocation5 + $0x728] sm:$0xff]
        %v2989 = vld [vmem:[#allocation5 + $0x730] sm:$0xff]
        %v2990 = vld [vmem:[#allocation5 + $0x738] sm:$0xff]
        %v2991 = vld [vmem:[#allocation5 + $0x740] sm:$0xff]
        %v2992 = vld [vmem:[#allocation5 + $0x748] sm:$0xff]
        %v2993 = vld [vmem:[#allocation5 + $0x750] sm:$0xff]
        %v2994 = vld [vmem:[#allocation5 + $0x758] sm:$0xff]
        %v2995 = vld [vmem:[#allocation5 + $0x760] sm:$0xff]
        %v2996 = vld [vmem:[#allocation5 + $0x768] sm:$0xff]
        %v2997 = vld [vmem:[#allocation5 + $0x770] sm:$0xff]
        %v2998 = vld [vmem:[#allocation5 + $0x778] sm:$0xff]
        %v2999 = vld [vmem:[#allocation5 + $0x780] sm:$0xff]
        %v3000 = vld [vmem:[#allocation5 + $0x788] sm:$0xff]
        %v3001 = vld [vmem:[#allocation5 + $0x790] sm:$0xff]
        %v3002 = vld [vmem:[#allocation5 + $0x798] sm:$0xff]
        %v3003 = vld [vmem:[#allocation5 + $0x7a0] sm:$0xff]
        %v3004 = vld [vmem:[#allocation5 + $0x7a8] sm:$0xff]
        %v3005 = vld [vmem:[#allocation5 + $0x7b0] sm:$0xff]
        %v3006 = vld [vmem:[#allocation5 + $0x7b8] sm:$0xff]
        %v3007 = vld [vmem:[#allocation5 + $0x7c0] sm:$0xff]
        %v3008 = vld [vmem:[#allocation5 + $0x7c8] sm:$0xff]
        %v3009 = vld [vmem:[#allocation5 + $0x7d0] sm:$0xff]
        %v3010 = vld [vmem:[#allocation5 + $0x7d8] sm:$0xff]
        %v3011 = vld [vmem:[#allocation5 + $0x7e0] sm:$0xff]
        %v3012 = vld [vmem:[#allocation5 + $0x7e8] sm:$0xff]
        %v3013 = vld [vmem:[#allocation5 + $0x7f0] sm:$0xff]
        %v3014 = vld [vmem:[#allocation5 + $0x7f8] sm:$0xff]
        %3015 = vmatprep.subr.mxu0 %v2952
        %3016 = vmatpush1.msra.mxu0 %v2951
        %3017 = vmatprep.subr.mxu0 %v2954
        %3018 = vmatpush1.msra.mxu0 %v2953
        %3019 = vmatprep.subr.mxu0 %v2956
        %3020 = vmatpush1.msra.mxu0 %v2955
        %3021 = vmatprep.subr.mxu0 %v2958
        %3022 = vmatpush1.msra.mxu0 %v2957
        %3023 = vmatprep.subr.mxu0 %v2960
        %3024 = vmatpush1.msra.mxu0 %v2959
        %3025 = vmatprep.subr.mxu0 %v2962
        %3026 = vmatpush1.msra.mxu0 %v2961
        %3027 = vmatprep.subr.mxu0 %v2964
        %3028 = vmatpush1.msra.mxu0 %v2963
        %3029 = vmatprep.subr.mxu0 %v2966
        %3030 = vmatpush1.msra.mxu0 %v2965
        %3031 = vmatprep.subr.mxu0 %v2968
        %3032 = vmatpush1.msra.mxu0 %v2967
        %3033 = vmatprep.subr.mxu0 %v2970
        %3034 = vmatpush1.msra.mxu0 %v2969
        %3035 = vmatprep.subr.mxu0 %v2972
        %3036 = vmatpush1.msra.mxu0 %v2971
        %3037 = vmatprep.subr.mxu0 %v2974
        %3038 = vmatpush1.msra.mxu0 %v2973
        %3039 = vmatprep.subr.mxu0 %v2976
        %3040 = vmatpush1.msra.mxu0 %v2975
        %3041 = vmatprep.subr.mxu0 %v2978
        %3042 = vmatpush1.msra.mxu0 %v2977
        %3043 = vmatprep.subr.mxu0 %v2980
        %3044 = vmatpush1.msra.mxu0 %v2979
        %3045 = vmatprep.subr.mxu0 %v2982
        %3046 = vmatpush1.msra.mxu0 %v2981
        %3047 = vmatprep.subr.mxu0 %v2984
        %3048 = vmatpush1.msra.mxu0 %v2983
        %3049 = vmatprep.subr.mxu0 %v2986
        %3050 = vmatpush1.msra.mxu0 %v2985
        %3051 = vmatprep.subr.mxu0 %v2988
        %3052 = vmatpush1.msra.mxu0 %v2987
        %3053 = vmatprep.subr.mxu0 %v2990
        %3054 = vmatpush1.msra.mxu0 %v2989
        %3055 = vmatprep.subr.mxu0 %v2992
        %3056 = vmatpush1.msra.mxu0 %v2991
        %3057 = vmatprep.subr.mxu0 %v2994
        %3058 = vmatpush1.msra.mxu0 %v2993
        %3059 = vmatprep.subr.mxu0 %v2996
        %3060 = vmatpush1.msra.mxu0 %v2995
        %3061 = vmatprep.subr.mxu0 %v2998
        %3062 = vmatpush1.msra.mxu0 %v2997
        %3063 = vmatprep.subr.mxu0 %v3000
        %3064 = vmatpush1.msra.mxu0 %v2999
        %3065 = vmatprep.subr.mxu0 %v3002
        %3066 = vmatpush1.msra.mxu0 %v3001
        %3067 = vmatprep.subr.mxu0 %v3004
        %3068 = vmatpush1.msra.mxu0 %v3003
        %3069 = vmatprep.subr.mxu0 %v3006
        %3070 = vmatpush1.msra.mxu0 %v3005
        %3071 = vmatprep.subr.mxu0 %v3008
        %3072 = vmatpush1.msra.mxu0 %v3007
        %3073 = vmatprep.subr.mxu0 %v3010
        %3074 = vmatpush1.msra.mxu0 %v3009
        %3075 = vmatprep.subr.mxu0 %v3012
        %3076 = vmatpush1.msra.mxu0 %v3011
        %3077 = vmatprep.subr.mxu0 %v3014
        %3078 = vmatpush1.msra.mxu0 %v3013
        %3079 = vmatprep.mubr.f32.mxu0 %v2928
        %3080 = vmatmul.mubr.f32.gmra.mrb[0].mxu0 %v2927
        %v3081 = vpop.f32.mrb[0].mxu0
        %v3082 = vadd.f32 0.0, %v3081
        %v3083 = vpop.f32.mrb[0].mxu0
        %v3084 = vadd.f32 0.0, %v3083
        %3085 = vmatprep.mubr.f32.mxu0 %v2930
        %3086 = vmatmul.mubr.f32.gmra.mrb[0].mxu0 %v2929
        %v3087 = vpop.f32.mrb[0].mxu0
        %v3088 = vadd.f32 0.0, %v3087
        %v3089 = vpop.f32.mrb[0].mxu0
        %v3090 = vadd.f32 0.0, %v3089
        %3091 = vmatprep.mubr.f32.mxu0 %v2932
        %3092 = vmatmul.mubr.f32.gmra.mrb[0].mxu0 %v2931
        %v3093 = vpop.f32.mrb[0].mxu0
        %v3094 = vadd.f32 0.0, %v3093
        %v3095 = vpop.f32.mrb[0].mxu0
        %v3096 = vadd.f32 0.0, %v3095
        %3097 = vmatprep.mubr.f32.mxu0 %v2934
        %3098 = vmatmul.mubr.f32.gmra.mrb[0].mxu0 %v2933
        %v3099 = vpop.f32.mrb[0].mxu0
        %v3100 = vadd.f32 0.0, %v3099
        %v3101 = vpop.f32.mrb[0].mxu0
        %v3102 = vadd.f32 0.0, %v3101
        %3103 = vmatprep.mubr.f32.mxu0 %v2936
        %3104 = vmatmul.mubr.f32.gmra.mrb[0].mxu0 %v2935
        %v3105 = vpop.f32.mrb[0].mxu0
        %v3106 = vadd.f32 0.0, %v3105
        %v3107 = vpop.f32.mrb[0].mxu0
        %v3108 = vadd.f32 0.0, %v3107
        %3109 = vmatprep.mubr.f32.mxu0 %v2938
        %3110 = vmatmul.mubr.f32.gmra.mrb[0].mxu0 %v2937
        %v3111 = vpop.f32.mrb[0].mxu0
        %v3112 = vadd.f32 0.0, %v3111
        %v3113 = vpop.f32.mrb[0].mxu0
        %v3114 = vadd.f32 0.0, %v3113
        %3115 = vmatprep.mubr.f32.mxu0 %v2940
        %3116 = vmatmul.mubr.f32.gmra.mrb[0].mxu0 %v2939
        %v3117 = vpop.f32.mrb[0].mxu0
        %v3118 = vadd.f32 0.0, %v3117
        %v3119 = vpop.f32.mrb[0].mxu0
        %v3120 = vadd.f32 0.0, %v3119
        %3121 = vmatprep.mubr.f32.mxu0 %v2942
        %3122 = vmatmul.mubr.f32.gmra.mrb[0].mxu0 %v2941
        %v3123 = vpop.f32.mrb[0].mxu0
        %v3124 = vadd.f32 0.0, %v3123
        %v3125 = vpop.f32.mrb[0].mxu0
        %v3126 = vadd.f32 0.0, %v3125
        %3127 = vmatprep.mubr.f32.mxu0 %v2944
        %3128 = vmatmul.mubr.f32.gmra.mrb[0].mxu0 %v2943
        %v3129 = vpop.f32.mrb[0].mxu0
        %v3130 = vadd.f32 0.0, %v3129
        %v3131 = vpop.f32.mrb[0].mxu0
        %v3132 = vadd.f32 0.0, %v3131
        %3133 = vmatprep.mubr.f32.mxu0 %v2946
        %3134 = vmatmul.mubr.f32.gmra.mrb[0].mxu0 %v2945
        %v3135 = vpop.f32.mrb[0].mxu0
        %v3136 = vadd.f32 0.0, %v3135
        %v3137 = vpop.f32.mrb[0].mxu0
        %v3138 = vadd.f32 0.0, %v3137
        %3139 = vmatprep.mubr.f32.mxu0 %v2948
        %3140 = vmatmul.mubr.f32.gmra.mrb[0].mxu0 %v2947
        %v3141 = vpop.f32.mrb[0].mxu0
        %v3142 = vadd.f32 0.0, %v3141
        %v3143 = vpop.f32.mrb[0].mxu0
        %v3144 = vadd.f32 0.0, %v3143
        %3145 = vmatprep.mubr.f32.mxu0 %v2950
        %3146 = vmatmul.mubr.f32.gmra.mrb[0].mxu0 %v2949
        %v3147 = vpop.f32.mrb[0].mxu0
        %v3148 = vadd.f32 0.0, %v3147
        %v3149 = vpop.f32.mrb[0].mxu0
        %v3150 = vadd.f32 0.0, %v3149
        %3151 = vdwg.mxu0
        %v3152 = vadd.f32 %v2594, %v3082
        %v3153 = vadd.f32 %v2595, %v3084
        %v3154 = vadd.f32 %v2596, %v3088
        %v3155 = vadd.f32 %v2597, %v3090
        %v3156 = vadd.f32 %v2598, %v3094
        %v3157 = vadd.f32 %v2599, %v3096
        %v3158 = vadd.f32 %v2600, %v3100
        %v3159 = vadd.f32 %v2601, %v3102
        %v3160 = vadd.f32 %v2602, %v3106
        %v3161 = vadd.f32 %v2603, %v3108
        %v3162 = vadd.f32 %v2604, %v3112
        %v3163 = vadd.f32 %v2605, %v3114
        %v3164 = vadd.f32 %v2606, %v3118
        %v3165 = vadd.f32 %v2607, %v3120
        %v3166 = vadd.f32 %v2608, %v3124
        %v3167 = vadd.f32 %v2609, %v3126
        %v3168 = vadd.f32 %v2610, %v3130
        %v3169 = vadd.f32 %v2611, %v3132
        %v3170 = vadd.f32 %v2612, %v3136
        %v3171 = vadd.f32 %v2613, %v3138
        %v3172 = vadd.f32 %v2614, %v3142
        %v3173 = vadd.f32 %v2615, %v3144
        %v3174 = vadd.f32 %v2616, %v3148
        %v3175 = vadd.f32 %v2617, %v3150
        %v3176 = vld [vmem:[%s9] sm:$0x3]
        %v3178 = vlaneseq
        %v3179 = vshrl.u32 %v3178, 7
        %v3180 = vsub.s32 0, %v3179
        %v3181 = vrot.slane %v3176, %v3180
        %v3182 = vlaneseq
        %v3183 = vshrl.u32 %v3182, 7
        %v3184 = vsub.s32 1, %v3183
        %v3185 = vrot.slane %v3176, %v3184
        %v3188 = vadd.f32 %v3152, %v3181
        %v3189 = vadd.f32 %v3153, %v3185
        %v3190 = vadd.f32 %v3154, %v3181
        %v3191 = vadd.f32 %v3155, %v3185
        %v3192 = vadd.f32 %v3156, %v3181
        %v3193 = vadd.f32 %v3157, %v3185
        %v3194 = vadd.f32 %v3158, %v3181
        %v3195 = vadd.f32 %v3159, %v3185
        %v3196 = vadd.f32 %v3160, %v3181
        %v3197 = vadd.f32 %v3161, %v3185
        %v3198 = vadd.f32 %v3162, %v3181
        %v3199 = vadd.f32 %v3163, %v3185
        %v3200 = vadd.f32 %v3164, %v3181
        %v3201 = vadd.f32 %v3165, %v3185
        %v3202 = vadd.f32 %v3166, %v3181
        %v3203 = vadd.f32 %v3167, %v3185
        %v3204 = vadd.f32 %v3168, %v3181
        %v3205 = vadd.f32 %v3169, %v3185
        %v3206 = vadd.f32 %v3170, %v3181
        %v3207 = vadd.f32 %v3171, %v3185
        %v3208 = vadd.f32 %v3172, %v3181
        %v3209 = vadd.f32 %v3173, %v3185
        %v3210 = vadd.f32 %v3174, %v3181
        %v3211 = vadd.f32 %v3175, %v3185
        %3212 = vst [vmem:[%s403] sm:$0xff] %v3188
        %3213 = vst [vmem:[%s403 + $0x8] sm:$0xff] %v3189
        %3214 = vst [vmem:[%s403 + $0x10] sm:$0xff] %v3190
        %3215 = vst [vmem:[%s403 + $0x18] sm:$0xff] %v3191
        %3216 = vst [vmem:[%s403 + $0x20] sm:$0xff] %v3192
        %3217 = vst [vmem:[%s403 + $0x28] sm:$0xff] %v3193
        %3218 = vst [vmem:[%s403 + $0x30] sm:$0xff] %v3194
        %3219 = vst [vmem:[%s403 + $0x38] sm:$0xff] %v3195
        %3220 = vst [vmem:[%s403 + $0x40] sm:$0xff] %v3196
        %3221 = vst [vmem:[%s403 + $0x48] sm:$0xff] %v3197
        %3222 = vst [vmem:[%s403 + $0x50] sm:$0xff] %v3198
        %3223 = vst [vmem:[%s403 + $0x58] sm:$0xff] %v3199
        %3224 = vst [vmem:[%s403 + $0x60] sm:$0xff] %v3200
        %3225 = vst [vmem:[%s403 + $0x68] sm:$0xff] %v3201
        %3226 = vst [vmem:[%s403 + $0x70] sm:$0xff] %v3202
        %3227 = vst [vmem:[%s403 + $0x78] sm:$0xff] %v3203
        %3228 = vst [vmem:[%s403 + $0x80] sm:$0xff] %v3204
        %3229 = vst [vmem:[%s403 + $0x88] sm:$0xff] %v3205
        %3230 = vst [vmem:[%s403 + $0x90] sm:$0xff] %v3206
        %3231 = vst [vmem:[%s403 + $0x98] sm:$0xff] %v3207
        %3232 = vst [vmem:[%s403 + $0xa0] sm:$0xff] %v3208
        %3233 = vst [vmem:[%s403 + $0xa8] sm:$0xff] %v3209
        %3234 = vst [vmem:[%s403 + $0xb0] sm:$0xff] %v3210
        %3235 = vst [vmem:[%s403 + $0xb8] sm:$0xff] %v3211
        %v3236 = vld [vmem:[%s409 + $0xc0] sm:$0xff]
        %v3237 = vld [vmem:[%s409 + $0xc8] sm:$0xff]
        %v3238 = vld [vmem:[%s409 + $0xd0] sm:$0xff]
        %v3239 = vld [vmem:[%s409 + $0xd8] sm:$0xff]
        %v3240 = vld [vmem:[%s409 + $0xe0] sm:$0xff]
        %v3241 = vld [vmem:[%s409 + $0xe8] sm:$0xff]
        %v3242 = vld [vmem:[%s409 + $0xf0] sm:$0xff]
        %v3243 = vld [vmem:[%s409 + $0xf8] sm:$0xff]
        %v3244 = vld [vmem:[%s409 + $0x100] sm:$0xff]
        %v3245 = vld [vmem:[%s409 + $0x108] sm:$0xff]
        %v3246 = vld [vmem:[%s409 + $0x110] sm:$0xff]
        %v3247 = vld [vmem:[%s409 + $0x118] sm:$0xff]
        %v3248 = vld [vmem:[%s409 + $0x120] sm:$0xff]
        %v3249 = vld [vmem:[%s409 + $0x128] sm:$0xff]
        %v3250 = vld [vmem:[%s409 + $0x130] sm:$0xff]
        %v3251 = vld [vmem:[%s409 + $0x138] sm:$0xff]
        %v3252 = vld [vmem:[%s409 + $0x140] sm:$0xff]
        %v3253 = vld [vmem:[%s409 + $0x148] sm:$0xff]
        %v3254 = vld [vmem:[%s409 + $0x150] sm:$0xff]
        %v3255 = vld [vmem:[%s409 + $0x158] sm:$0xff]
        %v3256 = vld [vmem:[%s409 + $0x160] sm:$0xff]
        %v3257 = vld [vmem:[%s409 + $0x168] sm:$0xff]
        %v3258 = vld [vmem:[%s409 + $0x170] sm:$0xff]
        %v3259 = vld [vmem:[%s409 + $0x178] sm:$0xff]
        %v3260 = vld [vmem:[%s416 + $0xc0] sm:$0xff]
        %v3261 = vld [vmem:[%s416 + $0xc8] sm:$0xff]
        %v3262 = vld [vmem:[%s416 + $0xd0] sm:$0xff]
        %v3263 = vld [vmem:[%s416 + $0xd8] sm:$0xff]
        %v3264 = vld [vmem:[%s416 + $0xe0] sm:$0xff]
        %v3265 = vld [vmem:[%s416 + $0xe8] sm:$0xff]
        %v3266 = vld [vmem:[%s416 + $0xf0] sm:$0xff]
        %v3267 = vld [vmem:[%s416 + $0xf8] sm:$0xff]
        %v3268 = vld [vmem:[%s416 + $0x100] sm:$0xff]
        %v3269 = vld [vmem:[%s416 + $0x108] sm:$0xff]
        %v3270 = vld [vmem:[%s416 + $0x110] sm:$0xff]
        %v3271 = vld [vmem:[%s416 + $0x118] sm:$0xff]
        %v3272 = vld [vmem:[%s416 + $0x120] sm:$0xff]
        %v3273 = vld [vmem:[%s416 + $0x128] sm:$0xff]
        %v3274 = vld [vmem:[%s416 + $0x130] sm:$0xff]
        %v3275 = vld [vmem:[%s416 + $0x138] sm:$0xff]
        %v3276 = vld [vmem:[%s416 + $0x140] sm:$0xff]
        %v3277 = vld [vmem:[%s416 + $0x148] sm:$0xff]
        %v3278 = vld [vmem:[%s416 + $0x150] sm:$0xff]
        %v3279 = vld [vmem:[%s416 + $0x158] sm:$0xff]
        %v3280 = vld [vmem:[%s416 + $0x160] sm:$0xff]
        %v3281 = vld [vmem:[%s416 + $0x168] sm:$0xff]
        %v3282 = vld [vmem:[%s416 + $0x170] sm:$0xff]
        %v3283 = vld [vmem:[%s416 + $0x178] sm:$0xff]
        %v3284 = vld [vmem:[%s2] sm:$0xff]
        %v3285 = vld [vmem:[%s2 + $0x8] sm:$0xff]
        %v3286 = vld [vmem:[%s2 + $0x10] sm:$0xff]
        %v3287 = vld [vmem:[%s2 + $0x18] sm:$0xff]
        %v3288 = vld [vmem:[%s2 + $0x20] sm:$0xff]
        %v3289 = vld [vmem:[%s2 + $0x28] sm:$0xff]
        %v3290 = vld [vmem:[%s2 + $0x30] sm:$0xff]
        %v3291 = vld [vmem:[%s2 + $0x38] sm:$0xff]
        %v3292 = vld [vmem:[%s2 + $0x40] sm:$0xff]
        %v3293 = vld [vmem:[%s2 + $0x48] sm:$0xff]
        %v3294 = vld [vmem:[%s2 + $0x50] sm:$0xff]
        %v3295 = vld [vmem:[%s2 + $0x58] sm:$0xff]
        %v3296 = vld [vmem:[%s2 + $0x60] sm:$0xff]
        %v3297 = vld [vmem:[%s2 + $0x68] sm:$0xff]
        %v3298 = vld [vmem:[%s2 + $0x70] sm:$0xff]
        %v3299 = vld [vmem:[%s2 + $0x78] sm:$0xff]
        %v3300 = vld [vmem:[%s2 + $0x80] sm:$0xff]
        %v3301 = vld [vmem:[%s2 + $0x88] sm:$0xff]
        %v3302 = vld [vmem:[%s2 + $0x90] sm:$0xff]
        %v3303 = vld [vmem:[%s2 + $0x98] sm:$0xff]
        %v3304 = vld [vmem:[%s2 + $0xa0] sm:$0xff]
        %v3305 = vld [vmem:[%s2 + $0xa8] sm:$0xff]
        %v3306 = vld [vmem:[%s2 + $0xb0] sm:$0xff]
        %v3307 = vld [vmem:[%s2 + $0xb8] sm:$0xff]
        %v3308 = vld [vmem:[%s2 + $0xc0] sm:$0xff]
        %v3309 = vld [vmem:[%s2 + $0xc8] sm:$0xff]
        %v3310 = vld [vmem:[%s2 + $0xd0] sm:$0xff]
        %v3311 = vld [vmem:[%s2 + $0xd8] sm:$0xff]
        %v3312 = vld [vmem:[%s2 + $0xe0] sm:$0xff]
        %v3313 = vld [vmem:[%s2 + $0xe8] sm:$0xff]
        %v3314 = vld [vmem:[%s2 + $0xf0] sm:$0xff]
        %v3315 = vld [vmem:[%s2 + $0xf8] sm:$0xff]
        %v3316 = vld [vmem:[%s2 + $0x100] sm:$0xff]
        %v3317 = vld [vmem:[%s2 + $0x108] sm:$0xff]
        %v3318 = vld [vmem:[%s2 + $0x110] sm:$0xff]
        %v3319 = vld [vmem:[%s2 + $0x118] sm:$0xff]
        %v3320 = vld [vmem:[%s2 + $0x120] sm:$0xff]
        %v3321 = vld [vmem:[%s2 + $0x128] sm:$0xff]
        %v3322 = vld [vmem:[%s2 + $0x130] sm:$0xff]
        %v3323 = vld [vmem:[%s2 + $0x138] sm:$0xff]
        %v3324 = vld [vmem:[%s2 + $0x140] sm:$0xff]
        %v3325 = vld [vmem:[%s2 + $0x148] sm:$0xff]
        %v3326 = vld [vmem:[%s2 + $0x150] sm:$0xff]
        %v3327 = vld [vmem:[%s2 + $0x158] sm:$0xff]
        %v3328 = vld [vmem:[%s2 + $0x160] sm:$0xff]
        %v3329 = vld [vmem:[%s2 + $0x168] sm:$0xff]
        %v3330 = vld [vmem:[%s2 + $0x170] sm:$0xff]
        %v3331 = vld [vmem:[%s2 + $0x178] sm:$0xff]
        %v3332 = vld [vmem:[%s2 + $0x180] sm:$0xff]
        %v3333 = vld [vmem:[%s2 + $0x188] sm:$0xff]
        %v3334 = vld [vmem:[%s2 + $0x190] sm:$0xff]
        %v3335 = vld [vmem:[%s2 + $0x198] sm:$0xff]
        %v3336 = vld [vmem:[%s2 + $0x1a0] sm:$0xff]
        %v3337 = vld [vmem:[%s2 + $0x1a8] sm:$0xff]
        %v3338 = vld [vmem:[%s2 + $0x1b0] sm:$0xff]
        %v3339 = vld [vmem:[%s2 + $0x1b8] sm:$0xff]
        %v3340 = vld [vmem:[%s2 + $0x1c0] sm:$0xff]
        %v3341 = vld [vmem:[%s2 + $0x1c8] sm:$0xff]
        %v3342 = vld [vmem:[%s2 + $0x1d0] sm:$0xff]
        %v3343 = vld [vmem:[%s2 + $0x1d8] sm:$0xff]
        %v3344 = vld [vmem:[%s2 + $0x1e0] sm:$0xff]
        %v3345 = vld [vmem:[%s2 + $0x1e8] sm:$0xff]
        %v3346 = vld [vmem:[%s2 + $0x1f0] sm:$0xff]
        %v3347 = vld [vmem:[%s2 + $0x1f8] sm:$0xff]
        %v3348 = vld [vmem:[%s3] sm:$0x3]
        %v3350 = vlaneseq
        %v3351 = vshrl.u32 %v3350, 7
        %v3352 = vsub.s32 0, %v3351
        %v3353 = vrot.slane %v3348, %v3352
        %v3354 = vlaneseq
        %v3355 = vshrl.u32 %v3354, 7
        %v3356 = vsub.s32 1, %v3355
        %v3357 = vrot.slane %v3348, %v3356
        %3360 = vmatprep.subr.mxu0 %v3285
        %3361 = vmatpush1.msra.mxu0 %v3284
        %3362 = vmatprep.subr.mxu0 %v3287
        %3363 = vmatpush1.msra.mxu0 %v3286
        %3364 = vmatprep.subr.mxu0 %v3289
        %3365 = vmatpush1.msra.mxu0 %v3288
        %3366 = vmatprep.subr.mxu0 %v3291
        %3367 = vmatpush1.msra.mxu0 %v3290
        %3368 = vmatprep.subr.mxu0 %v3293
        %3369 = vmatpush1.msra.mxu0 %v3292
        %3370 = vmatprep.subr.mxu0 %v3295
        %3371 = vmatpush1.msra.mxu0 %v3294
        %3372 = vmatprep.subr.mxu0 %v3297
        %3373 = vmatpush1.msra.mxu0 %v3296
        %3374 = vmatprep.subr.mxu0 %v3299
        %3375 = vmatpush1.msra.mxu0 %v3298
        %3376 = vmatprep.subr.mxu0 %v3301
        %3377 = vmatpush1.msra.mxu0 %v3300
        %3378 = vmatprep.subr.mxu0 %v3303
        %3379 = vmatpush1.msra.mxu0 %v3302
        %3380 = vmatprep.subr.mxu0 %v3305
        %3381 = vmatpush1.msra.mxu0 %v3304
        %3382 = vmatprep.subr.mxu0 %v3307
        %3383 = vmatpush1.msra.mxu0 %v3306
        %3384 = vmatprep.subr.mxu0 %v3309
        %3385 = vmatpush1.msra.mxu0 %v3308
        %3386 = vmatprep.subr.mxu0 %v3311
        %3387 = vmatpush1.msra.mxu0 %v3310
        %3388 = vmatprep.subr.mxu0 %v3313
        %3389 = vmatpush1.msra.mxu0 %v3312
        %3390 = vmatprep.subr.mxu0 %v3315
        %3391 = vmatpush1.msra.mxu0 %v3314
        %3392 = vmatprep.subr.mxu0 %v3317
        %3393 = vmatpush1.msra.mxu0 %v3316
        %3394 = vmatprep.subr.mxu0 %v3319
        %3395 = vmatpush1.msra.mxu0 %v3318
        %3396 = vmatprep.subr.mxu0 %v3321
        %3397 = vmatpush1.msra.mxu0 %v3320
        %3398 = vmatprep.subr.mxu0 %v3323
        %3399 = vmatpush1.msra.mxu0 %v3322
        %3400 = vmatprep.subr.mxu0 %v3325
        %3401 = vmatpush1.msra.mxu0 %v3324
        %3402 = vmatprep.subr.mxu0 %v3327
        %3403 = vmatpush1.msra.mxu0 %v3326
        %3404 = vmatprep.subr.mxu0 %v3329
        %3405 = vmatpush1.msra.mxu0 %v3328
        %3406 = vmatprep.subr.mxu0 %v3331
        %3407 = vmatpush1.msra.mxu0 %v3330
        %3408 = vmatprep.subr.mxu0 %v3333
        %3409 = vmatpush1.msra.mxu0 %v3332
        %3410 = vmatprep.subr.mxu0 %v3335
        %3411 = vmatpush1.msra.mxu0 %v3334
        %3412 = vmatprep.subr.mxu0 %v3337
        %3413 = vmatpush1.msra.mxu0 %v3336
        %3414 = vmatprep.subr.mxu0 %v3339
        %3415 = vmatpush1.msra.mxu0 %v3338
        %3416 = vmatprep.subr.mxu0 %v3341
        %3417 = vmatpush1.msra.mxu0 %v3340
        %3418 = vmatprep.subr.mxu0 %v3343
        %3419 = vmatpush1.msra.mxu0 %v3342
        %3420 = vmatprep.subr.mxu0 %v3345
        %3421 = vmatpush1.msra.mxu0 %v3344
        %3422 = vmatprep.subr.mxu0 %v3347
        %3423 = vmatpush1.msra.mxu0 %v3346
        %3424 = vmatprep.mubr.f32.mxu0 %v3237
        %3425 = vmatmul.mubr.f32.gmra.mrb[0].mxu0 %v3236
        %v3426 = vpop.f32.mrb[0].mxu0
        %v3427 = vadd.f32 %v3353, %v3426
        %v3428 = vpop.f32.mrb[0].mxu0
        %v3429 = vadd.f32 %v3357, %v3428
        %3430 = vmatprep.mubr.f32.mxu0 %v3239
        %3431 = vmatmul.mubr.f32.gmra.mrb[0].mxu0 %v3238
        %v3432 = vpop.f32.mrb[0].mxu0
        %v3433 = vadd.f32 %v3353, %v3432
        %v3434 = vpop.f32.mrb[0].mxu0
        %v3435 = vadd.f32 %v3357, %v3434
        %3436 = vmatprep.mubr.f32.mxu0 %v3241
        %3437 = vmatmul.mubr.f32.gmra.mrb[0].mxu0 %v3240
        %v3438 = vpop.f32.mrb[0].mxu0
        %v3439 = vadd.f32 %v3353, %v3438
        %v3440 = vpop.f32.mrb[0].mxu0
        %v3441 = vadd.f32 %v3357, %v3440
        %3442 = vmatprep.mubr.f32.mxu0 %v3243
        %3443 = vmatmul.mubr.f32.gmra.mrb[0].mxu0 %v3242
        %v3444 = vpop.f32.mrb[0].mxu0
        %v3445 = vadd.f32 %v3353, %v3444
        %v3446 = vpop.f32.mrb[0].mxu0
        %v3447 = vadd.f32 %v3357, %v3446
        %3448 = vmatprep.mubr.f32.mxu0 %v3245
        %3449 = vmatmul.mubr.f32.gmra.mrb[0].mxu0 %v3244
        %v3450 = vpop.f32.mrb[0].mxu0
        %v3451 = vadd.f32 %v3353, %v3450
        %v3452 = vpop.f32.mrb[0].mxu0
        %v3453 = vadd.f32 %v3357, %v3452
        %3454 = vmatprep.mubr.f32.mxu0 %v3247
        %3455 = vmatmul.mubr.f32.gmra.mrb[0].mxu0 %v3246
        %v3456 = vpop.f32.mrb[0].mxu0
        %v3457 = vadd.f32 %v3353, %v3456
        %v3458 = vpop.f32.mrb[0].mxu0
        %v3459 = vadd.f32 %v3357, %v3458
        %3460 = vmatprep.mubr.f32.mxu0 %v3249
        %3461 = vmatmul.mubr.f32.gmra.mrb[0].mxu0 %v3248
        %v3462 = vpop.f32.mrb[0].mxu0
        %v3463 = vadd.f32 %v3353, %v3462
        %v3464 = vpop.f32.mrb[0].mxu0
        %v3465 = vadd.f32 %v3357, %v3464
        %3466 = vmatprep.mubr.f32.mxu0 %v3251
        %3467 = vmatmul.mubr.f32.gmra.mrb[0].mxu0 %v3250
        %v3468 = vpop.f32.mrb[0].mxu0
        %v3469 = vadd.f32 %v3353, %v3468
        %v3470 = vpop.f32.mrb[0].mxu0
        %v3471 = vadd.f32 %v3357, %v3470
        %3472 = vmatprep.mubr.f32.mxu0 %v3253
        %3473 = vmatmul.mubr.f32.gmra.mrb[0].mxu0 %v3252
        %v3474 = vpop.f32.mrb[0].mxu0
        %v3475 = vadd.f32 %v3353, %v3474
        %v3476 = vpop.f32.mrb[0].mxu0
        %v3477 = vadd.f32 %v3357, %v3476
        %3478 = vmatprep.mubr.f32.mxu0 %v3255
        %3479 = vmatmul.mubr.f32.gmra.mrb[0].mxu0 %v3254
        %v3480 = vpop.f32.mrb[0].mxu0
        %v3481 = vadd.f32 %v3353, %v3480
        %v3482 = vpop.f32.mrb[0].mxu0
        %v3483 = vadd.f32 %v3357, %v3482
        %3484 = vmatprep.mubr.f32.mxu0 %v3257
        %3485 = vmatmul.mubr.f32.gmra.mrb[0].mxu0 %v3256
        %v3486 = vpop.f32.mrb[0].mxu0
        %v3487 = vadd.f32 %v3353, %v3486
        %v3488 = vpop.f32.mrb[0].mxu0
        %v3489 = vadd.f32 %v3357, %v3488
        %3490 = vmatprep.mubr.f32.mxu0 %v3259
        %3491 = vmatmul.mubr.f32.gmra.mrb[0].mxu0 %v3258
        %v3492 = vpop.f32.mrb[0].mxu0
        %v3493 = vadd.f32 %v3353, %v3492
        %v3494 = vpop.f32.mrb[0].mxu0
        %v3495 = vadd.f32 %v3357, %v3494
        %3496 = vdwg.mxu0
        %v3497 = vadd.f32 %v3427, %v3260
        %v3498 = vadd.f32 %v3429, %v3261
        %v3499 = vadd.f32 %v3433, %v3262
        %v3500 = vadd.f32 %v3435, %v3263
        %v3501 = vadd.f32 %v3439, %v3264
        %v3502 = vadd.f32 %v3441, %v3265
        %v3503 = vadd.f32 %v3445, %v3266
        %v3504 = vadd.f32 %v3447, %v3267
        %v3505 = vadd.f32 %v3451, %v3268
        %v3506 = vadd.f32 %v3453, %v3269
        %v3507 = vadd.f32 %v3457, %v3270
        %v3508 = vadd.f32 %v3459, %v3271
        %v3509 = vadd.f32 %v3463, %v3272
        %v3510 = vadd.f32 %v3465, %v3273
        %v3511 = vadd.f32 %v3469, %v3274
        %v3512 = vadd.f32 %v3471, %v3275
        %v3513 = vadd.f32 %v3475, %v3276
        %v3514 = vadd.f32 %v3477, %v3277
        %v3515 = vadd.f32 %v3481, %v3278
        %v3516 = vadd.f32 %v3483, %v3279
        %v3517 = vadd.f32 %v3487, %v3280
        %v3518 = vadd.f32 %v3489, %v3281
        %v3519 = vadd.f32 %v3493, %v3282
        %v3520 = vadd.f32 %v3495, %v3283
        %v3521 = vadd.f32 %v3497, %v3498
        %3522 = vadd.xlane.f32.xlu0 %v3521
        %v3523 = vpop.xlane.xlu0 %3522
        %v3524 = vadd.f32 %v3499, %v3500
        %3525 = vadd.xlane.f32.xlu0 %v3524
        %v3526 = vpop.xlane.xlu0 %3525
        %v3527 = vadd.f32 %v3501, %v3502
        %3528 = vadd.xlane.f32.xlu0 %v3527
        %v3529 = vpop.xlane.xlu0 %3528
        %v3530 = vadd.f32 %v3503, %v3504
        %3531 = vadd.xlane.f32.xlu0 %v3530
        %v3532 = vpop.xlane.xlu0 %3531
        %v3533 = vadd.f32 %v3505, %v3506
        %3534 = vadd.xlane.f32.xlu0 %v3533
        %v3535 = vpop.xlane.xlu0 %3534
        %v3536 = vadd.f32 %v3507, %v3508
        %3537 = vadd.xlane.f32.xlu0 %v3536
        %v3538 = vpop.xlane.xlu0 %3537
        %v3539 = vadd.f32 %v3509, %v3510
        %3540 = vadd.xlane.f32.xlu0 %v3539
        %v3541 = vpop.xlane.xlu0 %3540
        %v3542 = vadd.f32 %v3511, %v3512
        %3543 = vadd.xlane.f32.xlu0 %v3542
        %v3544 = vpop.xlane.xlu0 %3543
        %v3545 = vadd.f32 %v3513, %v3514
        %3546 = vadd.xlane.f32.xlu0 %v3545
        %v3547 = vpop.xlane.xlu0 %3546
        %v3548 = vadd.f32 %v3515, %v3516
        %3549 = vadd.xlane.f32.xlu0 %v3548
        %v3550 = vpop.xlane.xlu0 %3549
        %v3551 = vadd.f32 %v3517, %v3518
        %3552 = vadd.xlane.f32.xlu0 %v3551
        %v3553 = vpop.xlane.xlu0 %3552
        %v3554 = vadd.f32 %v3519, %v3520
        %3555 = vadd.xlane.f32.xlu0 %v3554
        %v3556 = vpop.xlane.xlu0 %3555
        %v3557 = vmul.f32 %v3497, %v3497
        %v3558 = vmul.f32 %v3498, %v3498
        %v3559 = vmul.f32 %v3499, %v3499
        %v3560 = vmul.f32 %v3500, %v3500
        %v3561 = vmul.f32 %v3501, %v3501
        %v3562 = vmul.f32 %v3502, %v3502
        %v3563 = vmul.f32 %v3503, %v3503
        %v3564 = vmul.f32 %v3504, %v3504
        %v3565 = vmul.f32 %v3505, %v3505
        %v3566 = vmul.f32 %v3506, %v3506
        %v3567 = vmul.f32 %v3507, %v3507
        %v3568 = vmul.f32 %v3508, %v3508
        %v3569 = vmul.f32 %v3509, %v3509
        %v3570 = vmul.f32 %v3510, %v3510
        %v3571 = vmul.f32 %v3511, %v3511
        %v3572 = vmul.f32 %v3512, %v3512
        %v3573 = vmul.f32 %v3513, %v3513
        %v3574 = vmul.f32 %v3514, %v3514
        %v3575 = vmul.f32 %v3515, %v3515
        %v3576 = vmul.f32 %v3516, %v3516
        %v3577 = vmul.f32 %v3517, %v3517
        %v3578 = vmul.f32 %v3518, %v3518
        %v3579 = vmul.f32 %v3519, %v3519
        %v3580 = vmul.f32 %v3520, %v3520
        %v3581 = vadd.f32 %v3557, %v3558
        %3582 = vadd.xlane.f32.xlu0 %v3581
        %v3583 = vpop.xlane.xlu0 %3582
        %v3584 = vadd.f32 %v3559, %v3560
        %3585 = vadd.xlane.f32.xlu0 %v3584
        %v3586 = vpop.xlane.xlu0 %3585
        %v3587 = vadd.f32 %v3561, %v3562
        %3588 = vadd.xlane.f32.xlu0 %v3587
        %v3589 = vpop.xlane.xlu0 %3588
        %v3590 = vadd.f32 %v3563, %v3564
        %3591 = vadd.xlane.f32.xlu0 %v3590
        %v3592 = vpop.xlane.xlu0 %3591
        %v3593 = vadd.f32 %v3565, %v3566
        %3594 = vadd.xlane.f32.xlu0 %v3593
        %v3595 = vpop.xlane.xlu0 %3594
        %v3596 = vadd.f32 %v3567, %v3568
        %3597 = vadd.xlane.f32.xlu0 %v3596
        %v3598 = vpop.xlane.xlu0 %3597
        %v3599 = vadd.f32 %v3569, %v3570
        %3600 = vadd.xlane.f32.xlu0 %v3599
        %v3601 = vpop.xlane.xlu0 %3600
        %v3602 = vadd.f32 %v3571, %v3572
        %3603 = vadd.xlane.f32.xlu0 %v3602
        %v3604 = vpop.xlane.xlu0 %3603
        %v3605 = vadd.f32 %v3573, %v3574
        %3606 = vadd.xlane.f32.xlu0 %v3605
        %v3607 = vpop.xlane.xlu0 %3606
        %v3608 = vadd.f32 %v3575, %v3576
        %3609 = vadd.xlane.f32.xlu0 %v3608
        %v3610 = vpop.xlane.xlu0 %3609
        %v3611 = vadd.f32 %v3577, %v3578
        %3612 = vadd.xlane.f32.xlu0 %v3611
        %v3613 = vpop.xlane.xlu0 %3612
        %v3614 = vadd.f32 %v3579, %v3580
        %3615 = vadd.xlane.f32.xlu0 %v3614
        %v3616 = vpop.xlane.xlu0 %3615
        %v3617 = vmul.f32 %v3523, 0.00390625
        %v3618 = vmul.f32 %v3526, 0.00390625
        %v3619 = vmul.f32 %v3529, 0.00390625
        %v3620 = vmul.f32 %v3532, 0.00390625
        %v3621 = vmul.f32 %v3535, 0.00390625
        %v3622 = vmul.f32 %v3538, 0.00390625
        %v3623 = vmul.f32 %v3541, 0.00390625
        %v3624 = vmul.f32 %v3544, 0.00390625
        %v3625 = vmul.f32 %v3547, 0.00390625
        %v3626 = vmul.f32 %v3550, 0.00390625
        %v3627 = vmul.f32 %v3553, 0.00390625
        %v3628 = vmul.f32 %v3556, 0.00390625
        %v3629 = vmul.f32 %v3583, 0.00390625
        %v3630 = vmul.f32 %v3586, 0.00390625
        %v3631 = vmul.f32 %v3589, 0.00390625
        %v3632 = vmul.f32 %v3592, 0.00390625
        %v3633 = vmul.f32 %v3595, 0.00390625
        %v3634 = vmul.f32 %v3598, 0.00390625
        %v3635 = vmul.f32 %v3601, 0.00390625
        %v3636 = vmul.f32 %v3604, 0.00390625
        %v3637 = vmul.f32 %v3607, 0.00390625
        %v3638 = vmul.f32 %v3610, 0.00390625
        %v3639 = vmul.f32 %v3613, 0.00390625
        %v3640 = vmul.f32 %v3616, 0.00390625
        %v3641 = vmul.f32 %v3617, %v3617
        %v3642 = vmul.f32 %v3618, %v3618
        %v3643 = vmul.f32 %v3619, %v3619
        %v3644 = vmul.f32 %v3620, %v3620
        %v3645 = vmul.f32 %v3621, %v3621
        %v3646 = vmul.f32 %v3622, %v3622
        %v3647 = vmul.f32 %v3623, %v3623
        %v3648 = vmul.f32 %v3624, %v3624
        %v3649 = vmul.f32 %v3625, %v3625
        %v3650 = vmul.f32 %v3626, %v3626
        %v3651 = vmul.f32 %v3627, %v3627
        %v3652 = vmul.f32 %v3628, %v3628
        %v3653 = vsub.f32 %v3629, %v3641
        %v3654 = vsub.f32 %v3630, %v3642
        %v3655 = vsub.f32 %v3631, %v3643
        %v3656 = vsub.f32 %v3632, %v3644
        %v3657 = vsub.f32 %v3633, %v3645
        %v3658 = vsub.f32 %v3634, %v3646
        %v3659 = vsub.f32 %v3635, %v3647
        %v3660 = vsub.f32 %v3636, %v3648
        %v3661 = vsub.f32 %v3637, %v3649
        %v3662 = vsub.f32 %v3638, %v3650
        %v3663 = vsub.f32 %v3639, %v3651
        %v3664 = vsub.f32 %v3640, %v3652
        %v3665 = vsub.f32 %v3497, %v3617
        %v3666 = vsub.f32 %v3498, %v3617
        %v3667 = vsub.f32 %v3499, %v3618
        %v3668 = vsub.f32 %v3500, %v3618
        %v3669 = vsub.f32 %v3501, %v3619
        %v3670 = vsub.f32 %v3502, %v3619
        %v3671 = vsub.f32 %v3503, %v3620
        %v3672 = vsub.f32 %v3504, %v3620
        %v3673 = vsub.f32 %v3505, %v3621
        %v3674 = vsub.f32 %v3506, %v3621
        %v3675 = vsub.f32 %v3507, %v3622
        %v3676 = vsub.f32 %v3508, %v3622
        %v3677 = vsub.f32 %v3509, %v3623
        %v3678 = vsub.f32 %v3510, %v3623
        %v3679 = vsub.f32 %v3511, %v3624
        %v3680 = vsub.f32 %v3512, %v3624
        %v3681 = vsub.f32 %v3513, %v3625
        %v3682 = vsub.f32 %v3514, %v3625
        %v3683 = vsub.f32 %v3515, %v3626
        %v3684 = vsub.f32 %v3516, %v3626
        %v3685 = vsub.f32 %v3517, %v3627
        %v3686 = vsub.f32 %v3518, %v3627
        %v3687 = vsub.f32 %v3519, %v3628
        %v3688 = vsub.f32 %v3520, %v3628
        %v3689 = vadd.f32 %v3653, 1e-12
        %v3690 = vadd.f32 %v3654, 1e-12
        %v3691 = vadd.f32 %v3655, 1e-12
        %v3692 = vadd.f32 %v3656, 1e-12
        %v3693 = vadd.f32 %v3657, 1e-12
        %v3694 = vadd.f32 %v3658, 1e-12
        %v3695 = vadd.f32 %v3659, 1e-12
        %v3696 = vadd.f32 %v3660, 1e-12
        %v3697 = vadd.f32 %v3661, 1e-12
        %v3698 = vadd.f32 %v3662, 1e-12
        %v3699 = vadd.f32 %v3663, 1e-12
        %v3700 = vadd.f32 %v3664, 1e-12
        %v3701 = vrsqrt.pop %v3689
        %v3702 = vrsqrt.pop %v3690
        %v3703 = vrsqrt.pop %v3691
        %v3704 = vrsqrt.pop %v3692
        %v3705 = vrsqrt.pop %v3693
        %v3706 = vrsqrt.pop %v3694
        %v3707 = vrsqrt.pop %v3695
        %v3708 = vrsqrt.pop %v3696
        %v3709 = vrsqrt.pop %v3697
        %v3710 = vrsqrt.pop %v3698
        %v3711 = vrsqrt.pop %v3699
        %v3712 = vrsqrt.pop %v3700
        %v3713 = vmul.f32 %v3665, %v3701
        %v3714 = vmul.f32 %v3666, %v3701
        %v3715 = vmul.f32 %v3667, %v3702
        %v3716 = vmul.f32 %v3668, %v3702
        %v3717 = vmul.f32 %v3669, %v3703
        %v3718 = vmul.f32 %v3670, %v3703
        %v3719 = vmul.f32 %v3671, %v3704
        %v3720 = vmul.f32 %v3672, %v3704
        %v3721 = vmul.f32 %v3673, %v3705
        %v3722 = vmul.f32 %v3674, %v3705
        %v3723 = vmul.f32 %v3675, %v3706
        %v3724 = vmul.f32 %v3676, %v3706
        %v3725 = vmul.f32 %v3677, %v3707
        %v3726 = vmul.f32 %v3678, %v3707
        %v3727 = vmul.f32 %v3679, %v3708
        %v3728 = vmul.f32 %v3680, %v3708
        %v3729 = vmul.f32 %v3681, %v3709
        %v3730 = vmul.f32 %v3682, %v3709
        %v3731 = vmul.f32 %v3683, %v3710
        %v3732 = vmul.f32 %v3684, %v3710
        %v3733 = vmul.f32 %v3685, %v3711
        %v3734 = vmul.f32 %v3686, %v3711
        %v3735 = vmul.f32 %v3687, %v3712
        %v3736 = vmul.f32 %v3688, %v3712
        %v3737 = vld [vmem:[%s4] sm:$0x3]
        %v3739 = vlaneseq
        %v3740 = vshrl.u32 %v3739, 7
        %v3741 = vsub.s32 0, %v3740
        %v3742 = vrot.slane %v3737, %v3741
        %v3743 = vlaneseq
        %v3744 = vshrl.u32 %v3743, 7
        %v3745 = vsub.s32 1, %v3744
        %v3746 = vrot.slane %v3737, %v3745
        %v3749 = vmul.f32 %v3713, %v3742
        %v3750 = vmul.f32 %v3714, %v3746
        %v3751 = vmul.f32 %v3715, %v3742
        %v3752 = vmul.f32 %v3716, %v3746
        %v3753 = vmul.f32 %v3717, %v3742
        %v3754 = vmul.f32 %v3718, %v3746
        %v3755 = vmul.f32 %v3719, %v3742
        %v3756 = vmul.f32 %v3720, %v3746
        %v3757 = vmul.f32 %v3721, %v3742
        %v3758 = vmul.f32 %v3722, %v3746
        %v3759 = vmul.f32 %v3723, %v3742
        %v3760 = vmul.f32 %v3724, %v3746
        %v3761 = vmul.f32 %v3725, %v3742
        %v3762 = vmul.f32 %v3726, %v3746
        %v3763 = vmul.f32 %v3727, %v3742
        %v3764 = vmul.f32 %v3728, %v3746
        %v3765 = vmul.f32 %v3729, %v3742
        %v3766 = vmul.f32 %v3730, %v3746
        %v3767 = vmul.f32 %v3731, %v3742
        %v3768 = vmul.f32 %v3732, %v3746
        %v3769 = vmul.f32 %v3733, %v3742
        %v3770 = vmul.f32 %v3734, %v3746
        %v3771 = vmul.f32 %v3735, %v3742
        %v3772 = vmul.f32 %v3736, %v3746
        %v3773 = vld [vmem:[%s5] sm:$0x3]
        %v3775 = vlaneseq
        %v3776 = vshrl.u32 %v3775, 7
        %v3777 = vsub.s32 0, %v3776
        %v3778 = vrot.slane %v3773, %v3777
        %v3779 = vlaneseq
        %v3780 = vshrl.u32 %v3779, 7
        %v3781 = vsub.s32 1, %v3780
        %v3782 = vrot.slane %v3773, %v3781
        %v3785 = vadd.f32 %v3749, %v3778
        %v3786 = vadd.f32 %v3750, %v3782
        %v3787 = vadd.f32 %v3751, %v3778
        %v3788 = vadd.f32 %v3752, %v3782
        %v3789 = vadd.f32 %v3753, %v3778
        %v3790 = vadd.f32 %v3754, %v3782
        %v3791 = vadd.f32 %v3755, %v3778
        %v3792 = vadd.f32 %v3756, %v3782
        %v3793 = vadd.f32 %v3757, %v3778
        %v3794 = vadd.f32 %v3758, %v3782
        %v3795 = vadd.f32 %v3759, %v3778
        %v3796 = vadd.f32 %v3760, %v3782
        %v3797 = vadd.f32 %v3761, %v3778
        %v3798 = vadd.f32 %v3762, %v3782
        %v3799 = vadd.f32 %v3763, %v3778
        %v3800 = vadd.f32 %v3764, %v3782
        %v3801 = vadd.f32 %v3765, %v3778
        %v3802 = vadd.f32 %v3766, %v3782
        %v3803 = vadd.f32 %v3767, %v3778
        %v3804 = vadd.f32 %v3768, %v3782
        %v3805 = vadd.f32 %v3769, %v3778
        %v3806 = vadd.f32 %v3770, %v3782
        %v3807 = vadd.f32 %v3771, %v3778
        %v3808 = vadd.f32 %v3772, %v3782
        %v3809 = vld [vmem:[#allocation2] sm:$0xff]
        %v3810 = vld [vmem:[#allocation2 + $0x8] sm:$0xff]
        %v3811 = vld [vmem:[#allocation2 + $0x40] sm:$0xff]
        %v3812 = vld [vmem:[#allocation2 + $0x48] sm:$0xff]
        %v3813 = vld [vmem:[#allocation2 + $0x80] sm:$0xff]
        %v3814 = vld [vmem:[#allocation2 + $0x88] sm:$0xff]
        %v3815 = vld [vmem:[#allocation2 + $0xc0] sm:$0xff]
        %v3816 = vld [vmem:[#allocation2 + $0xc8] sm:$0xff]
        %v3817 = vld [vmem:[#allocation2 + $0x100] sm:$0xff]
        %v3818 = vld [vmem:[#allocation2 + $0x108] sm:$0xff]
        %v3819 = vld [vmem:[#allocation2 + $0x140] sm:$0xff]
        %v3820 = vld [vmem:[#allocation2 + $0x148] sm:$0xff]
        %v3821 = vld [vmem:[#allocation2 + $0x180] sm:$0xff]
        %v3822 = vld [vmem:[#allocation2 + $0x188] sm:$0xff]
        %v3823 = vld [vmem:[#allocation2 + $0x1c0] sm:$0xff]
        %v3824 = vld [vmem:[#allocation2 + $0x1c8] sm:$0xff]
        %v3825 = vld [vmem:[#allocation2 + $0x200] sm:$0xff]
        %v3826 = vld [vmem:[#allocation2 + $0x208] sm:$0xff]
        %v3827 = vld [vmem:[#allocation2 + $0x240] sm:$0xff]
        %v3828 = vld [vmem:[#allocation2 + $0x248] sm:$0xff]
        %v3829 = vld [vmem:[#allocation2 + $0x280] sm:$0xff]
        %v3830 = vld [vmem:[#allocation2 + $0x288] sm:$0xff]
        %v3831 = vld [vmem:[#allocation2 + $0x2c0] sm:$0xff]
        %v3832 = vld [vmem:[#allocation2 + $0x2c8] sm:$0xff]
        %v3833 = vld [vmem:[#allocation2 + $0x300] sm:$0xff]
        %v3834 = vld [vmem:[#allocation2 + $0x308] sm:$0xff]
        %v3835 = vld [vmem:[#allocation2 + $0x340] sm:$0xff]
        %v3836 = vld [vmem:[#allocation2 + $0x348] sm:$0xff]
        %v3837 = vld [vmem:[#allocation2 + $0x380] sm:$0xff]
        %v3838 = vld [vmem:[#allocation2 + $0x388] sm:$0xff]
        %v3839 = vld [vmem:[#allocation2 + $0x3c0] sm:$0xff]
        %v3840 = vld [vmem:[#allocation2 + $0x3c8] sm:$0xff]
        %v3841 = vld [vmem:[#allocation2 + $0x400] sm:$0xff]
        %v3842 = vld [vmem:[#allocation2 + $0x408] sm:$0xff]
        %v3843 = vld [vmem:[#allocation2 + $0x440] sm:$0xff]
        %v3844 = vld [vmem:[#allocation2 + $0x448] sm:$0xff]
        %v3845 = vld [vmem:[#allocation2 + $0x480] sm:$0xff]
        %v3846 = vld [vmem:[#allocation2 + $0x488] sm:$0xff]
        %v3847 = vld [vmem:[#allocation2 + $0x4c0] sm:$0xff]
        %v3848 = vld [vmem:[#allocation2 + $0x4c8] sm:$0xff]
        %v3849 = vld [vmem:[#allocation2 + $0x500] sm:$0xff]
        %v3850 = vld [vmem:[#allocation2 + $0x508] sm:$0xff]
        %v3851 = vld [vmem:[#allocation2 + $0x540] sm:$0xff]
        %v3852 = vld [vmem:[#allocation2 + $0x548] sm:$0xff]
        %v3853 = vld [vmem:[#allocation2 + $0x580] sm:$0xff]
        %v3854 = vld [vmem:[#allocation2 + $0x588] sm:$0xff]
        %v3855 = vld [vmem:[#allocation2 + $0x5c0] sm:$0xff]
        %v3856 = vld [vmem:[#allocation2 + $0x5c8] sm:$0xff]
        %v3857 = vld [vmem:[#allocation2 + $0x600] sm:$0xff]
        %v3858 = vld [vmem:[#allocation2 + $0x608] sm:$0xff]
        %v3859 = vld [vmem:[#allocation2 + $0x640] sm:$0xff]
        %v3860 = vld [vmem:[#allocation2 + $0x648] sm:$0xff]
        %v3861 = vld [vmem:[#allocation2 + $0x680] sm:$0xff]
        %v3862 = vld [vmem:[#allocation2 + $0x688] sm:$0xff]
        %v3863 = vld [vmem:[#allocation2 + $0x6c0] sm:$0xff]
        %v3864 = vld [vmem:[#allocation2 + $0x6c8] sm:$0xff]
        %v3865 = vld [vmem:[#allocation2 + $0x700] sm:$0xff]
        %v3866 = vld [vmem:[#allocation2 + $0x708] sm:$0xff]
        %v3867 = vld [vmem:[#allocation2 + $0x740] sm:$0xff]
        %v3868 = vld [vmem:[#allocation2 + $0x748] sm:$0xff]
        %v3869 = vld [vmem:[#allocation2 + $0x780] sm:$0xff]
        %v3870 = vld [vmem:[#allocation2 + $0x788] sm:$0xff]
        %v3871 = vld [vmem:[#allocation2 + $0x7c0] sm:$0xff]
        %v3872 = vld [vmem:[#allocation2 + $0x7c8] sm:$0xff]
        %v3873 = vld [vmem:[%s7] sm:$0x3]
        %v3875 = vlaneseq
        %v3876 = vshrl.u32 %v3875, 7
        %v3877 = vsub.s32 0, %v3876
        %v3878 = vrot.slane %v3873, %v3877
        %v3879 = vlaneseq
        %v3880 = vshrl.u32 %v3879, 7
        %v3881 = vsub.s32 1, %v3880
        %v3882 = vrot.slane %v3873, %v3881
        %3885 = vmatprep.subr.mxu0 %v3810
        %3886 = vmatpush1.msra.mxu0 %v3809
        %3887 = vmatprep.subr.mxu0 %v3812
        %3888 = vmatpush1.msra.mxu0 %v3811
        %3889 = vmatprep.subr.mxu0 %v3814
        %3890 = vmatpush1.msra.mxu0 %v3813
        %3891 = vmatprep.subr.mxu0 %v3816
        %3892 = vmatpush1.msra.mxu0 %v3815
        %3893 = vmatprep.subr.mxu0 %v3818
        %3894 = vmatpush1.msra.mxu0 %v3817
        %3895 = vmatprep.subr.mxu0 %v3820
        %3896 = vmatpush1.msra.mxu0 %v3819
        %3897 = vmatprep.subr.mxu0 %v3822
        %3898 = vmatpush1.msra.mxu0 %v3821
        %3899 = vmatprep.subr.mxu0 %v3824
        %3900 = vmatpush1.msra.mxu0 %v3823
        %3901 = vmatprep.subr.mxu0 %v3826
        %3902 = vmatpush1.msra.mxu0 %v3825
        %3903 = vmatprep.subr.mxu0 %v3828
        %3904 = vmatpush1.msra.mxu0 %v3827
        %3905 = vmatprep.subr.mxu0 %v3830
        %3906 = vmatpush1.msra.mxu0 %v3829
        %3907 = vmatprep.subr.mxu0 %v3832
        %3908 = vmatpush1.msra.mxu0 %v3831
        %3909 = vmatprep.subr.mxu0 %v3834
        %3910 = vmatpush1.msra.mxu0 %v3833
        %3911 = vmatprep.subr.mxu0 %v3836
        %3912 = vmatpush1.msra.mxu0 %v3835
        %3913 = vmatprep.subr.mxu0 %v3838
        %3914 = vmatpush1.msra.mxu0 %v3837
        %3915 = vmatprep.subr.mxu0 %v3840
        %3916 = vmatpush1.msra.mxu0 %v3839
        %3917 = vmatprep.subr.mxu0 %v3842
        %3918 = vmatpush1.msra.mxu0 %v3841
        %3919 = vmatprep.subr.mxu0 %v3844
        %3920 = vmatpush1.msra.mxu0 %v3843
        %3921 = vmatprep.subr.mxu0 %v3846
        %3922 = vmatpush1.msra.mxu0 %v3845
        %3923 = vmatprep.subr.mxu0 %v3848
        %3924 = vmatpush1.msra.mxu0 %v3847
        %3925 = vmatprep.subr.mxu0 %v3850
        %3926 = vmatpush1.msra.mxu0 %v3849
        %3927 = vmatprep.subr.mxu0 %v3852
        %3928 = vmatpush1.msra.mxu0 %v3851
        %3929 = vmatprep.subr.mxu0 %v3854
        %3930 = vmatpush1.msra.mxu0 %v3853
        %3931 = vmatprep.subr.mxu0 %v3856
        %3932 = vmatpush1.msra.mxu0 %v3855
        %3933 = vmatprep.subr.mxu0 %v3858
        %3934 = vmatpush1.msra.mxu0 %v3857
        %3935 = vmatprep.subr.mxu0 %v3860
        %3936 = vmatpush1.msra.mxu0 %v3859
        %3937 = vmatprep.subr.mxu0 %v3862
        %3938 = vmatpush1.msra.mxu0 %v3861
        %3939 = vmatprep.subr.mxu0 %v3864
        %3940 = vmatpush1.msra.mxu0 %v3863
        %3941 = vmatprep.subr.mxu0 %v3866
        %3942 = vmatpush1.msra.mxu0 %v3865
        %3943 = vmatprep.subr.mxu0 %v3868
        %3944 = vmatpush1.msra.mxu0 %v3867
        %3945 = vmatprep.subr.mxu0 %v3870
        %3946 = vmatpush1.msra.mxu0 %v3869
        %3947 = vmatprep.subr.mxu0 %v3872
        %3948 = vmatpush1.msra.mxu0 %v3871
        %3949 = vmatprep.mubr.f32.mxu0 %v3786
        %3950 = vmatmul.mubr.f32.gmra.mrb[0].mxu0 %v3785
        %v3951 = vpop.f32.mrb[0].mxu0
        %v3952 = vadd.f32 %v3878, %v3951
        %v3953 = vpop.f32.mrb[0].mxu0
        %v3954 = vadd.f32 %v3882, %v3953
        %3955 = vmatprep.mubr.f32.mxu0 %v3788
        %3956 = vmatmul.mubr.f32.gmra.mrb[0].mxu0 %v3787
        %v3957 = vpop.f32.mrb[0].mxu0
        %v3958 = vadd.f32 %v3878, %v3957
        %v3959 = vpop.f32.mrb[0].mxu0
        %v3960 = vadd.f32 %v3882, %v3959
        %3961 = vmatprep.mubr.f32.mxu0 %v3790
        %3962 = vmatmul.mubr.f32.gmra.mrb[0].mxu0 %v3789
        %v3963 = vpop.f32.mrb[0].mxu0
        %v3964 = vadd.f32 %v3878, %v3963
        %v3965 = vpop.f32.mrb[0].mxu0
        %v3966 = vadd.f32 %v3882, %v3965
        %3967 = vmatprep.mubr.f32.mxu0 %v3792
        %3968 = vmatmul.mubr.f32.gmra.mrb[0].mxu0 %v3791
        %v3969 = vpop.f32.mrb[0].mxu0
        %v3970 = vadd.f32 %v3878, %v3969
        %v3971 = vpop.f32.mrb[0].mxu0
        %v3972 = vadd.f32 %v3882, %v3971
        %3973 = vmatprep.mubr.f32.mxu0 %v3794
        %3974 = vmatmul.mubr.f32.gmra.mrb[0].mxu0 %v3793
        %v3975 = vpop.f32.mrb[0].mxu0
        %v3976 = vadd.f32 %v3878, %v3975
        %v3977 = vpop.f32.mrb[0].mxu0
        %v3978 = vadd.f32 %v3882, %v3977
        %3979 = vmatprep.mubr.f32.mxu0 %v3796
        %3980 = vmatmul.mubr.f32.gmra.mrb[0].mxu0 %v3795
        %v3981 = vpop.f32.mrb[0].mxu0
        %v3982 = vadd.f32 %v3878, %v3981
        %v3983 = vpop.f32.mrb[0].mxu0
        %v3984 = vadd.f32 %v3882, %v3983
        %3985 = vmatprep.mubr.f32.mxu0 %v3798
        %3986 = vmatmul.mubr.f32.gmra.mrb[0].mxu0 %v3797
        %v3987 = vpop.f32.mrb[0].mxu0
        %v3988 = vadd.f32 %v3878, %v3987
        %v3989 = vpop.f32.mrb[0].mxu0
        %v3990 = vadd.f32 %v3882, %v3989
        %3991 = vmatprep.mubr.f32.mxu0 %v3800
        %3992 = vmatmul.mubr.f32.gmra.mrb[0].mxu0 %v3799
        %v3993 = vpop.f32.mrb[0].mxu0
        %v3994 = vadd.f32 %v3878, %v3993
        %v3995 = vpop.f32.mrb[0].mxu0
        %v3996 = vadd.f32 %v3882, %v3995
        %3997 = vmatprep.mubr.f32.mxu0 %v3802
        %3998 = vmatmul.mubr.f32.gmra.mrb[0].mxu0 %v3801
        %v3999 = vpop.f32.mrb[0].mxu0
        %v4000 = vadd.f32 %v3878, %v3999
        %v4001 = vpop.f32.mrb[0].mxu0
        %v4002 = vadd.f32 %v3882, %v4001
        %4003 = vmatprep.mubr.f32.mxu0 %v3804
        %4004 = vmatmul.mubr.f32.gmra.mrb[0].mxu0 %v3803
        %v4005 = vpop.f32.mrb[0].mxu0
        %v4006 = vadd.f32 %v3878, %v4005
        %v4007 = vpop.f32.mrb[0].mxu0
        %v4008 = vadd.f32 %v3882, %v4007
        %4009 = vmatprep.mubr.f32.mxu0 %v3806
        %4010 = vmatmul.mubr.f32.gmra.mrb[0].mxu0 %v3805
        %v4011 = vpop.f32.mrb[0].mxu0
        %v4012 = vadd.f32 %v3878, %v4011
        %v4013 = vpop.f32.mrb[0].mxu0
        %v4014 = vadd.f32 %v3882, %v4013
        %4015 = vmatprep.mubr.f32.mxu0 %v3808
        %4016 = vmatmul.mubr.f32.gmra.mrb[0].mxu0 %v3807
        %v4017 = vpop.f32.mrb[0].mxu0
        %v4018 = vadd.f32 %v3878, %v4017
        %v4019 = vpop.f32.mrb[0].mxu0
        %v4020 = vadd.f32 %v3882, %v4019
        %4021 = vdwg.mxu0
        %v4022 = vmul.f32 %v3952, 0.5
        %v4023 = vmul.f32 %v3954, 0.5
        %v4024 = vmul.f32 %v3958, 0.5
        %v4025 = vmul.f32 %v3960, 0.5
        %v4026 = vmul.f32 %v3964, 0.5
        %v4027 = vmul.f32 %v3966, 0.5
        %v4028 = vmul.f32 %v3970, 0.5
        %v4029 = vmul.f32 %v3972, 0.5
        %v4030 = vmul.f32 %v3976, 0.5
        %v4031 = vmul.f32 %v3978, 0.5
        %v4032 = vmul.f32 %v3982, 0.5
        %v4033 = vmul.f32 %v3984, 0.5
        %v4034 = vmul.f32 %v3988, 0.5
        %v4035 = vmul.f32 %v3990, 0.5
        %v4036 = vmul.f32 %v3994, 0.5
        %v4037 = vmul.f32 %v3996, 0.5
        %v4038 = vmul.f32 %v4000, 0.5
        %v4039 = vmul.f32 %v4002, 0.5
        %v4040 = vmul.f32 %v4006, 0.5
        %v4041 = vmul.f32 %v4008, 0.5
        %v4042 = vmul.f32 %v4012, 0.5
        %v4043 = vmul.f32 %v4014, 0.5
        %v4044 = vmul.f32 %v4018, 0.5
        %v4045 = vmul.f32 %v4020, 0.5
        %v4046 = vmul.f32 %v3952, 0.70710677
        %v4047 = vmul.f32 %v3954, 0.70710677
        %v4048 = vmul.f32 %v3958, 0.70710677
        %v4049 = vmul.f32 %v3960, 0.70710677
        %v4050 = vmul.f32 %v3964, 0.70710677
        %v4051 = vmul.f32 %v3966, 0.70710677
        %v4052 = vmul.f32 %v3970, 0.70710677
        %v4053 = vmul.f32 %v3972, 0.70710677
        %v4054 = vmul.f32 %v3976, 0.70710677
        %v4055 = vmul.f32 %v3978, 0.70710677
        %v4056 = vmul.f32 %v3982, 0.70710677
        %v4057 = vmul.f32 %v3984, 0.70710677
        %v4058 = vmul.f32 %v3988, 0.70710677
        %v4059 = vmul.f32 %v3990, 0.70710677
        %v4060 = vmul.f32 %v3994, 0.70710677
        %v4061 = vmul.f32 %v3996, 0.70710677
        %v4062 = vmul.f32 %v4000, 0.70710677
        %v4063 = vmul.f32 %v4002, 0.70710677
        %v4064 = vmul.f32 %v4006, 0.70710677
        %v4065 = vmul.f32 %v4008, 0.70710677
        %v4066 = vmul.f32 %v4012, 0.70710677
        %v4067 = vmul.f32 %v4014, 0.70710677
        %v4068 = vmul.f32 %v4018, 0.70710677
        %v4069 = vmul.f32 %v4020, 0.70710677
        %v4070 = verf.f32.pop %v4046
        %v4071 = verf.f32.pop %v4047
        %v4072 = verf.f32.pop %v4048
        %v4073 = verf.f32.pop %v4049
        %v4074 = verf.f32.pop %v4050
        %v4075 = verf.f32.pop %v4051
        %v4076 = verf.f32.pop %v4052
        %v4077 = verf.f32.pop %v4053
        %v4078 = verf.f32.pop %v4054
        %v4079 = verf.f32.pop %v4055
        %v4080 = verf.f32.pop %v4056
        %v4081 = verf.f32.pop %v4057
        %v4082 = verf.f32.pop %v4058
        %v4083 = verf.f32.pop %v4059
        %v4084 = verf.f32.pop %v4060
        %v4085 = verf.f32.pop %v4061
        %v4086 = verf.f32.pop %v4062
        %v4087 = verf.f32.pop %v4063
        %v4088 = verf.f32.pop %v4064
        %v4089 = verf.f32.pop %v4065
        %v4090 = verf.f32.pop %v4066
        %v4091 = verf.f32.pop %v4067
        %v4092 = verf.f32.pop %v4068
        %v4093 = verf.f32.pop %v4069
        %v4094 = vadd.f32 %v4070, 1.0
        %v4095 = vadd.f32 %v4071, 1.0
        %v4096 = vadd.f32 %v4072, 1.0
        %v4097 = vadd.f32 %v4073, 1.0
        %v4098 = vadd.f32 %v4074, 1.0
        %v4099 = vadd.f32 %v4075, 1.0
        %v4100 = vadd.f32 %v4076, 1.0
        %v4101 = vadd.f32 %v4077, 1.0
        %v4102 = vadd.f32 %v4078, 1.0
        %v4103 = vadd.f32 %v4079, 1.0
        %v4104 = vadd.f32 %v4080, 1.0
        %v4105 = vadd.f32 %v4081, 1.0
        %v4106 = vadd.f32 %v4082, 1.0
        %v4107 = vadd.f32 %v4083, 1.0
        %v4108 = vadd.f32 %v4084, 1.0
        %v4109 = vadd.f32 %v4085, 1.0
        %v4110 = vadd.f32 %v4086, 1.0
        %v4111 = vadd.f32 %v4087, 1.0
        %v4112 = vadd.f32 %v4088, 1.0
        %v4113 = vadd.f32 %v4089, 1.0
        %v4114 = vadd.f32 %v4090, 1.0
        %v4115 = vadd.f32 %v4091, 1.0
        %v4116 = vadd.f32 %v4092, 1.0
        %v4117 = vadd.f32 %v4093, 1.0
        %v4118 = vmul.f32 %v4022, %v4094
        %v4119 = vmul.f32 %v4023, %v4095
        %v4120 = vmul.f32 %v4024, %v4096
        %v4121 = vmul.f32 %v4025, %v4097
        %v4122 = vmul.f32 %v4026, %v4098
        %v4123 = vmul.f32 %v4027, %v4099
        %v4124 = vmul.f32 %v4028, %v4100
        %v4125 = vmul.f32 %v4029, %v4101
        %v4126 = vmul.f32 %v4030, %v4102
        %v4127 = vmul.f32 %v4031, %v4103
        %v4128 = vmul.f32 %v4032, %v4104
        %v4129 = vmul.f32 %v4033, %v4105
        %v4130 = vmul.f32 %v4034, %v4106
        %v4131 = vmul.f32 %v4035, %v4107
        %v4132 = vmul.f32 %v4036, %v4108
        %v4133 = vmul.f32 %v4037, %v4109
        %v4134 = vmul.f32 %v4038, %v4110
        %v4135 = vmul.f32 %v4039, %v4111
        %v4136 = vmul.f32 %v4040, %v4112
        %v4137 = vmul.f32 %v4041, %v4113
        %v4138 = vmul.f32 %v4042, %v4114
        %v4139 = vmul.f32 %v4043, %v4115
        %v4140 = vmul.f32 %v4044, %v4116
        %v4141 = vmul.f32 %v4045, %v4117
        %v4142 = vld [vmem:[#allocation5] sm:$0xff]
        %v4143 = vld [vmem:[#allocation5 + $0x8] sm:$0xff]
        %v4144 = vld [vmem:[#allocation5 + $0x10] sm:$0xff]
        %v4145 = vld [vmem:[#allocation5 + $0x18] sm:$0xff]
        %v4146 = vld [vmem:[#allocation5 + $0x20] sm:$0xff]
        %v4147 = vld [vmem:[#allocation5 + $0x28] sm:$0xff]
        %v4148 = vld [vmem:[#allocation5 + $0x30] sm:$0xff]
        %v4149 = vld [vmem:[#allocation5 + $0x38] sm:$0xff]
        %v4150 = vld [vmem:[#allocation5 + $0x40] sm:$0xff]
        %v4151 = vld [vmem:[#allocation5 + $0x48] sm:$0xff]
        %v4152 = vld [vmem:[#allocation5 + $0x50] sm:$0xff]
        %v4153 = vld [vmem:[#allocation5 + $0x58] sm:$0xff]
        %v4154 = vld [vmem:[#allocation5 + $0x60] sm:$0xff]
        %v4155 = vld [vmem:[#allocation5 + $0x68] sm:$0xff]
        %v4156 = vld [vmem:[#allocation5 + $0x70] sm:$0xff]
        %v4157 = vld [vmem:[#allocation5 + $0x78] sm:$0xff]
        %v4158 = vld [vmem:[#allocation5 + $0x80] sm:$0xff]
        %v4159 = vld [vmem:[#allocation5 + $0x88] sm:$0xff]
        %v4160 = vld [vmem:[#allocation5 + $0x90] sm:$0xff]
        %v4161 = vld [vmem:[#allocation5 + $0x98] sm:$0xff]
        %v4162 = vld [vmem:[#allocation5 + $0xa0] sm:$0xff]
        %v4163 = vld [vmem:[#allocation5 + $0xa8] sm:$0xff]
        %v4164 = vld [vmem:[#allocation5 + $0xb0] sm:$0xff]
        %v4165 = vld [vmem:[#allocation5 + $0xb8] sm:$0xff]
        %v4166 = vld [vmem:[#allocation5 + $0xc0] sm:$0xff]
        %v4167 = vld [vmem:[#allocation5 + $0xc8] sm:$0xff]
        %v4168 = vld [vmem:[#allocation5 + $0xd0] sm:$0xff]
        %v4169 = vld [vmem:[#allocation5 + $0xd8] sm:$0xff]
        %v4170 = vld [vmem:[#allocation5 + $0xe0] sm:$0xff]
        %v4171 = vld [vmem:[#allocation5 + $0xe8] sm:$0xff]
        %v4172 = vld [vmem:[#allocation5 + $0xf0] sm:$0xff]
        %v4173 = vld [vmem:[#allocation5 + $0xf8] sm:$0xff]
        %v4174 = vld [vmem:[#allocation5 + $0x100] sm:$0xff]
        %v4175 = vld [vmem:[#allocation5 + $0x108] sm:$0xff]
        %v4176 = vld [vmem:[#allocation5 + $0x110] sm:$0xff]
        %v4177 = vld [vmem:[#allocation5 + $0x118] sm:$0xff]
        %v4178 = vld [vmem:[#allocation5 + $0x120] sm:$0xff]
        %v4179 = vld [vmem:[#allocation5 + $0x128] sm:$0xff]
        %v4180 = vld [vmem:[#allocation5 + $0x130] sm:$0xff]
        %v4181 = vld [vmem:[#allocation5 + $0x138] sm:$0xff]
        %v4182 = vld [vmem:[#allocation5 + $0x140] sm:$0xff]
        %v4183 = vld [vmem:[#allocation5 + $0x148] sm:$0xff]
        %v4184 = vld [vmem:[#allocation5 + $0x150] sm:$0xff]
        %v4185 = vld [vmem:[#allocation5 + $0x158] sm:$0xff]
        %v4186 = vld [vmem:[#allocation5 + $0x160] sm:$0xff]
        %v4187 = vld [vmem:[#allocation5 + $0x168] sm:$0xff]
        %v4188 = vld [vmem:[#allocation5 + $0x170] sm:$0xff]
        %v4189 = vld [vmem:[#allocation5 + $0x178] sm:$0xff]
        %v4190 = vld [vmem:[#allocation5 + $0x180] sm:$0xff]
        %v4191 = vld [vmem:[#allocation5 + $0x188] sm:$0xff]
        %v4192 = vld [vmem:[#allocation5 + $0x190] sm:$0xff]
        %v4193 = vld [vmem:[#allocation5 + $0x198] sm:$0xff]
        %v4194 = vld [vmem:[#allocation5 + $0x1a0] sm:$0xff]
        %v4195 = vld [vmem:[#allocation5 + $0x1a8] sm:$0xff]
        %v4196 = vld [vmem:[#allocation5 + $0x1b0] sm:$0xff]
        %v4197 = vld [vmem:[#allocation5 + $0x1b8] sm:$0xff]
        %v4198 = vld [vmem:[#allocation5 + $0x1c0] sm:$0xff]
        %v4199 = vld [vmem:[#allocation5 + $0x1c8] sm:$0xff]
        %v4200 = vld [vmem:[#allocation5 + $0x1d0] sm:$0xff]
        %v4201 = vld [vmem:[#allocation5 + $0x1d8] sm:$0xff]
        %v4202 = vld [vmem:[#allocation5 + $0x1e0] sm:$0xff]
        %v4203 = vld [vmem:[#allocation5 + $0x1e8] sm:$0xff]
        %v4204 = vld [vmem:[#allocation5 + $0x1f0] sm:$0xff]
        %v4205 = vld [vmem:[#allocation5 + $0x1f8] sm:$0xff]
        %v4206 = vld [vmem:[#allocation2 + $0x10] sm:$0xff]
        %v4207 = vld [vmem:[#allocation2 + $0x18] sm:$0xff]
        %v4208 = vld [vmem:[#allocation2 + $0x50] sm:$0xff]
        %v4209 = vld [vmem:[#allocation2 + $0x58] sm:$0xff]
        %v4210 = vld [vmem:[#allocation2 + $0x90] sm:$0xff]
        %v4211 = vld [vmem:[#allocation2 + $0x98] sm:$0xff]
        %v4212 = vld [vmem:[#allocation2 + $0xd0] sm:$0xff]
        %v4213 = vld [vmem:[#allocation2 + $0xd8] sm:$0xff]
        %v4214 = vld [vmem:[#allocation2 + $0x110] sm:$0xff]
        %v4215 = vld [vmem:[#allocation2 + $0x118] sm:$0xff]
        %v4216 = vld [vmem:[#allocation2 + $0x150] sm:$0xff]
        %v4217 = vld [vmem:[#allocation2 + $0x158] sm:$0xff]
        %v4218 = vld [vmem:[#allocation2 + $0x190] sm:$0xff]
        %v4219 = vld [vmem:[#allocation2 + $0x198] sm:$0xff]
        %v4220 = vld [vmem:[#allocation2 + $0x1d0] sm:$0xff]
        %v4221 = vld [vmem:[#allocation2 + $0x1d8] sm:$0xff]
        %v4222 = vld [vmem:[#allocation2 + $0x210] sm:$0xff]
        %v4223 = vld [vmem:[#allocation2 + $0x218] sm:$0xff]
        %v4224 = vld [vmem:[#allocation2 + $0x250] sm:$0xff]
        %v4225 = vld [vmem:[#allocation2 + $0x258] sm:$0xff]
        %v4226 = vld [vmem:[#allocation2 + $0x290] sm:$0xff]
        %v4227 = vld [vmem:[#allocation2 + $0x298] sm:$0xff]
        %v4228 = vld [vmem:[#allocation2 + $0x2d0] sm:$0xff]
        %v4229 = vld [vmem:[#allocation2 + $0x2d8] sm:$0xff]
        %v4230 = vld [vmem:[#allocation2 + $0x310] sm:$0xff]
        %v4231 = vld [vmem:[#allocation2 + $0x318] sm:$0xff]
        %v4232 = vld [vmem:[#allocation2 + $0x350] sm:$0xff]
        %v4233 = vld [vmem:[#allocation2 + $0x358] sm:$0xff]
        %v4234 = vld [vmem:[#allocation2 + $0x390] sm:$0xff]
        %v4235 = vld [vmem:[#allocation2 + $0x398] sm:$0xff]
        %v4236 = vld [vmem:[#allocation2 + $0x3d0] sm:$0xff]
        %v4237 = vld [vmem:[#allocation2 + $0x3d8] sm:$0xff]
        %v4238 = vld [vmem:[#allocation2 + $0x410] sm:$0xff]
        %v4239 = vld [vmem:[#allocation2 + $0x418] sm:$0xff]
        %v4240 = vld [vmem:[#allocation2 + $0x450] sm:$0xff]
        %v4241 = vld [vmem:[#allocation2 + $0x458] sm:$0xff]
        %v4242 = vld [vmem:[#allocation2 + $0x490] sm:$0xff]
        %v4243 = vld [vmem:[#allocation2 + $0x498] sm:$0xff]
        %v4244 = vld [vmem:[#allocation2 + $0x4d0] sm:$0xff]
        %v4245 = vld [vmem:[#allocation2 + $0x4d8] sm:$0xff]
        %v4246 = vld [vmem:[#allocation2 + $0x510] sm:$0xff]
        %v4247 = vld [vmem:[#allocation2 + $0x518] sm:$0xff]
        %v4248 = vld [vmem:[#allocation2 + $0x550] sm:$0xff]
        %v4249 = vld [vmem:[#allocation2 + $0x558] sm:$0xff]
        %v4250 = vld [vmem:[#allocation2 + $0x590] sm:$0xff]
        %v4251 = vld [vmem:[#allocation2 + $0x598] sm:$0xff]
        %v4252 = vld [vmem:[#allocation2 + $0x5d0] sm:$0xff]
        %v4253 = vld [vmem:[#allocation2 + $0x5d8] sm:$0xff]
        %v4254 = vld [vmem:[#allocation2 + $0x610] sm:$0xff]
        %v4255 = vld [vmem:[#allocation2 + $0x618] sm:$0xff]
        %v4256 = vld [vmem:[#allocation2 + $0x650] sm:$0xff]
        %v4257 = vld [vmem:[#allocation2 + $0x658] sm:$0xff]
        %v4258 = vld [vmem:[#allocation2 + $0x690] sm:$0xff]
        %v4259 = vld [vmem:[#allocation2 + $0x698] sm:$0xff]
        %v4260 = vld [vmem:[#allocation2 + $0x6d0] sm:$0xff]
        %v4261 = vld [vmem:[#allocation2 + $0x6d8] sm:$0xff]
        %v4262 = vld [vmem:[#allocation2 + $0x710] sm:$0xff]
        %v4263 = vld [vmem:[#allocation2 + $0x718] sm:$0xff]
        %v4264 = vld [vmem:[#allocation2 + $0x750] sm:$0xff]
        %v4265 = vld [vmem:[#allocation2 + $0x758] sm:$0xff]
        %v4266 = vld [vmem:[#allocation2 + $0x790] sm:$0xff]
        %v4267 = vld [vmem:[#allocation2 + $0x798] sm:$0xff]
        %v4268 = vld [vmem:[#allocation2 + $0x7d0] sm:$0xff]
        %v4269 = vld [vmem:[#allocation2 + $0x7d8] sm:$0xff]
        %v4270 = vld [vmem:[%s7 + $0x2] sm:$0x3]
        %v4272 = vlaneseq
        %v4273 = vshrl.u32 %v4272, 7
        %v4274 = vsub.s32 0, %v4273
        %v4275 = vrot.slane %v4270, %v4274
        %v4276 = vlaneseq
        %v4277 = vshrl.u32 %v4276, 7
        %v4278 = vsub.s32 1, %v4277
        %v4279 = vrot.slane %v4270, %v4278
        %4282 = vmatprep.subr.mxu0 %v4207
        %4283 = vmatpush1.msra.mxu0 %v4206
        %4284 = vmatprep.subr.mxu0 %v4209
        %4285 = vmatpush1.msra.mxu0 %v4208
        %4286 = vmatprep.subr.mxu0 %v4211
        %4287 = vmatpush1.msra.mxu0 %v4210
        %4288 = vmatprep.subr.mxu0 %v4213
        %4289 = vmatpush1.msra.mxu0 %v4212
        %4290 = vmatprep.subr.mxu0 %v4215
        %4291 = vmatpush1.msra.mxu0 %v4214
        %4292 = vmatprep.subr.mxu0 %v4217
        %4293 = vmatpush1.msra.mxu0 %v4216
        %4294 = vmatprep.subr.mxu0 %v4219
        %4295 = vmatpush1.msra.mxu0 %v4218
        %4296 = vmatprep.subr.mxu0 %v4221
        %4297 = vmatpush1.msra.mxu0 %v4220
        %4298 = vmatprep.subr.mxu0 %v4223
        %4299 = vmatpush1.msra.mxu0 %v4222
        %4300 = vmatprep.subr.mxu0 %v4225
        %4301 = vmatpush1.msra.mxu0 %v4224
        %4302 = vmatprep.subr.mxu0 %v4227
        %4303 = vmatpush1.msra.mxu0 %v4226
        %4304 = vmatprep.subr.mxu0 %v4229
        %4305 = vmatpush1.msra.mxu0 %v4228
        %4306 = vmatprep.subr.mxu0 %v4231
        %4307 = vmatpush1.msra.mxu0 %v4230
        %4308 = vmatprep.subr.mxu0 %v4233
        %4309 = vmatpush1.msra.mxu0 %v4232
        %4310 = vmatprep.subr.mxu0 %v4235
        %4311 = vmatpush1.msra.mxu0 %v4234
        %4312 = vmatprep.subr.mxu0 %v4237
        %4313 = vmatpush1.msra.mxu0 %v4236
        %4314 = vmatprep.subr.mxu0 %v4239
        %4315 = vmatpush1.msra.mxu0 %v4238
        %4316 = vmatprep.subr.mxu0 %v4241
        %4317 = vmatpush1.msra.mxu0 %v4240
        %4318 = vmatprep.subr.mxu0 %v4243
        %4319 = vmatpush1.msra.mxu0 %v4242
        %4320 = vmatprep.subr.mxu0 %v4245
        %4321 = vmatpush1.msra.mxu0 %v4244
        %4322 = vmatprep.subr.mxu0 %v4247
        %4323 = vmatpush1.msra.mxu0 %v4246
        %4324 = vmatprep.subr.mxu0 %v4249
        %4325 = vmatpush1.msra.mxu0 %v4248
        %4326 = vmatprep.subr.mxu0 %v4251
        %4327 = vmatpush1.msra.mxu0 %v4250
        %4328 = vmatprep.subr.mxu0 %v4253
        %4329 = vmatpush1.msra.mxu0 %v4252
        %4330 = vmatprep.subr.mxu0 %v4255
        %4331 = vmatpush1.msra.mxu0 %v4254
        %4332 = vmatprep.subr.mxu0 %v4257
        %4333 = vmatpush1.msra.mxu0 %v4256
        %4334 = vmatprep.subr.mxu0 %v4259
        %4335 = vmatpush1.msra.mxu0 %v4258
        %4336 = vmatprep.subr.mxu0 %v4261
        %4337 = vmatpush1.msra.mxu0 %v4260
        %4338 = vmatprep.subr.mxu0 %v4263
        %4339 = vmatpush1.msra.mxu0 %v4262
        %4340 = vmatprep.subr.mxu0 %v4265
        %4341 = vmatpush1.msra.mxu0 %v4264
        %4342 = vmatprep.subr.mxu0 %v4267
        %4343 = vmatpush1.msra.mxu0 %v4266
        %4344 = vmatprep.subr.mxu0 %v4269
        %4345 = vmatpush1.msra.mxu0 %v4268
        %4346 = vmatprep.mubr.f32.mxu0 %v3786
        %4347 = vmatmul.mubr.f32.gmra.mrb[0].mxu0 %v3785
        %v4348 = vpop.f32.mrb[0].mxu0
        %v4349 = vadd.f32 %v4275, %v4348
        %v4350 = vpop.f32.mrb[0].mxu0
        %v4351 = vadd.f32 %v4279, %v4350
        %4352 = vmatprep.mubr.f32.mxu0 %v3788
        %4353 = vmatmul.mubr.f32.gmra.mrb[0].mxu0 %v3787
        %v4354 = vpop.f32.mrb[0].mxu0
        %v4355 = vadd.f32 %v4275, %v4354
        %v4356 = vpop.f32.mrb[0].mxu0
        %v4357 = vadd.f32 %v4279, %v4356
        %4358 = vmatprep.mubr.f32.mxu0 %v3790
        %4359 = vmatmul.mubr.f32.gmra.mrb[0].mxu0 %v3789
        %v4360 = vpop.f32.mrb[0].mxu0
        %v4361 = vadd.f32 %v4275, %v4360
        %v4362 = vpop.f32.mrb[0].mxu0
        %v4363 = vadd.f32 %v4279, %v4362
        %4364 = vmatprep.mubr.f32.mxu0 %v3792
        %4365 = vmatmul.mubr.f32.gmra.mrb[0].mxu0 %v3791
        %v4366 = vpop.f32.mrb[0].mxu0
        %v4367 = vadd.f32 %v4275, %v4366
        %v4368 = vpop.f32.mrb[0].mxu0
        %v4369 = vadd.f32 %v4279, %v4368
        %4370 = vmatprep.mubr.f32.mxu0 %v3794
        %4371 = vmatmul.mubr.f32.gmra.mrb[0].mxu0 %v3793
        %v4372 = vpop.f32.mrb[0].mxu0
        %v4373 = vadd.f32 %v4275, %v4372
        %v4374 = vpop.f32.mrb[0].mxu0
        %v4375 = vadd.f32 %v4279, %v4374
        %4376 = vmatprep.mubr.f32.mxu0 %v3796
        %4377 = vmatmul.mubr.f32.gmra.mrb[0].mxu0 %v3795
        %v4378 = vpop.f32.mrb[0].mxu0
        %v4379 = vadd.f32 %v4275, %v4378
        %v4380 = vpop.f32.mrb[0].mxu0
        %v4381 = vadd.f32 %v4279, %v4380
        %4382 = vmatprep.mubr.f32.mxu0 %v3798
        %4383 = vmatmul.mubr.f32.gmra.mrb[0].mxu0 %v3797
        %v4384 = vpop.f32.mrb[0].mxu0
        %v4385 = vadd.f32 %v4275, %v4384
        %v4386 = vpop.f32.mrb[0].mxu0
        %v4387 = vadd.f32 %v4279, %v4386
        %4388 = vmatprep.mubr.f32.mxu0 %v3800
        %4389 = vmatmul.mubr.f32.gmra.mrb[0].mxu0 %v3799
        %v4390 = vpop.f32.mrb[0].mxu0
        %v4391 = vadd.f32 %v4275, %v4390
        %v4392 = vpop.f32.mrb[0].mxu0
        %v4393 = vadd.f32 %v4279, %v4392
        %4394 = vmatprep.mubr.f32.mxu0 %v3802
        %4395 = vmatmul.mubr.f32.gmra.mrb[0].mxu0 %v3801
        %v4396 = vpop.f32.mrb[0].mxu0
        %v4397 = vadd.f32 %v4275, %v4396
        %v4398 = vpop.f32.mrb[0].mxu0
        %v4399 = vadd.f32 %v4279, %v4398
        %4400 = vmatprep.mubr.f32.mxu0 %v3804
        %4401 = vmatmul.mubr.f32.gmra.mrb[0].mxu0 %v3803
        %v4402 = vpop.f32.mrb[0].mxu0
        %v4403 = vadd.f32 %v4275, %v4402
        %v4404 = vpop.f32.mrb[0].mxu0
        %v4405 = vadd.f32 %v4279, %v4404
        %4406 = vmatprep.mubr.f32.mxu0 %v3806
        %4407 = vmatmul.mubr.f32.gmra.mrb[0].mxu0 %v3805
        %v4408 = vpop.f32.mrb[0].mxu0
        %v4409 = vadd.f32 %v4275, %v4408
        %v4410 = vpop.f32.mrb[0].mxu0
        %v4411 = vadd.f32 %v4279, %v4410
        %4412 = vmatprep.mubr.f32.mxu0 %v3808
        %4413 = vmatmul.mubr.f32.gmra.mrb[0].mxu0 %v3807
        %v4414 = vpop.f32.mrb[0].mxu0
        %v4415 = vadd.f32 %v4275, %v4414
        %v4416 = vpop.f32.mrb[0].mxu0
        %v4417 = vadd.f32 %v4279, %v4416
        %4418 = vdwg.mxu0
        %v4419 = vmul.f32 %v4349, 0.5
        %v4420 = vmul.f32 %v4351, 0.5
        %v4421 = vmul.f32 %v4355, 0.5
        %v4422 = vmul.f32 %v4357, 0.5
        %v4423 = vmul.f32 %v4361, 0.5
        %v4424 = vmul.f32 %v4363, 0.5
        %v4425 = vmul.f32 %v4367, 0.5
        %v4426 = vmul.f32 %v4369, 0.5
        %v4427 = vmul.f32 %v4373, 0.5
        %v4428 = vmul.f32 %v4375, 0.5
        %v4429 = vmul.f32 %v4379, 0.5
        %v4430 = vmul.f32 %v4381, 0.5
        %v4431 = vmul.f32 %v4385, 0.5
        %v4432 = vmul.f32 %v4387, 0.5
        %v4433 = vmul.f32 %v4391, 0.5
        %v4434 = vmul.f32 %v4393, 0.5
        %v4435 = vmul.f32 %v4397, 0.5
        %v4436 = vmul.f32 %v4399, 0.5
        %v4437 = vmul.f32 %v4403, 0.5
        %v4438 = vmul.f32 %v4405, 0.5
        %v4439 = vmul.f32 %v4409, 0.5
        %v4440 = vmul.f32 %v4411, 0.5
        %v4441 = vmul.f32 %v4415, 0.5
        %v4442 = vmul.f32 %v4417, 0.5
        %v4443 = vmul.f32 %v4349, 0.70710677
        %v4444 = vmul.f32 %v4351, 0.70710677
        %v4445 = vmul.f32 %v4355, 0.70710677
        %v4446 = vmul.f32 %v4357, 0.70710677
        %v4447 = vmul.f32 %v4361, 0.70710677
        %v4448 = vmul.f32 %v4363, 0.70710677
        %v4449 = vmul.f32 %v4367, 0.70710677
        %v4450 = vmul.f32 %v4369, 0.70710677
        %v4451 = vmul.f32 %v4373, 0.70710677
        %v4452 = vmul.f32 %v4375, 0.70710677
        %v4453 = vmul.f32 %v4379, 0.70710677
        %v4454 = vmul.f32 %v4381, 0.70710677
        %v4455 = vmul.f32 %v4385, 0.70710677
        %v4456 = vmul.f32 %v4387, 0.70710677
        %v4457 = vmul.f32 %v4391, 0.70710677
        %v4458 = vmul.f32 %v4393, 0.70710677
        %v4459 = vmul.f32 %v4397, 0.70710677
        %v4460 = vmul.f32 %v4399, 0.70710677
        %v4461 = vmul.f32 %v4403, 0.70710677
        %v4462 = vmul.f32 %v4405, 0.70710677
        %v4463 = vmul.f32 %v4409, 0.70710677
        %v4464 = vmul.f32 %v4411, 0.70710677
        %v4465 = vmul.f32 %v4415, 0.70710677
        %v4466 = vmul.f32 %v4417, 0.70710677
        %v4467 = verf.f32.pop %v4443
        %v4468 = verf.f32.pop %v4444
        %v4469 = verf.f32.pop %v4445
        %v4470 = verf.f32.pop %v4446
        %v4471 = verf.f32.pop %v4447
        %v4472 = verf.f32.pop %v4448
        %v4473 = verf.f32.pop %v4449
        %v4474 = verf.f32.pop %v4450
        %v4475 = verf.f32.pop %v4451
        %v4476 = verf.f32.pop %v4452
        %v4477 = verf.f32.pop %v4453
        %v4478 = verf.f32.pop %v4454
        %v4479 = verf.f32.pop %v4455
        %v4480 = verf.f32.pop %v4456
        %v4481 = verf.f32.pop %v4457
        %v4482 = verf.f32.pop %v4458
        %v4483 = verf.f32.pop %v4459
        %v4484 = verf.f32.pop %v4460
        %v4485 = verf.f32.pop %v4461
        %v4486 = verf.f32.pop %v4462
        %v4487 = verf.f32.pop %v4463
        %v4488 = verf.f32.pop %v4464
        %v4489 = verf.f32.pop %v4465
        %v4490 = verf.f32.pop %v4466
        %v4491 = vadd.f32 %v4467, 1.0
        %v4492 = vadd.f32 %v4468, 1.0
        %v4493 = vadd.f32 %v4469, 1.0
        %v4494 = vadd.f32 %v4470, 1.0
        %v4495 = vadd.f32 %v4471, 1.0
        %v4496 = vadd.f32 %v4472, 1.0
        %v4497 = vadd.f32 %v4473, 1.0
        %v4498 = vadd.f32 %v4474, 1.0
        %v4499 = vadd.f32 %v4475, 1.0
        %v4500 = vadd.f32 %v4476, 1.0
        %v4501 = vadd.f32 %v4477, 1.0
        %v4502 = vadd.f32 %v4478, 1.0
        %v4503 = vadd.f32 %v4479, 1.0
        %v4504 = vadd.f32 %v4480, 1.0
        %v4505 = vadd.f32 %v4481, 1.0
        %v4506 = vadd.f32 %v4482, 1.0
        %v4507 = vadd.f32 %v4483, 1.0
        %v4508 = vadd.f32 %v4484, 1.0
        %v4509 = vadd.f32 %v4485, 1.0
        %v4510 = vadd.f32 %v4486, 1.0
        %v4511 = vadd.f32 %v4487, 1.0
        %v4512 = vadd.f32 %v4488, 1.0
        %v4513 = vadd.f32 %v4489, 1.0
        %v4514 = vadd.f32 %v4490, 1.0
        %v4515 = vmul.f32 %v4419, %v4491
        %v4516 = vmul.f32 %v4420, %v4492
        %v4517 = vmul.f32 %v4421, %v4493
        %v4518 = vmul.f32 %v4422, %v4494
        %v4519 = vmul.f32 %v4423, %v4495
        %v4520 = vmul.f32 %v4424, %v4496
        %v4521 = vmul.f32 %v4425, %v4497
        %v4522 = vmul.f32 %v4426, %v4498
        %v4523 = vmul.f32 %v4427, %v4499
        %v4524 = vmul.f32 %v4428, %v4500
        %v4525 = vmul.f32 %v4429, %v4501
        %v4526 = vmul.f32 %v4430, %v4502
        %v4527 = vmul.f32 %v4431, %v4503
        %v4528 = vmul.f32 %v4432, %v4504
        %v4529 = vmul.f32 %v4433, %v4505
        %v4530 = vmul.f32 %v4434, %v4506
        %v4531 = vmul.f32 %v4435, %v4507
        %v4532 = vmul.f32 %v4436, %v4508
        %v4533 = vmul.f32 %v4437, %v4509
        %v4534 = vmul.f32 %v4438, %v4510
        %v4535 = vmul.f32 %v4439, %v4511
        %v4536 = vmul.f32 %v4440, %v4512
        %v4537 = vmul.f32 %v4441, %v4513
        %v4538 = vmul.f32 %v4442, %v4514
        %v4539 = vld [vmem:[#allocation5 + $0x200] sm:$0xff]
        %v4540 = vld [vmem:[#allocation5 + $0x208] sm:$0xff]
        %v4541 = vld [vmem:[#allocation5 + $0x210] sm:$0xff]
        %v4542 = vld [vmem:[#allocation5 + $0x218] sm:$0xff]
        %v4543 = vld [vmem:[#allocation5 + $0x220] sm:$0xff]
        %v4544 = vld [vmem:[#allocation5 + $0x228] sm:$0xff]
        %v4545 = vld [vmem:[#allocation5 + $0x230] sm:$0xff]
        %v4546 = vld [vmem:[#allocation5 + $0x238] sm:$0xff]
        %v4547 = vld [vmem:[#allocation5 + $0x240] sm:$0xff]
        %v4548 = vld [vmem:[#allocation5 + $0x248] sm:$0xff]
        %v4549 = vld [vmem:[#allocation5 + $0x250] sm:$0xff]
        %v4550 = vld [vmem:[#allocation5 + $0x258] sm:$0xff]
        %v4551 = vld [vmem:[#allocation5 + $0x260] sm:$0xff]
        %v4552 = vld [vmem:[#allocation5 + $0x268] sm:$0xff]
        %v4553 = vld [vmem:[#allocation5 + $0x270] sm:$0xff]
        %v4554 = vld [vmem:[#allocation5 + $0x278] sm:$0xff]
        %v4555 = vld [vmem:[#allocation5 + $0x280] sm:$0xff]
        %v4556 = vld [vmem:[#allocation5 + $0x288] sm:$0xff]
        %v4557 = vld [vmem:[#allocation5 + $0x290] sm:$0xff]
        %v4558 = vld [vmem:[#allocation5 + $0x298] sm:$0xff]
        %v4559 = vld [vmem:[#allocation5 + $0x2a0] sm:$0xff]
        %v4560 = vld [vmem:[#allocation5 + $0x2a8] sm:$0xff]
        %v4561 = vld [vmem:[#allocation5 + $0x2b0] sm:$0xff]
        %v4562 = vld [vmem:[#allocation5 + $0x2b8] sm:$0xff]
        %v4563 = vld [vmem:[#allocation5 + $0x2c0] sm:$0xff]
        %v4564 = vld [vmem:[#allocation5 + $0x2c8] sm:$0xff]
        %v4565 = vld [vmem:[#allocation5 + $0x2d0] sm:$0xff]
        %v4566 = vld [vmem:[#allocation5 + $0x2d8] sm:$0xff]
        %v4567 = vld [vmem:[#allocation5 + $0x2e0] sm:$0xff]
        %v4568 = vld [vmem:[#allocation5 + $0x2e8] sm:$0xff]
        %v4569 = vld [vmem:[#allocation5 + $0x2f0] sm:$0xff]
        %v4570 = vld [vmem:[#allocation5 + $0x2f8] sm:$0xff]
        %v4571 = vld [vmem:[#allocation5 + $0x300] sm:$0xff]
        %v4572 = vld [vmem:[#allocation5 + $0x308] sm:$0xff]
        %v4573 = vld [vmem:[#allocation5 + $0x310] sm:$0xff]
        %v4574 = vld [vmem:[#allocation5 + $0x318] sm:$0xff]
        %v4575 = vld [vmem:[#allocation5 + $0x320] sm:$0xff]
        %v4576 = vld [vmem:[#allocation5 + $0x328] sm:$0xff]
        %v4577 = vld [vmem:[#allocation5 + $0x330] sm:$0xff]
        %v4578 = vld [vmem:[#allocation5 + $0x338] sm:$0xff]
        %v4579 = vld [vmem:[#allocation5 + $0x340] sm:$0xff]
        %v4580 = vld [vmem:[#allocation5 + $0x348] sm:$0xff]
        %v4581 = vld [vmem:[#allocation5 + $0x350] sm:$0xff]
        %v4582 = vld [vmem:[#allocation5 + $0x358] sm:$0xff]
        %v4583 = vld [vmem:[#allocation5 + $0x360] sm:$0xff]
        %v4584 = vld [vmem:[#allocation5 + $0x368] sm:$0xff]
        %v4585 = vld [vmem:[#allocation5 + $0x370] sm:$0xff]
        %v4586 = vld [vmem:[#allocation5 + $0x378] sm:$0xff]
        %v4587 = vld [vmem:[#allocation5 + $0x380] sm:$0xff]
        %v4588 = vld [vmem:[#allocation5 + $0x388] sm:$0xff]
        %v4589 = vld [vmem:[#allocation5 + $0x390] sm:$0xff]
        %v4590 = vld [vmem:[#allocation5 + $0x398] sm:$0xff]
        %v4591 = vld [vmem:[#allocation5 + $0x3a0] sm:$0xff]
        %v4592 = vld [vmem:[#allocation5 + $0x3a8] sm:$0xff]
        %v4593 = vld [vmem:[#allocation5 + $0x3b0] sm:$0xff]
        %v4594 = vld [vmem:[#allocation5 + $0x3b8] sm:$0xff]
        %v4595 = vld [vmem:[#allocation5 + $0x3c0] sm:$0xff]
        %v4596 = vld [vmem:[#allocation5 + $0x3c8] sm:$0xff]
        %v4597 = vld [vmem:[#allocation5 + $0x3d0] sm:$0xff]
        %v4598 = vld [vmem:[#allocation5 + $0x3d8] sm:$0xff]
        %v4599 = vld [vmem:[#allocation5 + $0x3e0] sm:$0xff]
        %v4600 = vld [vmem:[#allocation5 + $0x3e8] sm:$0xff]
        %v4601 = vld [vmem:[#allocation5 + $0x3f0] sm:$0xff]
        %v4602 = vld [vmem:[#allocation5 + $0x3f8] sm:$0xff]
        %4603 = vmatprep.subr.mxu0 %v4540
        %4604 = vmatpush1.msra.mxu0 %v4539
        %4605 = vmatprep.subr.mxu0 %v4542
        %4606 = vmatpush1.msra.mxu0 %v4541
        %4607 = vmatprep.subr.mxu0 %v4544
        %4608 = vmatpush1.msra.mxu0 %v4543
        %4609 = vmatprep.subr.mxu0 %v4546
        %4610 = vmatpush1.msra.mxu0 %v4545
        %4611 = vmatprep.subr.mxu0 %v4548
        %4612 = vmatpush1.msra.mxu0 %v4547
        %4613 = vmatprep.subr.mxu0 %v4550
        %4614 = vmatpush1.msra.mxu0 %v4549
        %4615 = vmatprep.subr.mxu0 %v4552
        %4616 = vmatpush1.msra.mxu0 %v4551
        %4617 = vmatprep.subr.mxu0 %v4554
        %4618 = vmatpush1.msra.mxu0 %v4553
        %4619 = vmatprep.subr.mxu0 %v4556
        %4620 = vmatpush1.msra.mxu0 %v4555
        %4621 = vmatprep.subr.mxu0 %v4558
        %4622 = vmatpush1.msra.mxu0 %v4557
        %4623 = vmatprep.subr.mxu0 %v4560
        %4624 = vmatpush1.msra.mxu0 %v4559
        %4625 = vmatprep.subr.mxu0 %v4562
        %4626 = vmatpush1.msra.mxu0 %v4561
        %4627 = vmatprep.subr.mxu0 %v4564
        %4628 = vmatpush1.msra.mxu0 %v4563
        %4629 = vmatprep.subr.mxu0 %v4566
        %4630 = vmatpush1.msra.mxu0 %v4565
        %4631 = vmatprep.subr.mxu0 %v4568
        %4632 = vmatpush1.msra.mxu0 %v4567
        %4633 = vmatprep.subr.mxu0 %v4570
        %4634 = vmatpush1.msra.mxu0 %v4569
        %4635 = vmatprep.subr.mxu0 %v4572
        %4636 = vmatpush1.msra.mxu0 %v4571
        %4637 = vmatprep.subr.mxu0 %v4574
        %4638 = vmatpush1.msra.mxu0 %v4573
        %4639 = vmatprep.subr.mxu0 %v4576
        %4640 = vmatpush1.msra.mxu0 %v4575
        %4641 = vmatprep.subr.mxu0 %v4578
        %4642 = vmatpush1.msra.mxu0 %v4577
        %4643 = vmatprep.subr.mxu0 %v4580
        %4644 = vmatpush1.msra.mxu0 %v4579
        %4645 = vmatprep.subr.mxu0 %v4582
        %4646 = vmatpush1.msra.mxu0 %v4581
        %4647 = vmatprep.subr.mxu0 %v4584
        %4648 = vmatpush1.msra.mxu0 %v4583
        %4649 = vmatprep.subr.mxu0 %v4586
        %4650 = vmatpush1.msra.mxu0 %v4585
        %4651 = vmatprep.subr.mxu0 %v4588
        %4652 = vmatpush1.msra.mxu0 %v4587
        %4653 = vmatprep.subr.mxu0 %v4590
        %4654 = vmatpush1.msra.mxu0 %v4589
        %4655 = vmatprep.subr.mxu0 %v4592
        %4656 = vmatpush1.msra.mxu0 %v4591
        %4657 = vmatprep.subr.mxu0 %v4594
        %4658 = vmatpush1.msra.mxu0 %v4593
        %4659 = vmatprep.subr.mxu0 %v4596
        %4660 = vmatpush1.msra.mxu0 %v4595
        %4661 = vmatprep.subr.mxu0 %v4598
        %4662 = vmatpush1.msra.mxu0 %v4597
        %4663 = vmatprep.subr.mxu0 %v4600
        %4664 = vmatpush1.msra.mxu0 %v4599
        %4665 = vmatprep.subr.mxu0 %v4602
        %4666 = vmatpush1.msra.mxu0 %v4601
        %4667 = vmatprep.mubr.f32.mxu0 %v4516
        %4668 = vmatmul.mubr.f32.gmra.mrb[0].mxu0 %v4515
        %v4669 = vpop.f32.mrb[0].mxu0
        %v4670 = vadd.f32 0.0, %v4669
        %v4671 = vpop.f32.mrb[0].mxu0
        %v4672 = vadd.f32 0.0, %v4671
        %4673 = vmatprep.mubr.f32.mxu0 %v4518
        %4674 = vmatmul.mubr.f32.gmra.mrb[0].mxu0 %v4517
        %v4675 = vpop.f32.mrb[0].mxu0
        %v4676 = vadd.f32 0.0, %v4675
        %v4677 = vpop.f32.mrb[0].mxu0
        %v4678 = vadd.f32 0.0, %v4677
        %4679 = vmatprep.mubr.f32.mxu0 %v4520
        %4680 = vmatmul.mubr.f32.gmra.mrb[0].mxu0 %v4519
        %v4681 = vpop.f32.mrb[0].mxu0
        %v4682 = vadd.f32 0.0, %v4681
        %v4683 = vpop.f32.mrb[0].mxu0
        %v4684 = vadd.f32 0.0, %v4683
        %4685 = vmatprep.mubr.f32.mxu0 %v4522
        %4686 = vmatmul.mubr.f32.gmra.mrb[0].mxu0 %v4521
        %v4687 = vpop.f32.mrb[0].mxu0
        %v4688 = vadd.f32 0.0, %v4687
        %v4689 = vpop.f32.mrb[0].mxu0
        %v4690 = vadd.f32 0.0, %v4689
        %4691 = vmatprep.mubr.f32.mxu0 %v4524
        %4692 = vmatmul.mubr.f32.gmra.mrb[0].mxu0 %v4523
        %v4693 = vpop.f32.mrb[0].mxu0
        %v4694 = vadd.f32 0.0, %v4693
        %v4695 = vpop.f32.mrb[0].mxu0
        %v4696 = vadd.f32 0.0, %v4695
        %4697 = vmatprep.mubr.f32.mxu0 %v4526
        %4698 = vmatmul.mubr.f32.gmra.mrb[0].mxu0 %v4525
        %v4699 = vpop.f32.mrb[0].mxu0
        %v4700 = vadd.f32 0.0, %v4699
        %v4701 = vpop.f32.mrb[0].mxu0
        %v4702 = vadd.f32 0.0, %v4701
        %4703 = vmatprep.mubr.f32.mxu0 %v4528
        %4704 = vmatmul.mubr.f32.gmra.mrb[0].mxu0 %v4527
        %v4705 = vpop.f32.mrb[0].mxu0
        %v4706 = vadd.f32 0.0, %v4705
        %v4707 = vpop.f32.mrb[0].mxu0
        %v4708 = vadd.f32 0.0, %v4707
        %4709 = vmatprep.mubr.f32.mxu0 %v4530
        %4710 = vmatmul.mubr.f32.gmra.mrb[0].mxu0 %v4529
        %v4711 = vpop.f32.mrb[0].mxu0
        %v4712 = vadd.f32 0.0, %v4711
        %v4713 = vpop.f32.mrb[0].mxu0
        %v4714 = vadd.f32 0.0, %v4713
        %4715 = vmatprep.mubr.f32.mxu0 %v4532
        %4716 = vmatmul.mubr.f32.gmra.mrb[0].mxu0 %v4531
        %v4717 = vpop.f32.mrb[0].mxu0
        %v4718 = vadd.f32 0.0, %v4717
        %v4719 = vpop.f32.mrb[0].mxu0
        %v4720 = vadd.f32 0.0, %v4719
        %4721 = vmatprep.mubr.f32.mxu0 %v4534
        %4722 = vmatmul.mubr.f32.gmra.mrb[0].mxu0 %v4533
        %v4723 = vpop.f32.mrb[0].mxu0
        %v4724 = vadd.f32 0.0, %v4723
        %v4725 = vpop.f32.mrb[0].mxu0
        %v4726 = vadd.f32 0.0, %v4725
        %4727 = vmatprep.mubr.f32.mxu0 %v4536
        %4728 = vmatmul.mubr.f32.gmra.mrb[0].mxu0 %v4535
        %v4729 = vpop.f32.mrb[0].mxu0
        %v4730 = vadd.f32 0.0, %v4729
        %v4731 = vpop.f32.mrb[0].mxu0
        %v4732 = vadd.f32 0.0, %v4731
        %4733 = vmatprep.mubr.f32.mxu0 %v4538
        %4734 = vmatmul.mubr.f32.gmra.mrb[0].mxu0 %v4537
        %v4735 = vpop.f32.mrb[0].mxu0
        %v4736 = vadd.f32 0.0, %v4735
        %v4737 = vpop.f32.mrb[0].mxu0
        %v4738 = vadd.f32 0.0, %v4737
        %4739 = vdwg.mxu0
        %4740 = vmatprep.subr.mxu0 %v4143
        %4741 = vmatpush1.msra.mxu0 %v4142
        %4742 = vmatprep.subr.mxu0 %v4145
        %4743 = vmatpush1.msra.mxu0 %v4144
        %4744 = vmatprep.subr.mxu0 %v4147
        %4745 = vmatpush1.msra.mxu0 %v4146
        %4746 = vmatprep.subr.mxu0 %v4149
        %4747 = vmatpush1.msra.mxu0 %v4148
        %4748 = vmatprep.subr.mxu0 %v4151
        %4749 = vmatpush1.msra.mxu0 %v4150
        %4750 = vmatprep.subr.mxu0 %v4153
        %4751 = vmatpush1.msra.mxu0 %v4152
        %4752 = vmatprep.subr.mxu0 %v4155
        %4753 = vmatpush1.msra.mxu0 %v4154
        %4754 = vmatprep.subr.mxu0 %v4157
        %4755 = vmatpush1.msra.mxu0 %v4156
        %4756 = vmatprep.subr.mxu0 %v4159
        %4757 = vmatpush1.msra.mxu0 %v4158
        %4758 = vmatprep.subr.mxu0 %v4161
        %4759 = vmatpush1.msra.mxu0 %v4160
        %4760 = vmatprep.subr.mxu0 %v4163
        %4761 = vmatpush1.msra.mxu0 %v4162
        %4762 = vmatprep.subr.mxu0 %v4165
        %4763 = vmatpush1.msra.mxu0 %v4164
        %4764 = vmatprep.subr.mxu0 %v4167
        %4765 = vmatpush1.msra.mxu0 %v4166
        %4766 = vmatprep.subr.mxu0 %v4169
        %4767 = vmatpush1.msra.mxu0 %v4168
        %4768 = vmatprep.subr.mxu0 %v4171
        %4769 = vmatpush1.msra.mxu0 %v4170
        %4770 = vmatprep.subr.mxu0 %v4173
        %4771 = vmatpush1.msra.mxu0 %v4172
        %4772 = vmatprep.subr.mxu0 %v4175
        %4773 = vmatpush1.msra.mxu0 %v4174
        %4774 = vmatprep.subr.mxu0 %v4177
        %4775 = vmatpush1.msra.mxu0 %v4176
        %4776 = vmatprep.subr.mxu0 %v4179
        %4777 = vmatpush1.msra.mxu0 %v4178
        %4778 = vmatprep.subr.mxu0 %v4181
        %4779 = vmatpush1.msra.mxu0 %v4180
        %4780 = vmatprep.subr.mxu0 %v4183
        %4781 = vmatpush1.msra.mxu0 %v4182
        %4782 = vmatprep.subr.mxu0 %v4185
        %4783 = vmatpush1.msra.mxu0 %v4184
        %4784 = vmatprep.subr.mxu0 %v4187
        %4785 = vmatpush1.msra.mxu0 %v4186
        %4786 = vmatprep.subr.mxu0 %v4189
        %4787 = vmatpush1.msra.mxu0 %v4188
        %4788 = vmatprep.subr.mxu0 %v4191
        %4789 = vmatpush1.msra.mxu0 %v4190
        %4790 = vmatprep.subr.mxu0 %v4193
        %4791 = vmatpush1.msra.mxu0 %v4192
        %4792 = vmatprep.subr.mxu0 %v4195
        %4793 = vmatpush1.msra.mxu0 %v4194
        %4794 = vmatprep.subr.mxu0 %v4197
        %4795 = vmatpush1.msra.mxu0 %v4196
        %4796 = vmatprep.subr.mxu0 %v4199
        %4797 = vmatpush1.msra.mxu0 %v4198
        %4798 = vmatprep.subr.mxu0 %v4201
        %4799 = vmatpush1.msra.mxu0 %v4200
        %4800 = vmatprep.subr.mxu0 %v4203
        %4801 = vmatpush1.msra.mxu0 %v4202
        %4802 = vmatprep.subr.mxu0 %v4205
        %4803 = vmatpush1.msra.mxu0 %v4204
        %4804 = vmatprep.mubr.f32.mxu0 %v4119
        %4805 = vmatmul.mubr.f32.gmra.mrb[0].mxu0 %v4118
        %v4806 = vpop.f32.mrb[0].mxu0
        %v4807 = vadd.f32 %v4670, %v4806
        %v4808 = vpop.f32.mrb[0].mxu0
        %v4809 = vadd.f32 %v4672, %v4808
        %4810 = vmatprep.mubr.f32.mxu0 %v4121
        %4811 = vmatmul.mubr.f32.gmra.mrb[0].mxu0 %v4120
        %v4812 = vpop.f32.mrb[0].mxu0
        %v4813 = vadd.f32 %v4676, %v4812
        %v4814 = vpop.f32.mrb[0].mxu0
        %v4815 = vadd.f32 %v4678, %v4814
        %4816 = vmatprep.mubr.f32.mxu0 %v4123
        %4817 = vmatmul.mubr.f32.gmra.mrb[0].mxu0 %v4122
        %v4818 = vpop.f32.mrb[0].mxu0
        %v4819 = vadd.f32 %v4682, %v4818
        %v4820 = vpop.f32.mrb[0].mxu0
        %v4821 = vadd.f32 %v4684, %v4820
        %4822 = vmatprep.mubr.f32.mxu0 %v4125
        %4823 = vmatmul.mubr.f32.gmra.mrb[0].mxu0 %v4124
        %v4824 = vpop.f32.mrb[0].mxu0
        %v4825 = vadd.f32 %v4688, %v4824
        %v4826 = vpop.f32.mrb[0].mxu0
        %v4827 = vadd.f32 %v4690, %v4826
        %4828 = vmatprep.mubr.f32.mxu0 %v4127
        %4829 = vmatmul.mubr.f32.gmra.mrb[0].mxu0 %v4126
        %v4830 = vpop.f32.mrb[0].mxu0
        %v4831 = vadd.f32 %v4694, %v4830
        %v4832 = vpop.f32.mrb[0].mxu0
        %v4833 = vadd.f32 %v4696, %v4832
        %4834 = vmatprep.mubr.f32.mxu0 %v4129
        %4835 = vmatmul.mubr.f32.gmra.mrb[0].mxu0 %v4128
        %v4836 = vpop.f32.mrb[0].mxu0
        %v4837 = vadd.f32 %v4700, %v4836
        %v4838 = vpop.f32.mrb[0].mxu0
        %v4839 = vadd.f32 %v4702, %v4838
        %4840 = vmatprep.mubr.f32.mxu0 %v4131
        %4841 = vmatmul.mubr.f32.gmra.mrb[0].mxu0 %v4130
        %v4842 = vpop.f32.mrb[0].mxu0
        %v4843 = vadd.f32 %v4706, %v4842
        %v4844 = vpop.f32.mrb[0].mxu0
        %v4845 = vadd.f32 %v4708, %v4844
        %4846 = vmatprep.mubr.f32.mxu0 %v4133
        %4847 = vmatmul.mubr.f32.gmra.mrb[0].mxu0 %v4132
        %v4848 = vpop.f32.mrb[0].mxu0
        %v4849 = vadd.f32 %v4712, %v4848
        %v4850 = vpop.f32.mrb[0].mxu0
        %v4851 = vadd.f32 %v4714, %v4850
        %4852 = vmatprep.mubr.f32.mxu0 %v4135
        %4853 = vmatmul.mubr.f32.gmra.mrb[0].mxu0 %v4134
        %v4854 = vpop.f32.mrb[0].mxu0
        %v4855 = vadd.f32 %v4718, %v4854
        %v4856 = vpop.f32.mrb[0].mxu0
        %v4857 = vadd.f32 %v4720, %v4856
        %4858 = vmatprep.mubr.f32.mxu0 %v4137
        %4859 = vmatmul.mubr.f32.gmra.mrb[0].mxu0 %v4136
        %v4860 = vpop.f32.mrb[0].mxu0
        %v4861 = vadd.f32 %v4724, %v4860
        %v4862 = vpop.f32.mrb[0].mxu0
        %v4863 = vadd.f32 %v4726, %v4862
        %4864 = vmatprep.mubr.f32.mxu0 %v4139
        %4865 = vmatmul.mubr.f32.gmra.mrb[0].mxu0 %v4138
        %v4866 = vpop.f32.mrb[0].mxu0
        %v4867 = vadd.f32 %v4730, %v4866
        %v4868 = vpop.f32.mrb[0].mxu0
        %v4869 = vadd.f32 %v4732, %v4868
        %4870 = vmatprep.mubr.f32.mxu0 %v4141
        %4871 = vmatmul.mubr.f32.gmra.mrb[0].mxu0 %v4140
        %v4872 = vpop.f32.mrb[0].mxu0
        %v4873 = vadd.f32 %v4736, %v4872
        %v4874 = vpop.f32.mrb[0].mxu0
        %v4875 = vadd.f32 %v4738, %v4874
        %4876 = vdwg.mxu0
        %v4877 = vld [vmem:[#allocation2 + $0x20] sm:$0xff]
        %v4878 = vld [vmem:[#allocation2 + $0x28] sm:$0xff]
        %v4879 = vld [vmem:[#allocation2 + $0x60] sm:$0xff]
        %v4880 = vld [vmem:[#allocation2 + $0x68] sm:$0xff]
        %v4881 = vld [vmem:[#allocation2 + $0xa0] sm:$0xff]
        %v4882 = vld [vmem:[#allocation2 + $0xa8] sm:$0xff]
        %v4883 = vld [vmem:[#allocation2 + $0xe0] sm:$0xff]
        %v4884 = vld [vmem:[#allocation2 + $0xe8] sm:$0xff]
        %v4885 = vld [vmem:[#allocation2 + $0x120] sm:$0xff]
        %v4886 = vld [vmem:[#allocation2 + $0x128] sm:$0xff]
        %v4887 = vld [vmem:[#allocation2 + $0x160] sm:$0xff]
        %v4888 = vld [vmem:[#allocation2 + $0x168] sm:$0xff]
        %v4889 = vld [vmem:[#allocation2 + $0x1a0] sm:$0xff]
        %v4890 = vld [vmem:[#allocation2 + $0x1a8] sm:$0xff]
        %v4891 = vld [vmem:[#allocation2 + $0x1e0] sm:$0xff]
        %v4892 = vld [vmem:[#allocation2 + $0x1e8] sm:$0xff]
        %v4893 = vld [vmem:[#allocation2 + $0x220] sm:$0xff]
        %v4894 = vld [vmem:[#allocation2 + $0x228] sm:$0xff]
        %v4895 = vld [vmem:[#allocation2 + $0x260] sm:$0xff]
        %v4896 = vld [vmem:[#allocation2 + $0x268] sm:$0xff]
        %v4897 = vld [vmem:[#allocation2 + $0x2a0] sm:$0xff]
        %v4898 = vld [vmem:[#allocation2 + $0x2a8] sm:$0xff]
        %v4899 = vld [vmem:[#allocation2 + $0x2e0] sm:$0xff]
        %v4900 = vld [vmem:[#allocation2 + $0x2e8] sm:$0xff]
        %v4901 = vld [vmem:[#allocation2 + $0x320] sm:$0xff]
        %v4902 = vld [vmem:[#allocation2 + $0x328] sm:$0xff]
        %v4903 = vld [vmem:[#allocation2 + $0x360] sm:$0xff]
        %v4904 = vld [vmem:[#allocation2 + $0x368] sm:$0xff]
        %v4905 = vld [vmem:[#allocation2 + $0x3a0] sm:$0xff]
        %v4906 = vld [vmem:[#allocation2 + $0x3a8] sm:$0xff]
        %v4907 = vld [vmem:[#allocation2 + $0x3e0] sm:$0xff]
        %v4908 = vld [vmem:[#allocation2 + $0x3e8] sm:$0xff]
        %v4909 = vld [vmem:[#allocation2 + $0x420] sm:$0xff]
        %v4910 = vld [vmem:[#allocation2 + $0x428] sm:$0xff]
        %v4911 = vld [vmem:[#allocation2 + $0x460] sm:$0xff]
        %v4912 = vld [vmem:[#allocation2 + $0x468] sm:$0xff]
        %v4913 = vld [vmem:[#allocation2 + $0x4a0] sm:$0xff]
        %v4914 = vld [vmem:[#allocation2 + $0x4a8] sm:$0xff]
        %v4915 = vld [vmem:[#allocation2 + $0x4e0] sm:$0xff]
        %v4916 = vld [vmem:[#allocation2 + $0x4e8] sm:$0xff]
        %v4917 = vld [vmem:[#allocation2 + $0x520] sm:$0xff]
        %v4918 = vld [vmem:[#allocation2 + $0x528] sm:$0xff]
        %v4919 = vld [vmem:[#allocation2 + $0x560] sm:$0xff]
        %v4920 = vld [vmem:[#allocation2 + $0x568] sm:$0xff]
        %v4921 = vld [vmem:[#allocation2 + $0x5a0] sm:$0xff]
        %v4922 = vld [vmem:[#allocation2 + $0x5a8] sm:$0xff]
        %v4923 = vld [vmem:[#allocation2 + $0x5e0] sm:$0xff]
        %v4924 = vld [vmem:[#allocation2 + $0x5e8] sm:$0xff]
        %v4925 = vld [vmem:[#allocation2 + $0x620] sm:$0xff]
        %v4926 = vld [vmem:[#allocation2 + $0x628] sm:$0xff]
        %v4927 = vld [vmem:[#allocation2 + $0x660] sm:$0xff]
        %v4928 = vld [vmem:[#allocation2 + $0x668] sm:$0xff]
        %v4929 = vld [vmem:[#allocation2 + $0x6a0] sm:$0xff]
        %v4930 = vld [vmem:[#allocation2 + $0x6a8] sm:$0xff]
        %v4931 = vld [vmem:[#allocation2 + $0x6e0] sm:$0xff]
        %v4932 = vld [vmem:[#allocation2 + $0x6e8] sm:$0xff]
        %v4933 = vld [vmem:[#allocation2 + $0x720] sm:$0xff]
        %v4934 = vld [vmem:[#allocation2 + $0x728] sm:$0xff]
        %v4935 = vld [vmem:[#allocation2 + $0x760] sm:$0xff]
        %v4936 = vld [vmem:[#allocation2 + $0x768] sm:$0xff]
        %v4937 = vld [vmem:[#allocation2 + $0x7a0] sm:$0xff]
        %v4938 = vld [vmem:[#allocation2 + $0x7a8] sm:$0xff]
        %v4939 = vld [vmem:[#allocation2 + $0x7e0] sm:$0xff]
        %v4940 = vld [vmem:[#allocation2 + $0x7e8] sm:$0xff]
        %v4941 = vld [vmem:[%s7 + $0x4] sm:$0x3]
        %v4943 = vlaneseq
        %v4944 = vshrl.u32 %v4943, 7
        %v4945 = vsub.s32 0, %v4944
        %v4946 = vrot.slane %v4941, %v4945
        %v4947 = vlaneseq
        %v4948 = vshrl.u32 %v4947, 7
        %v4949 = vsub.s32 1, %v4948
        %v4950 = vrot.slane %v4941, %v4949
        %4953 = vmatprep.subr.mxu0 %v4878
        %4954 = vmatpush1.msra.mxu0 %v4877
        %4955 = vmatprep.subr.mxu0 %v4880
        %4956 = vmatpush1.msra.mxu0 %v4879
        %4957 = vmatprep.subr.mxu0 %v4882
        %4958 = vmatpush1.msra.mxu0 %v4881
        %4959 = vmatprep.subr.mxu0 %v4884
        %4960 = vmatpush1.msra.mxu0 %v4883
        %4961 = vmatprep.subr.mxu0 %v4886
        %4962 = vmatpush1.msra.mxu0 %v4885
        %4963 = vmatprep.subr.mxu0 %v4888
        %4964 = vmatpush1.msra.mxu0 %v4887
        %4965 = vmatprep.subr.mxu0 %v4890
        %4966 = vmatpush1.msra.mxu0 %v4889
        %4967 = vmatprep.subr.mxu0 %v4892
        %4968 = vmatpush1.msra.mxu0 %v4891
        %4969 = vmatprep.subr.mxu0 %v4894
        %4970 = vmatpush1.msra.mxu0 %v4893
        %4971 = vmatprep.subr.mxu0 %v4896
        %4972 = vmatpush1.msra.mxu0 %v4895
        %4973 = vmatprep.subr.mxu0 %v4898
        %4974 = vmatpush1.msra.mxu0 %v4897
        %4975 = vmatprep.subr.mxu0 %v4900
        %4976 = vmatpush1.msra.mxu0 %v4899
        %4977 = vmatprep.subr.mxu0 %v4902
        %4978 = vmatpush1.msra.mxu0 %v4901
        %4979 = vmatprep.subr.mxu0 %v4904
        %4980 = vmatpush1.msra.mxu0 %v4903
        %4981 = vmatprep.subr.mxu0 %v4906
        %4982 = vmatpush1.msra.mxu0 %v4905
        %4983 = vmatprep.subr.mxu0 %v4908
        %4984 = vmatpush1.msra.mxu0 %v4907
        %4985 = vmatprep.subr.mxu0 %v4910
        %4986 = vmatpush1.msra.mxu0 %v4909
        %4987 = vmatprep.subr.mxu0 %v4912
        %4988 = vmatpush1.msra.mxu0 %v4911
        %4989 = vmatprep.subr.mxu0 %v4914
        %4990 = vmatpush1.msra.mxu0 %v4913
        %4991 = vmatprep.subr.mxu0 %v4916
        %4992 = vmatpush1.msra.mxu0 %v4915
        %4993 = vmatprep.subr.mxu0 %v4918
        %4994 = vmatpush1.msra.mxu0 %v4917
        %4995 = vmatprep.subr.mxu0 %v4920
        %4996 = vmatpush1.msra.mxu0 %v4919
        %4997 = vmatprep.subr.mxu0 %v4922
        %4998 = vmatpush1.msra.mxu0 %v4921
        %4999 = vmatprep.subr.mxu0 %v4924
        %5000 = vmatpush1.msra.mxu0 %v4923
        %5001 = vmatprep.subr.mxu0 %v4926
        %5002 = vmatpush1.msra.mxu0 %v4925
        %5003 = vmatprep.subr.mxu0 %v4928
        %5004 = vmatpush1.msra.mxu0 %v4927
        %5005 = vmatprep.subr.mxu0 %v4930
        %5006 = vmatpush1.msra.mxu0 %v4929
        %5007 = vmatprep.subr.mxu0 %v4932
        %5008 = vmatpush1.msra.mxu0 %v4931
        %5009 = vmatprep.subr.mxu0 %v4934
        %5010 = vmatpush1.msra.mxu0 %v4933
        %5011 = vmatprep.subr.mxu0 %v4936
        %5012 = vmatpush1.msra.mxu0 %v4935
        %5013 = vmatprep.subr.mxu0 %v4938
        %5014 = vmatpush1.msra.mxu0 %v4937
        %5015 = vmatprep.subr.mxu0 %v4940
        %5016 = vmatpush1.msra.mxu0 %v4939
        %5017 = vmatprep.mubr.f32.mxu0 %v3786
        %5018 = vmatmul.mubr.f32.gmra.mrb[0].mxu0 %v3785
        %v5019 = vpop.f32.mrb[0].mxu0
        %v5020 = vadd.f32 %v4946, %v5019
        %v5021 = vpop.f32.mrb[0].mxu0
        %v5022 = vadd.f32 %v4950, %v5021
        %5023 = vmatprep.mubr.f32.mxu0 %v3788
        %5024 = vmatmul.mubr.f32.gmra.mrb[0].mxu0 %v3787
        %v5025 = vpop.f32.mrb[0].mxu0
        %v5026 = vadd.f32 %v4946, %v5025
        %v5027 = vpop.f32.mrb[0].mxu0
        %v5028 = vadd.f32 %v4950, %v5027
        %5029 = vmatprep.mubr.f32.mxu0 %v3790
        %5030 = vmatmul.mubr.f32.gmra.mrb[0].mxu0 %v3789
        %v5031 = vpop.f32.mrb[0].mxu0
        %v5032 = vadd.f32 %v4946, %v5031
        %v5033 = vpop.f32.mrb[0].mxu0
        %v5034 = vadd.f32 %v4950, %v5033
        %5035 = vmatprep.mubr.f32.mxu0 %v3792
        %5036 = vmatmul.mubr.f32.gmra.mrb[0].mxu0 %v3791
        %v5037 = vpop.f32.mrb[0].mxu0
        %v5038 = vadd.f32 %v4946, %v5037
        %v5039 = vpop.f32.mrb[0].mxu0
        %v5040 = vadd.f32 %v4950, %v5039
        %5041 = vmatprep.mubr.f32.mxu0 %v3794
        %5042 = vmatmul.mubr.f32.gmra.mrb[0].mxu0 %v3793
        %v5043 = vpop.f32.mrb[0].mxu0
        %v5044 = vadd.f32 %v4946, %v5043
        %v5045 = vpop.f32.mrb[0].mxu0
        %v5046 = vadd.f32 %v4950, %v5045
        %5047 = vmatprep.mubr.f32.mxu0 %v3796
        %5048 = vmatmul.mubr.f32.gmra.mrb[0].mxu0 %v3795
        %v5049 = vpop.f32.mrb[0].mxu0
        %v5050 = vadd.f32 %v4946, %v5049
        %v5051 = vpop.f32.mrb[0].mxu0
        %v5052 = vadd.f32 %v4950, %v5051
        %5053 = vmatprep.mubr.f32.mxu0 %v3798
        %5054 = vmatmul.mubr.f32.gmra.mrb[0].mxu0 %v3797
        %v5055 = vpop.f32.mrb[0].mxu0
        %v5056 = vadd.f32 %v4946, %v5055
        %v5057 = vpop.f32.mrb[0].mxu0
        %v5058 = vadd.f32 %v4950, %v5057
        %5059 = vmatprep.mubr.f32.mxu0 %v3800
        %5060 = vmatmul.mubr.f32.gmra.mrb[0].mxu0 %v3799
        %v5061 = vpop.f32.mrb[0].mxu0
        %v5062 = vadd.f32 %v4946, %v5061
        %v5063 = vpop.f32.mrb[0].mxu0
        %v5064 = vadd.f32 %v4950, %v5063
        %5065 = vmatprep.mubr.f32.mxu0 %v3802
        %5066 = vmatmul.mubr.f32.gmra.mrb[0].mxu0 %v3801
        %v5067 = vpop.f32.mrb[0].mxu0
        %v5068 = vadd.f32 %v4946, %v5067
        %v5069 = vpop.f32.mrb[0].mxu0
        %v5070 = vadd.f32 %v4950, %v5069
        %5071 = vmatprep.mubr.f32.mxu0 %v3804
        %5072 = vmatmul.mubr.f32.gmra.mrb[0].mxu0 %v3803
        %v5073 = vpop.f32.mrb[0].mxu0
        %v5074 = vadd.f32 %v4946, %v5073
        %v5075 = vpop.f32.mrb[0].mxu0
        %v5076 = vadd.f32 %v4950, %v5075
        %5077 = vmatprep.mubr.f32.mxu0 %v3806
        %5078 = vmatmul.mubr.f32.gmra.mrb[0].mxu0 %v3805
        %v5079 = vpop.f32.mrb[0].mxu0
        %v5080 = vadd.f32 %v4946, %v5079
        %v5081 = vpop.f32.mrb[0].mxu0
        %v5082 = vadd.f32 %v4950, %v5081
        %5083 = vmatprep.mubr.f32.mxu0 %v3808
        %5084 = vmatmul.mubr.f32.gmra.mrb[0].mxu0 %v3807
        %v5085 = vpop.f32.mrb[0].mxu0
        %v5086 = vadd.f32 %v4946, %v5085
        %v5087 = vpop.f32.mrb[0].mxu0
        %v5088 = vadd.f32 %v4950, %v5087
        %5089 = vdwg.mxu0
        %v5090 = vmul.f32 %v5020, 0.5
        %v5091 = vmul.f32 %v5022, 0.5
        %v5092 = vmul.f32 %v5026, 0.5
        %v5093 = vmul.f32 %v5028, 0.5
        %v5094 = vmul.f32 %v5032, 0.5
        %v5095 = vmul.f32 %v5034, 0.5
        %v5096 = vmul.f32 %v5038, 0.5
        %v5097 = vmul.f32 %v5040, 0.5
        %v5098 = vmul.f32 %v5044, 0.5
        %v5099 = vmul.f32 %v5046, 0.5
        %v5100 = vmul.f32 %v5050, 0.5
        %v5101 = vmul.f32 %v5052, 0.5
        %v5102 = vmul.f32 %v5056, 0.5
        %v5103 = vmul.f32 %v5058, 0.5
        %v5104 = vmul.f32 %v5062, 0.5
        %v5105 = vmul.f32 %v5064, 0.5
        %v5106 = vmul.f32 %v5068, 0.5
        %v5107 = vmul.f32 %v5070, 0.5
        %v5108 = vmul.f32 %v5074, 0.5
        %v5109 = vmul.f32 %v5076, 0.5
        %v5110 = vmul.f32 %v5080, 0.5
        %v5111 = vmul.f32 %v5082, 0.5
        %v5112 = vmul.f32 %v5086, 0.5
        %v5113 = vmul.f32 %v5088, 0.5
        %v5114 = vmul.f32 %v5020, 0.70710677
        %v5115 = vmul.f32 %v5022, 0.70710677
        %v5116 = vmul.f32 %v5026, 0.70710677
        %v5117 = vmul.f32 %v5028, 0.70710677
        %v5118 = vmul.f32 %v5032, 0.70710677
        %v5119 = vmul.f32 %v5034, 0.70710677
        %v5120 = vmul.f32 %v5038, 0.70710677
        %v5121 = vmul.f32 %v5040, 0.70710677
        %v5122 = vmul.f32 %v5044, 0.70710677
        %v5123 = vmul.f32 %v5046, 0.70710677
        %v5124 = vmul.f32 %v5050, 0.70710677
        %v5125 = vmul.f32 %v5052, 0.70710677
        %v5126 = vmul.f32 %v5056, 0.70710677
        %v5127 = vmul.f32 %v5058, 0.70710677
        %v5128 = vmul.f32 %v5062, 0.70710677
        %v5129 = vmul.f32 %v5064, 0.70710677
        %v5130 = vmul.f32 %v5068, 0.70710677
        %v5131 = vmul.f32 %v5070, 0.70710677
        %v5132 = vmul.f32 %v5074, 0.70710677
        %v5133 = vmul.f32 %v5076, 0.70710677
        %v5134 = vmul.f32 %v5080, 0.70710677
        %v5135 = vmul.f32 %v5082, 0.70710677
        %v5136 = vmul.f32 %v5086, 0.70710677
        %v5137 = vmul.f32 %v5088, 0.70710677
        %v5138 = verf.f32.pop %v5114
        %v5139 = verf.f32.pop %v5115
        %v5140 = verf.f32.pop %v5116
        %v5141 = verf.f32.pop %v5117
        %v5142 = verf.f32.pop %v5118
        %v5143 = verf.f32.pop %v5119
        %v5144 = verf.f32.pop %v5120
        %v5145 = verf.f32.pop %v5121
        %v5146 = verf.f32.pop %v5122
        %v5147 = verf.f32.pop %v5123
        %v5148 = verf.f32.pop %v5124
        %v5149 = verf.f32.pop %v5125
        %v5150 = verf.f32.pop %v5126
        %v5151 = verf.f32.pop %v5127
        %v5152 = verf.f32.pop %v5128
        %v5153 = verf.f32.pop %v5129
        %v5154 = verf.f32.pop %v5130
        %v5155 = verf.f32.pop %v5131
        %v5156 = verf.f32.pop %v5132
        %v5157 = verf.f32.pop %v5133
        %v5158 = verf.f32.pop %v5134
        %v5159 = verf.f32.pop %v5135
        %v5160 = verf.f32.pop %v5136
        %v5161 = verf.f32.pop %v5137
        %v5162 = vadd.f32 %v5138, 1.0
        %v5163 = vadd.f32 %v5139, 1.0
        %v5164 = vadd.f32 %v5140, 1.0
        %v5165 = vadd.f32 %v5141, 1.0
        %v5166 = vadd.f32 %v5142, 1.0
        %v5167 = vadd.f32 %v5143, 1.0
        %v5168 = vadd.f32 %v5144, 1.0
        %v5169 = vadd.f32 %v5145, 1.0
        %v5170 = vadd.f32 %v5146, 1.0
        %v5171 = vadd.f32 %v5147, 1.0
        %v5172 = vadd.f32 %v5148, 1.0
        %v5173 = vadd.f32 %v5149, 1.0
        %v5174 = vadd.f32 %v5150, 1.0
        %v5175 = vadd.f32 %v5151, 1.0
        %v5176 = vadd.f32 %v5152, 1.0
        %v5177 = vadd.f32 %v5153, 1.0
        %v5178 = vadd.f32 %v5154, 1.0
        %v5179 = vadd.f32 %v5155, 1.0
        %v5180 = vadd.f32 %v5156, 1.0
        %v5181 = vadd.f32 %v5157, 1.0
        %v5182 = vadd.f32 %v5158, 1.0
        %v5183 = vadd.f32 %v5159, 1.0
        %v5184 = vadd.f32 %v5160, 1.0
        %v5185 = vadd.f32 %v5161, 1.0
        %v5186 = vmul.f32 %v5090, %v5162
        %v5187 = vmul.f32 %v5091, %v5163
        %v5188 = vmul.f32 %v5092, %v5164
        %v5189 = vmul.f32 %v5093, %v5165
        %v5190 = vmul.f32 %v5094, %v5166
        %v5191 = vmul.f32 %v5095, %v5167
        %v5192 = vmul.f32 %v5096, %v5168
        %v5193 = vmul.f32 %v5097, %v5169
        %v5194 = vmul.f32 %v5098, %v5170
        %v5195 = vmul.f32 %v5099, %v5171
        %v5196 = vmul.f32 %v5100, %v5172
        %v5197 = vmul.f32 %v5101, %v5173
        %v5198 = vmul.f32 %v5102, %v5174
        %v5199 = vmul.f32 %v5103, %v5175
        %v5200 = vmul.f32 %v5104, %v5176
        %v5201 = vmul.f32 %v5105, %v5177
        %v5202 = vmul.f32 %v5106, %v5178
        %v5203 = vmul.f32 %v5107, %v5179
        %v5204 = vmul.f32 %v5108, %v5180
        %v5205 = vmul.f32 %v5109, %v5181
        %v5206 = vmul.f32 %v5110, %v5182
        %v5207 = vmul.f32 %v5111, %v5183
        %v5208 = vmul.f32 %v5112, %v5184
        %v5209 = vmul.f32 %v5113, %v5185
        %v5210 = vld [vmem:[#allocation5 + $0x400] sm:$0xff]
        %v5211 = vld [vmem:[#allocation5 + $0x408] sm:$0xff]
        %v5212 = vld [vmem:[#allocation5 + $0x410] sm:$0xff]
        %v5213 = vld [vmem:[#allocation5 + $0x418] sm:$0xff]
        %v5214 = vld [vmem:[#allocation5 + $0x420] sm:$0xff]
        %v5215 = vld [vmem:[#allocation5 + $0x428] sm:$0xff]
        %v5216 = vld [vmem:[#allocation5 + $0x430] sm:$0xff]
        %v5217 = vld [vmem:[#allocation5 + $0x438] sm:$0xff]
        %v5218 = vld [vmem:[#allocation5 + $0x440] sm:$0xff]
        %v5219 = vld [vmem:[#allocation5 + $0x448] sm:$0xff]
        %v5220 = vld [vmem:[#allocation5 + $0x450] sm:$0xff]
        %v5221 = vld [vmem:[#allocation5 + $0x458] sm:$0xff]
        %v5222 = vld [vmem:[#allocation5 + $0x460] sm:$0xff]
        %v5223 = vld [vmem:[#allocation5 + $0x468] sm:$0xff]
        %v5224 = vld [vmem:[#allocation5 + $0x470] sm:$0xff]
        %v5225 = vld [vmem:[#allocation5 + $0x478] sm:$0xff]
        %v5226 = vld [vmem:[#allocation5 + $0x480] sm:$0xff]
        %v5227 = vld [vmem:[#allocation5 + $0x488] sm:$0xff]
        %v5228 = vld [vmem:[#allocation5 + $0x490] sm:$0xff]
        %v5229 = vld [vmem:[#allocation5 + $0x498] sm:$0xff]
        %v5230 = vld [vmem:[#allocation5 + $0x4a0] sm:$0xff]
        %v5231 = vld [vmem:[#allocation5 + $0x4a8] sm:$0xff]
        %v5232 = vld [vmem:[#allocation5 + $0x4b0] sm:$0xff]
        %v5233 = vld [vmem:[#allocation5 + $0x4b8] sm:$0xff]
        %v5234 = vld [vmem:[#allocation5 + $0x4c0] sm:$0xff]
        %v5235 = vld [vmem:[#allocation5 + $0x4c8] sm:$0xff]
        %v5236 = vld [vmem:[#allocation5 + $0x4d0] sm:$0xff]
        %v5237 = vld [vmem:[#allocation5 + $0x4d8] sm:$0xff]
        %v5238 = vld [vmem:[#allocation5 + $0x4e0] sm:$0xff]
        %v5239 = vld [vmem:[#allocation5 + $0x4e8] sm:$0xff]
        %v5240 = vld [vmem:[#allocation5 + $0x4f0] sm:$0xff]
        %v5241 = vld [vmem:[#allocation5 + $0x4f8] sm:$0xff]
        %v5242 = vld [vmem:[#allocation5 + $0x500] sm:$0xff]
        %v5243 = vld [vmem:[#allocation5 + $0x508] sm:$0xff]
        %v5244 = vld [vmem:[#allocation5 + $0x510] sm:$0xff]
        %v5245 = vld [vmem:[#allocation5 + $0x518] sm:$0xff]
        %v5246 = vld [vmem:[#allocation5 + $0x520] sm:$0xff]
        %v5247 = vld [vmem:[#allocation5 + $0x528] sm:$0xff]
        %v5248 = vld [vmem:[#allocation5 + $0x530] sm:$0xff]
        %v5249 = vld [vmem:[#allocation5 + $0x538] sm:$0xff]
        %v5250 = vld [vmem:[#allocation5 + $0x540] sm:$0xff]
        %v5251 = vld [vmem:[#allocation5 + $0x548] sm:$0xff]
        %v5252 = vld [vmem:[#allocation5 + $0x550] sm:$0xff]
        %v5253 = vld [vmem:[#allocation5 + $0x558] sm:$0xff]
        %v5254 = vld [vmem:[#allocation5 + $0x560] sm:$0xff]
        %v5255 = vld [vmem:[#allocation5 + $0x568] sm:$0xff]
        %v5256 = vld [vmem:[#allocation5 + $0x570] sm:$0xff]
        %v5257 = vld [vmem:[#allocation5 + $0x578] sm:$0xff]
        %v5258 = vld [vmem:[#allocation5 + $0x580] sm:$0xff]
        %v5259 = vld [vmem:[#allocation5 + $0x588] sm:$0xff]
        %v5260 = vld [vmem:[#allocation5 + $0x590] sm:$0xff]
        %v5261 = vld [vmem:[#allocation5 + $0x598] sm:$0xff]
        %v5262 = vld [vmem:[#allocation5 + $0x5a0] sm:$0xff]
        %v5263 = vld [vmem:[#allocation5 + $0x5a8] sm:$0xff]
        %v5264 = vld [vmem:[#allocation5 + $0x5b0] sm:$0xff]
        %v5265 = vld [vmem:[#allocation5 + $0x5b8] sm:$0xff]
        %v5266 = vld [vmem:[#allocation5 + $0x5c0] sm:$0xff]
        %v5267 = vld [vmem:[#allocation5 + $0x5c8] sm:$0xff]
        %v5268 = vld [vmem:[#allocation5 + $0x5d0] sm:$0xff]
        %v5269 = vld [vmem:[#allocation5 + $0x5d8] sm:$0xff]
        %v5270 = vld [vmem:[#allocation5 + $0x5e0] sm:$0xff]
        %v5271 = vld [vmem:[#allocation5 + $0x5e8] sm:$0xff]
        %v5272 = vld [vmem:[#allocation5 + $0x5f0] sm:$0xff]
        %v5273 = vld [vmem:[#allocation5 + $0x5f8] sm:$0xff]
        %5274 = vmatprep.subr.mxu0 %v5211
        %5275 = vmatpush1.msra.mxu0 %v5210
        %5276 = vmatprep.subr.mxu0 %v5213
        %5277 = vmatpush1.msra.mxu0 %v5212
        %5278 = vmatprep.subr.mxu0 %v5215
        %5279 = vmatpush1.msra.mxu0 %v5214
        %5280 = vmatprep.subr.mxu0 %v5217
        %5281 = vmatpush1.msra.mxu0 %v5216
        %5282 = vmatprep.subr.mxu0 %v5219
        %5283 = vmatpush1.msra.mxu0 %v5218
        %5284 = vmatprep.subr.mxu0 %v5221
        %5285 = vmatpush1.msra.mxu0 %v5220
        %5286 = vmatprep.subr.mxu0 %v5223
        %5287 = vmatpush1.msra.mxu0 %v5222
        %5288 = vmatprep.subr.mxu0 %v5225
        %5289 = vmatpush1.msra.mxu0 %v5224
        %5290 = vmatprep.subr.mxu0 %v5227
        %5291 = vmatpush1.msra.mxu0 %v5226
        %5292 = vmatprep.subr.mxu0 %v5229
        %5293 = vmatpush1.msra.mxu0 %v5228
        %5294 = vmatprep.subr.mxu0 %v5231
        %5295 = vmatpush1.msra.mxu0 %v5230
        %5296 = vmatprep.subr.mxu0 %v5233
        %5297 = vmatpush1.msra.mxu0 %v5232
        %5298 = vmatprep.subr.mxu0 %v5235
        %5299 = vmatpush1.msra.mxu0 %v5234
        %5300 = vmatprep.subr.mxu0 %v5237
        %5301 = vmatpush1.msra.mxu0 %v5236
        %5302 = vmatprep.subr.mxu0 %v5239
        %5303 = vmatpush1.msra.mxu0 %v5238
        %5304 = vmatprep.subr.mxu0 %v5241
        %5305 = vmatpush1.msra.mxu0 %v5240
        %5306 = vmatprep.subr.mxu0 %v5243
        %5307 = vmatpush1.msra.mxu0 %v5242
        %5308 = vmatprep.subr.mxu0 %v5245
        %5309 = vmatpush1.msra.mxu0 %v5244
        %5310 = vmatprep.subr.mxu0 %v5247
        %5311 = vmatpush1.msra.mxu0 %v5246
        %5312 = vmatprep.subr.mxu0 %v5249
        %5313 = vmatpush1.msra.mxu0 %v5248
        %5314 = vmatprep.subr.mxu0 %v5251
        %5315 = vmatpush1.msra.mxu0 %v5250
        %5316 = vmatprep.subr.mxu0 %v5253
        %5317 = vmatpush1.msra.mxu0 %v5252
        %5318 = vmatprep.subr.mxu0 %v5255
        %5319 = vmatpush1.msra.mxu0 %v5254
        %5320 = vmatprep.subr.mxu0 %v5257
        %5321 = vmatpush1.msra.mxu0 %v5256
        %5322 = vmatprep.subr.mxu0 %v5259
        %5323 = vmatpush1.msra.mxu0 %v5258
        %5324 = vmatprep.subr.mxu0 %v5261
        %5325 = vmatpush1.msra.mxu0 %v5260
        %5326 = vmatprep.subr.mxu0 %v5263
        %5327 = vmatpush1.msra.mxu0 %v5262
        %5328 = vmatprep.subr.mxu0 %v5265
        %5329 = vmatpush1.msra.mxu0 %v5264
        %5330 = vmatprep.subr.mxu0 %v5267
        %5331 = vmatpush1.msra.mxu0 %v5266
        %5332 = vmatprep.subr.mxu0 %v5269
        %5333 = vmatpush1.msra.mxu0 %v5268
        %5334 = vmatprep.subr.mxu0 %v5271
        %5335 = vmatpush1.msra.mxu0 %v5270
        %5336 = vmatprep.subr.mxu0 %v5273
        %5337 = vmatpush1.msra.mxu0 %v5272
        %5338 = vmatprep.mubr.f32.mxu0 %v5187
        %5339 = vmatmul.mubr.f32.gmra.mrb[0].mxu0 %v5186
        %v5340 = vpop.f32.mrb[0].mxu0
        %v5341 = vadd.f32 0.0, %v5340
        %v5342 = vpop.f32.mrb[0].mxu0
        %v5343 = vadd.f32 0.0, %v5342
        %5344 = vmatprep.mubr.f32.mxu0 %v5189
        %5345 = vmatmul.mubr.f32.gmra.mrb[0].mxu0 %v5188
        %v5346 = vpop.f32.mrb[0].mxu0
        %v5347 = vadd.f32 0.0, %v5346
        %v5348 = vpop.f32.mrb[0].mxu0
        %v5349 = vadd.f32 0.0, %v5348
        %5350 = vmatprep.mubr.f32.mxu0 %v5191
        %5351 = vmatmul.mubr.f32.gmra.mrb[0].mxu0 %v5190
        %v5352 = vpop.f32.mrb[0].mxu0
        %v5353 = vadd.f32 0.0, %v5352
        %v5354 = vpop.f32.mrb[0].mxu0
        %v5355 = vadd.f32 0.0, %v5354
        %5356 = vmatprep.mubr.f32.mxu0 %v5193
        %5357 = vmatmul.mubr.f32.gmra.mrb[0].mxu0 %v5192
        %v5358 = vpop.f32.mrb[0].mxu0
        %v5359 = vadd.f32 0.0, %v5358
        %v5360 = vpop.f32.mrb[0].mxu0
        %v5361 = vadd.f32 0.0, %v5360
        %5362 = vmatprep.mubr.f32.mxu0 %v5195
        %5363 = vmatmul.mubr.f32.gmra.mrb[0].mxu0 %v5194
        %v5364 = vpop.f32.mrb[0].mxu0
        %v5365 = vadd.f32 0.0, %v5364
        %v5366 = vpop.f32.mrb[0].mxu0
        %v5367 = vadd.f32 0.0, %v5366
        %5368 = vmatprep.mubr.f32.mxu0 %v5197
        %5369 = vmatmul.mubr.f32.gmra.mrb[0].mxu0 %v5196
        %v5370 = vpop.f32.mrb[0].mxu0
        %v5371 = vadd.f32 0.0, %v5370
        %v5372 = vpop.f32.mrb[0].mxu0
        %v5373 = vadd.f32 0.0, %v5372
        %5374 = vmatprep.mubr.f32.mxu0 %v5199
        %5375 = vmatmul.mubr.f32.gmra.mrb[0].mxu0 %v5198
        %v5376 = vpop.f32.mrb[0].mxu0
        %v5377 = vadd.f32 0.0, %v5376
        %v5378 = vpop.f32.mrb[0].mxu0
        %v5379 = vadd.f32 0.0, %v5378
        %5380 = vmatprep.mubr.f32.mxu0 %v5201
        %5381 = vmatmul.mubr.f32.gmra.mrb[0].mxu0 %v5200
        %v5382 = vpop.f32.mrb[0].mxu0
        %v5383 = vadd.f32 0.0, %v5382
        %v5384 = vpop.f32.mrb[0].mxu0
        %v5385 = vadd.f32 0.0, %v5384
        %5386 = vmatprep.mubr.f32.mxu0 %v5203
        %5387 = vmatmul.mubr.f32.gmra.mrb[0].mxu0 %v5202
        %v5388 = vpop.f32.mrb[0].mxu0
        %v5389 = vadd.f32 0.0, %v5388
        %v5390 = vpop.f32.mrb[0].mxu0
        %v5391 = vadd.f32 0.0, %v5390
        %5392 = vmatprep.mubr.f32.mxu0 %v5205
        %5393 = vmatmul.mubr.f32.gmra.mrb[0].mxu0 %v5204
        %v5394 = vpop.f32.mrb[0].mxu0
        %v5395 = vadd.f32 0.0, %v5394
        %v5396 = vpop.f32.mrb[0].mxu0
        %v5397 = vadd.f32 0.0, %v5396
        %5398 = vmatprep.mubr.f32.mxu0 %v5207
        %5399 = vmatmul.mubr.f32.gmra.mrb[0].mxu0 %v5206
        %v5400 = vpop.f32.mrb[0].mxu0
        %v5401 = vadd.f32 0.0, %v5400
        %v5402 = vpop.f32.mrb[0].mxu0
        %v5403 = vadd.f32 0.0, %v5402
        %5404 = vmatprep.mubr.f32.mxu0 %v5209
        %5405 = vmatmul.mubr.f32.gmra.mrb[0].mxu0 %v5208
        %v5406 = vpop.f32.mrb[0].mxu0
        %v5407 = vadd.f32 0.0, %v5406
        %v5408 = vpop.f32.mrb[0].mxu0
        %v5409 = vadd.f32 0.0, %v5408
        %5410 = vdwg.mxu0
        %v5411 = vadd.f32 %v4807, %v5341
        %v5412 = vadd.f32 %v4809, %v5343
        %v5413 = vadd.f32 %v4813, %v5347
        %v5414 = vadd.f32 %v4815, %v5349
        %v5415 = vadd.f32 %v4819, %v5353
        %v5416 = vadd.f32 %v4821, %v5355
        %v5417 = vadd.f32 %v4825, %v5359
        %v5418 = vadd.f32 %v4827, %v5361
        %v5419 = vadd.f32 %v4831, %v5365
        %v5420 = vadd.f32 %v4833, %v5367
        %v5421 = vadd.f32 %v4837, %v5371
        %v5422 = vadd.f32 %v4839, %v5373
        %v5423 = vadd.f32 %v4843, %v5377
        %v5424 = vadd.f32 %v4845, %v5379
        %v5425 = vadd.f32 %v4849, %v5383
        %v5426 = vadd.f32 %v4851, %v5385
        %v5427 = vadd.f32 %v4855, %v5389
        %v5428 = vadd.f32 %v4857, %v5391
        %v5429 = vadd.f32 %v4861, %v5395
        %v5430 = vadd.f32 %v4863, %v5397
        %v5431 = vadd.f32 %v4867, %v5401
        %v5432 = vadd.f32 %v4869, %v5403
        %v5433 = vadd.f32 %v4873, %v5407
        %v5434 = vadd.f32 %v4875, %v5409
        %v5435 = vld [vmem:[#allocation2 + $0x30] sm:$0xff]
        %v5436 = vld [vmem:[#allocation2 + $0x38] sm:$0xff]
        %v5437 = vld [vmem:[#allocation2 + $0x70] sm:$0xff]
        %v5438 = vld [vmem:[#allocation2 + $0x78] sm:$0xff]
        %v5439 = vld [vmem:[#allocation2 + $0xb0] sm:$0xff]
        %v5440 = vld [vmem:[#allocation2 + $0xb8] sm:$0xff]
        %v5441 = vld [vmem:[#allocation2 + $0xf0] sm:$0xff]
        %v5442 = vld [vmem:[#allocation2 + $0xf8] sm:$0xff]
        %v5443 = vld [vmem:[#allocation2 + $0x130] sm:$0xff]
        %v5444 = vld [vmem:[#allocation2 + $0x138] sm:$0xff]
        %v5445 = vld [vmem:[#allocation2 + $0x170] sm:$0xff]
        %v5446 = vld [vmem:[#allocation2 + $0x178] sm:$0xff]
        %v5447 = vld [vmem:[#allocation2 + $0x1b0] sm:$0xff]
        %v5448 = vld [vmem:[#allocation2 + $0x1b8] sm:$0xff]
        %v5449 = vld [vmem:[#allocation2 + $0x1f0] sm:$0xff]
        %v5450 = vld [vmem:[#allocation2 + $0x1f8] sm:$0xff]
        %v5451 = vld [vmem:[#allocation2 + $0x230] sm:$0xff]
        %v5452 = vld [vmem:[#allocation2 + $0x238] sm:$0xff]
        %v5453 = vld [vmem:[#allocation2 + $0x270] sm:$0xff]
        %v5454 = vld [vmem:[#allocation2 + $0x278] sm:$0xff]
        %v5455 = vld [vmem:[#allocation2 + $0x2b0] sm:$0xff]
        %v5456 = vld [vmem:[#allocation2 + $0x2b8] sm:$0xff]
        %v5457 = vld [vmem:[#allocation2 + $0x2f0] sm:$0xff]
        %v5458 = vld [vmem:[#allocation2 + $0x2f8] sm:$0xff]
        %v5459 = vld [vmem:[#allocation2 + $0x330] sm:$0xff]
        %v5460 = vld [vmem:[#allocation2 + $0x338] sm:$0xff]
        %v5461 = vld [vmem:[#allocation2 + $0x370] sm:$0xff]
        %v5462 = vld [vmem:[#allocation2 + $0x378] sm:$0xff]
        %v5463 = vld [vmem:[#allocation2 + $0x3b0] sm:$0xff]
        %v5464 = vld [vmem:[#allocation2 + $0x3b8] sm:$0xff]
        %v5465 = vld [vmem:[#allocation2 + $0x3f0] sm:$0xff]
        %v5466 = vld [vmem:[#allocation2 + $0x3f8] sm:$0xff]
        %v5467 = vld [vmem:[#allocation2 + $0x430] sm:$0xff]
        %v5468 = vld [vmem:[#allocation2 + $0x438] sm:$0xff]
        %v5469 = vld [vmem:[#allocation2 + $0x470] sm:$0xff]
        %v5470 = vld [vmem:[#allocation2 + $0x478] sm:$0xff]
        %v5471 = vld [vmem:[#allocation2 + $0x4b0] sm:$0xff]
        %v5472 = vld [vmem:[#allocation2 + $0x4b8] sm:$0xff]
        %v5473 = vld [vmem:[#allocation2 + $0x4f0] sm:$0xff]
        %v5474 = vld [vmem:[#allocation2 + $0x4f8] sm:$0xff]
        %v5475 = vld [vmem:[#allocation2 + $0x530] sm:$0xff]
        %v5476 = vld [vmem:[#allocation2 + $0x538] sm:$0xff]
        %v5477 = vld [vmem:[#allocation2 + $0x570] sm:$0xff]
        %v5478 = vld [vmem:[#allocation2 + $0x578] sm:$0xff]
        %v5479 = vld [vmem:[#allocation2 + $0x5b0] sm:$0xff]
        %v5480 = vld [vmem:[#allocation2 + $0x5b8] sm:$0xff]
        %v5481 = vld [vmem:[#allocation2 + $0x5f0] sm:$0xff]
        %v5482 = vld [vmem:[#allocation2 + $0x5f8] sm:$0xff]
        %v5483 = vld [vmem:[#allocation2 + $0x630] sm:$0xff]
        %v5484 = vld [vmem:[#allocation2 + $0x638] sm:$0xff]
        %v5485 = vld [vmem:[#allocation2 + $0x670] sm:$0xff]
        %v5486 = vld [vmem:[#allocation2 + $0x678] sm:$0xff]
        %v5487 = vld [vmem:[#allocation2 + $0x6b0] sm:$0xff]
        %v5488 = vld [vmem:[#allocation2 + $0x6b8] sm:$0xff]
        %v5489 = vld [vmem:[#allocation2 + $0x6f0] sm:$0xff]
        %v5490 = vld [vmem:[#allocation2 + $0x6f8] sm:$0xff]
        %v5491 = vld [vmem:[#allocation2 + $0x730] sm:$0xff]
        %v5492 = vld [vmem:[#allocation2 + $0x738] sm:$0xff]
        %v5493 = vld [vmem:[#allocation2 + $0x770] sm:$0xff]
        %v5494 = vld [vmem:[#allocation2 + $0x778] sm:$0xff]
        %v5495 = vld [vmem:[#allocation2 + $0x7b0] sm:$0xff]
        %v5496 = vld [vmem:[#allocation2 + $0x7b8] sm:$0xff]
        %v5497 = vld [vmem:[#allocation2 + $0x7f0] sm:$0xff]
        %v5498 = vld [vmem:[#allocation2 + $0x7f8] sm:$0xff]
        %v5499 = vld [vmem:[%s7 + $0x6] sm:$0x3]
        %v5501 = vlaneseq
        %v5502 = vshrl.u32 %v5501, 7
        %v5503 = vsub.s32 0, %v5502
        %v5504 = vrot.slane %v5499, %v5503
        %v5505 = vlaneseq
        %v5506 = vshrl.u32 %v5505, 7
        %v5507 = vsub.s32 1, %v5506
        %v5508 = vrot.slane %v5499, %v5507
        %5511 = vmatprep.subr.mxu0 %v5436
        %5512 = vmatpush1.msra.mxu0 %v5435
        %5513 = vmatprep.subr.mxu0 %v5438
        %5514 = vmatpush1.msra.mxu0 %v5437
        %5515 = vmatprep.subr.mxu0 %v5440
        %5516 = vmatpush1.msra.mxu0 %v5439
        %5517 = vmatprep.subr.mxu0 %v5442
        %5518 = vmatpush1.msra.mxu0 %v5441
        %5519 = vmatprep.subr.mxu0 %v5444
        %5520 = vmatpush1.msra.mxu0 %v5443
        %5521 = vmatprep.subr.mxu0 %v5446
        %5522 = vmatpush1.msra.mxu0 %v5445
        %5523 = vmatprep.subr.mxu0 %v5448
        %5524 = vmatpush1.msra.mxu0 %v5447
        %5525 = vmatprep.subr.mxu0 %v5450
        %5526 = vmatpush1.msra.mxu0 %v5449
        %5527 = vmatprep.subr.mxu0 %v5452
        %5528 = vmatpush1.msra.mxu0 %v5451
        %5529 = vmatprep.subr.mxu0 %v5454
        %5530 = vmatpush1.msra.mxu0 %v5453
        %5531 = vmatprep.subr.mxu0 %v5456
        %5532 = vmatpush1.msra.mxu0 %v5455
        %5533 = vmatprep.subr.mxu0 %v5458
        %5534 = vmatpush1.msra.mxu0 %v5457
        %5535 = vmatprep.subr.mxu0 %v5460
        %5536 = vmatpush1.msra.mxu0 %v5459
        %5537 = vmatprep.subr.mxu0 %v5462
        %5538 = vmatpush1.msra.mxu0 %v5461
        %5539 = vmatprep.subr.mxu0 %v5464
        %5540 = vmatpush1.msra.mxu0 %v5463
        %5541 = vmatprep.subr.mxu0 %v5466
        %5542 = vmatpush1.msra.mxu0 %v5465
        %5543 = vmatprep.subr.mxu0 %v5468
        %5544 = vmatpush1.msra.mxu0 %v5467
        %5545 = vmatprep.subr.mxu0 %v5470
        %5546 = vmatpush1.msra.mxu0 %v5469
        %5547 = vmatprep.subr.mxu0 %v5472
        %5548 = vmatpush1.msra.mxu0 %v5471
        %5549 = vmatprep.subr.mxu0 %v5474
        %5550 = vmatpush1.msra.mxu0 %v5473
        %5551 = vmatprep.subr.mxu0 %v5476
        %5552 = vmatpush1.msra.mxu0 %v5475
        %5553 = vmatprep.subr.mxu0 %v5478
        %5554 = vmatpush1.msra.mxu0 %v5477
        %5555 = vmatprep.subr.mxu0 %v5480
        %5556 = vmatpush1.msra.mxu0 %v5479
        %5557 = vmatprep.subr.mxu0 %v5482
        %5558 = vmatpush1.msra.mxu0 %v5481
        %5559 = vmatprep.subr.mxu0 %v5484
        %5560 = vmatpush1.msra.mxu0 %v5483
        %5561 = vmatprep.subr.mxu0 %v5486
        %5562 = vmatpush1.msra.mxu0 %v5485
        %5563 = vmatprep.subr.mxu0 %v5488
        %5564 = vmatpush1.msra.mxu0 %v5487
        %5565 = vmatprep.subr.mxu0 %v5490
        %5566 = vmatpush1.msra.mxu0 %v5489
        %5567 = vmatprep.subr.mxu0 %v5492
        %5568 = vmatpush1.msra.mxu0 %v5491
        %5569 = vmatprep.subr.mxu0 %v5494
        %5570 = vmatpush1.msra.mxu0 %v5493
        %5571 = vmatprep.subr.mxu0 %v5496
        %5572 = vmatpush1.msra.mxu0 %v5495
        %5573 = vmatprep.subr.mxu0 %v5498
        %5574 = vmatpush1.msra.mxu0 %v5497
        %5575 = vmatprep.mubr.f32.mxu0 %v3786
        %5576 = vmatmul.mubr.f32.gmra.mrb[0].mxu0 %v3785
        %v5577 = vpop.f32.mrb[0].mxu0
        %v5578 = vadd.f32 %v5504, %v5577
        %v5579 = vpop.f32.mrb[0].mxu0
        %v5580 = vadd.f32 %v5508, %v5579
        %5581 = vmatprep.mubr.f32.mxu0 %v3788
        %5582 = vmatmul.mubr.f32.gmra.mrb[0].mxu0 %v3787
        %v5583 = vpop.f32.mrb[0].mxu0
        %v5584 = vadd.f32 %v5504, %v5583
        %v5585 = vpop.f32.mrb[0].mxu0
        %v5586 = vadd.f32 %v5508, %v5585
        %5587 = vmatprep.mubr.f32.mxu0 %v3790
        %5588 = vmatmul.mubr.f32.gmra.mrb[0].mxu0 %v3789
        %v5589 = vpop.f32.mrb[0].mxu0
        %v5590 = vadd.f32 %v5504, %v5589
        %v5591 = vpop.f32.mrb[0].mxu0
        %v5592 = vadd.f32 %v5508, %v5591
        %5593 = vmatprep.mubr.f32.mxu0 %v3792
        %5594 = vmatmul.mubr.f32.gmra.mrb[0].mxu0 %v3791
        %v5595 = vpop.f32.mrb[0].mxu0
        %v5596 = vadd.f32 %v5504, %v5595
        %v5597 = vpop.f32.mrb[0].mxu0
        %v5598 = vadd.f32 %v5508, %v5597
        %5599 = vmatprep.mubr.f32.mxu0 %v3794
        %5600 = vmatmul.mubr.f32.gmra.mrb[0].mxu0 %v3793
        %v5601 = vpop.f32.mrb[0].mxu0
        %v5602 = vadd.f32 %v5504, %v5601
        %v5603 = vpop.f32.mrb[0].mxu0
        %v5604 = vadd.f32 %v5508, %v5603
        %5605 = vmatprep.mubr.f32.mxu0 %v3796
        %5606 = vmatmul.mubr.f32.gmra.mrb[0].mxu0 %v3795
        %v5607 = vpop.f32.mrb[0].mxu0
        %v5608 = vadd.f32 %v5504, %v5607
        %v5609 = vpop.f32.mrb[0].mxu0
        %v5610 = vadd.f32 %v5508, %v5609
        %5611 = vmatprep.mubr.f32.mxu0 %v3798
        %5612 = vmatmul.mubr.f32.gmra.mrb[0].mxu0 %v3797
        %v5613 = vpop.f32.mrb[0].mxu0
        %v5614 = vadd.f32 %v5504, %v5613
        %v5615 = vpop.f32.mrb[0].mxu0
        %v5616 = vadd.f32 %v5508, %v5615
        %5617 = vmatprep.mubr.f32.mxu0 %v3800
        %5618 = vmatmul.mubr.f32.gmra.mrb[0].mxu0 %v3799
        %v5619 = vpop.f32.mrb[0].mxu0
        %v5620 = vadd.f32 %v5504, %v5619
        %v5621 = vpop.f32.mrb[0].mxu0
        %v5622 = vadd.f32 %v5508, %v5621
        %5623 = vmatprep.mubr.f32.mxu0 %v3802
        %5624 = vmatmul.mubr.f32.gmra.mrb[0].mxu0 %v3801
        %v5625 = vpop.f32.mrb[0].mxu0
        %v5626 = vadd.f32 %v5504, %v5625
        %v5627 = vpop.f32.mrb[0].mxu0
        %v5628 = vadd.f32 %v5508, %v5627
        %5629 = vmatprep.mubr.f32.mxu0 %v3804
        %5630 = vmatmul.mubr.f32.gmra.mrb[0].mxu0 %v3803
        %v5631 = vpop.f32.mrb[0].mxu0
        %v5632 = vadd.f32 %v5504, %v5631
        %v5633 = vpop.f32.mrb[0].mxu0
        %v5634 = vadd.f32 %v5508, %v5633
        %5635 = vmatprep.mubr.f32.mxu0 %v3806
        %5636 = vmatmul.mubr.f32.gmra.mrb[0].mxu0 %v3805
        %v5637 = vpop.f32.mrb[0].mxu0
        %v5638 = vadd.f32 %v5504, %v5637
        %v5639 = vpop.f32.mrb[0].mxu0
        %v5640 = vadd.f32 %v5508, %v5639
        %5641 = vmatprep.mubr.f32.mxu0 %v3808
        %5642 = vmatmul.mubr.f32.gmra.mrb[0].mxu0 %v3807
        %v5643 = vpop.f32.mrb[0].mxu0
        %v5644 = vadd.f32 %v5504, %v5643
        %v5645 = vpop.f32.mrb[0].mxu0
        %v5646 = vadd.f32 %v5508, %v5645
        %5647 = vdwg.mxu0
        %v5648 = vmul.f32 %v5578, 0.5
        %v5649 = vmul.f32 %v5580, 0.5
        %v5650 = vmul.f32 %v5584, 0.5
        %v5651 = vmul.f32 %v5586, 0.5
        %v5652 = vmul.f32 %v5590, 0.5
        %v5653 = vmul.f32 %v5592, 0.5
        %v5654 = vmul.f32 %v5596, 0.5
        %v5655 = vmul.f32 %v5598, 0.5
        %v5656 = vmul.f32 %v5602, 0.5
        %v5657 = vmul.f32 %v5604, 0.5
        %v5658 = vmul.f32 %v5608, 0.5
        %v5659 = vmul.f32 %v5610, 0.5
        %v5660 = vmul.f32 %v5614, 0.5
        %v5661 = vmul.f32 %v5616, 0.5
        %v5662 = vmul.f32 %v5620, 0.5
        %v5663 = vmul.f32 %v5622, 0.5
        %v5664 = vmul.f32 %v5626, 0.5
        %v5665 = vmul.f32 %v5628, 0.5
        %v5666 = vmul.f32 %v5632, 0.5
        %v5667 = vmul.f32 %v5634, 0.5
        %v5668 = vmul.f32 %v5638, 0.5
        %v5669 = vmul.f32 %v5640, 0.5
        %v5670 = vmul.f32 %v5644, 0.5
        %v5671 = vmul.f32 %v5646, 0.5
        %v5672 = vmul.f32 %v5578, 0.70710677
        %v5673 = vmul.f32 %v5580, 0.70710677
        %v5674 = vmul.f32 %v5584, 0.70710677
        %v5675 = vmul.f32 %v5586, 0.70710677
        %v5676 = vmul.f32 %v5590, 0.70710677
        %v5677 = vmul.f32 %v5592, 0.70710677
        %v5678 = vmul.f32 %v5596, 0.70710677
        %v5679 = vmul.f32 %v5598, 0.70710677
        %v5680 = vmul.f32 %v5602, 0.70710677
        %v5681 = vmul.f32 %v5604, 0.70710677
        %v5682 = vmul.f32 %v5608, 0.70710677
        %v5683 = vmul.f32 %v5610, 0.70710677
        %v5684 = vmul.f32 %v5614, 0.70710677
        %v5685 = vmul.f32 %v5616, 0.70710677
        %v5686 = vmul.f32 %v5620, 0.70710677
        %v5687 = vmul.f32 %v5622, 0.70710677
        %v5688 = vmul.f32 %v5626, 0.70710677
        %v5689 = vmul.f32 %v5628, 0.70710677
        %v5690 = vmul.f32 %v5632, 0.70710677
        %v5691 = vmul.f32 %v5634, 0.70710677
        %v5692 = vmul.f32 %v5638, 0.70710677
        %v5693 = vmul.f32 %v5640, 0.70710677
        %v5694 = vmul.f32 %v5644, 0.70710677
        %v5695 = vmul.f32 %v5646, 0.70710677
        %v5696 = verf.f32.pop %v5672
        %v5697 = verf.f32.pop %v5673
        %v5698 = verf.f32.pop %v5674
        %v5699 = verf.f32.pop %v5675
        %v5700 = verf.f32.pop %v5676
        %v5701 = verf.f32.pop %v5677
        %v5702 = verf.f32.pop %v5678
        %v5703 = verf.f32.pop %v5679
        %v5704 = verf.f32.pop %v5680
        %v5705 = verf.f32.pop %v5681
        %v5706 = verf.f32.pop %v5682
        %v5707 = verf.f32.pop %v5683
        %v5708 = verf.f32.pop %v5684
        %v5709 = verf.f32.pop %v5685
        %v5710 = verf.f32.pop %v5686
        %v5711 = verf.f32.pop %v5687
        %v5712 = verf.f32.pop %v5688
        %v5713 = verf.f32.pop %v5689
        %v5714 = verf.f32.pop %v5690
        %v5715 = verf.f32.pop %v5691
        %v5716 = verf.f32.pop %v5692
        %v5717 = verf.f32.pop %v5693
        %v5718 = verf.f32.pop %v5694
        %v5719 = verf.f32.pop %v5695
        %v5720 = vadd.f32 %v5696, 1.0
        %v5721 = vadd.f32 %v5697, 1.0
        %v5722 = vadd.f32 %v5698, 1.0
        %v5723 = vadd.f32 %v5699, 1.0
        %v5724 = vadd.f32 %v5700, 1.0
        %v5725 = vadd.f32 %v5701, 1.0
        %v5726 = vadd.f32 %v5702, 1.0
        %v5727 = vadd.f32 %v5703, 1.0
        %v5728 = vadd.f32 %v5704, 1.0
        %v5729 = vadd.f32 %v5705, 1.0
        %v5730 = vadd.f32 %v5706, 1.0
        %v5731 = vadd.f32 %v5707, 1.0
        %v5732 = vadd.f32 %v5708, 1.0
        %v5733 = vadd.f32 %v5709, 1.0
        %v5734 = vadd.f32 %v5710, 1.0
        %v5735 = vadd.f32 %v5711, 1.0
        %v5736 = vadd.f32 %v5712, 1.0
        %v5737 = vadd.f32 %v5713, 1.0
        %v5738 = vadd.f32 %v5714, 1.0
        %v5739 = vadd.f32 %v5715, 1.0
        %v5740 = vadd.f32 %v5716, 1.0
        %v5741 = vadd.f32 %v5717, 1.0
        %v5742 = vadd.f32 %v5718, 1.0
        %v5743 = vadd.f32 %v5719, 1.0
        %v5744 = vmul.f32 %v5648, %v5720
        %v5745 = vmul.f32 %v5649, %v5721
        %v5746 = vmul.f32 %v5650, %v5722
        %v5747 = vmul.f32 %v5651, %v5723
        %v5748 = vmul.f32 %v5652, %v5724
        %v5749 = vmul.f32 %v5653, %v5725
        %v5750 = vmul.f32 %v5654, %v5726
        %v5751 = vmul.f32 %v5655, %v5727
        %v5752 = vmul.f32 %v5656, %v5728
        %v5753 = vmul.f32 %v5657, %v5729
        %v5754 = vmul.f32 %v5658, %v5730
        %v5755 = vmul.f32 %v5659, %v5731
        %v5756 = vmul.f32 %v5660, %v5732
        %v5757 = vmul.f32 %v5661, %v5733
        %v5758 = vmul.f32 %v5662, %v5734
        %v5759 = vmul.f32 %v5663, %v5735
        %v5760 = vmul.f32 %v5664, %v5736
        %v5761 = vmul.f32 %v5665, %v5737
        %v5762 = vmul.f32 %v5666, %v5738
        %v5763 = vmul.f32 %v5667, %v5739
        %v5764 = vmul.f32 %v5668, %v5740
        %v5765 = vmul.f32 %v5669, %v5741
        %v5766 = vmul.f32 %v5670, %v5742
        %v5767 = vmul.f32 %v5671, %v5743
        %v5768 = vld [vmem:[#allocation5 + $0x600] sm:$0xff]
        %v5769 = vld [vmem:[#allocation5 + $0x608] sm:$0xff]
        %v5770 = vld [vmem:[#allocation5 + $0x610] sm:$0xff]
        %v5771 = vld [vmem:[#allocation5 + $0x618] sm:$0xff]
        %v5772 = vld [vmem:[#allocation5 + $0x620] sm:$0xff]
        %v5773 = vld [vmem:[#allocation5 + $0x628] sm:$0xff]
        %v5774 = vld [vmem:[#allocation5 + $0x630] sm:$0xff]
        %v5775 = vld [vmem:[#allocation5 + $0x638] sm:$0xff]
        %v5776 = vld [vmem:[#allocation5 + $0x640] sm:$0xff]
        %v5777 = vld [vmem:[#allocation5 + $0x648] sm:$0xff]
        %v5778 = vld [vmem:[#allocation5 + $0x650] sm:$0xff]
        %v5779 = vld [vmem:[#allocation5 + $0x658] sm:$0xff]
        %v5780 = vld [vmem:[#allocation5 + $0x660] sm:$0xff]
        %v5781 = vld [vmem:[#allocation5 + $0x668] sm:$0xff]
        %v5782 = vld [vmem:[#allocation5 + $0x670] sm:$0xff]
        %v5783 = vld [vmem:[#allocation5 + $0x678] sm:$0xff]
        %v5784 = vld [vmem:[#allocation5 + $0x680] sm:$0xff]
        %v5785 = vld [vmem:[#allocation5 + $0x688] sm:$0xff]
        %v5786 = vld [vmem:[#allocation5 + $0x690] sm:$0xff]
        %v5787 = vld [vmem:[#allocation5 + $0x698] sm:$0xff]
        %v5788 = vld [vmem:[#allocation5 + $0x6a0] sm:$0xff]
        %v5789 = vld [vmem:[#allocation5 + $0x6a8] sm:$0xff]
        %v5790 = vld [vmem:[#allocation5 + $0x6b0] sm:$0xff]
        %v5791 = vld [vmem:[#allocation5 + $0x6b8] sm:$0xff]
        %v5792 = vld [vmem:[#allocation5 + $0x6c0] sm:$0xff]
        %v5793 = vld [vmem:[#allocation5 + $0x6c8] sm:$0xff]
        %v5794 = vld [vmem:[#allocation5 + $0x6d0] sm:$0xff]
        %v5795 = vld [vmem:[#allocation5 + $0x6d8] sm:$0xff]
        %v5796 = vld [vmem:[#allocation5 + $0x6e0] sm:$0xff]
        %v5797 = vld [vmem:[#allocation5 + $0x6e8] sm:$0xff]
        %v5798 = vld [vmem:[#allocation5 + $0x6f0] sm:$0xff]
        %v5799 = vld [vmem:[#allocation5 + $0x6f8] sm:$0xff]
        %v5800 = vld [vmem:[#allocation5 + $0x700] sm:$0xff]
        %v5801 = vld [vmem:[#allocation5 + $0x708] sm:$0xff]
        %v5802 = vld [vmem:[#allocation5 + $0x710] sm:$0xff]
        %v5803 = vld [vmem:[#allocation5 + $0x718] sm:$0xff]
        %v5804 = vld [vmem:[#allocation5 + $0x720] sm:$0xff]
        %v5805 = vld [vmem:[#allocation5 + $0x728] sm:$0xff]
        %v5806 = vld [vmem:[#allocation5 + $0x730] sm:$0xff]
        %v5807 = vld [vmem:[#allocation5 + $0x738] sm:$0xff]
        %v5808 = vld [vmem:[#allocation5 + $0x740] sm:$0xff]
        %v5809 = vld [vmem:[#allocation5 + $0x748] sm:$0xff]
        %v5810 = vld [vmem:[#allocation5 + $0x750] sm:$0xff]
        %v5811 = vld [vmem:[#allocation5 + $0x758] sm:$0xff]
        %v5812 = vld [vmem:[#allocation5 + $0x760] sm:$0xff]
        %v5813 = vld [vmem:[#allocation5 + $0x768] sm:$0xff]
        %v5814 = vld [vmem:[#allocation5 + $0x770] sm:$0xff]
        %v5815 = vld [vmem:[#allocation5 + $0x778] sm:$0xff]
        %v5816 = vld [vmem:[#allocation5 + $0x780] sm:$0xff]
        %v5817 = vld [vmem:[#allocation5 + $0x788] sm:$0xff]
        %v5818 = vld [vmem:[#allocation5 + $0x790] sm:$0xff]
        %v5819 = vld [vmem:[#allocation5 + $0x798] sm:$0xff]
        %v5820 = vld [vmem:[#allocation5 + $0x7a0] sm:$0xff]
        %v5821 = vld [vmem:[#allocation5 + $0x7a8] sm:$0xff]
        %v5822 = vld [vmem:[#allocation5 + $0x7b0] sm:$0xff]
        %v5823 = vld [vmem:[#allocation5 + $0x7b8] sm:$0xff]
        %v5824 = vld [vmem:[#allocation5 + $0x7c0] sm:$0xff]
        %v5825 = vld [vmem:[#allocation5 + $0x7c8] sm:$0xff]
        %v5826 = vld [vmem:[#allocation5 + $0x7d0] sm:$0xff]
        %v5827 = vld [vmem:[#allocation5 + $0x7d8] sm:$0xff]
        %v5828 = vld [vmem:[#allocation5 + $0x7e0] sm:$0xff]
        %v5829 = vld [vmem:[#allocation5 + $0x7e8] sm:$0xff]
        %v5830 = vld [vmem:[#allocation5 + $0x7f0] sm:$0xff]
        %v5831 = vld [vmem:[#allocation5 + $0x7f8] sm:$0xff]
        %5832 = vmatprep.subr.mxu0 %v5769
        %5833 = vmatpush1.msra.mxu0 %v5768
        %5834 = vmatprep.subr.mxu0 %v5771
        %5835 = vmatpush1.msra.mxu0 %v5770
        %5836 = vmatprep.subr.mxu0 %v5773
        %5837 = vmatpush1.msra.mxu0 %v5772
        %5838 = vmatprep.subr.mxu0 %v5775
        %5839 = vmatpush1.msra.mxu0 %v5774
        %5840 = vmatprep.subr.mxu0 %v5777
        %5841 = vmatpush1.msra.mxu0 %v5776
        %5842 = vmatprep.subr.mxu0 %v5779
        %5843 = vmatpush1.msra.mxu0 %v5778
        %5844 = vmatprep.subr.mxu0 %v5781
        %5845 = vmatpush1.msra.mxu0 %v5780
        %5846 = vmatprep.subr.mxu0 %v5783
        %5847 = vmatpush1.msra.mxu0 %v5782
        %5848 = vmatprep.subr.mxu0 %v5785
        %5849 = vmatpush1.msra.mxu0 %v5784
        %5850 = vmatprep.subr.mxu0 %v5787
        %5851 = vmatpush1.msra.mxu0 %v5786
        %5852 = vmatprep.subr.mxu0 %v5789
        %5853 = vmatpush1.msra.mxu0 %v5788
        %5854 = vmatprep.subr.mxu0 %v5791
        %5855 = vmatpush1.msra.mxu0 %v5790
        %5856 = vmatprep.subr.mxu0 %v5793
        %5857 = vmatpush1.msra.mxu0 %v5792
        %5858 = vmatprep.subr.mxu0 %v5795
        %5859 = vmatpush1.msra.mxu0 %v5794
        %5860 = vmatprep.subr.mxu0 %v5797
        %5861 = vmatpush1.msra.mxu0 %v5796
        %5862 = vmatprep.subr.mxu0 %v5799
        %5863 = vmatpush1.msra.mxu0 %v5798
        %5864 = vmatprep.subr.mxu0 %v5801
        %5865 = vmatpush1.msra.mxu0 %v5800
        %5866 = vmatprep.subr.mxu0 %v5803
        %5867 = vmatpush1.msra.mxu0 %v5802
        %5868 = vmatprep.subr.mxu0 %v5805
        %5869 = vmatpush1.msra.mxu0 %v5804
        %5870 = vmatprep.subr.mxu0 %v5807
        %5871 = vmatpush1.msra.mxu0 %v5806
        %5872 = vmatprep.subr.mxu0 %v5809
        %5873 = vmatpush1.msra.mxu0 %v5808
        %5874 = vmatprep.subr.mxu0 %v5811
        %5875 = vmatpush1.msra.mxu0 %v5810
        %5876 = vmatprep.subr.mxu0 %v5813
        %5877 = vmatpush1.msra.mxu0 %v5812
        %5878 = vmatprep.subr.mxu0 %v5815
        %5879 = vmatpush1.msra.mxu0 %v5814
        %5880 = vmatprep.subr.mxu0 %v5817
        %5881 = vmatpush1.msra.mxu0 %v5816
        %5882 = vmatprep.subr.mxu0 %v5819
        %5883 = vmatpush1.msra.mxu0 %v5818
        %5884 = vmatprep.subr.mxu0 %v5821
        %5885 = vmatpush1.msra.mxu0 %v5820
        %5886 = vmatprep.subr.mxu0 %v5823
        %5887 = vmatpush1.msra.mxu0 %v5822
        %5888 = vmatprep.subr.mxu0 %v5825
        %5889 = vmatpush1.msra.mxu0 %v5824
        %5890 = vmatprep.subr.mxu0 %v5827
        %5891 = vmatpush1.msra.mxu0 %v5826
        %5892 = vmatprep.subr.mxu0 %v5829
        %5893 = vmatpush1.msra.mxu0 %v5828
        %5894 = vmatprep.subr.mxu0 %v5831
        %5895 = vmatpush1.msra.mxu0 %v5830
        %5896 = vmatprep.mubr.f32.mxu0 %v5745
        %5897 = vmatmul.mubr.f32.gmra.mrb[0].mxu0 %v5744
        %v5898 = vpop.f32.mrb[0].mxu0
        %v5899 = vadd.f32 0.0, %v5898
        %v5900 = vpop.f32.mrb[0].mxu0
        %v5901 = vadd.f32 0.0, %v5900
        %5902 = vmatprep.mubr.f32.mxu0 %v5747
        %5903 = vmatmul.mubr.f32.gmra.mrb[0].mxu0 %v5746
        %v5904 = vpop.f32.mrb[0].mxu0
        %v5905 = vadd.f32 0.0, %v5904
        %v5906 = vpop.f32.mrb[0].mxu0
        %v5907 = vadd.f32 0.0, %v5906
        %5908 = vmatprep.mubr.f32.mxu0 %v5749
        %5909 = vmatmul.mubr.f32.gmra.mrb[0].mxu0 %v5748
        %v5910 = vpop.f32.mrb[0].mxu0
        %v5911 = vadd.f32 0.0, %v5910
        %v5912 = vpop.f32.mrb[0].mxu0
        %v5913 = vadd.f32 0.0, %v5912
        %5914 = vmatprep.mubr.f32.mxu0 %v5751
        %5915 = vmatmul.mubr.f32.gmra.mrb[0].mxu0 %v5750
        %v5916 = vpop.f32.mrb[0].mxu0
        %v5917 = vadd.f32 0.0, %v5916
        %v5918 = vpop.f32.mrb[0].mxu0
        %v5919 = vadd.f32 0.0, %v5918
        %5920 = vmatprep.mubr.f32.mxu0 %v5753
        %5921 = vmatmul.mubr.f32.gmra.mrb[0].mxu0 %v5752
        %v5922 = vpop.f32.mrb[0].mxu0
        %v5923 = vadd.f32 0.0, %v5922
        %v5924 = vpop.f32.mrb[0].mxu0
        %v5925 = vadd.f32 0.0, %v5924
        %5926 = vmatprep.mubr.f32.mxu0 %v5755
        %5927 = vmatmul.mubr.f32.gmra.mrb[0].mxu0 %v5754
        %v5928 = vpop.f32.mrb[0].mxu0
        %v5929 = vadd.f32 0.0, %v5928
        %v5930 = vpop.f32.mrb[0].mxu0
        %v5931 = vadd.f32 0.0, %v5930
        %5932 = vmatprep.mubr.f32.mxu0 %v5757
        %5933 = vmatmul.mubr.f32.gmra.mrb[0].mxu0 %v5756
        %v5934 = vpop.f32.mrb[0].mxu0
        %v5935 = vadd.f32 0.0, %v5934
        %v5936 = vpop.f32.mrb[0].mxu0
        %v5937 = vadd.f32 0.0, %v5936
        %5938 = vmatprep.mubr.f32.mxu0 %v5759
        %5939 = vmatmul.mubr.f32.gmra.mrb[0].mxu0 %v5758
        %v5940 = vpop.f32.mrb[0].mxu0
        %v5941 = vadd.f32 0.0, %v5940
        %v5942 = vpop.f32.mrb[0].mxu0
        %v5943 = vadd.f32 0.0, %v5942
        %5944 = vmatprep.mubr.f32.mxu0 %v5761
        %5945 = vmatmul.mubr.f32.gmra.mrb[0].mxu0 %v5760
        %v5946 = vpop.f32.mrb[0].mxu0
        %v5947 = vadd.f32 0.0, %v5946
        %v5948 = vpop.f32.mrb[0].mxu0
        %v5949 = vadd.f32 0.0, %v5948
        %5950 = vmatprep.mubr.f32.mxu0 %v5763
        %5951 = vmatmul.mubr.f32.gmra.mrb[0].mxu0 %v5762
        %v5952 = vpop.f32.mrb[0].mxu0
        %v5953 = vadd.f32 0.0, %v5952
        %v5954 = vpop.f32.mrb[0].mxu0
        %v5955 = vadd.f32 0.0, %v5954
        %5956 = vmatprep.mubr.f32.mxu0 %v5765
        %5957 = vmatmul.mubr.f32.gmra.mrb[0].mxu0 %v5764
        %v5958 = vpop.f32.mrb[0].mxu0
        %v5959 = vadd.f32 0.0, %v5958
        %v5960 = vpop.f32.mrb[0].mxu0
        %v5961 = vadd.f32 0.0, %v5960
        %5962 = vmatprep.mubr.f32.mxu0 %v5767
        %5963 = vmatmul.mubr.f32.gmra.mrb[0].mxu0 %v5766
        %v5964 = vpop.f32.mrb[0].mxu0
        %v5965 = vadd.f32 0.0, %v5964
        %v5966 = vpop.f32.mrb[0].mxu0
        %v5967 = vadd.f32 0.0, %v5966
        %5968 = vdwg.mxu0
        %v5969 = vadd.f32 %v5411, %v5899
        %v5970 = vadd.f32 %v5412, %v5901
        %v5971 = vadd.f32 %v5413, %v5905
        %v5972 = vadd.f32 %v5414, %v5907
        %v5973 = vadd.f32 %v5415, %v5911
        %v5974 = vadd.f32 %v5416, %v5913
        %v5975 = vadd.f32 %v5417, %v5917
        %v5976 = vadd.f32 %v5418, %v5919
        %v5977 = vadd.f32 %v5419, %v5923
        %v5978 = vadd.f32 %v5420, %v5925
        %v5979 = vadd.f32 %v5421, %v5929
        %v5980 = vadd.f32 %v5422, %v5931
        %v5981 = vadd.f32 %v5423, %v5935
        %v5982 = vadd.f32 %v5424, %v5937
        %v5983 = vadd.f32 %v5425, %v5941
        %v5984 = vadd.f32 %v5426, %v5943
        %v5985 = vadd.f32 %v5427, %v5947
        %v5986 = vadd.f32 %v5428, %v5949
        %v5987 = vadd.f32 %v5429, %v5953
        %v5988 = vadd.f32 %v5430, %v5955
        %v5989 = vadd.f32 %v5431, %v5959
        %v5990 = vadd.f32 %v5432, %v5961
        %v5991 = vadd.f32 %v5433, %v5965
        %v5992 = vadd.f32 %v5434, %v5967
        %v5993 = vld [vmem:[%s9] sm:$0x3]
        %v5995 = vlaneseq
        %v5996 = vshrl.u32 %v5995, 7
        %v5997 = vsub.s32 0, %v5996
        %v5998 = vrot.slane %v5993, %v5997
        %v5999 = vlaneseq
        %v6000 = vshrl.u32 %v5999, 7
        %v6001 = vsub.s32 1, %v6000
        %v6002 = vrot.slane %v5993, %v6001
        %v6005 = vadd.f32 %v5969, %v5998
        %v6006 = vadd.f32 %v5970, %v6002
        %v6007 = vadd.f32 %v5971, %v5998
        %v6008 = vadd.f32 %v5972, %v6002
        %v6009 = vadd.f32 %v5973, %v5998
        %v6010 = vadd.f32 %v5974, %v6002
        %v6011 = vadd.f32 %v5975, %v5998
        %v6012 = vadd.f32 %v5976, %v6002
        %v6013 = vadd.f32 %v5977, %v5998
        %v6014 = vadd.f32 %v5978, %v6002
        %v6015 = vadd.f32 %v5979, %v5998
        %v6016 = vadd.f32 %v5980, %v6002
        %v6017 = vadd.f32 %v5981, %v5998
        %v6018 = vadd.f32 %v5982, %v6002
        %v6019 = vadd.f32 %v5983, %v5998
        %v6020 = vadd.f32 %v5984, %v6002
        %v6021 = vadd.f32 %v5985, %v5998
        %v6022 = vadd.f32 %v5986, %v6002
        %v6023 = vadd.f32 %v5987, %v5998
        %v6024 = vadd.f32 %v5988, %v6002
        %v6025 = vadd.f32 %v5989, %v5998
        %v6026 = vadd.f32 %v5990, %v6002
        %v6027 = vadd.f32 %v5991, %v5998
        %v6028 = vadd.f32 %v5992, %v6002
        %6029 = vst [vmem:[%s403 + $0xc0] sm:$0xff] %v6005
        %6030 = vst [vmem:[%s403 + $0xc8] sm:$0xff] %v6006
        %6031 = vst [vmem:[%s403 + $0xd0] sm:$0xff] %v6007
        %6032 = vst [vmem:[%s403 + $0xd8] sm:$0xff] %v6008
        %6033 = vst [vmem:[%s403 + $0xe0] sm:$0xff] %v6009
        %6034 = vst [vmem:[%s403 + $0xe8] sm:$0xff] %v6010
        %6035 = vst [vmem:[%s403 + $0xf0] sm:$0xff] %v6011
        %6036 = vst [vmem:[%s403 + $0xf8] sm:$0xff] %v6012
        %6037 = vst [vmem:[%s403 + $0x100] sm:$0xff] %v6013
        %6038 = vst [vmem:[%s403 + $0x108] sm:$0xff] %v6014
        %6039 = vst [vmem:[%s403 + $0x110] sm:$0xff] %v6015
        %6040 = vst [vmem:[%s403 + $0x118] sm:$0xff] %v6016
        %6041 = vst [vmem:[%s403 + $0x120] sm:$0xff] %v6017
        %6042 = vst [vmem:[%s403 + $0x128] sm:$0xff] %v6018
        %6043 = vst [vmem:[%s403 + $0x130] sm:$0xff] %v6019
        %6044 = vst [vmem:[%s403 + $0x138] sm:$0xff] %v6020
        %6045 = vst [vmem:[%s403 + $0x140] sm:$0xff] %v6021
        %6046 = vst [vmem:[%s403 + $0x148] sm:$0xff] %v6022
        %6047 = vst [vmem:[%s403 + $0x150] sm:$0xff] %v6023
        %6048 = vst [vmem:[%s403 + $0x158] sm:$0xff] %v6024
        %6049 = vst [vmem:[%s403 + $0x160] sm:$0xff] %v6025
        %6050 = vst [vmem:[%s403 + $0x168] sm:$0xff] %v6026
        %6051 = vst [vmem:[%s403 + $0x170] sm:$0xff] %v6027
        %6052 = vst [vmem:[%s403 + $0x178] sm:$0xff] %v6028
        %s6053 = sand.u32 %s254, 1
        %s6054 = scalar_lea.sflag [#allocation4], %s6053
        %s6055 = sand.u32 %s254, 1
        %s6056 = smul.addr %s6055, 384
        %s6057 = scalar_lea.vmem [#allocation7], %s6056
        // Predicated region
        $region69: #{ffn_forward.1} parent=59 // pred_check
          %p6058 = pneg %p264
        $region70: #{ffn_forward.1} parent=59 // pred_check_branch
          %6060 = sbr.rel (%p6058) target = $region72
        $region71: #{ffn_forward.1} parent=59 // pred_region
          %s6061 = smul.u32 24, %s26
          %s6063 = ssub.s32 6144, 6144
          %6064 = vsyncadd %s6054, %s6063
          %s6065 = smul.addr %s6061, 2
          %s6066 = smul.addr %s6065, 128
          %s6067 = scalar_lea.hbm %s10, %s6066
          %s6068 = sshll.u32 %s6057, 4
          %s6069 = int_to_ptr.vmem [resolvable:$true] %s6068
          %6074 = dma.vmem_to_hbm [thread:$0]  %s6069, 6144, %s6067, %s6054, 256, 256, 16
        $region72: #{ffn_forward.1} parent=59 // pred_fallthru
          _
      $region60: #{ffn_forward.1} parent=5 // pred_fallthru
        _
      %p6075 = scmp.le.s32.totalorder 2, %s21
      // Predicated region
      $region73: #{ffn_forward.1} parent=5 // pred_check
        %p6076 = pneg %p6075
      $region74: #{ffn_forward.1} parent=5 // pred_check_branch
        %6078 = sbr.rel (%p6076) target = $region76
      $region75: #{ffn_forward.1} parent=5 // pred_region
        %s6079 = ssub.s32 %s21, 2
        // Predicated region
        $region77: #{ffn_forward.1} parent=75 // pred_check
          %p6080 = pneg %p270
        $region78: #{ffn_forward.1} parent=75 // pred_check_branch
          %6082 = sbr.rel (%p6080) target = $region80
        $region79: #{ffn_forward.1} parent=75 // pred_region
          %s6083 = sand.u32 %s255, 1
          %s6084 = scalar_lea.sflag [#allocation4], %s6083
          %s6085 = sand.u32 %s255, 1
          %s6086 = smul.addr %s6085, 384
          %s6087 = scalar_lea.vmem [#allocation7], %s6086
          %6088 = dma.done %s6084, 6144
        $region80: #{ffn_forward.1} parent=75 // pred_fallthru
          _
      $region76: #{ffn_forward.1} parent=5 // pred_fallthru
        _
    $region6: #{ffn_forward.1} parent=1 // loop_footer
      %s25 = sadd.s32 1, %s21
    $region7: #{ffn_forward.1} parent=1 // loop_footer_branch
      %20 = sbr.rel target = $region3
    $region8: #{ffn_forward.1} parent=1 // loop_exit
      _
    %6089 = vsyncpa [#allocation3], 1
    %s6090 = scalar_lea.sflag [#allocation3], 1
    %6091 = vsyncpa %s6090, 1
    %6092 = vsyncpa [#allocation6], 1
    %6093 = vsyncpa [#allocation4], 1
    %s6094 = scalar_lea.sflag [#allocation4], 1
    %6095 = vsyncpa %s6094, 1

</llo_original>
